<compile_context>
chip_gen: v7x
topology: tpu7x:2x2x1
jax: 0.10.0
libtpu: 0.0.40
codegen_flags: <defaults>
</compile_context>

<pallas_src>
import functools

import numpy as np
import jax
import jax.numpy as jnp
from jax.experimental import pallas as pl
from jax.experimental.pallas import tpu as pltpu

LEAKY_SLOPE = 0.2
BN_EPS = 1e-5
VMEM_LIMIT = 32 * 1024 * 1024  # explicit scoped-VMEM cap (v5e default is 16 MiB)

# Flip to run MXU matmuls with bf16 operands (f32 accumulation) on v6e/v7x.
# Kept off by default so the end-to-end check stays well inside the 2e-3
# tolerance across the 10 chained matmul layers (review correctness concern).
USE_BF16_MATMUL = False


def _maybe_bf16(x):
    return x.astype(jnp.bfloat16) if USE_BF16_MATMUL else x


# ----------------------------- Pallas kernels -----------------------------

def _mm_act_kernel(a_ref, w_ref, o_ref, *, slope):
    """One M-block of act(A @ W); weight block stays resident across the grid."""
    acc = jnp.dot(a_ref[...], w_ref[...], preferred_element_type=jnp.float32)
    if slope is not None:
        acc = jnp.where(acc >= 0, acc, slope * acc)
    o_ref[...] = acc


def _linear_kernel(a_ref, w_ref, bias_ref, o_ref, *, slope):
    acc = jnp.dot(a_ref[...], w_ref[...], preferred_element_type=jnp.float32)
    acc = acc + bias_ref[...]
    if slope is not None:
        acc = jnp.where(acc >= 0, acc, slope * acc)
    o_ref[...] = acc


def _head_kernel(x_ref, w_ref, o_ref):
    # Cout == 1 conv head: VPU multiply + lane reduce (XLU) instead of an
    # N=1 MXU matmul, with the sigmoid fused in.
    s = jnp.sum(x_ref[...] * w_ref[...], axis=-1, keepdims=True)
    o_ref[...] = jax.nn.sigmoid(s)


def _conv_bn_kernel(*refs, slope, eps, tm, nblk, has_res):
    """Fused conv-matmul + BatchNorm + (residual) + LeakyReLU.

    Grid tiles the M dimension ("arbitrary"): each step matmuls one patch block
    and stores it into a VMEM scratch accumulator (persists across steps).  The
    last step computes exact batch statistics over all rows, normalizes,
    optionally adds the resident residual, applies LeakyReLU and writes the
    output once (no intermediate HBM writeback).
    """
    if has_res:
        a_ref, w_ref, g_ref, b_ref, r_ref, o_ref, y_sc = refs
    else:
        a_ref, w_ref, g_ref, b_ref, o_ref, y_sc = refs
        r_ref = None

    i = pl.program_id(0)
    acc = jnp.dot(a_ref[...], w_ref[...], preferred_element_type=jnp.float32)
    row0 = pl.multiple_of(i * tm, tm)
    y_sc[pl.ds(row0, tm), :] = acc

    @pl.when(i == nblk - 1)
    def _():
        y = y_sc[...]
        mean = jnp.mean(y, axis=0, keepdims=True)
        var = jnp.mean((y - mean) ** 2, axis=0, keepdims=True)
        out = (y - mean) * jax.lax.rsqrt(var + eps) * g_ref[...] + b_ref[...]
        if r_ref is not None:
            out = out + r_ref[...]
        if slope is not None:
            out = jnp.where(out >= 0, out, slope * out)
        o_ref[...] = out


# ----------------------------- Pallas wrappers -----------------------------

def _cost(M, K, N, transcendentals=0):
    return pl.CostEstimate(
        flops=2 * M * K * N,
        transcendentals=transcendentals,
        bytes_accessed=4 * (M * K + K * N + 2 * M * N),
    )


def _pick_tm(M):
    # Largest clean row-tile (review suggests 256-512 rows); fall back to the
    # full extent for tiny layers so blocks always divide evenly (BN needs
    # exact row counts, no padded garbage rows).
    for t in (512, 256):
        if M > t and M % t == 0:
            return t
    return M


def matmul_act(a, w, *, slope=None):
    """act(A @ W), M-tiled, "parallel" grid (megacore row split on v7x)."""
    M, K = a.shape
    K2, N = w.shape
    assert K == K2
    tm = _pick_tm(M)
    nblk = M // tm
    return pl.pallas_call(
        functools.partial(_mm_act_kernel, slope=slope),
        grid=(nblk,),
        in_specs=[
            pl.BlockSpec((tm, K), lambda i: (i, 0)),
            pl.BlockSpec((K, N), lambda i: (0, 0)),   # weight stays resident
        ],
        out_specs=pl.BlockSpec((tm, N), lambda i: (i, 0)),
        out_shape=jax.ShapeDtypeStruct((M, N), jnp.float32),
        compiler_params=pltpu.CompilerParams(
            dimension_semantics=("parallel",),
            vmem_limit_bytes=VMEM_LIMIT),
        cost_estimate=_cost(M, K, N),
    )(_maybe_bf16(a), _maybe_bf16(w))


def matmul_bn_act(a, w, gamma, beta, *, slope=None, residual=None):
    """act(BN(A @ W) [+ residual]) in a single pallas_call (see kernel doc)."""
    M, K = a.shape
    K2, N = w.shape
    assert K == K2
    tm = _pick_tm(M)
    nblk = M // tm
    has_res = residual is not None

    in_specs = [
        pl.BlockSpec((tm, K), lambda i: (i, 0)),      # patch block streams
        pl.BlockSpec((K, N), lambda i: (0, 0)),       # weight resident
        pl.BlockSpec((1, N), lambda i: (0, 0)),       # gamma resident
        pl.BlockSpec((1, N), lambda i: (0, 0)),       # beta resident
    ]
    args = [_maybe_bf16(a), _maybe_bf16(w),
            gamma.reshape(1, N), beta.reshape(1, N)]
    if has_res:
        in_specs.append(pl.BlockSpec((M, N), lambda i: (0, 0)))  # residual resident
        args.append(residual)

    return pl.pallas_call(
        functools.partial(_conv_bn_kernel, slope=slope, eps=BN_EPS,
                          tm=tm, nblk=nblk, has_res=has_res),
        grid=(nblk,),
        in_specs=in_specs,
        # Output block revisited across the whole grid (written at finalize).
        out_specs=pl.BlockSpec((M, N), lambda i: (0, 0)),
        out_shape=jax.ShapeDtypeStruct((M, N), jnp.float32),
        scratch_shapes=[pltpu.VMEM((M, N), jnp.float32)],
        compiler_params=pltpu.CompilerParams(
            dimension_semantics=("arbitrary",),
            vmem_limit_bytes=VMEM_LIMIT),
        cost_estimate=_cost(M, K, N),
    )(*args)


def pallas_linear(x, w, bias, *, slope=None):
    M, K = x.shape
    K2, N = w.shape
    assert K == K2
    return pl.pallas_call(
        functools.partial(_linear_kernel, slope=slope),
        grid=(1,),
        in_specs=[pl.BlockSpec((M, K), lambda i: (0, 0)),
                  pl.BlockSpec((K, N), lambda i: (0, 0)),
                  pl.BlockSpec((1, N), lambda i: (0, 0))],
        out_specs=pl.BlockSpec((M, N), lambda i: (0, 0)),
        out_shape=jax.ShapeDtypeStruct((M, N), jnp.float32),
        compiler_params=pltpu.CompilerParams(
            dimension_semantics=("arbitrary",),
            vmem_limit_bytes=VMEM_LIMIT),
        cost_estimate=_cost(M, K, N),
    )(_maybe_bf16(x), _maybe_bf16(w), bias.reshape(1, N))


def conv_head_sigmoid(x_flat, w_row):
    """Final 4x4 valid conv (Cout=1) + sigmoid as a lane-reduce kernel."""
    B, K = x_flat.shape
    return pl.pallas_call(
        _head_kernel,
        grid=(1,),
        in_specs=[pl.BlockSpec((B, K), lambda i: (0, 0)),
                  pl.BlockSpec((1, K), lambda i: (0, 0))],
        out_specs=pl.BlockSpec((B, 1), lambda i: (0, 0)),
        out_shape=jax.ShapeDtypeStruct((B, 1), jnp.float32),
        compiler_params=pltpu.CompilerParams(
            dimension_semantics=("arbitrary",),
            vmem_limit_bytes=VMEM_LIMIT),
        cost_estimate=pl.CostEstimate(flops=2 * B * K, transcendentals=B,
                                      bytes_accessed=4 * (B * K + K + B)),
    )(x_flat, w_row)


# ----------------------------- conv via im2col -----------------------------

def _im2col(x, kh, kw, stride, pad):
    B, H, W, C = x.shape
    if pad:
        x = jnp.pad(x, ((0, 0), (pad, pad), (pad, pad), (0, 0)))
    Hp, Wp = H + 2 * pad, W + 2 * pad
    OH = (Hp - kh) // stride + 1
    OW = (Wp - kw) // stride + 1
    cols = []
    for i in range(kh):
        for j in range(kw):
            cols.append(x[:, i:i + stride * OH:stride, j:j + stride * OW:stride, :])
    p = jnp.stack(cols, axis=3)                      # (B, OH, OW, kh*kw, C)
    return p.reshape(B * OH * OW, kh * kw * C), (B, OH, OW)
# TODO(synk): replace the materialized im2col gather with in-kernel tap
# accumulation (K-grid over kernel taps + strided input index_map) to remove
# the extra patch-matrix HBM traffic of the stride-2 4x4 convs.


def _pad_cin(x_nhwc, w_hwio):
    """Zero-pad Cin up to a multiple of 8 (first conv: 3 -> 8, K = 128)."""
    cin = w_hwio.shape[2]
    cin_pad = -(-cin // 8) * 8
    if cin_pad != cin:
        x_nhwc = jnp.pad(x_nhwc, ((0, 0), (0, 0), (0, 0), (0, cin_pad - cin)))
        w_hwio = jnp.pad(w_hwio, ((0, 0), (0, 0), (0, cin_pad - cin), (0, 0)))
    return x_nhwc, w_hwio


def conv2d_act(x_nhwc, w_hwio, stride, pad, *, slope=None):
    x_nhwc, w_hwio = _pad_cin(x_nhwc, w_hwio)
    kh, kw, cin, cout = w_hwio.shape
    patches, (B, OH, OW) = _im2col(x_nhwc, kh, kw, stride, pad)
    w_mat = w_hwio.reshape(kh * kw * cin, cout)
    out = matmul_act(patches, w_mat, slope=slope)
    return out.reshape(B, OH, OW, cout)


def conv2d_bn_act(x_nhwc, w_hwio, stride, pad, gamma, beta, *,
                  slope=None, residual=None):
    x_nhwc, w_hwio = _pad_cin(x_nhwc, w_hwio)
    kh, kw, cin, cout = w_hwio.shape
    patches, (B, OH, OW) = _im2col(x_nhwc, kh, kw, stride, pad)
    w_mat = w_hwio.reshape(kh * kw * cin, cout)
    res_flat = None if residual is None else residual.reshape(B * OH * OW, cout)
    out = matmul_bn_act(patches, w_mat, gamma, beta,
                        slope=slope, residual=res_flat)
    return out.reshape(B, OH, OW, cout)


# ----------------------------- parameters -----------------------------

def init_params(nc, ndf, key):
    ks = jax.random.split(key, 20)

    def conv_w(k, kh, kw, cin, cout):
        return jax.random.normal(k, (kh, kw, cin, cout), jnp.float32) * 0.05

    p = {}
    p["conv_3_64"]    = conv_w(ks[0], 4, 4, nc, ndf)
    p["conv_64_128"]  = conv_w(ks[1], 4, 4, ndf, ndf * 2)
    p["conv_128_256"] = conv_w(ks[2], 4, 4, ndf * 2, ndf * 4)
    p["conv_256_512"] = conv_w(ks[3], 4, 4, ndf * 4, ndf * 8)
    p["conv_512_128"] = conv_w(ks[4], 1, 1, ndf * 8, ndf * 2)
    p["conv_128_128"] = conv_w(ks[5], 3, 3, ndf * 2, ndf * 2)
    p["conv_128_512"] = conv_w(ks[6], 3, 3, ndf * 2, ndf * 8)
    p["conv_640_512"] = conv_w(ks[7], 1, 1, ndf * 8 + 128, ndf * 8)
    p["conv_512_1"]   = conv_w(ks[8], 4, 4, ndf * 8, 1)
    p["linear_w"] = jax.random.normal(ks[9], (1024, 128), jnp.float32) * 0.03
    p["linear_b"] = jax.random.normal(ks[10], (128,), jnp.float32) * 0.01
    for idx, (name, c) in enumerate(
            (("bn_128", ndf * 2), ("bn_256", ndf * 4), ("bn_512", ndf * 8))):
        p[name + "_g"] = 1.0 + 0.1 * jax.random.normal(ks[11 + 2 * idx], (c,), jnp.float32)
        p[name + "_b"] = 0.1 * jax.random.normal(ks[12 + 2 * idx], (c,), jnp.float32)
    return p


# ----------------------------- forward pass -----------------------------

def icml_d_forward(params, img_nchw, txt):
    B = img_nchw.shape[0]
    s = LEAKY_SLOPE
    x = jnp.transpose(img_nchw, (0, 2, 3, 1))  # NCHW -> NHWC

    # conv + lrelu (no BN): M-tiled "parallel" grid
    e1 = conv2d_act(x, params["conv_3_64"], 2, 1, slope=s)
    # conv + BN + lrelu fused into one pallas_call per layer
    e2 = conv2d_bn_act(e1, params["conv_64_128"], 2, 1,
                       params["bn_128_g"], params["bn_128_b"], slope=s)
    e3 = conv2d_bn_act(e2, params["conv_128_256"], 2, 1,
                       params["bn_256_g"], params["bn_256_b"], slope=s)
    e4 = conv2d_bn_act(e3, params["conv_256_512"], 2, 1,
                       params["bn_512_g"], params["bn_512_b"], slope=None)
    e5 = conv2d_bn_act(e4, params["conv_512_128"], 1, 0,
                       params["bn_128_g"], params["bn_128_b"], slope=s)
    e6 = conv2d_bn_act(e5, params["conv_128_128"], 1, 1,
                       params["bn_128_g"], params["bn_128_b"], slope=s)
    # e7 = BN(conv(e6)); residual e4 and lrelu fused -> directly produces e8
    e8 = conv2d_bn_act(e6, params["conv_128_512"], 1, 1,
                       params["bn_512_g"], params["bn_512_b"], slope=s,
                       residual=e4)

    txt_emb = pallas_linear(txt.reshape(B, 1024), params["linear_w"],
                            params["linear_b"], slope=s)          # (B, 128)
    e9 = jnp.broadcast_to(txt_emb[:, None, None, :], (B, 4, 4, 128))
    e12 = jnp.concatenate([e8, e9], axis=-1)                       # (B, 4, 4, 8*ndf+128)

    e13 = conv2d_bn_act(e12, params["conv_640_512"], 1, 0,
                        params["bn_512_g"], params["bn_512_b"], slope=s)

    # final 4x4 valid conv (Cout=1) + sigmoid as a lane-reduce head
    C = e13.shape[-1]
    x_flat = e13.reshape(B, 4 * 4 * C)
    w_row = params["conv_512_1"].reshape(4 * 4 * C, 1).T           # (1, 16*C)
    out = conv_head_sigmoid(x_flat, w_row)
    return out.reshape(B)


# ----------------------------- pure-JAX reference -----------------------------

def ref_forward(params, img_nchw, txt):
    B = img_nchw.shape[0]
    x = jnp.transpose(img_nchw, (0, 2, 3, 1))

    def conv(x, w, stride, pad):
        return jax.lax.conv_general_dilated(
            x, w, (stride, stride), [(pad, pad), (pad, pad)],
            dimension_numbers=("NHWC", "HWIO", "NHWC"))

    def bn(x, g, b):
        m = jnp.mean(x, axis=(0, 1, 2), keepdims=True)
        v = jnp.mean((x - m) ** 2, axis=(0, 1, 2), keepdims=True)
        return (x - m) * jax.lax.rsqrt(v + BN_EPS) * g + b

    def lrelu(x):
        return jnp.where(x >= 0, x, LEAKY_SLOPE * x)

    e1 = lrelu(conv(x, params["conv_3_64"], 2, 1))
    e2 = lrelu(bn(conv(e1, params["conv_64_128"], 2, 1), params["bn_128_g"], params["bn_128_b"]))
    e3 = lrelu(bn(conv(e2, params["conv_128_256"], 2, 1), params["bn_256_g"], params["bn_256_b"]))
    e4 = bn(conv(e3, params["conv_256_512"], 2, 1), params["bn_512_g"], params["bn_512_b"])
    e5 = lrelu(bn(conv(e4, params["conv_512_128"], 1, 0), params["bn_128_g"], params["bn_128_b"]))
    e6 = lrelu(bn(conv(e5, params["conv_128_128"], 1, 1), params["bn_128_g"], params["bn_128_b"]))
    e7 = bn(conv(e6, params["conv_128_512"], 1, 1), params["bn_512_g"], params["bn_512_b"])
    e8 = lrelu(e4 + e7)
    txt_emb = lrelu(txt.reshape(B, 1024) @ params["linear_w"] + params["linear_b"])
    e9 = jnp.broadcast_to(txt_emb[:, None, None, :], (B, 4, 4, 128))
    e12 = jnp.concatenate([e8, e9], axis=-1)
    e13 = lrelu(bn(conv(e12, params["conv_640_512"], 1, 0), params["bn_512_g"], params["bn_512_b"]))
    e14 = conv(e13, params["conv_512_1"], 1, 0)
    return jax.nn.sigmoid(e14.reshape(B))


# ----------------------------- main -----------------------------

if __name__ == "__main__":
    nc, ndf = 3, 8          # small channel config; spatial size 64 is fixed by the architecture
    B = 2

    key = jax.random.PRNGKey(0)
    k_img, k_txt, k_p = jax.random.split(key, 3)
    img = jax.random.normal(k_img, (B, nc, 64, 64), jnp.float32)   # NCHW, PyTorch convention
    txt = jax.random.normal(k_txt, (B, 1024), jnp.float32)
    params = init_params(nc, ndf, k_p)

    out = jax.jit(icml_d_forward)(params, img, txt)
    out = jax.block_until_ready(out)

    ref = ref_forward(params, img, txt)
    np.testing.assert_allclose(np.asarray(out), np.asarray(ref), rtol=2e-3, atol=2e-3)
    assert out.shape == (B,)
    assert bool(jnp.all(jnp.isfinite(out)))

    print("KERNEL_OK")
</pallas_src>

<mosaic_0001>
module attributes {stable_mosaic.version = 11 : i64} {
  func.func @_mm_act_kernel(%arg0: i32, %arg1: memref<512x128xf32, #tpu.memory_space<vmem>>, %arg2: memref<128x8xf32, #tpu.memory_space<vmem>>, %arg3: memref<512x8xf32, #tpu.memory_space<vmem>>) attributes {dimension_semantics = [#tpu.dimension_semantics<parallel>], iteration_bounds = array<i64: 4>, scalar_prefetch = 0 : i64, scratch_operands = 0 : i64, tpu.core_type = #tpu.core_type<tc>, window_params = [{transform_indices = @transform_0, window_bounds = array<i64: 512, 128>}, {pipeline_mode = #tpu.pipeline_mode<synchronous>, transform_indices = @transform_1, window_bounds = array<i64: 128, 8>}, {transform_indices = @transform_2, window_bounds = array<i64: 512, 8>}]} {
    %c0 = arith.constant 0 : index
    %c0_0 = arith.constant 0 : index
    %0 = vector.load %arg1[%c0, %c0_0] : memref<512x128xf32, #tpu.memory_space<vmem>>, vector<512x128xf32>
    %c0_1 = arith.constant 0 : index
    %c0_2 = arith.constant 0 : index
    %1 = vector.load %arg2[%c0_1, %c0_2] : memref<128x8xf32, #tpu.memory_space<vmem>>, vector<128x8xf32>
    %cst = arith.constant dense<0.000000e+00> : vector<512x8xf32>
    %2 = tpu.matmul %0, %1, %cst {dimension_numbers = #tpu.dot_dimension_numbers<[1], [0], [0], [1], [0, 0, 1, 1], [], []>} : vector<512x128xf32>, vector<128x8xf32>, vector<512x8xf32> -> vector<512x8xf32>
    %cst_3 = arith.constant 0.000000e+00 : f32
    %3 = vector.broadcast %cst_3 : f32 to vector<512x8xf32>
    %4 = arith.cmpf oge, %2, %3 : vector<512x8xf32>
    %cst_4 = arith.constant 2.000000e-01 : f32
    %5 = vector.broadcast %cst_4 : f32 to vector<512x8xf32>
    %6 = arith.mulf %5, %2 : vector<512x8xf32>
    %7 = arith.select %4, %2, %6 : vector<512x8xi1>, vector<512x8xf32>
    %c0_5 = arith.constant 0 : index
    %c0_6 = arith.constant 0 : index
    %8 = vector.load %arg3[%c0_5, %c0_6] : memref<512x8xf32, #tpu.memory_space<vmem>>, vector<512x8xf32>
    tpu.vector_store %arg3[%c0_5, %c0_6], %7 {strides = array<i32>} : memref<512x8xf32, #tpu.memory_space<vmem>>, vector<512x8xf32>,
    return
  }
  func.func @transform_0(%arg0: i32) -> (i32, i32) {
    %c0_i32 = arith.constant 0 : i32
    %c0_i32_0 = arith.constant 0 : i32
    return %arg0, %c0_i32 : i32, i32
  }
  func.func @transform_1(%arg0: i32) -> (i32, i32) {
    %c0_i32 = arith.constant 0 : i32
    %c0_i32_0 = arith.constant 0 : i32
    %c0_i32_1 = arith.constant 0 : i32
    return %c0_i32, %c0_i32_0 : i32, i32
  }
  func.func @transform_2(%arg0: i32) -> (i32, i32) {
    %c0_i32 = arith.constant 0 : i32
    %c0_i32_0 = arith.constant 0 : i32
    return %arg0, %c0_i32 : i32, i32
  }
}

module attributes {stable_mosaic.version = 11 : i64} {
  func.func @_conv_bn_kernel(%arg0: i32, %arg1: memref<256x128xf32, #tpu.memory_space<vmem>>, %arg2: memref<128x16xf32, #tpu.memory_space<vmem>>, %arg3: memref<1x16xf32, #tpu.memory_space<vmem>>, %arg4: memref<1x16xf32, #tpu.memory_space<vmem>>, %arg5: memref<512x16xf32, #tpu.memory_space<vmem>>, %arg6: memref<512x16xf32, #tpu.memory_space<vmem>>) attributes {dimension_semantics = [#tpu.dimension_semantics<arbitrary>], iteration_bounds = array<i64: 2>, scalar_prefetch = 0 : i64, scratch_operands = 1 : i64, tpu.core_type = #tpu.core_type<tc>, window_params = [{transform_indices = @transform_0, window_bounds = array<i64: 256, 128>}, {pipeline_mode = #tpu.pipeline_mode<synchronous>, transform_indices = @transform_1, window_bounds = array<i64: 128, 16>}, {pipeline_mode = #tpu.pipeline_mode<synchronous>, transform_indices = @transform_2, window_bounds = array<i64: 1, 16>}, {pipeline_mode = #tpu.pipeline_mode<synchronous>, transform_indices = @transform_3, window_bounds = array<i64: 1, 16>}, {pipeline_mode = #tpu.pipeline_mode<synchronous>, transform_indices = @transform_4, window_bounds = array<i64: 512, 16>}]} {
    %c0 = arith.constant 0 : index
    %c0_0 = arith.constant 0 : index
    %0 = vector.load %arg1[%c0, %c0_0] : memref<256x128xf32, #tpu.memory_space<vmem>>, vector<256x128xf32>
    %c0_1 = arith.constant 0 : index
    %c0_2 = arith.constant 0 : index
    %1 = vector.load %arg2[%c0_1, %c0_2] : memref<128x16xf32, #tpu.memory_space<vmem>>, vector<128x16xf32>
    %cst = arith.constant dense<0.000000e+00> : vector<256x16xf32>
    %2 = tpu.matmul %0, %1, %cst {dimension_numbers = #tpu.dot_dimension_numbers<[1], [0], [0], [1], [0, 0, 1, 1], [], []>} : vector<256x128xf32>, vector<128x16xf32>, vector<256x16xf32> -> vector<256x16xf32>
    %c256_i32 = arith.constant 256 : i32
    %3 = arith.muli %arg0, %c256_i32 : i32
    %4 = tpu.assume_multiple %3, 256 : i32
    %5 = arith.index_cast %4 : i32 to index
    %c0_3 = arith.constant 0 : index
    %6 = vector.load %arg6[%5, %c0_3] : memref<512x16xf32, #tpu.memory_space<vmem>>, vector<256x16xf32>
    tpu.vector_store %arg6[%5, %c0_3], %2 {strides = array<i32>} : memref<512x16xf32, #tpu.memory_space<vmem>>, vector<256x16xf32>,
    %c1_i32 = arith.constant 1 : i32
    %7 = arith.cmpi eq, %arg0, %c1_i32 : i32
    %8 = arith.extui %7 : i1 to i32
    %c0_i32 = arith.constant 0 : i32
    %9 = arith.cmpi ne, %8, %c0_i32 : i32
    scf.if %9 {
      %c0_4 = arith.constant 0 : index
      %c0_5 = arith.constant 0 : index
      %10 = vector.load %arg6[%c0_4, %c0_5] : memref<512x16xf32, #tpu.memory_space<vmem>>, vector<512x16xf32>
      %cst_6 = arith.constant dense<0.000000e+00> : vector<16xf32>
      %11 = vector.multi_reduction <add>, %10, %cst_6 [0] : vector<512x16xf32> to vector<16xf32>
      %12 = vector.shape_cast %11 : vector<16xf32> to vector<1x16xf32>
      %cst_7 = arith.constant 5.120000e+02 : f32
      %13 = vector.broadcast %cst_7 : f32 to vector<1x16xf32>
      %14 = arith.divf %12, %13 : vector<1x16xf32>
      %15 = vector.broadcast %14 : vector<1x16xf32> to vector<512x16xf32>
      %16 = arith.subf %10, %15 : vector<512x16xf32>
      %17 = arith.mulf %16, %16 : vector<512x16xf32>
      %cst_8 = arith.constant dense<0.000000e+00> : vector<16xf32>
      %18 = vector.multi_reduction <add>, %17, %cst_8 [0] : vector<512x16xf32> to vector<16xf32>
      %19 = vector.shape_cast %18 : vector<16xf32> to vector<1x16xf32>
      %cst_9 = arith.constant 5.120000e+02 : f32
      %20 = vector.broadcast %cst_9 : f32 to vector<1x16xf32>
      %21 = arith.divf %19, %20 : vector<1x16xf32>
      %22 = vector.broadcast %14 : vector<1x16xf32> to vector<512x16xf32>
      %23 = arith.subf %10, %22 : vector<512x16xf32>
      %cst_10 = arith.constant 9.99999974E-6 : f32
      %24 = vector.broadcast %cst_10 : f32 to vector<1x16xf32>
      %25 = arith.addf %21, %24 : vector<1x16xf32>
      %26 = math.rsqrt %25 : vector<1x16xf32>
      %27 = vector.broadcast %26 : vector<1x16xf32> to vector<512x16xf32>
      %28 = arith.mulf %23, %27 : vector<512x16xf32>
      %c0_11 = arith.constant 0 : index
      %c0_12 = arith.constant 0 : index
      %29 = vector.load %arg3[%c0_11, %c0_12] : memref<1x16xf32, #tpu.memory_space<vmem>>, vector<1x16xf32>
      %30 = vector.broadcast %29 : vector<1x16xf32> to vector<512x16xf32>
      %31 = arith.mulf %28, %30 : vector<512x16xf32>
      %c0_13 = arith.constant 0 : index
      %c0_14 = arith.constant 0 : index
      %32 = vector.load %arg4[%c0_13, %c0_14] : memref<1x16xf32, #tpu.memory_space<vmem>>, vector<1x16xf32>
      %33 = vector.broadcast %32 : vector<1x16xf32> to vector<512x16xf32>
      %34 = arith.addf %31, %33 : vector<512x16xf32>
      %cst_15 = arith.constant 0.000000e+00 : f32
      %35 = vector.broadcast %cst_15 : f32 to vector<512x16xf32>
      %36 = arith.cmpf oge, %34, %35 : vector<512x16xf32>
      %cst_16 = arith.constant 2.000000e-01 : f32
      %37 = vector.broadcast %cst_16 : f32 to vector<512x16xf32>
      %38 = arith.mulf %37, %34 : vector<512x16xf32>
      %39 = arith.select %36, %34, %38 : vector<512x16xi1>, vector<512x16xf32>
      %c0_17 = arith.constant 0 : index
      %c0_18 = arith.constant 0 : index
      %40 = vector.load %arg5[%c0_17, %c0_18] : memref<512x16xf32, #tpu.memory_space<vmem>>, vector<512x16xf32>
      tpu.vector_store %arg5[%c0_17, %c0_18], %39 {strides = array<i32>} : memref<512x16xf32, #tpu.memory_space<vmem>>, vector<512x16xf32>,
    } else {
    }
    return
  }
  func.func @transform_0(%arg0: i32) -> (i32, i32) {
    %c0_i32 = arith.constant 0 : i32
    %c0_i32_0 = arith.constant 0 : i32
    return %arg0, %c0_i32 : i32, i32
  }
  func.func @transform_1(%arg0: i32) -> (i32, i32) {
    %c0_i32 = arith.constant 0 : i32
    %c0_i32_0 = arith.constant 0 : i32
    %c0_i32_1 = arith.constant 0 : i32
    return %c0_i32, %c0_i32_0 : i32, i32
  }
  func.func @transform_2(%arg0: i32) -> (i32, i32) {
    %c0_i32 = arith.constant 0 : i32
    %c0_i32_0 = arith.constant 0 : i32
    %c0_i32_1 = arith.constant 0 : i32
    return %c0_i32, %c0_i32_0 : i32, i32
  }
  func.func @transform_3(%arg0: i32) -> (i32, i32) {
    %c0_i32 = arith.constant 0 : i32
    %c0_i32_0 = arith.constant 0 : i32
    %c0_i32_1 = arith.constant 0 : i32
    return %c0_i32, %c0_i32_0 : i32, i32
  }
  func.func @transform_4(%arg0: i32) -> (i32, i32) {
    %c0_i32 = arith.constant 0 : i32
    %c0_i32_0 = arith.constant 0 : i32
    %c0_i32_1 = arith.constant 0 : i32
    return %c0_i32, %c0_i32_0 : i32, i32
  }
}

module attributes {stable_mosaic.version = 11 : i64} {
  func.func @_conv_bn_kernel(%arg0: i32, %arg1: memref<128x256xf32, #tpu.memory_space<vmem>>, %arg2: memref<256x32xf32, #tpu.memory_space<vmem>>, %arg3: memref<1x32xf32, #tpu.memory_space<vmem>>, %arg4: memref<1x32xf32, #tpu.memory_space<vmem>>, %arg5: memref<128x32xf32, #tpu.memory_space<vmem>>, %arg6: memref<128x32xf32, #tpu.memory_space<vmem>>) attributes {dimension_semantics = [#tpu.dimension_semantics<arbitrary>], iteration_bounds = array<i64: 1>, scalar_prefetch = 0 : i64, scratch_operands = 1 : i64, tpu.core_type = #tpu.core_type<tc>, window_params = [{transform_indices = @transform_0, window_bounds = array<i64: 128, 256>}, {pipeline_mode = #tpu.pipeline_mode<synchronous>, transform_indices = @transform_1, window_bounds = array<i64: 256, 32>}, {pipeline_mode = #tpu.pipeline_mode<synchronous>, transform_indices = @transform_2, window_bounds = array<i64: 1, 32>}, {pipeline_mode = #tpu.pipeline_mode<synchronous>, transform_indices = @transform_3, window_bounds = array<i64: 1, 32>}, {pipeline_mode = #tpu.pipeline_mode<synchronous>, transform_indices = @transform_4, window_bounds = array<i64: 128, 32>}]} {
    %c0 = arith.constant 0 : index
    %c0_0 = arith.constant 0 : index
    %0 = vector.load %arg1[%c0, %c0_0] : memref<128x256xf32, #tpu.memory_space<vmem>>, vector<128x256xf32>
    %c0_1 = arith.constant 0 : index
    %c0_2 = arith.constant 0 : index
    %1 = vector.load %arg2[%c0_1, %c0_2] : memref<256x32xf32, #tpu.memory_space<vmem>>, vector<256x32xf32>
    %cst = arith.constant dense<0.000000e+00> : vector<128x32xf32>
    %2 = tpu.matmul %0, %1, %cst {dimension_numbers = #tpu.dot_dimension_numbers<[1], [0], [0], [1], [0, 0, 1, 1], [], []>} : vector<128x256xf32>, vector<256x32xf32>, vector<128x32xf32> -> vector<128x32xf32>
    %c128_i32 = arith.constant 128 : i32
    %3 = arith.muli %arg0, %c128_i32 : i32
    %4 = tpu.assume_multiple %3, 128 : i32
    %5 = arith.index_cast %4 : i32 to index
    %c0_3 = arith.constant 0 : index
    %6 = vector.load %arg6[%5, %c0_3] : memref<128x32xf32, #tpu.memory_space<vmem>>, vector<128x32xf32>
    tpu.vector_store %arg6[%5, %c0_3], %2 {strides = array<i32>} : memref<128x32xf32, #tpu.memory_space<vmem>>, vector<128x32xf32>,
    %c0_i32 = arith.constant 0 : i32
    %7 = arith.cmpi eq, %arg0, %c0_i32 : i32
    %8 = arith.extui %7 : i1 to i32
    %c0_i32_4 = arith.constant 0 : i32
    %9 = arith.cmpi ne, %8, %c0_i32_4 : i32
    scf.if %9 {
      %c0_5 = arith.constant 0 : index
      %c0_6 = arith.constant 0 : index
      %10 = vector.load %arg6[%c0_5, %c0_6] : memref<128x32xf32, #tpu.memory_space<vmem>>, vector<128x32xf32>
      %cst_7 = arith.constant dense<0.000000e+00> : vector<32xf32>
      %11 = vector.multi_reduction <add>, %10, %cst_7 [0] : vector<128x32xf32> to vector<32xf32>
      %12 = vector.shape_cast %11 : vector<32xf32> to vector<1x32xf32>
      %cst_8 = arith.constant 1.280000e+02 : f32
      %13 = vector.broadcast %cst_8 : f32 to vector<1x32xf32>
      %14 = arith.divf %12, %13 : vector<1x32xf32>
      %15 = vector.broadcast %14 : vector<1x32xf32> to vector<128x32xf32>
      %16 = arith.subf %10, %15 : vector<128x32xf32>
      %17 = arith.mulf %16, %16 : vector<128x32xf32>
      %cst_9 = arith.constant dense<0.000000e+00> : vector<32xf32>
      %18 = vector.multi_reduction <add>, %17, %cst_9 [0] : vector<128x32xf32> to vector<32xf32>
      %19 = vector.shape_cast %18 : vector<32xf32> to vector<1x32xf32>
      %cst_10 = arith.constant 1.280000e+02 : f32
      %20 = vector.broadcast %cst_10 : f32 to vector<1x32xf32>
      %21 = arith.divf %19, %20 : vector<1x32xf32>
      %22 = vector.broadcast %14 : vector<1x32xf32> to vector<128x32xf32>
      %23 = arith.subf %10, %22 : vector<128x32xf32>
      %cst_11 = arith.constant 9.99999974E-6 : f32
      %24 = vector.broadcast %cst_11 : f32 to vector<1x32xf32>
      %25 = arith.addf %21, %24 : vector<1x32xf32>
      %26 = math.rsqrt %25 : vector<1x32xf32>
      %27 = vector.broadcast %26 : vector<1x32xf32> to vector<128x32xf32>
      %28 = arith.mulf %23, %27 : vector<128x32xf32>
      %c0_12 = arith.constant 0 : index
      %c0_13 = arith.constant 0 : index
      %29 = vector.load %arg3[%c0_12, %c0_13] : memref<1x32xf32, #tpu.memory_space<vmem>>, vector<1x32xf32>
      %30 = vector.broadcast %29 : vector<1x32xf32> to vector<128x32xf32>
      %31 = arith.mulf %28, %30 : vector<128x32xf32>
      %c0_14 = arith.constant 0 : index
      %c0_15 = arith.constant 0 : index
      %32 = vector.load %arg4[%c0_14, %c0_15] : memref<1x32xf32, #tpu.memory_space<vmem>>, vector<1x32xf32>
      %33 = vector.broadcast %32 : vector<1x32xf32> to vector<128x32xf32>
      %34 = arith.addf %31, %33 : vector<128x32xf32>
      %cst_16 = arith.constant 0.000000e+00 : f32
      %35 = vector.broadcast %cst_16 : f32 to vector<128x32xf32>
      %36 = arith.cmpf oge, %34, %35 : vector<128x32xf32>
      %cst_17 = arith.constant 2.000000e-01 : f32
      %37 = vector.broadcast %cst_17 : f32 to vector<128x32xf32>
      %38 = arith.mulf %37, %34 : vector<128x32xf32>
      %39 = arith.select %36, %34, %38 : vector<128x32xi1>, vector<128x32xf32>
      %c0_18 = arith.constant 0 : index
      %c0_19 = arith.constant 0 : index
      %40 = vector.load %arg5[%c0_18, %c0_19] : memref<128x32xf32, #tpu.memory_space<vmem>>, vector<128x32xf32>
      tpu.vector_store %arg5[%c0_18, %c0_19], %39 {strides = array<i32>} : memref<128x32xf32, #tpu.memory_space<vmem>>, vector<128x32xf32>,
    } else {
    }
    return
  }
  func.func @transform_0(%arg0: i32) -> (i32, i32) {
    %c0_i32 = arith.constant 0 : i32
    %c0_i32_0 = arith.constant 0 : i32
    return %arg0, %c0_i32 : i32, i32
  }
  func.func @transform_1(%arg0: i32) -> (i32, i32) {
    %c0_i32 = arith.constant 0 : i32
    %c0_i32_0 = arith.constant 0 : i32
    %c0_i32_1 = arith.constant 0 : i32
    return %c0_i32, %c0_i32_0 : i32, i32
  }
  func.func @transform_2(%arg0: i32) -> (i32, i32) {
    %c0_i32 = arith.constant 0 : i32
    %c0_i32_0 = arith.constant 0 : i32
    %c0_i32_1 = arith.constant 0 : i32
    return %c0_i32, %c0_i32_0 : i32, i32
  }
  func.func @transform_3(%arg0: i32) -> (i32, i32) {
    %c0_i32 = arith.constant 0 : i32
    %c0_i32_0 = arith.constant 0 : i32
    %c0_i32_1 = arith.constant 0 : i32
    return %c0_i32, %c0_i32_0 : i32, i32
  }
  func.func @transform_4(%arg0: i32) -> (i32, i32) {
    %c0_i32 = arith.constant 0 : i32
    %c0_i32_0 = arith.constant 0 : i32
    %c0_i32_1 = arith.constant 0 : i32
    return %c0_i32, %c0_i32_0 : i32, i32
  }
}

module attributes {stable_mosaic.version = 11 : i64} {
  func.func @_conv_bn_kernel(%arg0: i32, %arg1: memref<32x512xf32, #tpu.memory_space<vmem>>, %arg2: memref<512x64xf32, #tpu.memory_space<vmem>>, %arg3: memref<1x64xf32, #tpu.memory_space<vmem>>, %arg4: memref<1x64xf32, #tpu.memory_space<vmem>>, %arg5: memref<32x64xf32, #tpu.memory_space<vmem>>, %arg6: memref<32x64xf32, #tpu.memory_space<vmem>>) attributes {dimension_semantics = [#tpu.dimension_semantics<arbitrary>], iteration_bounds = array<i64: 1>, scalar_prefetch = 0 : i64, scratch_operands = 1 : i64, tpu.core_type = #tpu.core_type<tc>, window_params = [{transform_indices = @transform_0, window_bounds = array<i64: 32, 512>}, {pipeline_mode = #tpu.pipeline_mode<synchronous>, transform_indices = @transform_1, window_bounds = array<i64: 512, 64>}, {pipeline_mode = #tpu.pipeline_mode<synchronous>, transform_indices = @transform_2, window_bounds = array<i64: 1, 64>}, {pipeline_mode = #tpu.pipeline_mode<synchronous>, transform_indices = @transform_3, window_bounds = array<i64: 1, 64>}, {pipeline_mode = #tpu.pipeline_mode<synchronous>, transform_indices = @transform_4, window_bounds = array<i64: 32, 64>}]} {
    %c0 = arith.constant 0 : index
    %c0_0 = arith.constant 0 : index
    %0 = vector.load %arg1[%c0, %c0_0] : memref<32x512xf32, #tpu.memory_space<vmem>>, vector<32x512xf32>
    %c0_1 = arith.constant 0 : index
    %c0_2 = arith.constant 0 : index
    %1 = vector.load %arg2[%c0_1, %c0_2] : memref<512x64xf32, #tpu.memory_space<vmem>>, vector<512x64xf32>
    %cst = arith.constant dense<0.000000e+00> : vector<32x64xf32>
    %2 = tpu.matmul %0, %1, %cst {dimension_numbers = #tpu.dot_dimension_numbers<[1], [0], [0], [1], [0, 0, 1, 1], [], []>} : vector<32x512xf32>, vector<512x64xf32>, vector<32x64xf32> -> vector<32x64xf32>
    %c32_i32 = arith.constant 32 : i32
    %3 = arith.muli %arg0, %c32_i32 : i32
    %4 = tpu.assume_multiple %3, 32 : i32
    %5 = arith.index_cast %4 : i32 to index
    %c0_3 = arith.constant 0 : index
    %6 = vector.load %arg6[%5, %c0_3] : memref<32x64xf32, #tpu.memory_space<vmem>>, vector<32x64xf32>
    tpu.vector_store %arg6[%5, %c0_3], %2 {strides = array<i32>} : memref<32x64xf32, #tpu.memory_space<vmem>>, vector<32x64xf32>,
    %c0_i32 = arith.constant 0 : i32
    %7 = arith.cmpi eq, %arg0, %c0_i32 : i32
    %8 = arith.extui %7 : i1 to i32
    %c0_i32_4 = arith.constant 0 : i32
    %9 = arith.cmpi ne, %8, %c0_i32_4 : i32
    scf.if %9 {
      %c0_5 = arith.constant 0 : index
      %c0_6 = arith.constant 0 : index
      %10 = vector.load %arg6[%c0_5, %c0_6] : memref<32x64xf32, #tpu.memory_space<vmem>>, vector<32x64xf32>
      %cst_7 = arith.constant dense<0.000000e+00> : vector<64xf32>
      %11 = vector.multi_reduction <add>, %10, %cst_7 [0] : vector<32x64xf32> to vector<64xf32>
      %12 = vector.shape_cast %11 : vector<64xf32> to vector<1x64xf32>
      %cst_8 = arith.constant 3.200000e+01 : f32
      %13 = vector.broadcast %cst_8 : f32 to vector<1x64xf32>
      %14 = arith.divf %12, %13 : vector<1x64xf32>
      %15 = vector.broadcast %14 : vector<1x64xf32> to vector<32x64xf32>
      %16 = arith.subf %10, %15 : vector<32x64xf32>
      %17 = arith.mulf %16, %16 : vector<32x64xf32>
      %cst_9 = arith.constant dense<0.000000e+00> : vector<64xf32>
      %18 = vector.multi_reduction <add>, %17, %cst_9 [0] : vector<32x64xf32> to vector<64xf32>
      %19 = vector.shape_cast %18 : vector<64xf32> to vector<1x64xf32>
      %cst_10 = arith.constant 3.200000e+01 : f32
      %20 = vector.broadcast %cst_10 : f32 to vector<1x64xf32>
      %21 = arith.divf %19, %20 : vector<1x64xf32>
      %22 = vector.broadcast %14 : vector<1x64xf32> to vector<32x64xf32>
      %23 = arith.subf %10, %22 : vector<32x64xf32>
      %cst_11 = arith.constant 9.99999974E-6 : f32
      %24 = vector.broadcast %cst_11 : f32 to vector<1x64xf32>
      %25 = arith.addf %21, %24 : vector<1x64xf32>
      %26 = math.rsqrt %25 : vector<1x64xf32>
      %27 = vector.broadcast %26 : vector<1x64xf32> to vector<32x64xf32>
      %28 = arith.mulf %23, %27 : vector<32x64xf32>
      %c0_12 = arith.constant 0 : index
      %c0_13 = arith.constant 0 : index
      %29 = vector.load %arg3[%c0_12, %c0_13] : memref<1x64xf32, #tpu.memory_space<vmem>>, vector<1x64xf32>
      %30 = vector.broadcast %29 : vector<1x64xf32> to vector<32x64xf32>
      %31 = arith.mulf %28, %30 : vector<32x64xf32>
      %c0_14 = arith.constant 0 : index
      %c0_15 = arith.constant 0 : index
      %32 = vector.load %arg4[%c0_14, %c0_15] : memref<1x64xf32, #tpu.memory_space<vmem>>, vector<1x64xf32>
      %33 = vector.broadcast %32 : vector<1x64xf32> to vector<32x64xf32>
      %34 = arith.addf %31, %33 : vector<32x64xf32>
      %c0_16 = arith.constant 0 : index
      %c0_17 = arith.constant 0 : index
      %35 = vector.load %arg5[%c0_16, %c0_17] : memref<32x64xf32, #tpu.memory_space<vmem>>, vector<32x64xf32>
      tpu.vector_store %arg5[%c0_16, %c0_17], %34 {strides = array<i32>} : memref<32x64xf32, #tpu.memory_space<vmem>>, vector<32x64xf32>,
    } else {
    }
    return
  }
  func.func @transform_0(%arg0: i32) -> (i32, i32) {
    %c0_i32 = arith.constant 0 : i32
    %c0_i32_0 = arith.constant 0 : i32
    return %arg0, %c0_i32 : i32, i32
  }
  func.func @transform_1(%arg0: i32) -> (i32, i32) {
    %c0_i32 = arith.constant 0 : i32
    %c0_i32_0 = arith.constant 0 : i32
    %c0_i32_1 = arith.constant 0 : i32
    return %c0_i32, %c0_i32_0 : i32, i32
  }
  func.func @transform_2(%arg0: i32) -> (i32, i32) {
    %c0_i32 = arith.constant 0 : i32
    %c0_i32_0 = arith.constant 0 : i32
    %c0_i32_1 = arith.constant 0 : i32
    return %c0_i32, %c0_i32_0 : i32, i32
  }
  func.func @transform_3(%arg0: i32) -> (i32, i32) {
    %c0_i32 = arith.constant 0 : i32
    %c0_i32_0 = arith.constant 0 : i32
    %c0_i32_1 = arith.constant 0 : i32
    return %c0_i32, %c0_i32_0 : i32, i32
  }
  func.func @transform_4(%arg0: i32) -> (i32, i32) {
    %c0_i32 = arith.constant 0 : i32
    %c0_i32_0 = arith.constant 0 : i32
    %c0_i32_1 = arith.constant 0 : i32
    return %c0_i32, %c0_i32_0 : i32, i32
  }
}

module attributes {stable_mosaic.version = 11 : i64} {
  func.func @_conv_bn_kernel(%arg0: i32, %arg1: memref<32x64xf32, #tpu.memory_space<vmem>>, %arg2: memref<64x16xf32, #tpu.memory_space<vmem>>, %arg3: memref<1x16xf32, #tpu.memory_space<vmem>>, %arg4: memref<1x16xf32, #tpu.memory_space<vmem>>, %arg5: memref<32x16xf32, #tpu.memory_space<vmem>>, %arg6: memref<32x16xf32, #tpu.memory_space<vmem>>) attributes {dimension_semantics = [#tpu.dimension_semantics<arbitrary>], iteration_bounds = array<i64: 1>, scalar_prefetch = 0 : i64, scratch_operands = 1 : i64, tpu.core_type = #tpu.core_type<tc>, window_params = [{transform_indices = @transform_0, window_bounds = array<i64: 32, 64>}, {pipeline_mode = #tpu.pipeline_mode<synchronous>, transform_indices = @transform_1, window_bounds = array<i64: 64, 16>}, {pipeline_mode = #tpu.pipeline_mode<synchronous>, transform_indices = @transform_2, window_bounds = array<i64: 1, 16>}, {pipeline_mode = #tpu.pipeline_mode<synchronous>, transform_indices = @transform_3, window_bounds = array<i64: 1, 16>}, {pipeline_mode = #tpu.pipeline_mode<synchronous>, transform_indices = @transform_4, window_bounds = array<i64: 32, 16>}]} {
    %c0 = arith.constant 0 : index
    %c0_0 = arith.constant 0 : index
    %0 = vector.load %arg1[%c0, %c0_0] : memref<32x64xf32, #tpu.memory_space<vmem>>, vector<32x64xf32>
    %c0_1 = arith.constant 0 : index
    %c0_2 = arith.constant 0 : index
    %1 = vector.load %arg2[%c0_1, %c0_2] : memref<64x16xf32, #tpu.memory_space<vmem>>, vector<64x16xf32>
    %cst = arith.constant dense<0.000000e+00> : vector<32x16xf32>
    %2 = tpu.matmul %0, %1, %cst {dimension_numbers = #tpu.dot_dimension_numbers<[1], [0], [0], [1], [0, 0, 1, 1], [], []>} : vector<32x64xf32>, vector<64x16xf32>, vector<32x16xf32> -> vector<32x16xf32>
    %c32_i32 = arith.constant 32 : i32
    %3 = arith.muli %arg0, %c32_i32 : i32
    %4 = tpu.assume_multiple %3, 32 : i32
    %5 = arith.index_cast %4 : i32 to index
    %c0_3 = arith.constant 0 : index
    %6 = vector.load %arg6[%5, %c0_3] : memref<32x16xf32, #tpu.memory_space<vmem>>, vector<32x16xf32>
    tpu.vector_store %arg6[%5, %c0_3], %2 {strides = array<i32>} : memref<32x16xf32, #tpu.memory_space<vmem>>, vector<32x16xf32>,
    %c0_i32 = arith.constant 0 : i32
    %7 = arith.cmpi eq, %arg0, %c0_i32 : i32
    %8 = arith.extui %7 : i1 to i32
    %c0_i32_4 = arith.constant 0 : i32
    %9 = arith.cmpi ne, %8, %c0_i32_4 : i32
    scf.if %9 {
      %c0_5 = arith.constant 0 : index
      %c0_6 = arith.constant 0 : index
      %10 = vector.load %arg6[%c0_5, %c0_6] : memref<32x16xf32, #tpu.memory_space<vmem>>, vector<32x16xf32>
      %cst_7 = arith.constant dense<0.000000e+00> : vector<16xf32>
      %11 = vector.multi_reduction <add>, %10, %cst_7 [0] : vector<32x16xf32> to vector<16xf32>
      %12 = vector.shape_cast %11 : vector<16xf32> to vector<1x16xf32>
      %cst_8 = arith.constant 3.200000e+01 : f32
      %13 = vector.broadcast %cst_8 : f32 to vector<1x16xf32>
      %14 = arith.divf %12, %13 : vector<1x16xf32>
      %15 = vector.broadcast %14 : vector<1x16xf32> to vector<32x16xf32>
      %16 = arith.subf %10, %15 : vector<32x16xf32>
      %17 = arith.mulf %16, %16 : vector<32x16xf32>
      %cst_9 = arith.constant dense<0.000000e+00> : vector<16xf32>
      %18 = vector.multi_reduction <add>, %17, %cst_9 [0] : vector<32x16xf32> to vector<16xf32>
      %19 = vector.shape_cast %18 : vector<16xf32> to vector<1x16xf32>
      %cst_10 = arith.constant 3.200000e+01 : f32
      %20 = vector.broadcast %cst_10 : f32 to vector<1x16xf32>
      %21 = arith.divf %19, %20 : vector<1x16xf32>
      %22 = vector.broadcast %14 : vector<1x16xf32> to vector<32x16xf32>
      %23 = arith.subf %10, %22 : vector<32x16xf32>
      %cst_11 = arith.constant 9.99999974E-6 : f32
      %24 = vector.broadcast %cst_11 : f32 to vector<1x16xf32>
      %25 = arith.addf %21, %24 : vector<1x16xf32>
      %26 = math.rsqrt %25 : vector<1x16xf32>
      %27 = vector.broadcast %26 : vector<1x16xf32> to vector<32x16xf32>
      %28 = arith.mulf %23, %27 : vector<32x16xf32>
      %c0_12 = arith.constant 0 : index
      %c0_13 = arith.constant 0 : index
      %29 = vector.load %arg3[%c0_12, %c0_13] : memref<1x16xf32, #tpu.memory_space<vmem>>, vector<1x16xf32>
      %30 = vector.broadcast %29 : vector<1x16xf32> to vector<32x16xf32>
      %31 = arith.mulf %28, %30 : vector<32x16xf32>
      %c0_14 = arith.constant 0 : index
      %c0_15 = arith.constant 0 : index
      %32 = vector.load %arg4[%c0_14, %c0_15] : memref<1x16xf32, #tpu.memory_space<vmem>>, vector<1x16xf32>
      %33 = vector.broadcast %32 : vector<1x16xf32> to vector<32x16xf32>
      %34 = arith.addf %31, %33 : vector<32x16xf32>
      %cst_16 = arith.constant 0.000000e+00 : f32
      %35 = vector.broadcast %cst_16 : f32 to vector<32x16xf32>
      %36 = arith.cmpf oge, %34, %35 : vector<32x16xf32>
      %cst_17 = arith.constant 2.000000e-01 : f32
      %37 = vector.broadcast %cst_17 : f32 to vector<32x16xf32>
      %38 = arith.mulf %37, %34 : vector<32x16xf32>
      %39 = arith.select %36, %34, %38 : vector<32x16xi1>, vector<32x16xf32>
      %c0_18 = arith.constant 0 : index
      %c0_19 = arith.constant 0 : index
      %40 = vector.load %arg5[%c0_18, %c0_19] : memref<32x16xf32, #tpu.memory_space<vmem>>, vector<32x16xf32>
      tpu.vector_store %arg5[%c0_18, %c0_19], %39 {strides = array<i32>} : memref<32x16xf32, #tpu.memory_space<vmem>>, vector<32x16xf32>,
    } else {
    }
    return
  }
  func.func @transform_0(%arg0: i32) -> (i32, i32) {
    %c0_i32 = arith.constant 0 : i32
    %c0_i32_0 = arith.constant 0 : i32
    return %arg0, %c0_i32 : i32, i32
  }
  func.func @transform_1(%arg0: i32) -> (i32, i32) {
    %c0_i32 = arith.constant 0 : i32
    %c0_i32_0 = arith.constant 0 : i32
    %c0_i32_1 = arith.constant 0 : i32
    return %c0_i32, %c0_i32_0 : i32, i32
  }
  func.func @transform_2(%arg0: i32) -> (i32, i32) {
    %c0_i32 = arith.constant 0 : i32
    %c0_i32_0 = arith.constant 0 : i32
    %c0_i32_1 = arith.constant 0 : i32
    return %c0_i32, %c0_i32_0 : i32, i32
  }
  func.func @transform_3(%arg0: i32) -> (i32, i32) {
    %c0_i32 = arith.constant 0 : i32
    %c0_i32_0 = arith.constant 0 : i32
    %c0_i32_1 = arith.constant 0 : i32
    return %c0_i32, %c0_i32_0 : i32, i32
  }
  func.func @transform_4(%arg0: i32) -> (i32, i32) {
    %c0_i32 = arith.constant 0 : i32
    %c0_i32_0 = arith.constant 0 : i32
    %c0_i32_1 = arith.constant 0 : i32
    return %c0_i32, %c0_i32_0 : i32, i32
  }
}

module attributes {stable_mosaic.version = 11 : i64} {
  func.func @_conv_bn_kernel(%arg0: i32, %arg1: memref<32x144xf32, #tpu.memory_space<vmem>>, %arg2: memref<144x16xf32, #tpu.memory_space<vmem>>, %arg3: memref<1x16xf32, #tpu.memory_space<vmem>>, %arg4: memref<1x16xf32, #tpu.memory_space<vmem>>, %arg5: memref<32x16xf32, #tpu.memory_space<vmem>>, %arg6: memref<32x16xf32, #tpu.memory_space<vmem>>) attributes {dimension_semantics = [#tpu.dimension_semantics<arbitrary>], iteration_bounds = array<i64: 1>, scalar_prefetch = 0 : i64, scratch_operands = 1 : i64, tpu.core_type = #tpu.core_type<tc>, window_params = [{transform_indices = @transform_0, window_bounds = array<i64: 32, 144>}, {pipeline_mode = #tpu.pipeline_mode<synchronous>, transform_indices = @transform_1, window_bounds = array<i64: 144, 16>}, {pipeline_mode = #tpu.pipeline_mode<synchronous>, transform_indices = @transform_2, window_bounds = array<i64: 1, 16>}, {pipeline_mode = #tpu.pipeline_mode<synchronous>, transform_indices = @transform_3, window_bounds = array<i64: 1, 16>}, {pipeline_mode = #tpu.pipeline_mode<synchronous>, transform_indices = @transform_4, window_bounds = array<i64: 32, 16>}]} {
    %c0 = arith.constant 0 : index
    %c0_0 = arith.constant 0 : index
    %0 = vector.load %arg1[%c0, %c0_0] : memref<32x144xf32, #tpu.memory_space<vmem>>, vector<32x144xf32>
    %c0_1 = arith.constant 0 : index
    %c0_2 = arith.constant 0 : index
    %1 = vector.load %arg2[%c0_1, %c0_2] : memref<144x16xf32, #tpu.memory_space<vmem>>, vector<144x16xf32>
    %cst = arith.constant dense<0.000000e+00> : vector<32x16xf32>
    %2 = tpu.matmul %0, %1, %cst {dimension_numbers = #tpu.dot_dimension_numbers<[1], [0], [0], [1], [0, 0, 1, 1], [], []>} : vector<32x144xf32>, vector<144x16xf32>, vector<32x16xf32> -> vector<32x16xf32>
    %c32_i32 = arith.constant 32 : i32
    %3 = arith.muli %arg0, %c32_i32 : i32
    %4 = tpu.assume_multiple %3, 32 : i32
    %5 = arith.index_cast %4 : i32 to index
    %c0_3 = arith.constant 0 : index
    %6 = vector.load %arg6[%5, %c0_3] : memref<32x16xf32, #tpu.memory_space<vmem>>, vector<32x16xf32>
    tpu.vector_store %arg6[%5, %c0_3], %2 {strides = array<i32>} : memref<32x16xf32, #tpu.memory_space<vmem>>, vector<32x16xf32>,
    %c0_i32 = arith.constant 0 : i32
    %7 = arith.cmpi eq, %arg0, %c0_i32 : i32
    %8 = arith.extui %7 : i1 to i32
    %c0_i32_4 = arith.constant 0 : i32
    %9 = arith.cmpi ne, %8, %c0_i32_4 : i32
    scf.if %9 {
      %c0_5 = arith.constant 0 : index
      %c0_6 = arith.constant 0 : index
      %10 = vector.load %arg6[%c0_5, %c0_6] : memref<32x16xf32, #tpu.memory_space<vmem>>, vector<32x16xf32>
      %cst_7 = arith.constant dense<0.000000e+00> : vector<16xf32>
      %11 = vector.multi_reduction <add>, %10, %cst_7 [0] : vector<32x16xf32> to vector<16xf32>
      %12 = vector.shape_cast %11 : vector<16xf32> to vector<1x16xf32>
      %cst_8 = arith.constant 3.200000e+01 : f32
      %13 = vector.broadcast %cst_8 : f32 to vector<1x16xf32>
      %14 = arith.divf %12, %13 : vector<1x16xf32>
      %15 = vector.broadcast %14 : vector<1x16xf32> to vector<32x16xf32>
      %16 = arith.subf %10, %15 : vector<32x16xf32>
      %17 = arith.mulf %16, %16 : vector<32x16xf32>
      %cst_9 = arith.constant dense<0.000000e+00> : vector<16xf32>
      %18 = vector.multi_reduction <add>, %17, %cst_9 [0] : vector<32x16xf32> to vector<16xf32>
      %19 = vector.shape_cast %18 : vector<16xf32> to vector<1x16xf32>
      %cst_10 = arith.constant 3.200000e+01 : f32
      %20 = vector.broadcast %cst_10 : f32 to vector<1x16xf32>
      %21 = arith.divf %19, %20 : vector<1x16xf32>
      %22 = vector.broadcast %14 : vector<1x16xf32> to vector<32x16xf32>
      %23 = arith.subf %10, %22 : vector<32x16xf32>
      %cst_11 = arith.constant 9.99999974E-6 : f32
      %24 = vector.broadcast %cst_11 : f32 to vector<1x16xf32>
      %25 = arith.addf %21, %24 : vector<1x16xf32>
      %26 = math.rsqrt %25 : vector<1x16xf32>
      %27 = vector.broadcast %26 : vector<1x16xf32> to vector<32x16xf32>
      %28 = arith.mulf %23, %27 : vector<32x16xf32>
      %c0_12 = arith.constant 0 : index
      %c0_13 = arith.constant 0 : index
      %29 = vector.load %arg3[%c0_12, %c0_13] : memref<1x16xf32, #tpu.memory_space<vmem>>, vector<1x16xf32>
      %30 = vector.broadcast %29 : vector<1x16xf32> to vector<32x16xf32>
      %31 = arith.mulf %28, %30 : vector<32x16xf32>
      %c0_14 = arith.constant 0 : index
      %c0_15 = arith.constant 0 : index
      %32 = vector.load %arg4[%c0_14, %c0_15] : memref<1x16xf32, #tpu.memory_space<vmem>>, vector<1x16xf32>
      %33 = vector.broadcast %32 : vector<1x16xf32> to vector<32x16xf32>
      %34 = arith.addf %31, %33 : vector<32x16xf32>
      %cst_16 = arith.constant 0.000000e+00 : f32
      %35 = vector.broadcast %cst_16 : f32 to vector<32x16xf32>
      %36 = arith.cmpf oge, %34, %35 : vector<32x16xf32>
      %cst_17 = arith.constant 2.000000e-01 : f32
      %37 = vector.broadcast %cst_17 : f32 to vector<32x16xf32>
      %38 = arith.mulf %37, %34 : vector<32x16xf32>
      %39 = arith.select %36, %34, %38 : vector<32x16xi1>, vector<32x16xf32>
      %c0_18 = arith.constant 0 : index
      %c0_19 = arith.constant 0 : index
      %40 = vector.load %arg5[%c0_18, %c0_19] : memref<32x16xf32, #tpu.memory_space<vmem>>, vector<32x16xf32>
      tpu.vector_store %arg5[%c0_18, %c0_19], %39 {strides = array<i32>} : memref<32x16xf32, #tpu.memory_space<vmem>>, vector<32x16xf32>,
    } else {
    }
    return
  }
  func.func @transform_0(%arg0: i32) -> (i32, i32) {
    %c0_i32 = arith.constant 0 : i32
    %c0_i32_0 = arith.constant 0 : i32
    return %arg0, %c0_i32 : i32, i32
  }
  func.func @transform_1(%arg0: i32) -> (i32, i32) {
    %c0_i32 = arith.constant 0 : i32
    %c0_i32_0 = arith.constant 0 : i32
    %c0_i32_1 = arith.constant 0 : i32
    return %c0_i32, %c0_i32_0 : i32, i32
  }
  func.func @transform_2(%arg0: i32) -> (i32, i32) {
    %c0_i32 = arith.constant 0 : i32
    %c0_i32_0 = arith.constant 0 : i32
    %c0_i32_1 = arith.constant 0 : i32
    return %c0_i32, %c0_i32_0 : i32, i32
  }
  func.func @transform_3(%arg0: i32) -> (i32, i32) {
    %c0_i32 = arith.constant 0 : i32
    %c0_i32_0 = arith.constant 0 : i32
    %c0_i32_1 = arith.constant 0 : i32
    return %c0_i32, %c0_i32_0 : i32, i32
  }
  func.func @transform_4(%arg0: i32) -> (i32, i32) {
    %c0_i32 = arith.constant 0 : i32
    %c0_i32_0 = arith.constant 0 : i32
    %c0_i32_1 = arith.constant 0 : i32
    return %c0_i32, %c0_i32_0 : i32, i32
  }
}

module attributes {stable_mosaic.version = 11 : i64} {
  func.func @_conv_bn_kernel(%arg0: i32, %arg1: memref<32x144xf32, #tpu.memory_space<vmem>>, %arg2: memref<144x64xf32, #tpu.memory_space<vmem>>, %arg3: memref<1x64xf32, #tpu.memory_space<vmem>>, %arg4: memref<1x64xf32, #tpu.memory_space<vmem>>, %arg5: memref<32x64xf32, #tpu.memory_space<vmem>>, %arg6: memref<32x64xf32, #tpu.memory_space<vmem>>, %arg7: memref<32x64xf32, #tpu.memory_space<vmem>>) attributes {dimension_semantics = [#tpu.dimension_semantics<arbitrary>], iteration_bounds = array<i64: 1>, scalar_prefetch = 0 : i64, scratch_operands = 1 : i64, tpu.core_type = #tpu.core_type<tc>, window_params = [{transform_indices = @transform_0, window_bounds = array<i64: 32, 144>}, {pipeline_mode = #tpu.pipeline_mode<synchronous>, transform_indices = @transform_1, window_bounds = array<i64: 144, 64>}, {pipeline_mode = #tpu.pipeline_mode<synchronous>, transform_indices = @transform_2, window_bounds = array<i64: 1, 64>}, {pipeline_mode = #tpu.pipeline_mode<synchronous>, transform_indices = @transform_3, window_bounds = array<i64: 1, 64>}, {pipeline_mode = #tpu.pipeline_mode<synchronous>, transform_indices = @transform_4, window_bounds = array<i64: 32, 64>}, {pipeline_mode = #tpu.pipeline_mode<synchronous>, transform_indices = @transform_5, window_bounds = array<i64: 32, 64>}]} {
    %c0 = arith.constant 0 : index
    %c0_0 = arith.constant 0 : index
    %0 = vector.load %arg1[%c0, %c0_0] : memref<32x144xf32, #tpu.memory_space<vmem>>, vector<32x144xf32>
    %c0_1 = arith.constant 0 : index
    %c0_2 = arith.constant 0 : index
    %1 = vector.load %arg2[%c0_1, %c0_2] : memref<144x64xf32, #tpu.memory_space<vmem>>, vector<144x64xf32>
    %cst = arith.constant dense<0.000000e+00> : vector<32x64xf32>
    %2 = tpu.matmul %0, %1, %cst {dimension_numbers = #tpu.dot_dimension_numbers<[1], [0], [0], [1], [0, 0, 1, 1], [], []>} : vector<32x144xf32>, vector<144x64xf32>, vector<32x64xf32> -> vector<32x64xf32>
    %c32_i32 = arith.constant 32 : i32
    %3 = arith.muli %arg0, %c32_i32 : i32
    %4 = tpu.assume_multiple %3, 32 : i32
    %5 = arith.index_cast %4 : i32 to index
    %c0_3 = arith.constant 0 : index
    %6 = vector.load %arg7[%5, %c0_3] : memref<32x64xf32, #tpu.memory_space<vmem>>, vector<32x64xf32>
    tpu.vector_store %arg7[%5, %c0_3], %2 {strides = array<i32>} : memref<32x64xf32, #tpu.memory_space<vmem>>, vector<32x64xf32>,
    %c0_i32 = arith.constant 0 : i32
    %7 = arith.cmpi eq, %arg0, %c0_i32 : i32
    %8 = arith.extui %7 : i1 to i32
    %c0_i32_4 = arith.constant 0 : i32
    %9 = arith.cmpi ne, %8, %c0_i32_4 : i32
    scf.if %9 {
      %c0_5 = arith.constant 0 : index
      %c0_6 = arith.constant 0 : index
      %10 = vector.load %arg7[%c0_5, %c0_6] : memref<32x64xf32, #tpu.memory_space<vmem>>, vector<32x64xf32>
      %cst_7 = arith.constant dense<0.000000e+00> : vector<64xf32>
      %11 = vector.multi_reduction <add>, %10, %cst_7 [0] : vector<32x64xf32> to vector<64xf32>
      %12 = vector.shape_cast %11 : vector<64xf32> to vector<1x64xf32>
      %cst_8 = arith.constant 3.200000e+01 : f32
      %13 = vector.broadcast %cst_8 : f32 to vector<1x64xf32>
      %14 = arith.divf %12, %13 : vector<1x64xf32>
      %15 = vector.broadcast %14 : vector<1x64xf32> to vector<32x64xf32>
      %16 = arith.subf %10, %15 : vector<32x64xf32>
      %17 = arith.mulf %16, %16 : vector<32x64xf32>
      %cst_9 = arith.constant dense<0.000000e+00> : vector<64xf32>
      %18 = vector.multi_reduction <add>, %17, %cst_9 [0] : vector<32x64xf32> to vector<64xf32>
      %19 = vector.shape_cast %18 : vector<64xf32> to vector<1x64xf32>
      %cst_10 = arith.constant 3.200000e+01 : f32
      %20 = vector.broadcast %cst_10 : f32 to vector<1x64xf32>
      %21 = arith.divf %19, %20 : vector<1x64xf32>
      %22 = vector.broadcast %14 : vector<1x64xf32> to vector<32x64xf32>
      %23 = arith.subf %10, %22 : vector<32x64xf32>
      %cst_11 = arith.constant 9.99999974E-6 : f32
      %24 = vector.broadcast %cst_11 : f32 to vector<1x64xf32>
      %25 = arith.addf %21, %24 : vector<1x64xf32>
      %26 = math.rsqrt %25 : vector<1x64xf32>
      %27 = vector.broadcast %26 : vector<1x64xf32> to vector<32x64xf32>
      %28 = arith.mulf %23, %27 : vector<32x64xf32>
      %c0_12 = arith.constant 0 : index
      %c0_13 = arith.constant 0 : index
      %29 = vector.load %arg3[%c0_12, %c0_13] : memref<1x64xf32, #tpu.memory_space<vmem>>, vector<1x64xf32>
      %30 = vector.broadcast %29 : vector<1x64xf32> to vector<32x64xf32>
      %31 = arith.mulf %28, %30 : vector<32x64xf32>
      %c0_14 = arith.constant 0 : index
      %c0_15 = arith.constant 0 : index
      %32 = vector.load %arg4[%c0_14, %c0_15] : memref<1x64xf32, #tpu.memory_space<vmem>>, vector<1x64xf32>
      %33 = vector.broadcast %32 : vector<1x64xf32> to vector<32x64xf32>
      %34 = arith.addf %31, %33 : vector<32x64xf32>
      %c0_16 = arith.constant 0 : index
      %c0_17 = arith.constant 0 : index
      %35 = vector.load %arg5[%c0_16, %c0_17] : memref<32x64xf32, #tpu.memory_space<vmem>>, vector<32x64xf32>
      %36 = arith.addf %34, %35 : vector<32x64xf32>
      %cst_18 = arith.constant 0.000000e+00 : f32
      %37 = vector.broadcast %cst_18 : f32 to vector<32x64xf32>
      %38 = arith.cmpf oge, %36, %37 : vector<32x64xf32>
      %cst_19 = arith.constant 2.000000e-01 : f32
      %39 = vector.broadcast %cst_19 : f32 to vector<32x64xf32>
      %40 = arith.mulf %39, %36 : vector<32x64xf32>
      %41 = arith.select %38, %36, %40 : vector<32x64xi1>, vector<32x64xf32>
      %c0_20 = arith.constant 0 : index
      %c0_21 = arith.constant 0 : index
      %42 = vector.load %arg6[%c0_20, %c0_21] : memref<32x64xf32, #tpu.memory_space<vmem>>, vector<32x64xf32>
      tpu.vector_store %arg6[%c0_20, %c0_21], %41 {strides = array<i32>} : memref<32x64xf32, #tpu.memory_space<vmem>>, vector<32x64xf32>,
    } else {
    }
    return
  }
  func.func @transform_0(%arg0: i32) -> (i32, i32) {
    %c0_i32 = arith.constant 0 : i32
    %c0_i32_0 = arith.constant 0 : i32
    return %arg0, %c0_i32 : i32, i32
  }
  func.func @transform_1(%arg0: i32) -> (i32, i32) {
    %c0_i32 = arith.constant 0 : i32
    %c0_i32_0 = arith.constant 0 : i32
    %c0_i32_1 = arith.constant 0 : i32
    return %c0_i32, %c0_i32_0 : i32, i32
  }
  func.func @transform_2(%arg0: i32) -> (i32, i32) {
    %c0_i32 = arith.constant 0 : i32
    %c0_i32_0 = arith.constant 0 : i32
    %c0_i32_1 = arith.constant 0 : i32
    return %c0_i32, %c0_i32_0 : i32, i32
  }
  func.func @transform_3(%arg0: i32) -> (i32, i32) {
    %c0_i32 = arith.constant 0 : i32
    %c0_i32_0 = arith.constant 0 : i32
    %c0_i32_1 = arith.constant 0 : i32
    return %c0_i32, %c0_i32_0 : i32, i32
  }
  func.func @transform_4(%arg0: i32) -> (i32, i32) {
    %c0_i32 = arith.constant 0 : i32
    %c0_i32_0 = arith.constant 0 : i32
    %c0_i32_1 = arith.constant 0 : i32
    return %c0_i32, %c0_i32_0 : i32, i32
  }
  func.func @transform_5(%arg0: i32) -> (i32, i32) {
    %c0_i32 = arith.constant 0 : i32
    %c0_i32_0 = arith.constant 0 : i32
    %c0_i32_1 = arith.constant 0 : i32
    return %c0_i32, %c0_i32_0 : i32, i32
  }
}

module attributes {stable_mosaic.version = 11 : i64} {
  func.func @_linear_kernel(%arg0: i32, %arg1: memref<2x1024xf32, #tpu.memory_space<vmem>>, %arg2: memref<1024x128xf32, #tpu.memory_space<vmem>>, %arg3: memref<1x128xf32, #tpu.memory_space<vmem>>, %arg4: memref<2x128xf32, #tpu.memory_space<vmem>>) attributes {dimension_semantics = [#tpu.dimension_semantics<arbitrary>], iteration_bounds = array<i64: 1>, scalar_prefetch = 0 : i64, scratch_operands = 0 : i64, tpu.core_type = #tpu.core_type<tc>, window_params = [{pipeline_mode = #tpu.pipeline_mode<synchronous>, transform_indices = @transform_0, window_bounds = array<i64: 2, 1024>}, {pipeline_mode = #tpu.pipeline_mode<synchronous>, transform_indices = @transform_1, window_bounds = array<i64: 1024, 128>}, {pipeline_mode = #tpu.pipeline_mode<synchronous>, transform_indices = @transform_2, window_bounds = array<i64: 1, 128>}, {pipeline_mode = #tpu.pipeline_mode<synchronous>, transform_indices = @transform_3, window_bounds = array<i64: 2, 128>}]} {
    %c0 = arith.constant 0 : index
    %c0_0 = arith.constant 0 : index
    %0 = vector.load %arg1[%c0, %c0_0] : memref<2x1024xf32, #tpu.memory_space<vmem>>, vector<2x1024xf32>
    %c0_1 = arith.constant 0 : index
    %c0_2 = arith.constant 0 : index
    %1 = vector.load %arg2[%c0_1, %c0_2] : memref<1024x128xf32, #tpu.memory_space<vmem>>, vector<1024x128xf32>
    %cst = arith.constant dense<0.000000e+00> : vector<2x128xf32>
    %2 = tpu.matmul %0, %1, %cst {dimension_numbers = #tpu.dot_dimension_numbers<[1], [0], [0], [1], [0, 0, 1, 1], [], []>} : vector<2x1024xf32>, vector<1024x128xf32>, vector<2x128xf32> -> vector<2x128xf32>
    %c0_3 = arith.constant 0 : index
    %c0_4 = arith.constant 0 : index
    %3 = vector.load %arg3[%c0_3, %c0_4] : memref<1x128xf32, #tpu.memory_space<vmem>>, vector<1x128xf32>
    %4 = vector.broadcast %3 : vector<1x128xf32> to vector<2x128xf32>
    %5 = arith.addf %2, %4 : vector<2x128xf32>
    %cst_5 = arith.constant 0.000000e+00 : f32
    %6 = vector.broadcast %cst_5 : f32 to vector<2x128xf32>
    %7 = arith.cmpf oge, %5, %6 : vector<2x128xf32>
    %cst_6 = arith.constant 2.000000e-01 : f32
    %8 = vector.broadcast %cst_6 : f32 to vector<2x128xf32>
    %9 = arith.mulf %8, %5 : vector<2x128xf32>
    %10 = arith.select %7, %5, %9 : vector<2x128xi1>, vector<2x128xf32>
    %c0_7 = arith.constant 0 : index
    %c0_8 = arith.constant 0 : index
    %11 = vector.load %arg4[%c0_7, %c0_8] : memref<2x128xf32, #tpu.memory_space<vmem>>, vector<2x128xf32>
    tpu.vector_store %arg4[%c0_7, %c0_8], %10 {strides = array<i32>} : memref<2x128xf32, #tpu.memory_space<vmem>>, vector<2x128xf32>,
    return
  }
  func.func @transform_0(%arg0: i32) -> (i32, i32) {
    %c0_i32 = arith.constant 0 : i32
    %c0_i32_0 = arith.constant 0 : i32
    %c0_i32_1 = arith.constant 0 : i32
    return %c0_i32, %c0_i32_0 : i32, i32
  }
  func.func @transform_1(%arg0: i32) -> (i32, i32) {
    %c0_i32 = arith.constant 0 : i32
    %c0_i32_0 = arith.constant 0 : i32
    %c0_i32_1 = arith.constant 0 : i32
    return %c0_i32, %c0_i32_0 : i32, i32
  }
  func.func @transform_2(%arg0: i32) -> (i32, i32) {
    %c0_i32 = arith.constant 0 : i32
    %c0_i32_0 = arith.constant 0 : i32
    %c0_i32_1 = arith.constant 0 : i32
    return %c0_i32, %c0_i32_0 : i32, i32
  }
  func.func @transform_3(%arg0: i32) -> (i32, i32) {
    %c0_i32 = arith.constant 0 : i32
    %c0_i32_0 = arith.constant 0 : i32
    %c0_i32_1 = arith.constant 0 : i32
    return %c0_i32, %c0_i32_0 : i32, i32
  }
}

module attributes {stable_mosaic.version = 11 : i64} {
  func.func @_conv_bn_kernel(%arg0: i32, %arg1: memref<32x192xf32, #tpu.memory_space<vmem>>, %arg2: memref<192x64xf32, #tpu.memory_space<vmem>>, %arg3: memref<1x64xf32, #tpu.memory_space<vmem>>, %arg4: memref<1x64xf32, #tpu.memory_space<vmem>>, %arg5: memref<32x64xf32, #tpu.memory_space<vmem>>, %arg6: memref<32x64xf32, #tpu.memory_space<vmem>>) attributes {dimension_semantics = [#tpu.dimension_semantics<arbitrary>], iteration_bounds = array<i64: 1>, scalar_prefetch = 0 : i64, scratch_operands = 1 : i64, tpu.core_type = #tpu.core_type<tc>, window_params = [{transform_indices = @transform_0, window_bounds = array<i64: 32, 192>}, {pipeline_mode = #tpu.pipeline_mode<synchronous>, transform_indices = @transform_1, window_bounds = array<i64: 192, 64>}, {pipeline_mode = #tpu.pipeline_mode<synchronous>, transform_indices = @transform_2, window_bounds = array<i64: 1, 64>}, {pipeline_mode = #tpu.pipeline_mode<synchronous>, transform_indices = @transform_3, window_bounds = array<i64: 1, 64>}, {pipeline_mode = #tpu.pipeline_mode<synchronous>, transform_indices = @transform_4, window_bounds = array<i64: 32, 64>}]} {
    %c0 = arith.constant 0 : index
    %c0_0 = arith.constant 0 : index
    %0 = vector.load %arg1[%c0, %c0_0] : memref<32x192xf32, #tpu.memory_space<vmem>>, vector<32x192xf32>
    %c0_1 = arith.constant 0 : index
    %c0_2 = arith.constant 0 : index
    %1 = vector.load %arg2[%c0_1, %c0_2] : memref<192x64xf32, #tpu.memory_space<vmem>>, vector<192x64xf32>
    %cst = arith.constant dense<0.000000e+00> : vector<32x64xf32>
    %2 = tpu.matmul %0, %1, %cst {dimension_numbers = #tpu.dot_dimension_numbers<[1], [0], [0], [1], [0, 0, 1, 1], [], []>} : vector<32x192xf32>, vector<192x64xf32>, vector<32x64xf32> -> vector<32x64xf32>
    %c32_i32 = arith.constant 32 : i32
    %3 = arith.muli %arg0, %c32_i32 : i32
    %4 = tpu.assume_multiple %3, 32 : i32
    %5 = arith.index_cast %4 : i32 to index
    %c0_3 = arith.constant 0 : index
    %6 = vector.load %arg6[%5, %c0_3] : memref<32x64xf32, #tpu.memory_space<vmem>>, vector<32x64xf32>
    tpu.vector_store %arg6[%5, %c0_3], %2 {strides = array<i32>} : memref<32x64xf32, #tpu.memory_space<vmem>>, vector<32x64xf32>,
    %c0_i32 = arith.constant 0 : i32
    %7 = arith.cmpi eq, %arg0, %c0_i32 : i32
    %8 = arith.extui %7 : i1 to i32
    %c0_i32_4 = arith.constant 0 : i32
    %9 = arith.cmpi ne, %8, %c0_i32_4 : i32
    scf.if %9 {
      %c0_5 = arith.constant 0 : index
      %c0_6 = arith.constant 0 : index
      %10 = vector.load %arg6[%c0_5, %c0_6] : memref<32x64xf32, #tpu.memory_space<vmem>>, vector<32x64xf32>
      %cst_7 = arith.constant dense<0.000000e+00> : vector<64xf32>
      %11 = vector.multi_reduction <add>, %10, %cst_7 [0] : vector<32x64xf32> to vector<64xf32>
      %12 = vector.shape_cast %11 : vector<64xf32> to vector<1x64xf32>
      %cst_8 = arith.constant 3.200000e+01 : f32
      %13 = vector.broadcast %cst_8 : f32 to vector<1x64xf32>
      %14 = arith.divf %12, %13 : vector<1x64xf32>
      %15 = vector.broadcast %14 : vector<1x64xf32> to vector<32x64xf32>
      %16 = arith.subf %10, %15 : vector<32x64xf32>
      %17 = arith.mulf %16, %16 : vector<32x64xf32>
      %cst_9 = arith.constant dense<0.000000e+00> : vector<64xf32>
      %18 = vector.multi_reduction <add>, %17, %cst_9 [0] : vector<32x64xf32> to vector<64xf32>
      %19 = vector.shape_cast %18 : vector<64xf32> to vector<1x64xf32>
      %cst_10 = arith.constant 3.200000e+01 : f32
      %20 = vector.broadcast %cst_10 : f32 to vector<1x64xf32>
      %21 = arith.divf %19, %20 : vector<1x64xf32>
      %22 = vector.broadcast %14 : vector<1x64xf32> to vector<32x64xf32>
      %23 = arith.subf %10, %22 : vector<32x64xf32>
      %cst_11 = arith.constant 9.99999974E-6 : f32
      %24 = vector.broadcast %cst_11 : f32 to vector<1x64xf32>
      %25 = arith.addf %21, %24 : vector<1x64xf32>
      %26 = math.rsqrt %25 : vector<1x64xf32>
      %27 = vector.broadcast %26 : vector<1x64xf32> to vector<32x64xf32>
      %28 = arith.mulf %23, %27 : vector<32x64xf32>
      %c0_12 = arith.constant 0 : index
      %c0_13 = arith.constant 0 : index
      %29 = vector.load %arg3[%c0_12, %c0_13] : memref<1x64xf32, #tpu.memory_space<vmem>>, vector<1x64xf32>
      %30 = vector.broadcast %29 : vector<1x64xf32> to vector<32x64xf32>
      %31 = arith.mulf %28, %30 : vector<32x64xf32>
      %c0_14 = arith.constant 0 : index
      %c0_15 = arith.constant 0 : index
      %32 = vector.load %arg4[%c0_14, %c0_15] : memref<1x64xf32, #tpu.memory_space<vmem>>, vector<1x64xf32>
      %33 = vector.broadcast %32 : vector<1x64xf32> to vector<32x64xf32>
      %34 = arith.addf %31, %33 : vector<32x64xf32>
      %cst_16 = arith.constant 0.000000e+00 : f32
      %35 = vector.broadcast %cst_16 : f32 to vector<32x64xf32>
      %36 = arith.cmpf oge, %34, %35 : vector<32x64xf32>
      %cst_17 = arith.constant 2.000000e-01 : f32
      %37 = vector.broadcast %cst_17 : f32 to vector<32x64xf32>
      %38 = arith.mulf %37, %34 : vector<32x64xf32>
      %39 = arith.select %36, %34, %38 : vector<32x64xi1>, vector<32x64xf32>
      %c0_18 = arith.constant 0 : index
      %c0_19 = arith.constant 0 : index
      %40 = vector.load %arg5[%c0_18, %c0_19] : memref<32x64xf32, #tpu.memory_space<vmem>>, vector<32x64xf32>
      tpu.vector_store %arg5[%c0_18, %c0_19], %39 {strides = array<i32>} : memref<32x64xf32, #tpu.memory_space<vmem>>, vector<32x64xf32>,
    } else {
    }
    return
  }
  func.func @transform_0(%arg0: i32) -> (i32, i32) {
    %c0_i32 = arith.constant 0 : i32
    %c0_i32_0 = arith.constant 0 : i32
    return %arg0, %c0_i32 : i32, i32
  }
  func.func @transform_1(%arg0: i32) -> (i32, i32) {
    %c0_i32 = arith.constant 0 : i32
    %c0_i32_0 = arith.constant 0 : i32
    %c0_i32_1 = arith.constant 0 : i32
    return %c0_i32, %c0_i32_0 : i32, i32
  }
  func.func @transform_2(%arg0: i32) -> (i32, i32) {
    %c0_i32 = arith.constant 0 : i32
    %c0_i32_0 = arith.constant 0 : i32
    %c0_i32_1 = arith.constant 0 : i32
    return %c0_i32, %c0_i32_0 : i32, i32
  }
  func.func @transform_3(%arg0: i32) -> (i32, i32) {
    %c0_i32 = arith.constant 0 : i32
    %c0_i32_0 = arith.constant 0 : i32
    %c0_i32_1 = arith.constant 0 : i32
    return %c0_i32, %c0_i32_0 : i32, i32
  }
  func.func @transform_4(%arg0: i32) -> (i32, i32) {
    %c0_i32 = arith.constant 0 : i32
    %c0_i32_0 = arith.constant 0 : i32
    %c0_i32_1 = arith.constant 0 : i32
    return %c0_i32, %c0_i32_0 : i32, i32
  }
}

module attributes {stable_mosaic.version = 11 : i64} {
  func.func @_head_kernel(%arg0: i32, %arg1: memref<2x1024xf32, #tpu.memory_space<vmem>>, %arg2: memref<1x1024xf32, #tpu.memory_space<vmem>>, %arg3: memref<2x1xf32, #tpu.memory_space<vmem>>) attributes {dimension_semantics = [#tpu.dimension_semantics<arbitrary>], iteration_bounds = array<i64: 1>, scalar_prefetch = 0 : i64, scratch_operands = 0 : i64, tpu.core_type = #tpu.core_type<tc>, window_params = [{pipeline_mode = #tpu.pipeline_mode<synchronous>, transform_indices = @transform_0, window_bounds = array<i64: 2, 1024>}, {pipeline_mode = #tpu.pipeline_mode<synchronous>, transform_indices = @transform_1, window_bounds = array<i64: 1, 1024>}, {pipeline_mode = #tpu.pipeline_mode<synchronous>, transform_indices = @transform_2, window_bounds = array<i64: 2, 1>}]} {
    %c0 = arith.constant 0 : index
    %c0_0 = arith.constant 0 : index
    %0 = vector.load %arg1[%c0, %c0_0] : memref<2x1024xf32, #tpu.memory_space<vmem>>, vector<2x1024xf32>
    %c0_1 = arith.constant 0 : index
    %c0_2 = arith.constant 0 : index
    %1 = vector.load %arg2[%c0_1, %c0_2] : memref<1x1024xf32, #tpu.memory_space<vmem>>, vector<1x1024xf32>
    %2 = vector.broadcast %1 : vector<1x1024xf32> to vector<2x1024xf32>
    %3 = arith.mulf %0, %2 : vector<2x1024xf32>
    %cst = arith.constant dense<0.000000e+00> : vector<2xf32>
    %4 = vector.multi_reduction <add>, %3, %cst [1] : vector<2x1024xf32> to vector<2xf32>
    %5 = vector.shape_cast %4 : vector<2xf32> to vector<2x1xf32>
    %6 = arith.negf %5 : vector<2x1xf32>
    %7 = math.exp %6 : vector<2x1xf32>
    %cst_3 = arith.constant 1.000000e+00 : f32
    %8 = vector.broadcast %cst_3 : f32 to vector<2x1xf32>
    %9 = arith.addf %8, %7 : vector<2x1xf32>
    %10 = arith.divf %8, %9 : vector<2x1xf32>
    %c0_4 = arith.constant 0 : index
    %c0_5 = arith.constant 0 : index
    %11 = vector.load %arg3[%c0_4, %c0_5] : memref<2x1xf32, #tpu.memory_space<vmem>>, vector<2x1xf32>
    tpu.vector_store %arg3[%c0_4, %c0_5], %10 {strides = array<i32>} : memref<2x1xf32, #tpu.memory_space<vmem>>, vector<2x1xf32>,
    return
  }
  func.func @transform_0(%arg0: i32) -> (i32, i32) {
    %c0_i32 = arith.constant 0 : i32
    %c0_i32_0 = arith.constant 0 : i32
    %c0_i32_1 = arith.constant 0 : i32
    return %c0_i32, %c0_i32_0 : i32, i32
  }
  func.func @transform_1(%arg0: i32) -> (i32, i32) {
    %c0_i32 = arith.constant 0 : i32
    %c0_i32_0 = arith.constant 0 : i32
    %c0_i32_1 = arith.constant 0 : i32
    return %c0_i32, %c0_i32_0 : i32, i32
  }
  func.func @transform_2(%arg0: i32) -> (i32, i32) {
    %c0_i32 = arith.constant 0 : i32
    %c0_i32_0 = arith.constant 0 : i32
    %c0_i32_1 = arith.constant 0 : i32
    return %c0_i32, %c0_i32_0 : i32, i32
  }
}

</mosaic_0001>

<llo_original>
// kernel: icml_d_forward.10
$region0: #{icml_d_forward.10}
  #allocation0 [shape = 'u32[]', space=smem, size = 0x4, offset = 0x4, fixed_abs, tag = 'smem constant byte address 0x4 - core index']
  #allocation1 [shape = 'u32[144,128]{1,0:T(1,128)}', space=vmem, size = 0x12000, scoped, tag = 'internal scratch']
  %s0 = inlined_call_operand.vmem [shape: f32[2048,128], index: 0, kind: input, shape index: {}]
  %s1 = inlined_call_operand.vmem [shape: f32[128,8], index: 1, kind: input, shape index: {}]
  %s2 = inlined_call_operand.vmem [shape: f32[2048,8], index: 2, kind: output, shape index: {}]
  %s3 = sld [smem:[#allocation0]]
  $region41: #{icml_d_forward.10} parent=0
    _
  %s5 = ssub.s32 1, %s3
  %s6 = scalar_select 0, %s5, %s3
  loop: start=0, step=1, limit=6
  $region2: #{icml_d_forward.10} parent=0 // loop_pre_header
    _
  $region3: #{icml_d_forward.10} parent=0 // loop_header
    %s8 = sphi 0, %s12
    %p9 = scmp.ge.s32.totalorder %s8, 6
    %s18 = sphi 0, %s20
    %s21 = sphi 0, %s18
    %s22 = sphi 0, %s21
    %s38 = sphi 0, %s22
    %s42 = sphi 0, %s42
    %s44 = sphi 0, %s42
    %s45 = sphi 0, %s44
    %s59 = sphi 0, %s45
    %s65 = sphi 0, %s67
    %s68 = sphi 0, %s65
    %s69 = sphi 0, %s68
    %s85 = sphi 0, %s69
  $region4: #{icml_d_forward.10} parent=0 // loop_header_branch
    %11 = sbr.rel (%p9) target = $region8
  $region5: #{icml_d_forward.10} parent=0 // loop_body
    %s13 = ssub.s32 %s8, 1
    %s14 = ssub.s32 %s8, 2
    %s15 = sadd.s32 %s8, 1
    %s16 = ssub.s32 %s8, %s15
    %p17 = scmp.eq.s32.totalorder %s16, 0
    %s19 = sadd.s32 %s18, 1
    %s20 = scalar_select %p17, %s18, %s19
    %p23 = pneg %p17
    %p24 = scmp.eq.s32.totalorder %s8, 3
    %p25 = por %p23, %p24
    %p26 = scmp.ne.s32.totalorder %s18, %s21
    %p27 = scmp.eq.s32.totalorder %s8, 0
    %p28 = por %p26, %p27
    %p29 = scmp.ne.s32.totalorder %s18, %s21
    %p30 = scmp.eq.s32.totalorder %s13, 3
    %p31 = por %p29, %p30
    %p32 = scmp.ne.s32.totalorder %s21, %s22
    %p33 = scmp.eq.s32.totalorder %s13, 0
    %p34 = por %p32, %p33
    %p35 = scmp.ne.s32.totalorder %s21, %s22
    %p36 = scmp.eq.s32.totalorder %s14, 3
    %p37 = por %p35, %p36
    %p39 = scmp.ne.s32.totalorder %s22, %s38
    %p40 = scmp.eq.s32.totalorder %s14, 0
    %p41 = por %p39, %p40
    %s43 = sadd.s32 %s42, 1
    %p46 = scmp.eq.s32.totalorder %s8, 3
    %p47 = scmp.ne.s32.totalorder %s42, %s44
    %p48 = scmp.eq.s32.totalorder %s8, 0
    %p49 = por %p47, %p48
    %p50 = scmp.ne.s32.totalorder %s42, %s44
    %p51 = scmp.eq.s32.totalorder %s13, 3
    %p52 = por %p50, %p51
    %p53 = scmp.ne.s32.totalorder %s44, %s45
    %p54 = scmp.eq.s32.totalorder %s13, 0
    %p55 = por %p53, %p54
    %p56 = scmp.ne.s32.totalorder %s44, %s45
    %p57 = scmp.eq.s32.totalorder %s14, 3
    %p58 = por %p56, %p57
    %p60 = scmp.ne.s32.totalorder %s45, %s59
    %p61 = scmp.eq.s32.totalorder %s14, 0
    %p62 = por %p60, %p61
    %s63 = ssub.s32 %s8, %s15
    %p64 = scmp.eq.s32.totalorder %s63, 0
    %s66 = sadd.s32 %s65, 1
    %s67 = scalar_select %p64, %s65, %s66
    %p70 = pneg %p64
    %p71 = scmp.eq.s32.totalorder %s8, 3
    %p72 = por %p70, %p71
    %p73 = scmp.ne.s32.totalorder %s65, %s68
    %p74 = scmp.eq.s32.totalorder %s8, 0
    %p75 = por %p73, %p74
    %p76 = scmp.ne.s32.totalorder %s65, %s68
    %p77 = scmp.eq.s32.totalorder %s13, 3
    %p78 = por %p76, %p77
    %p79 = scmp.ne.s32.totalorder %s68, %s69
    %p80 = scmp.eq.s32.totalorder %s13, 0
    %p81 = por %p79, %p80
    %p82 = scmp.ne.s32.totalorder %s68, %s69
    %p83 = scmp.eq.s32.totalorder %s14, 3
    %p84 = por %p82, %p83
    %p86 = scmp.ne.s32.totalorder %s69, %s85
    %p87 = scmp.eq.s32.totalorder %s14, 0
    %p88 = por %p86, %p87
    %p89 = scmp.le.s32.totalorder 1, %s8
    %p90 = scmp.lt.s32.totalorder %s8, 5
    %p91 = pnand %p89, %p90
    %p92 = pneg %p91
    // Predicated region
    $region9: #{icml_d_forward.10} parent=5 // pred_check
      _
    $region10: #{icml_d_forward.10} parent=5 // pred_check_branch
      %94 = sbr.rel (%p91) target = $region12
    $region11: #{icml_d_forward.10} parent=5 // pred_region
      %s95 = ssub.s32 %s8, 1
      // Predicated region
      $region13: #{icml_d_forward.10} parent=11 // pred_check
        %p96 = pneg %p55
      $region14: #{icml_d_forward.10} parent=11 // pred_check_branch
        %98 = sbr.rel (%p96) target = $region16
      $region15: #{icml_d_forward.10} parent=11 // pred_region
        _
      $region16: #{icml_d_forward.10} parent=11 // pred_fallthru
        _
    $region12: #{icml_d_forward.10} parent=5 // pred_fallthru
      _
    %p99 = scmp.lt.s32.totalorder %s8, 4
    // Predicated region
    $region17: #{icml_d_forward.10} parent=5 // pred_check
      %p100 = pneg %p99
    $region18: #{icml_d_forward.10} parent=5 // pred_check_branch
      %102 = sbr.rel (%p100) target = $region20
    $region19: #{icml_d_forward.10} parent=5 // pred_region
      // Predicated region
      $region21: #{icml_d_forward.10} parent=19 // pred_check
        %p103 = pneg %p28
      $region22: #{icml_d_forward.10} parent=19 // pred_check_branch
        %105 = sbr.rel (%p103) target = $region24
      $region23: #{icml_d_forward.10} parent=19 // pred_region
        %s106 = smul.u32 64, %s8
        %p107 = scmp.lt.s32.totalorder %s106, 255
        %s108 = scalar_select %p107, %s106, 255
        %s109 = smul.addr %s108, 8
        %s110 = scalar_lea.vmem %s0, %s109
        %s111 = smul.u32 64, %s8
      $region24: #{icml_d_forward.10} parent=19 // pred_fallthru
        _
    $region20: #{icml_d_forward.10} parent=5 // pred_fallthru
      _
    %p112 = scmp.le.s32.totalorder 1, %s8
    %p113 = scmp.lt.s32.totalorder %s8, 5
    %p114 = pnand %p112, %p113
    %p115 = pneg %p114
    // Predicated region
    $region25: #{icml_d_forward.10} parent=5 // pred_check
      _
    $region26: #{icml_d_forward.10} parent=5 // pred_check_branch
      %117 = sbr.rel (%p114) target = $region28
    $region27: #{icml_d_forward.10} parent=5 // pred_region
      %s118 = ssub.s32 %s8, 1
      %s119 = smul.u32 64, %s13
      %p120 = scmp.lt.s32.totalorder %s119, 255
      %s121 = scalar_select %p120, %s119, 255
      %s122 = smul.addr %s121, 8
      %s123 = scalar_lea.vmem %s0, %s122
      %p124 = pneg %p34
      %p125 = pneg %p31
      %p126 = pneg %p55
      %p127 = pneg %p52
      %p128 = pneg %p81
      %p129 = pneg %p78
      %s130 = smul.u32 64, %s13
      %p131 = scmp.lt.s32.totalorder %s130, 255
      %s132 = scalar_select %p131, %s130, 255
      %s133 = smul.addr %s132, 8
      %s134 = scalar_lea.vmem %s2, %s133
      %s135 = smul.u32 64, %s13
      %p136 = scmp.lt.s32.totalorder %s135, 255
      %s137 = scalar_select %p136, %s135, 255
      %s138 = smul.addr %s137, 8
      %s139 = scalar_lea.vmem %s0, %s138
      %s140 = smul.u32 64, %s13
      %s141 = smul.u32 64, %s13
      %p142 = scmp.lt.s32.totalorder %s141, 255
      %s143 = scalar_select %p142, %s141, 255
      %s144 = smul.addr %s143, 8
      %s145 = scalar_lea.vmem %s2, %s144
      %s146 = smul.u32 64, %s13
      %v147 = vld [vmem:[%s139] sm:$0xff]
      %v148 = vld [vmem:[%s139 + $0x8] sm:$0xff]
      %v149 = vld [vmem:[%s139 + $0x10] sm:$0xff]
      %v150 = vld [vmem:[%s139 + $0x18] sm:$0xff]
      %v151 = vld [vmem:[%s139 + $0x20] sm:$0xff]
      %v152 = vld [vmem:[%s139 + $0x28] sm:$0xff]
      %v153 = vld [vmem:[%s139 + $0x30] sm:$0xff]
      %v154 = vld [vmem:[%s139 + $0x38] sm:$0xff]
      %v155 = vld [vmem:[%s139 + $0x40] sm:$0xff]
      %v156 = vld [vmem:[%s139 + $0x48] sm:$0xff]
      %v157 = vld [vmem:[%s139 + $0x50] sm:$0xff]
      %v158 = vld [vmem:[%s139 + $0x58] sm:$0xff]
      %v159 = vld [vmem:[%s139 + $0x60] sm:$0xff]
      %v160 = vld [vmem:[%s139 + $0x68] sm:$0xff]
      %v161 = vld [vmem:[%s139 + $0x70] sm:$0xff]
      %v162 = vld [vmem:[%s139 + $0x78] sm:$0xff]
      %v163 = vld [vmem:[%s139 + $0x80] sm:$0xff]
      %v164 = vld [vmem:[%s139 + $0x88] sm:$0xff]
      %v165 = vld [vmem:[%s139 + $0x90] sm:$0xff]
      %v166 = vld [vmem:[%s139 + $0x98] sm:$0xff]
      %v167 = vld [vmem:[%s139 + $0xa0] sm:$0xff]
      %v168 = vld [vmem:[%s139 + $0xa8] sm:$0xff]
      %v169 = vld [vmem:[%s139 + $0xb0] sm:$0xff]
      %v170 = vld [vmem:[%s139 + $0xb8] sm:$0xff]
      %v171 = vld [vmem:[%s139 + $0xc0] sm:$0xff]
      %v172 = vld [vmem:[%s139 + $0xc8] sm:$0xff]
      %v173 = vld [vmem:[%s139 + $0xd0] sm:$0xff]
      %v174 = vld [vmem:[%s139 + $0xd8] sm:$0xff]
      %v175 = vld [vmem:[%s139 + $0xe0] sm:$0xff]
      %v176 = vld [vmem:[%s139 + $0xe8] sm:$0xff]
      %v177 = vld [vmem:[%s139 + $0xf0] sm:$0xff]
      %v178 = vld [vmem:[%s139 + $0xf8] sm:$0xff]
      %v179 = vld [vmem:[%s139 + $0x100] sm:$0xff]
      %v180 = vld [vmem:[%s139 + $0x108] sm:$0xff]
      %v181 = vld [vmem:[%s139 + $0x110] sm:$0xff]
      %v182 = vld [vmem:[%s139 + $0x118] sm:$0xff]
      %v183 = vld [vmem:[%s139 + $0x120] sm:$0xff]
      %v184 = vld [vmem:[%s139 + $0x128] sm:$0xff]
      %v185 = vld [vmem:[%s139 + $0x130] sm:$0xff]
      %v186 = vld [vmem:[%s139 + $0x138] sm:$0xff]
      %v187 = vld [vmem:[%s139 + $0x140] sm:$0xff]
      %v188 = vld [vmem:[%s139 + $0x148] sm:$0xff]
      %v189 = vld [vmem:[%s139 + $0x150] sm:$0xff]
      %v190 = vld [vmem:[%s139 + $0x158] sm:$0xff]
      %v191 = vld [vmem:[%s139 + $0x160] sm:$0xff]
      %v192 = vld [vmem:[%s139 + $0x168] sm:$0xff]
      %v193 = vld [vmem:[%s139 + $0x170] sm:$0xff]
      %v194 = vld [vmem:[%s139 + $0x178] sm:$0xff]
      %v195 = vld [vmem:[%s139 + $0x180] sm:$0xff]
      %v196 = vld [vmem:[%s139 + $0x188] sm:$0xff]
      %v197 = vld [vmem:[%s139 + $0x190] sm:$0xff]
      %v198 = vld [vmem:[%s139 + $0x198] sm:$0xff]
      %v199 = vld [vmem:[%s139 + $0x1a0] sm:$0xff]
      %v200 = vld [vmem:[%s139 + $0x1a8] sm:$0xff]
      %v201 = vld [vmem:[%s139 + $0x1b0] sm:$0xff]
      %v202 = vld [vmem:[%s139 + $0x1b8] sm:$0xff]
      %v203 = vld [vmem:[%s139 + $0x1c0] sm:$0xff]
      %v204 = vld [vmem:[%s139 + $0x1c8] sm:$0xff]
      %v205 = vld [vmem:[%s139 + $0x1d0] sm:$0xff]
      %v206 = vld [vmem:[%s139 + $0x1d8] sm:$0xff]
      %v207 = vld [vmem:[%s139 + $0x1e0] sm:$0xff]
      %v208 = vld [vmem:[%s139 + $0x1e8] sm:$0xff]
      %v209 = vld [vmem:[%s139 + $0x1f0] sm:$0xff]
      %v210 = vld [vmem:[%s139 + $0x1f8] sm:$0xff]
      %v211 = vld [vmem:[%s1] sm:$0xff]
      %v212 = vld [vmem:[%s1 + $0x8] sm:$0xff]
      %v213 = vld [vmem:[%s1 + $0x10] sm:$0xff]
      %v214 = vld [vmem:[%s1 + $0x18] sm:$0xff]
      %v215 = vld [vmem:[%s1 + $0x20] sm:$0xff]
      %v216 = vld [vmem:[%s1 + $0x28] sm:$0xff]
      %v217 = vld [vmem:[%s1 + $0x30] sm:$0xff]
      %v218 = vld [vmem:[%s1 + $0x38] sm:$0xff]
      %v219 = vld [vmem:[%s1 + $0x40] sm:$0xff]
      %v220 = vld [vmem:[%s1 + $0x48] sm:$0xff]
      %v221 = vld [vmem:[%s1 + $0x50] sm:$0xff]
      %v222 = vld [vmem:[%s1 + $0x58] sm:$0xff]
      %v223 = vld [vmem:[%s1 + $0x60] sm:$0xff]
      %v224 = vld [vmem:[%s1 + $0x68] sm:$0xff]
      %v225 = vld [vmem:[%s1 + $0x70] sm:$0xff]
      %v226 = vld [vmem:[%s1 + $0x78] sm:$0xff]
      %227 = vmatprep.subr.mxu0 0.0
      %228 = vmatpush1.msra.mxu0 %v211
      %229 = vmatprep.subr.mxu0 0.0
      %230 = vmatpush1.msra.mxu0 %v212
      %231 = vmatprep.subr.mxu0 0.0
      %232 = vmatpush1.msra.mxu0 %v213
      %233 = vmatprep.subr.mxu0 0.0
      %234 = vmatpush1.msra.mxu0 %v214
      %235 = vmatprep.subr.mxu0 0.0
      %236 = vmatpush1.msra.mxu0 %v215
      %237 = vmatprep.subr.mxu0 0.0
      %238 = vmatpush1.msra.mxu0 %v216
      %239 = vmatprep.subr.mxu0 0.0
      %240 = vmatpush1.msra.mxu0 %v217
      %241 = vmatprep.subr.mxu0 0.0
      %242 = vmatpush1.msra.mxu0 %v218
      %243 = vmatprep.subr.mxu0 0.0
      %244 = vmatpush1.msra.mxu0 %v219
      %245 = vmatprep.subr.mxu0 0.0
      %246 = vmatpush1.msra.mxu0 %v220
      %247 = vmatprep.subr.mxu0 0.0
      %248 = vmatpush1.msra.mxu0 %v221
      %249 = vmatprep.subr.mxu0 0.0
      %250 = vmatpush1.msra.mxu0 %v222
      %251 = vmatprep.subr.mxu0 0.0
      %252 = vmatpush1.msra.mxu0 %v223
      %253 = vmatprep.subr.mxu0 0.0
      %254 = vmatpush1.msra.mxu0 %v224
      %255 = vmatprep.subr.mxu0 0.0
      %256 = vmatpush1.msra.mxu0 %v225
      %257 = vmatprep.subr.mxu0 0.0
      %258 = vmatpush1.msra.mxu0 %v226
      %259 = vmatprep.subr.mxu0 0.0
      %260 = vmatpush1.msra.mxu0 0.0
      %261 = vmatprep.subr.mxu0 0.0
      %262 = vmatpush1.msra.mxu0 0.0
      %263 = vmatprep.subr.mxu0 0.0
      %264 = vmatpush1.msra.mxu0 0.0
      %265 = vmatprep.subr.mxu0 0.0
      %266 = vmatpush1.msra.mxu0 0.0
      %267 = vmatprep.subr.mxu0 0.0
      %268 = vmatpush1.msra.mxu0 0.0
      %269 = vmatprep.subr.mxu0 0.0
      %270 = vmatpush1.msra.mxu0 0.0
      %271 = vmatprep.subr.mxu0 0.0
      %272 = vmatpush1.msra.mxu0 0.0
      %273 = vmatprep.subr.mxu0 0.0
      %274 = vmatpush1.msra.mxu0 0.0
      %275 = vmatprep.subr.mxu0 0.0
      %276 = vmatpush1.msra.mxu0 0.0
      %277 = vmatprep.subr.mxu0 0.0
      %278 = vmatpush1.msra.mxu0 0.0
      %279 = vmatprep.subr.mxu0 0.0
      %280 = vmatpush1.msra.mxu0 0.0
      %281 = vmatprep.subr.mxu0 0.0
      %282 = vmatpush1.msra.mxu0 0.0
      %283 = vmatprep.subr.mxu0 0.0
      %284 = vmatpush1.msra.mxu0 0.0
      %285 = vmatprep.subr.mxu0 0.0
      %286 = vmatpush1.msra.mxu0 0.0
      %287 = vmatprep.subr.mxu0 0.0
      %288 = vmatpush1.msra.mxu0 0.0
      %289 = vmatprep.subr.mxu0 0.0
      %290 = vmatpush1.msra.mxu0 0.0
      %291 = vmatprep.mubr.f32.mxu0 0.0
      %292 = vmatmul.mubr.f32.gmra.mrb[0].mxu0 %v147
      %v293 = vpop.f32.mrb[0].mxu0
      %v294 = vadd.f32 0.0, %v293
      %v295 = vpop.f32.mrb[0].mxu0
      %296 = vmatprep.mubr.f32.mxu0 0.0
      %297 = vmatmul.mubr.f32.gmra.mrb[0].mxu0 %v148
      %v298 = vpop.f32.mrb[0].mxu0
      %v299 = vadd.f32 0.0, %v298
      %v300 = vpop.f32.mrb[0].mxu0
      %301 = vmatprep.mubr.f32.mxu0 0.0
      %302 = vmatmul.mubr.f32.gmra.mrb[0].mxu0 %v149
      %v303 = vpop.f32.mrb[0].mxu0
      %v304 = vadd.f32 0.0, %v303
      %v305 = vpop.f32.mrb[0].mxu0
      %306 = vmatprep.mubr.f32.mxu0 0.0
      %307 = vmatmul.mubr.f32.gmra.mrb[0].mxu0 %v150
      %v308 = vpop.f32.mrb[0].mxu0
      %v309 = vadd.f32 0.0, %v308
      %v310 = vpop.f32.mrb[0].mxu0
      %311 = vmatprep.mubr.f32.mxu0 0.0
      %312 = vmatmul.mubr.f32.gmra.mrb[0].mxu0 %v151
      %v313 = vpop.f32.mrb[0].mxu0
      %v314 = vadd.f32 0.0, %v313
      %v315 = vpop.f32.mrb[0].mxu0
      %316 = vmatprep.mubr.f32.mxu0 0.0
      %317 = vmatmul.mubr.f32.gmra.mrb[0].mxu0 %v152
      %v318 = vpop.f32.mrb[0].mxu0
      %v319 = vadd.f32 0.0, %v318
      %v320 = vpop.f32.mrb[0].mxu0
      %321 = vmatprep.mubr.f32.mxu0 0.0
      %322 = vmatmul.mubr.f32.gmra.mrb[0].mxu0 %v153
      %v323 = vpop.f32.mrb[0].mxu0
      %v324 = vadd.f32 0.0, %v323
      %v325 = vpop.f32.mrb[0].mxu0
      %326 = vmatprep.mubr.f32.mxu0 0.0
      %327 = vmatmul.mubr.f32.gmra.mrb[0].mxu0 %v154
      %v328 = vpop.f32.mrb[0].mxu0
      %v329 = vadd.f32 0.0, %v328
      %v330 = vpop.f32.mrb[0].mxu0
      %331 = vmatprep.mubr.f32.mxu0 0.0
      %332 = vmatmul.mubr.f32.gmra.mrb[0].mxu0 %v155
      %v333 = vpop.f32.mrb[0].mxu0
      %v334 = vadd.f32 0.0, %v333
      %v335 = vpop.f32.mrb[0].mxu0
      %336 = vmatprep.mubr.f32.mxu0 0.0
      %337 = vmatmul.mubr.f32.gmra.mrb[0].mxu0 %v156
      %v338 = vpop.f32.mrb[0].mxu0
      %v339 = vadd.f32 0.0, %v338
      %v340 = vpop.f32.mrb[0].mxu0
      %341 = vmatprep.mubr.f32.mxu0 0.0
      %342 = vmatmul.mubr.f32.gmra.mrb[0].mxu0 %v157
      %v343 = vpop.f32.mrb[0].mxu0
      %v344 = vadd.f32 0.0, %v343
      %v345 = vpop.f32.mrb[0].mxu0
      %346 = vmatprep.mubr.f32.mxu0 0.0
      %347 = vmatmul.mubr.f32.gmra.mrb[0].mxu0 %v158
      %v348 = vpop.f32.mrb[0].mxu0
      %v349 = vadd.f32 0.0, %v348
      %v350 = vpop.f32.mrb[0].mxu0
      %351 = vmatprep.mubr.f32.mxu0 0.0
      %352 = vmatmul.mubr.f32.gmra.mrb[0].mxu0 %v159
      %v353 = vpop.f32.mrb[0].mxu0
      %v354 = vadd.f32 0.0, %v353
      %v355 = vpop.f32.mrb[0].mxu0
      %356 = vmatprep.mubr.f32.mxu0 0.0
      %357 = vmatmul.mubr.f32.gmra.mrb[0].mxu0 %v160
      %v358 = vpop.f32.mrb[0].mxu0
      %v359 = vadd.f32 0.0, %v358
      %v360 = vpop.f32.mrb[0].mxu0
      %361 = vmatprep.mubr.f32.mxu0 0.0
      %362 = vmatmul.mubr.f32.gmra.mrb[0].mxu0 %v161
      %v363 = vpop.f32.mrb[0].mxu0
      %v364 = vadd.f32 0.0, %v363
      %v365 = vpop.f32.mrb[0].mxu0
      %366 = vmatprep.mubr.f32.mxu0 0.0
      %367 = vmatmul.mubr.f32.gmra.mrb[0].mxu0 %v162
      %v368 = vpop.f32.mrb[0].mxu0
      %v369 = vadd.f32 0.0, %v368
      %v370 = vpop.f32.mrb[0].mxu0
      %371 = vmatprep.mubr.f32.mxu0 0.0
      %372 = vmatmul.mubr.f32.gmra.mrb[0].mxu0 %v163
      %v373 = vpop.f32.mrb[0].mxu0
      %v374 = vadd.f32 0.0, %v373
      %v375 = vpop.f32.mrb[0].mxu0
      %376 = vmatprep.mubr.f32.mxu0 0.0
      %377 = vmatmul.mubr.f32.gmra.mrb[0].mxu0 %v164
      %v378 = vpop.f32.mrb[0].mxu0
      %v379 = vadd.f32 0.0, %v378
      %v380 = vpop.f32.mrb[0].mxu0
      %381 = vmatprep.mubr.f32.mxu0 0.0
      %382 = vmatmul.mubr.f32.gmra.mrb[0].mxu0 %v165
      %v383 = vpop.f32.mrb[0].mxu0
      %v384 = vadd.f32 0.0, %v383
      %v385 = vpop.f32.mrb[0].mxu0
      %386 = vmatprep.mubr.f32.mxu0 0.0
      %387 = vmatmul.mubr.f32.gmra.mrb[0].mxu0 %v166
      %v388 = vpop.f32.mrb[0].mxu0
      %v389 = vadd.f32 0.0, %v388
      %v390 = vpop.f32.mrb[0].mxu0
      %391 = vmatprep.mubr.f32.mxu0 0.0
      %392 = vmatmul.mubr.f32.gmra.mrb[0].mxu0 %v167
      %v393 = vpop.f32.mrb[0].mxu0
      %v394 = vadd.f32 0.0, %v393
      %v395 = vpop.f32.mrb[0].mxu0
      %396 = vmatprep.mubr.f32.mxu0 0.0
      %397 = vmatmul.mubr.f32.gmra.mrb[0].mxu0 %v168
      %v398 = vpop.f32.mrb[0].mxu0
      %v399 = vadd.f32 0.0, %v398
      %v400 = vpop.f32.mrb[0].mxu0
      %401 = vmatprep.mubr.f32.mxu0 0.0
      %402 = vmatmul.mubr.f32.gmra.mrb[0].mxu0 %v169
      %v403 = vpop.f32.mrb[0].mxu0
      %v404 = vadd.f32 0.0, %v403
      %v405 = vpop.f32.mrb[0].mxu0
      %406 = vmatprep.mubr.f32.mxu0 0.0
      %407 = vmatmul.mubr.f32.gmra.mrb[0].mxu0 %v170
      %v408 = vpop.f32.mrb[0].mxu0
      %v409 = vadd.f32 0.0, %v408
      %v410 = vpop.f32.mrb[0].mxu0
      %411 = vmatprep.mubr.f32.mxu0 0.0
      %412 = vmatmul.mubr.f32.gmra.mrb[0].mxu0 %v171
      %v413 = vpop.f32.mrb[0].mxu0
      %v414 = vadd.f32 0.0, %v413
      %v415 = vpop.f32.mrb[0].mxu0
      %416 = vmatprep.mubr.f32.mxu0 0.0
      %417 = vmatmul.mubr.f32.gmra.mrb[0].mxu0 %v172
      %v418 = vpop.f32.mrb[0].mxu0
      %v419 = vadd.f32 0.0, %v418
      %v420 = vpop.f32.mrb[0].mxu0
      %421 = vmatprep.mubr.f32.mxu0 0.0
      %422 = vmatmul.mubr.f32.gmra.mrb[0].mxu0 %v173
      %v423 = vpop.f32.mrb[0].mxu0
      %v424 = vadd.f32 0.0, %v423
      %v425 = vpop.f32.mrb[0].mxu0
      %426 = vmatprep.mubr.f32.mxu0 0.0
      %427 = vmatmul.mubr.f32.gmra.mrb[0].mxu0 %v174
      %v428 = vpop.f32.mrb[0].mxu0
      %v429 = vadd.f32 0.0, %v428
      %v430 = vpop.f32.mrb[0].mxu0
      %431 = vmatprep.mubr.f32.mxu0 0.0
      %432 = vmatmul.mubr.f32.gmra.mrb[0].mxu0 %v175
      %v433 = vpop.f32.mrb[0].mxu0
      %v434 = vadd.f32 0.0, %v433
      %v435 = vpop.f32.mrb[0].mxu0
      %436 = vmatprep.mubr.f32.mxu0 0.0
      %437 = vmatmul.mubr.f32.gmra.mrb[0].mxu0 %v176
      %v438 = vpop.f32.mrb[0].mxu0
      %v439 = vadd.f32 0.0, %v438
      %v440 = vpop.f32.mrb[0].mxu0
      %441 = vmatprep.mubr.f32.mxu0 0.0
      %442 = vmatmul.mubr.f32.gmra.mrb[0].mxu0 %v177
      %v443 = vpop.f32.mrb[0].mxu0
      %v444 = vadd.f32 0.0, %v443
      %v445 = vpop.f32.mrb[0].mxu0
      %446 = vmatprep.mubr.f32.mxu0 0.0
      %447 = vmatmul.mubr.f32.gmra.mrb[0].mxu0 %v178
      %v448 = vpop.f32.mrb[0].mxu0
      %v449 = vadd.f32 0.0, %v448
      %v450 = vpop.f32.mrb[0].mxu0
      %451 = vmatprep.mubr.f32.mxu0 0.0
      %452 = vmatmul.mubr.f32.gmra.mrb[0].mxu0 %v179
      %v453 = vpop.f32.mrb[0].mxu0
      %v454 = vadd.f32 0.0, %v453
      %v455 = vpop.f32.mrb[0].mxu0
      %456 = vmatprep.mubr.f32.mxu0 0.0
      %457 = vmatmul.mubr.f32.gmra.mrb[0].mxu0 %v180
      %v458 = vpop.f32.mrb[0].mxu0
      %v459 = vadd.f32 0.0, %v458
      %v460 = vpop.f32.mrb[0].mxu0
      %461 = vmatprep.mubr.f32.mxu0 0.0
      %462 = vmatmul.mubr.f32.gmra.mrb[0].mxu0 %v181
      %v463 = vpop.f32.mrb[0].mxu0
      %v464 = vadd.f32 0.0, %v463
      %v465 = vpop.f32.mrb[0].mxu0
      %466 = vmatprep.mubr.f32.mxu0 0.0
      %467 = vmatmul.mubr.f32.gmra.mrb[0].mxu0 %v182
      %v468 = vpop.f32.mrb[0].mxu0
      %v469 = vadd.f32 0.0, %v468
      %v470 = vpop.f32.mrb[0].mxu0
      %471 = vmatprep.mubr.f32.mxu0 0.0
      %472 = vmatmul.mubr.f32.gmra.mrb[0].mxu0 %v183
      %v473 = vpop.f32.mrb[0].mxu0
      %v474 = vadd.f32 0.0, %v473
      %v475 = vpop.f32.mrb[0].mxu0
      %476 = vmatprep.mubr.f32.mxu0 0.0
      %477 = vmatmul.mubr.f32.gmra.mrb[0].mxu0 %v184
      %v478 = vpop.f32.mrb[0].mxu0
      %v479 = vadd.f32 0.0, %v478
      %v480 = vpop.f32.mrb[0].mxu0
      %481 = vmatprep.mubr.f32.mxu0 0.0
      %482 = vmatmul.mubr.f32.gmra.mrb[0].mxu0 %v185
      %v483 = vpop.f32.mrb[0].mxu0
      %v484 = vadd.f32 0.0, %v483
      %v485 = vpop.f32.mrb[0].mxu0
      %486 = vmatprep.mubr.f32.mxu0 0.0
      %487 = vmatmul.mubr.f32.gmra.mrb[0].mxu0 %v186
      %v488 = vpop.f32.mrb[0].mxu0
      %v489 = vadd.f32 0.0, %v488
      %v490 = vpop.f32.mrb[0].mxu0
      %491 = vmatprep.mubr.f32.mxu0 0.0
      %492 = vmatmul.mubr.f32.gmra.mrb[0].mxu0 %v187
      %v493 = vpop.f32.mrb[0].mxu0
      %v494 = vadd.f32 0.0, %v493
      %v495 = vpop.f32.mrb[0].mxu0
      %496 = vmatprep.mubr.f32.mxu0 0.0
      %497 = vmatmul.mubr.f32.gmra.mrb[0].mxu0 %v188
      %v498 = vpop.f32.mrb[0].mxu0
      %v499 = vadd.f32 0.0, %v498
      %v500 = vpop.f32.mrb[0].mxu0
      %501 = vmatprep.mubr.f32.mxu0 0.0
      %502 = vmatmul.mubr.f32.gmra.mrb[0].mxu0 %v189
      %v503 = vpop.f32.mrb[0].mxu0
      %v504 = vadd.f32 0.0, %v503
      %v505 = vpop.f32.mrb[0].mxu0
      %506 = vmatprep.mubr.f32.mxu0 0.0
      %507 = vmatmul.mubr.f32.gmra.mrb[0].mxu0 %v190
      %v508 = vpop.f32.mrb[0].mxu0
      %v509 = vadd.f32 0.0, %v508
      %v510 = vpop.f32.mrb[0].mxu0
      %511 = vmatprep.mubr.f32.mxu0 0.0
      %512 = vmatmul.mubr.f32.gmra.mrb[0].mxu0 %v191
      %v513 = vpop.f32.mrb[0].mxu0
      %v514 = vadd.f32 0.0, %v513
      %v515 = vpop.f32.mrb[0].mxu0
      %516 = vmatprep.mubr.f32.mxu0 0.0
      %517 = vmatmul.mubr.f32.gmra.mrb[0].mxu0 %v192
      %v518 = vpop.f32.mrb[0].mxu0
      %v519 = vadd.f32 0.0, %v518
      %v520 = vpop.f32.mrb[0].mxu0
      %521 = vmatprep.mubr.f32.mxu0 0.0
      %522 = vmatmul.mubr.f32.gmra.mrb[0].mxu0 %v193
      %v523 = vpop.f32.mrb[0].mxu0
      %v524 = vadd.f32 0.0, %v523
      %v525 = vpop.f32.mrb[0].mxu0
      %526 = vmatprep.mubr.f32.mxu0 0.0
      %527 = vmatmul.mubr.f32.gmra.mrb[0].mxu0 %v194
      %v528 = vpop.f32.mrb[0].mxu0
      %v529 = vadd.f32 0.0, %v528
      %v530 = vpop.f32.mrb[0].mxu0
      %531 = vmatprep.mubr.f32.mxu0 0.0
      %532 = vmatmul.mubr.f32.gmra.mrb[0].mxu0 %v195
      %v533 = vpop.f32.mrb[0].mxu0
      %v534 = vadd.f32 0.0, %v533
      %v535 = vpop.f32.mrb[0].mxu0
      %536 = vmatprep.mubr.f32.mxu0 0.0
      %537 = vmatmul.mubr.f32.gmra.mrb[0].mxu0 %v196
      %v538 = vpop.f32.mrb[0].mxu0
      %v539 = vadd.f32 0.0, %v538
      %v540 = vpop.f32.mrb[0].mxu0
      %541 = vmatprep.mubr.f32.mxu0 0.0
      %542 = vmatmul.mubr.f32.gmra.mrb[0].mxu0 %v197
      %v543 = vpop.f32.mrb[0].mxu0
      %v544 = vadd.f32 0.0, %v543
      %v545 = vpop.f32.mrb[0].mxu0
      %546 = vmatprep.mubr.f32.mxu0 0.0
      %547 = vmatmul.mubr.f32.gmra.mrb[0].mxu0 %v198
      %v548 = vpop.f32.mrb[0].mxu0
      %v549 = vadd.f32 0.0, %v548
      %v550 = vpop.f32.mrb[0].mxu0
      %551 = vmatprep.mubr.f32.mxu0 0.0
      %552 = vmatmul.mubr.f32.gmra.mrb[0].mxu0 %v199
      %v553 = vpop.f32.mrb[0].mxu0
      %v554 = vadd.f32 0.0, %v553
      %v555 = vpop.f32.mrb[0].mxu0
      %556 = vmatprep.mubr.f32.mxu0 0.0
      %557 = vmatmul.mubr.f32.gmra.mrb[0].mxu0 %v200
      %v558 = vpop.f32.mrb[0].mxu0
      %v559 = vadd.f32 0.0, %v558
      %v560 = vpop.f32.mrb[0].mxu0
      %561 = vmatprep.mubr.f32.mxu0 0.0
      %562 = vmatmul.mubr.f32.gmra.mrb[0].mxu0 %v201
      %v563 = vpop.f32.mrb[0].mxu0
      %v564 = vadd.f32 0.0, %v563
      %v565 = vpop.f32.mrb[0].mxu0
      %566 = vmatprep.mubr.f32.mxu0 0.0
      %567 = vmatmul.mubr.f32.gmra.mrb[0].mxu0 %v202
      %v568 = vpop.f32.mrb[0].mxu0
      %v569 = vadd.f32 0.0, %v568
      %v570 = vpop.f32.mrb[0].mxu0
      %571 = vmatprep.mubr.f32.mxu0 0.0
      %572 = vmatmul.mubr.f32.gmra.mrb[0].mxu0 %v203
      %v573 = vpop.f32.mrb[0].mxu0
      %v574 = vadd.f32 0.0, %v573
      %v575 = vpop.f32.mrb[0].mxu0
      %576 = vmatprep.mubr.f32.mxu0 0.0
      %577 = vmatmul.mubr.f32.gmra.mrb[0].mxu0 %v204
      %v578 = vpop.f32.mrb[0].mxu0
      %v579 = vadd.f32 0.0, %v578
      %v580 = vpop.f32.mrb[0].mxu0
      %581 = vmatprep.mubr.f32.mxu0 0.0
      %582 = vmatmul.mubr.f32.gmra.mrb[0].mxu0 %v205
      %v583 = vpop.f32.mrb[0].mxu0
      %v584 = vadd.f32 0.0, %v583
      %v585 = vpop.f32.mrb[0].mxu0
      %586 = vmatprep.mubr.f32.mxu0 0.0
      %587 = vmatmul.mubr.f32.gmra.mrb[0].mxu0 %v206
      %v588 = vpop.f32.mrb[0].mxu0
      %v589 = vadd.f32 0.0, %v588
      %v590 = vpop.f32.mrb[0].mxu0
      %591 = vmatprep.mubr.f32.mxu0 0.0
      %592 = vmatmul.mubr.f32.gmra.mrb[0].mxu0 %v207
      %v593 = vpop.f32.mrb[0].mxu0
      %v594 = vadd.f32 0.0, %v593
      %v595 = vpop.f32.mrb[0].mxu0
      %596 = vmatprep.mubr.f32.mxu0 0.0
      %597 = vmatmul.mubr.f32.gmra.mrb[0].mxu0 %v208
      %v598 = vpop.f32.mrb[0].mxu0
      %v599 = vadd.f32 0.0, %v598
      %v600 = vpop.f32.mrb[0].mxu0
      %601 = vmatprep.mubr.f32.mxu0 0.0
      %602 = vmatmul.mubr.f32.gmra.mrb[0].mxu0 %v209
      %v603 = vpop.f32.mrb[0].mxu0
      %v604 = vadd.f32 0.0, %v603
      %v605 = vpop.f32.mrb[0].mxu0
      %606 = vmatprep.mubr.f32.mxu0 0.0
      %607 = vmatmul.mubr.f32.gmra.mrb[0].mxu0 %v210
      %v608 = vpop.f32.mrb[0].mxu0
      %v609 = vadd.f32 0.0, %v608
      %v610 = vpop.f32.mrb[0].mxu0
      %611 = vdwg.mxu0
      %vm612 = vcmp.ge.f32.partialorder %v294, 0.0
      %vm613 = vcmp.ge.f32.partialorder %v299, 0.0
      %vm614 = vcmp.ge.f32.partialorder %v304, 0.0
      %vm615 = vcmp.ge.f32.partialorder %v309, 0.0
      %vm616 = vcmp.ge.f32.partialorder %v314, 0.0
      %vm617 = vcmp.ge.f32.partialorder %v319, 0.0
      %vm618 = vcmp.ge.f32.partialorder %v324, 0.0
      %vm619 = vcmp.ge.f32.partialorder %v329, 0.0
      %vm620 = vcmp.ge.f32.partialorder %v334, 0.0
      %vm621 = vcmp.ge.f32.partialorder %v339, 0.0
      %vm622 = vcmp.ge.f32.partialorder %v344, 0.0
      %vm623 = vcmp.ge.f32.partialorder %v349, 0.0
      %vm624 = vcmp.ge.f32.partialorder %v354, 0.0
      %vm625 = vcmp.ge.f32.partialorder %v359, 0.0
      %vm626 = vcmp.ge.f32.partialorder %v364, 0.0
      %vm627 = vcmp.ge.f32.partialorder %v369, 0.0
      %vm628 = vcmp.ge.f32.partialorder %v374, 0.0
      %vm629 = vcmp.ge.f32.partialorder %v379, 0.0
      %vm630 = vcmp.ge.f32.partialorder %v384, 0.0
      %vm631 = vcmp.ge.f32.partialorder %v389, 0.0
      %vm632 = vcmp.ge.f32.partialorder %v394, 0.0
      %vm633 = vcmp.ge.f32.partialorder %v399, 0.0
      %vm634 = vcmp.ge.f32.partialorder %v404, 0.0
      %vm635 = vcmp.ge.f32.partialorder %v409, 0.0
      %vm636 = vcmp.ge.f32.partialorder %v414, 0.0
      %vm637 = vcmp.ge.f32.partialorder %v419, 0.0
      %vm638 = vcmp.ge.f32.partialorder %v424, 0.0
      %vm639 = vcmp.ge.f32.partialorder %v429, 0.0
      %vm640 = vcmp.ge.f32.partialorder %v434, 0.0
      %vm641 = vcmp.ge.f32.partialorder %v439, 0.0
      %vm642 = vcmp.ge.f32.partialorder %v444, 0.0
      %vm643 = vcmp.ge.f32.partialorder %v449, 0.0
      %vm644 = vcmp.ge.f32.partialorder %v454, 0.0
      %vm645 = vcmp.ge.f32.partialorder %v459, 0.0
      %vm646 = vcmp.ge.f32.partialorder %v464, 0.0
      %vm647 = vcmp.ge.f32.partialorder %v469, 0.0
      %vm648 = vcmp.ge.f32.partialorder %v474, 0.0
      %vm649 = vcmp.ge.f32.partialorder %v479, 0.0
      %vm650 = vcmp.ge.f32.partialorder %v484, 0.0
      %vm651 = vcmp.ge.f32.partialorder %v489, 0.0
      %vm652 = vcmp.ge.f32.partialorder %v494, 0.0
      %vm653 = vcmp.ge.f32.partialorder %v499, 0.0
      %vm654 = vcmp.ge.f32.partialorder %v504, 0.0
      %vm655 = vcmp.ge.f32.partialorder %v509, 0.0
      %vm656 = vcmp.ge.f32.partialorder %v514, 0.0
      %vm657 = vcmp.ge.f32.partialorder %v519, 0.0
      %vm658 = vcmp.ge.f32.partialorder %v524, 0.0
      %vm659 = vcmp.ge.f32.partialorder %v529, 0.0
      %vm660 = vcmp.ge.f32.partialorder %v534, 0.0
      %vm661 = vcmp.ge.f32.partialorder %v539, 0.0
      %vm662 = vcmp.ge.f32.partialorder %v544, 0.0
      %vm663 = vcmp.ge.f32.partialorder %v549, 0.0
      %vm664 = vcmp.ge.f32.partialorder %v554, 0.0
      %vm665 = vcmp.ge.f32.partialorder %v559, 0.0
      %vm666 = vcmp.ge.f32.partialorder %v564, 0.0
      %vm667 = vcmp.ge.f32.partialorder %v569, 0.0
      %vm668 = vcmp.ge.f32.partialorder %v574, 0.0
      %vm669 = vcmp.ge.f32.partialorder %v579, 0.0
      %vm670 = vcmp.ge.f32.partialorder %v584, 0.0
      %vm671 = vcmp.ge.f32.partialorder %v589, 0.0
      %vm672 = vcmp.ge.f32.partialorder %v594, 0.0
      %vm673 = vcmp.ge.f32.partialorder %v599, 0.0
      %vm674 = vcmp.ge.f32.partialorder %v604, 0.0
      %vm675 = vcmp.ge.f32.partialorder %v609, 0.0
      %v676 = vmul.f32 %v294, 0.2
      %v677 = vmul.f32 %v299, 0.2
      %v678 = vmul.f32 %v304, 0.2
      %v679 = vmul.f32 %v309, 0.2
      %v680 = vmul.f32 %v314, 0.2
      %v681 = vmul.f32 %v319, 0.2
      %v682 = vmul.f32 %v324, 0.2
      %v683 = vmul.f32 %v329, 0.2
      %v684 = vmul.f32 %v334, 0.2
      %v685 = vmul.f32 %v339, 0.2
      %v686 = vmul.f32 %v344, 0.2
      %v687 = vmul.f32 %v349, 0.2
      %v688 = vmul.f32 %v354, 0.2
      %v689 = vmul.f32 %v359, 0.2
      %v690 = vmul.f32 %v364, 0.2
      %v691 = vmul.f32 %v369, 0.2
      %v692 = vmul.f32 %v374, 0.2
      %v693 = vmul.f32 %v379, 0.2
      %v694 = vmul.f32 %v384, 0.2
      %v695 = vmul.f32 %v389, 0.2
      %v696 = vmul.f32 %v394, 0.2
      %v697 = vmul.f32 %v399, 0.2
      %v698 = vmul.f32 %v404, 0.2
      %v699 = vmul.f32 %v409, 0.2
      %v700 = vmul.f32 %v414, 0.2
      %v701 = vmul.f32 %v419, 0.2
      %v702 = vmul.f32 %v424, 0.2
      %v703 = vmul.f32 %v429, 0.2
      %v704 = vmul.f32 %v434, 0.2
      %v705 = vmul.f32 %v439, 0.2
      %v706 = vmul.f32 %v444, 0.2
      %v707 = vmul.f32 %v449, 0.2
      %v708 = vmul.f32 %v454, 0.2
      %v709 = vmul.f32 %v459, 0.2
      %v710 = vmul.f32 %v464, 0.2
      %v711 = vmul.f32 %v469, 0.2
      %v712 = vmul.f32 %v474, 0.2
      %v713 = vmul.f32 %v479, 0.2
      %v714 = vmul.f32 %v484, 0.2
      %v715 = vmul.f32 %v489, 0.2
      %v716 = vmul.f32 %v494, 0.2
      %v717 = vmul.f32 %v499, 0.2
      %v718 = vmul.f32 %v504, 0.2
      %v719 = vmul.f32 %v509, 0.2
      %v720 = vmul.f32 %v514, 0.2
      %v721 = vmul.f32 %v519, 0.2
      %v722 = vmul.f32 %v524, 0.2
      %v723 = vmul.f32 %v529, 0.2
      %v724 = vmul.f32 %v534, 0.2
      %v725 = vmul.f32 %v539, 0.2
      %v726 = vmul.f32 %v544, 0.2
      %v727 = vmul.f32 %v549, 0.2
      %v728 = vmul.f32 %v554, 0.2
      %v729 = vmul.f32 %v559, 0.2
      %v730 = vmul.f32 %v564, 0.2
      %v731 = vmul.f32 %v569, 0.2
      %v732 = vmul.f32 %v574, 0.2
      %v733 = vmul.f32 %v579, 0.2
      %v734 = vmul.f32 %v584, 0.2
      %v735 = vmul.f32 %v589, 0.2
      %v736 = vmul.f32 %v594, 0.2
      %v737 = vmul.f32 %v599, 0.2
      %v738 = vmul.f32 %v604, 0.2
      %v739 = vmul.f32 %v609, 0.2
      %v740 = vsel %vm612, %v294, %v676
      %v741 = vsel %vm613, %v299, %v677
      %v742 = vsel %vm614, %v304, %v678
      %v743 = vsel %vm615, %v309, %v679
      %v744 = vsel %vm616, %v314, %v680
      %v745 = vsel %vm617, %v319, %v681
      %v746 = vsel %vm618, %v324, %v682
      %v747 = vsel %vm619, %v329, %v683
      %v748 = vsel %vm620, %v334, %v684
      %v749 = vsel %vm621, %v339, %v685
      %v750 = vsel %vm622, %v344, %v686
      %v751 = vsel %vm623, %v349, %v687
      %v752 = vsel %vm624, %v354, %v688
      %v753 = vsel %vm625, %v359, %v689
      %v754 = vsel %vm626, %v364, %v690
      %v755 = vsel %vm627, %v369, %v691
      %v756 = vsel %vm628, %v374, %v692
      %v757 = vsel %vm629, %v379, %v693
      %v758 = vsel %vm630, %v384, %v694
      %v759 = vsel %vm631, %v389, %v695
      %v760 = vsel %vm632, %v394, %v696
      %v761 = vsel %vm633, %v399, %v697
      %v762 = vsel %vm634, %v404, %v698
      %v763 = vsel %vm635, %v409, %v699
      %v764 = vsel %vm636, %v414, %v700
      %v765 = vsel %vm637, %v419, %v701
      %v766 = vsel %vm638, %v424, %v702
      %v767 = vsel %vm639, %v429, %v703
      %v768 = vsel %vm640, %v434, %v704
      %v769 = vsel %vm641, %v439, %v705
      %v770 = vsel %vm642, %v444, %v706
      %v771 = vsel %vm643, %v449, %v707
      %v772 = vsel %vm644, %v454, %v708
      %v773 = vsel %vm645, %v459, %v709
      %v774 = vsel %vm646, %v464, %v710
      %v775 = vsel %vm647, %v469, %v711
      %v776 = vsel %vm648, %v474, %v712
      %v777 = vsel %vm649, %v479, %v713
      %v778 = vsel %vm650, %v484, %v714
      %v779 = vsel %vm651, %v489, %v715
      %v780 = vsel %vm652, %v494, %v716
      %v781 = vsel %vm653, %v499, %v717
      %v782 = vsel %vm654, %v504, %v718
      %v783 = vsel %vm655, %v509, %v719
      %v784 = vsel %vm656, %v514, %v720
      %v785 = vsel %vm657, %v519, %v721
      %v786 = vsel %vm658, %v524, %v722
      %v787 = vsel %vm659, %v529, %v723
      %v788 = vsel %vm660, %v534, %v724
      %v789 = vsel %vm661, %v539, %v725
      %v790 = vsel %vm662, %v544, %v726
      %v791 = vsel %vm663, %v549, %v727
      %v792 = vsel %vm664, %v554, %v728
      %v793 = vsel %vm665, %v559, %v729
      %v794 = vsel %vm666, %v564, %v730
      %v795 = vsel %vm667, %v569, %v731
      %v796 = vsel %vm668, %v574, %v732
      %v797 = vsel %vm669, %v579, %v733
      %v798 = vsel %vm670, %v584, %v734
      %v799 = vsel %vm671, %v589, %v735
      %v800 = vsel %vm672, %v594, %v736
      %v801 = vsel %vm673, %v599, %v737
      %v802 = vsel %vm674, %v604, %v738
      %v803 = vsel %vm675, %v609, %v739
      %vm804 = vcmask 64512
      %805 = vst.msk [vmem:[%s145] sm:$0xff] %vm804, %v740
      %806 = vst.msk [vmem:[%s145 + $0x8] sm:$0xff] %vm804, %v741
      %807 = vst.msk [vmem:[%s145 + $0x10] sm:$0xff] %vm804, %v742
      %808 = vst.msk [vmem:[%s145 + $0x18] sm:$0xff] %vm804, %v743
      %809 = vst.msk [vmem:[%s145 + $0x20] sm:$0xff] %vm804, %v744
      %810 = vst.msk [vmem:[%s145 + $0x28] sm:$0xff] %vm804, %v745
      %811 = vst.msk [vmem:[%s145 + $0x30] sm:$0xff] %vm804, %v746
      %812 = vst.msk [vmem:[%s145 + $0x38] sm:$0xff] %vm804, %v747
      %813 = vst.msk [vmem:[%s145 + $0x40] sm:$0xff] %vm804, %v748
      %814 = vst.msk [vmem:[%s145 + $0x48] sm:$0xff] %vm804, %v749
      %815 = vst.msk [vmem:[%s145 + $0x50] sm:$0xff] %vm804, %v750
      %816 = vst.msk [vmem:[%s145 + $0x58] sm:$0xff] %vm804, %v751
      %817 = vst.msk [vmem:[%s145 + $0x60] sm:$0xff] %vm804, %v752
      %818 = vst.msk [vmem:[%s145 + $0x68] sm:$0xff] %vm804, %v753
      %819 = vst.msk [vmem:[%s145 + $0x70] sm:$0xff] %vm804, %v754
      %820 = vst.msk [vmem:[%s145 + $0x78] sm:$0xff] %vm804, %v755
      %821 = vst.msk [vmem:[%s145 + $0x80] sm:$0xff] %vm804, %v756
      %822 = vst.msk [vmem:[%s145 + $0x88] sm:$0xff] %vm804, %v757
      %823 = vst.msk [vmem:[%s145 + $0x90] sm:$0xff] %vm804, %v758
      %824 = vst.msk [vmem:[%s145 + $0x98] sm:$0xff] %vm804, %v759
      %825 = vst.msk [vmem:[%s145 + $0xa0] sm:$0xff] %vm804, %v760
      %826 = vst.msk [vmem:[%s145 + $0xa8] sm:$0xff] %vm804, %v761
      %827 = vst.msk [vmem:[%s145 + $0xb0] sm:$0xff] %vm804, %v762
      %828 = vst.msk [vmem:[%s145 + $0xb8] sm:$0xff] %vm804, %v763
      %829 = vst.msk [vmem:[%s145 + $0xc0] sm:$0xff] %vm804, %v764
      %830 = vst.msk [vmem:[%s145 + $0xc8] sm:$0xff] %vm804, %v765
      %831 = vst.msk [vmem:[%s145 + $0xd0] sm:$0xff] %vm804, %v766
      %832 = vst.msk [vmem:[%s145 + $0xd8] sm:$0xff] %vm804, %v767
      %833 = vst.msk [vmem:[%s145 + $0xe0] sm:$0xff] %vm804, %v768
      %834 = vst.msk [vmem:[%s145 + $0xe8] sm:$0xff] %vm804, %v769
      %835 = vst.msk [vmem:[%s145 + $0xf0] sm:$0xff] %vm804, %v770
      %836 = vst.msk [vmem:[%s145 + $0xf8] sm:$0xff] %vm804, %v771
      %837 = vst.msk [vmem:[%s145 + $0x100] sm:$0xff] %vm804, %v772
      %838 = vst.msk [vmem:[%s145 + $0x108] sm:$0xff] %vm804, %v773
      %839 = vst.msk [vmem:[%s145 + $0x110] sm:$0xff] %vm804, %v774
      %840 = vst.msk [vmem:[%s145 + $0x118] sm:$0xff] %vm804, %v775
      %841 = vst.msk [vmem:[%s145 + $0x120] sm:$0xff] %vm804, %v776
      %842 = vst.msk [vmem:[%s145 + $0x128] sm:$0xff] %vm804, %v777
      %843 = vst.msk [vmem:[%s145 + $0x130] sm:$0xff] %vm804, %v778
      %844 = vst.msk [vmem:[%s145 + $0x138] sm:$0xff] %vm804, %v779
      %845 = vst.msk [vmem:[%s145 + $0x140] sm:$0xff] %vm804, %v780
      %846 = vst.msk [vmem:[%s145 + $0x148] sm:$0xff] %vm804, %v781
      %847 = vst.msk [vmem:[%s145 + $0x150] sm:$0xff] %vm804, %v782
      %848 = vst.msk [vmem:[%s145 + $0x158] sm:$0xff] %vm804, %v783
      %849 = vst.msk [vmem:[%s145 + $0x160] sm:$0xff] %vm804, %v784
      %850 = vst.msk [vmem:[%s145 + $0x168] sm:$0xff] %vm804, %v785
      %851 = vst.msk [vmem:[%s145 + $0x170] sm:$0xff] %vm804, %v786
      %852 = vst.msk [vmem:[%s145 + $0x178] sm:$0xff] %vm804, %v787
      %853 = vst.msk [vmem:[%s145 + $0x180] sm:$0xff] %vm804, %v788
      %854 = vst.msk [vmem:[%s145 + $0x188] sm:$0xff] %vm804, %v789
      %855 = vst.msk [vmem:[%s145 + $0x190] sm:$0xff] %vm804, %v790
      %856 = vst.msk [vmem:[%s145 + $0x198] sm:$0xff] %vm804, %v791
      %857 = vst.msk [vmem:[%s145 + $0x1a0] sm:$0xff] %vm804, %v792
      %858 = vst.msk [vmem:[%s145 + $0x1a8] sm:$0xff] %vm804, %v793
      %859 = vst.msk [vmem:[%s145 + $0x1b0] sm:$0xff] %vm804, %v794
      %860 = vst.msk [vmem:[%s145 + $0x1b8] sm:$0xff] %vm804, %v795
      %861 = vst.msk [vmem:[%s145 + $0x1c0] sm:$0xff] %vm804, %v796
      %862 = vst.msk [vmem:[%s145 + $0x1c8] sm:$0xff] %vm804, %v797
      %863 = vst.msk [vmem:[%s145 + $0x1d0] sm:$0xff] %vm804, %v798
      %864 = vst.msk [vmem:[%s145 + $0x1d8] sm:$0xff] %vm804, %v799
      %865 = vst.msk [vmem:[%s145 + $0x1e0] sm:$0xff] %vm804, %v800
      %866 = vst.msk [vmem:[%s145 + $0x1e8] sm:$0xff] %vm804, %v801
      %867 = vst.msk [vmem:[%s145 + $0x1f0] sm:$0xff] %vm804, %v802
      %868 = vst.msk [vmem:[%s145 + $0x1f8] sm:$0xff] %vm804, %v803
      %s869 = smul.u32 64, %s13
      %p870 = scmp.lt.s32.totalorder %s869, 255
      %s871 = scalar_select %p870, %s869, 255
      %s872 = smul.addr %s871, 8
      %s873 = scalar_lea.vmem %s2, %s872
      // Predicated region
      $region29: #{icml_d_forward.10} parent=27 // pred_check
        %p874 = pneg %p78
      $region30: #{icml_d_forward.10} parent=27 // pred_check_branch
        %876 = sbr.rel (%p874) target = $region32
      $region31: #{icml_d_forward.10} parent=27 // pred_region
        %s877 = smul.u32 64, %s13
      $region32: #{icml_d_forward.10} parent=27 // pred_fallthru
        _
    $region28: #{icml_d_forward.10} parent=5 // pred_fallthru
      _
    %p878 = scmp.le.s32.totalorder 2, %s8
    // Predicated region
    $region33: #{icml_d_forward.10} parent=5 // pred_check
      %p879 = pneg %p878
    $region34: #{icml_d_forward.10} parent=5 // pred_check_branch
      %881 = sbr.rel (%p879) target = $region36
    $region35: #{icml_d_forward.10} parent=5 // pred_region
      %s882 = ssub.s32 %s8, 2
      // Predicated region
      $region37: #{icml_d_forward.10} parent=35 // pred_check
        %p883 = pneg %p84
      $region38: #{icml_d_forward.10} parent=35 // pred_check_branch
        %885 = sbr.rel (%p883) target = $region40
      $region39: #{icml_d_forward.10} parent=35 // pred_region
        %s886 = smul.u32 64, %s14
        %p887 = scmp.lt.s32.totalorder %s886, 255
        %s888 = scalar_select %p887, %s886, 255
        %s889 = smul.addr %s888, 8
        %s890 = scalar_lea.vmem %s2, %s889
      $region40: #{icml_d_forward.10} parent=35 // pred_fallthru
        _
    $region36: #{icml_d_forward.10} parent=5 // pred_fallthru
      _
  $region6: #{icml_d_forward.10} parent=0 // loop_footer
    %s12 = sadd.s32 1, %s8
  $region7: #{icml_d_forward.10} parent=0 // loop_footer_branch
    %7 = sbr.rel target = $region3
  $region8: #{icml_d_forward.10} parent=0 // loop_exit
    _

// kernel: icml_d_forward.11
$region0: #{icml_d_forward.11}
  #allocation0 [shape = 'u32[]', space=smem, size = 0x4, offset = 0x4, fixed_abs, tag = 'smem constant byte address 0x4 - core index']
  #allocation1 [shape = 'u32[144,128]{1,0:T(1,128)}', space=vmem, size = 0x12000, scoped, tag = 'internal scratch']
  #allocation2 [shape = 'f32[512,16]{1,0:T(8,128)}', space=vmem, size = 0x40000, scoped, tag = 'scratch operand']
  %s0 = inlined_call_operand.vmem [shape: f32[512,128], index: 0, kind: input, shape index: {}]
  %s1 = inlined_call_operand.vmem [shape: f32[128,16], index: 1, kind: input, shape index: {}]
  %s2 = inlined_call_operand.vmem [shape: f32[1,16], index: 2, kind: input, shape index: {}]
  %s3 = inlined_call_operand.vmem [shape: f32[1,16], index: 3, kind: input, shape index: {}]
  %s4 = inlined_call_operand.vmem [shape: f32[512,16], index: 4, kind: output, shape index: {}]
  %s5 = sld [smem:[#allocation0]]
  $region53: #{icml_d_forward.11} parent=0
    _
  %s7 = ssub.s32 1, %s5
  %s8 = scalar_select 0, %s7, %s5
  loop: start=0, step=1, limit=4
  $region2: #{icml_d_forward.11} parent=0 // loop_pre_header
    _
  $region3: #{icml_d_forward.11} parent=0 // loop_header
    %s10 = sphi 0, %s14
    %p11 = scmp.ge.s32.totalorder %s10, 4
    %s20 = sphi 0, %s22
    %s23 = sphi 0, %s20
    %s24 = sphi 0, %s23
    %s40 = sphi 0, %s24
    %s44 = sphi 0, %s44
    %s46 = sphi 0, %s44
    %s47 = sphi 0, %s46
    %s61 = sphi 0, %s47
    %s65 = sphi 0, %s65
    %s67 = sphi 0, %s65
    %s68 = sphi 0, %s67
    %s82 = sphi 0, %s68
    %s86 = sphi 0, %s86
    %s88 = sphi 0, %s86
    %s89 = sphi 0, %s88
    %s103 = sphi 0, %s89
    %s107 = sphi 0, %s107
    %s109 = sphi 0, %s107
    %s110 = sphi 0, %s109
    %s124 = sphi 0, %s110
  $region4: #{icml_d_forward.11} parent=0 // loop_header_branch
    %13 = sbr.rel (%p11) target = $region8
  $region5: #{icml_d_forward.11} parent=0 // loop_body
    %s15 = ssub.s32 %s10, 1
    %s16 = ssub.s32 %s10, 2
    %s17 = sadd.s32 %s10, 1
    %s18 = ssub.s32 %s10, %s17
    %p19 = scmp.eq.s32.totalorder %s18, 0
    %s21 = sadd.s32 %s20, 1
    %s22 = scalar_select %p19, %s20, %s21
    %p25 = pneg %p19
    %p26 = scmp.eq.s32.totalorder %s10, 1
    %p27 = por %p25, %p26
    %p28 = scmp.ne.s32.totalorder %s20, %s23
    %p29 = scmp.eq.s32.totalorder %s10, 0
    %p30 = por %p28, %p29
    %p31 = scmp.ne.s32.totalorder %s20, %s23
    %p32 = scmp.eq.s32.totalorder %s15, 1
    %p33 = por %p31, %p32
    %p34 = scmp.ne.s32.totalorder %s23, %s24
    %p35 = scmp.eq.s32.totalorder %s15, 0
    %p36 = por %p34, %p35
    %p37 = scmp.ne.s32.totalorder %s23, %s24
    %p38 = scmp.eq.s32.totalorder %s16, 1
    %p39 = por %p37, %p38
    %p41 = scmp.ne.s32.totalorder %s24, %s40
    %p42 = scmp.eq.s32.totalorder %s16, 0
    %p43 = por %p41, %p42
    %s45 = sadd.s32 %s44, 1
    %p48 = scmp.eq.s32.totalorder %s10, 1
    %p49 = scmp.ne.s32.totalorder %s44, %s46
    %p50 = scmp.eq.s32.totalorder %s10, 0
    %p51 = por %p49, %p50
    %p52 = scmp.ne.s32.totalorder %s44, %s46
    %p53 = scmp.eq.s32.totalorder %s15, 1
    %p54 = por %p52, %p53
    %p55 = scmp.ne.s32.totalorder %s46, %s47
    %p56 = scmp.eq.s32.totalorder %s15, 0
    %p57 = por %p55, %p56
    %p58 = scmp.ne.s32.totalorder %s46, %s47
    %p59 = scmp.eq.s32.totalorder %s16, 1
    %p60 = por %p58, %p59
    %p62 = scmp.ne.s32.totalorder %s47, %s61
    %p63 = scmp.eq.s32.totalorder %s16, 0
    %p64 = por %p62, %p63
    %s66 = sadd.s32 %s65, 1
    %p69 = scmp.eq.s32.totalorder %s10, 1
    %p70 = scmp.ne.s32.totalorder %s65, %s67
    %p71 = scmp.eq.s32.totalorder %s10, 0
    %p72 = por %p70, %p71
    %p73 = scmp.ne.s32.totalorder %s65, %s67
    %p74 = scmp.eq.s32.totalorder %s15, 1
    %p75 = por %p73, %p74
    %p76 = scmp.ne.s32.totalorder %s67, %s68
    %p77 = scmp.eq.s32.totalorder %s15, 0
    %p78 = por %p76, %p77
    %p79 = scmp.ne.s32.totalorder %s67, %s68
    %p80 = scmp.eq.s32.totalorder %s16, 1
    %p81 = por %p79, %p80
    %p83 = scmp.ne.s32.totalorder %s68, %s82
    %p84 = scmp.eq.s32.totalorder %s16, 0
    %p85 = por %p83, %p84
    %s87 = sadd.s32 %s86, 1
    %p90 = scmp.eq.s32.totalorder %s10, 1
    %p91 = scmp.ne.s32.totalorder %s86, %s88
    %p92 = scmp.eq.s32.totalorder %s10, 0
    %p93 = por %p91, %p92
    %p94 = scmp.ne.s32.totalorder %s86, %s88
    %p95 = scmp.eq.s32.totalorder %s15, 1
    %p96 = por %p94, %p95
    %p97 = scmp.ne.s32.totalorder %s88, %s89
    %p98 = scmp.eq.s32.totalorder %s15, 0
    %p99 = por %p97, %p98
    %p100 = scmp.ne.s32.totalorder %s88, %s89
    %p101 = scmp.eq.s32.totalorder %s16, 1
    %p102 = por %p100, %p101
    %p104 = scmp.ne.s32.totalorder %s89, %s103
    %p105 = scmp.eq.s32.totalorder %s16, 0
    %p106 = por %p104, %p105
    %s108 = sadd.s32 %s107, 1
    %p111 = scmp.eq.s32.totalorder %s10, 1
    %p112 = scmp.ne.s32.totalorder %s107, %s109
    %p113 = scmp.eq.s32.totalorder %s10, 0
    %p114 = por %p112, %p113
    %p115 = scmp.ne.s32.totalorder %s107, %s109
    %p116 = scmp.eq.s32.totalorder %s15, 1
    %p117 = por %p115, %p116
    %p118 = scmp.ne.s32.totalorder %s109, %s110
    %p119 = scmp.eq.s32.totalorder %s15, 0
    %p120 = por %p118, %p119
    %p121 = scmp.ne.s32.totalorder %s109, %s110
    %p122 = scmp.eq.s32.totalorder %s16, 1
    %p123 = por %p121, %p122
    %p125 = scmp.ne.s32.totalorder %s110, %s124
    %p126 = scmp.eq.s32.totalorder %s16, 0
    %p127 = por %p125, %p126
    %p128 = scmp.le.s32.totalorder 1, %s10
    %p129 = scmp.lt.s32.totalorder %s10, 3
    %p130 = pnand %p128, %p129
    %p131 = pneg %p130
    // Predicated region
    $region9: #{icml_d_forward.11} parent=5 // pred_check
      _
    $region10: #{icml_d_forward.11} parent=5 // pred_check_branch
      %133 = sbr.rel (%p130) target = $region12
    $region11: #{icml_d_forward.11} parent=5 // pred_region
      %s134 = ssub.s32 %s10, 1
      // Predicated region
      $region13: #{icml_d_forward.11} parent=11 // pred_check
        %p135 = pneg %p57
      $region14: #{icml_d_forward.11} parent=11 // pred_check_branch
        %137 = sbr.rel (%p135) target = $region16
      $region15: #{icml_d_forward.11} parent=11 // pred_region
        _
      $region16: #{icml_d_forward.11} parent=11 // pred_fallthru
        _
      // Predicated region
      $region17: #{icml_d_forward.11} parent=11 // pred_check
        %p138 = pneg %p78
      $region18: #{icml_d_forward.11} parent=11 // pred_check_branch
        %140 = sbr.rel (%p138) target = $region20
      $region19: #{icml_d_forward.11} parent=11 // pred_region
        _
      $region20: #{icml_d_forward.11} parent=11 // pred_fallthru
        _
      // Predicated region
      $region21: #{icml_d_forward.11} parent=11 // pred_check
        %p141 = pneg %p99
      $region22: #{icml_d_forward.11} parent=11 // pred_check_branch
        %143 = sbr.rel (%p141) target = $region24
      $region23: #{icml_d_forward.11} parent=11 // pred_region
        _
      $region24: #{icml_d_forward.11} parent=11 // pred_fallthru
        _
    $region12: #{icml_d_forward.11} parent=5 // pred_fallthru
      _
    %p144 = scmp.lt.s32.totalorder %s10, 2
    // Predicated region
    $region25: #{icml_d_forward.11} parent=5 // pred_check
      %p145 = pneg %p144
    $region26: #{icml_d_forward.11} parent=5 // pred_check_branch
      %147 = sbr.rel (%p145) target = $region28
    $region27: #{icml_d_forward.11} parent=5 // pred_region
      // Predicated region
      $region29: #{icml_d_forward.11} parent=27 // pred_check
        %p148 = pneg %p30
      $region30: #{icml_d_forward.11} parent=27 // pred_check_branch
        %150 = sbr.rel (%p148) target = $region32
      $region31: #{icml_d_forward.11} parent=27 // pred_region
        %s151 = smul.u32 32, %s10
        %p152 = scmp.lt.s32.totalorder %s151, 63
        %s153 = scalar_select %p152, %s151, 63
        %s154 = smul.addr %s153, 8
        %s155 = scalar_lea.vmem %s0, %s154
        %s156 = smul.u32 32, %s10
      $region32: #{icml_d_forward.11} parent=27 // pred_fallthru
        _
    $region28: #{icml_d_forward.11} parent=5 // pred_fallthru
      _
    %p157 = scmp.le.s32.totalorder 1, %s10
    %p158 = scmp.lt.s32.totalorder %s10, 3
    %p159 = pnand %p157, %p158
    %p160 = pneg %p159
    // Predicated region
    $region33: #{icml_d_forward.11} parent=5 // pred_check
      _
    $region34: #{icml_d_forward.11} parent=5 // pred_check_branch
      %162 = sbr.rel (%p159) target = $region36
    $region35: #{icml_d_forward.11} parent=5 // pred_region
      %s163 = ssub.s32 %s10, 1
      %s164 = smul.u32 32, %s15
      %p165 = scmp.lt.s32.totalorder %s164, 63
      %s166 = scalar_select %p165, %s164, 63
      %s167 = smul.addr %s166, 8
      %s168 = scalar_lea.vmem %s0, %s167
      %p169 = pneg %p36
      %p170 = pneg %p33
      %p171 = pneg %p57
      %p172 = pneg %p54
      %p173 = pneg %p78
      %p174 = pneg %p75
      %p175 = pneg %p99
      %p176 = pneg %p96
      %p177 = pneg %p120
      %p178 = pneg %p117
      %s179 = smul.u32 32, %s15
      %p180 = scmp.lt.s32.totalorder %s179, 63
      %s181 = scalar_select %p180, %s179, 63
      %s182 = smul.addr %s181, 8
      %s183 = scalar_lea.vmem %s0, %s182
      %s184 = smul.u32 32, %s15
      %v185 = vld [vmem:[%s183] sm:$0xff]
      %v186 = vld [vmem:[%s183 + $0x8] sm:$0xff]
      %v187 = vld [vmem:[%s183 + $0x10] sm:$0xff]
      %v188 = vld [vmem:[%s183 + $0x18] sm:$0xff]
      %v189 = vld [vmem:[%s183 + $0x20] sm:$0xff]
      %v190 = vld [vmem:[%s183 + $0x28] sm:$0xff]
      %v191 = vld [vmem:[%s183 + $0x30] sm:$0xff]
      %v192 = vld [vmem:[%s183 + $0x38] sm:$0xff]
      %v193 = vld [vmem:[%s183 + $0x40] sm:$0xff]
      %v194 = vld [vmem:[%s183 + $0x48] sm:$0xff]
      %v195 = vld [vmem:[%s183 + $0x50] sm:$0xff]
      %v196 = vld [vmem:[%s183 + $0x58] sm:$0xff]
      %v197 = vld [vmem:[%s183 + $0x60] sm:$0xff]
      %v198 = vld [vmem:[%s183 + $0x68] sm:$0xff]
      %v199 = vld [vmem:[%s183 + $0x70] sm:$0xff]
      %v200 = vld [vmem:[%s183 + $0x78] sm:$0xff]
      %v201 = vld [vmem:[%s183 + $0x80] sm:$0xff]
      %v202 = vld [vmem:[%s183 + $0x88] sm:$0xff]
      %v203 = vld [vmem:[%s183 + $0x90] sm:$0xff]
      %v204 = vld [vmem:[%s183 + $0x98] sm:$0xff]
      %v205 = vld [vmem:[%s183 + $0xa0] sm:$0xff]
      %v206 = vld [vmem:[%s183 + $0xa8] sm:$0xff]
      %v207 = vld [vmem:[%s183 + $0xb0] sm:$0xff]
      %v208 = vld [vmem:[%s183 + $0xb8] sm:$0xff]
      %v209 = vld [vmem:[%s183 + $0xc0] sm:$0xff]
      %v210 = vld [vmem:[%s183 + $0xc8] sm:$0xff]
      %v211 = vld [vmem:[%s183 + $0xd0] sm:$0xff]
      %v212 = vld [vmem:[%s183 + $0xd8] sm:$0xff]
      %v213 = vld [vmem:[%s183 + $0xe0] sm:$0xff]
      %v214 = vld [vmem:[%s183 + $0xe8] sm:$0xff]
      %v215 = vld [vmem:[%s183 + $0xf0] sm:$0xff]
      %v216 = vld [vmem:[%s183 + $0xf8] sm:$0xff]
      %v217 = vld [vmem:[%s1] sm:$0xff]
      %v218 = vld [vmem:[%s1 + $0x8] sm:$0xff]
      %v219 = vld [vmem:[%s1 + $0x10] sm:$0xff]
      %v220 = vld [vmem:[%s1 + $0x18] sm:$0xff]
      %v221 = vld [vmem:[%s1 + $0x20] sm:$0xff]
      %v222 = vld [vmem:[%s1 + $0x28] sm:$0xff]
      %v223 = vld [vmem:[%s1 + $0x30] sm:$0xff]
      %v224 = vld [vmem:[%s1 + $0x38] sm:$0xff]
      %v225 = vld [vmem:[%s1 + $0x40] sm:$0xff]
      %v226 = vld [vmem:[%s1 + $0x48] sm:$0xff]
      %v227 = vld [vmem:[%s1 + $0x50] sm:$0xff]
      %v228 = vld [vmem:[%s1 + $0x58] sm:$0xff]
      %v229 = vld [vmem:[%s1 + $0x60] sm:$0xff]
      %v230 = vld [vmem:[%s1 + $0x68] sm:$0xff]
      %v231 = vld [vmem:[%s1 + $0x70] sm:$0xff]
      %v232 = vld [vmem:[%s1 + $0x78] sm:$0xff]
      %233 = vmatprep.subr.mxu0 0.0
      %234 = vmatpush1.msra.mxu0 %v217
      %235 = vmatprep.subr.mxu0 0.0
      %236 = vmatpush1.msra.mxu0 %v218
      %237 = vmatprep.subr.mxu0 0.0
      %238 = vmatpush1.msra.mxu0 %v219
      %239 = vmatprep.subr.mxu0 0.0
      %240 = vmatpush1.msra.mxu0 %v220
      %241 = vmatprep.subr.mxu0 0.0
      %242 = vmatpush1.msra.mxu0 %v221
      %243 = vmatprep.subr.mxu0 0.0
      %244 = vmatpush1.msra.mxu0 %v222
      %245 = vmatprep.subr.mxu0 0.0
      %246 = vmatpush1.msra.mxu0 %v223
      %247 = vmatprep.subr.mxu0 0.0
      %248 = vmatpush1.msra.mxu0 %v224
      %249 = vmatprep.subr.mxu0 0.0
      %250 = vmatpush1.msra.mxu0 %v225
      %251 = vmatprep.subr.mxu0 0.0
      %252 = vmatpush1.msra.mxu0 %v226
      %253 = vmatprep.subr.mxu0 0.0
      %254 = vmatpush1.msra.mxu0 %v227
      %255 = vmatprep.subr.mxu0 0.0
      %256 = vmatpush1.msra.mxu0 %v228
      %257 = vmatprep.subr.mxu0 0.0
      %258 = vmatpush1.msra.mxu0 %v229
      %259 = vmatprep.subr.mxu0 0.0
      %260 = vmatpush1.msra.mxu0 %v230
      %261 = vmatprep.subr.mxu0 0.0
      %262 = vmatpush1.msra.mxu0 %v231
      %263 = vmatprep.subr.mxu0 0.0
      %264 = vmatpush1.msra.mxu0 %v232
      %265 = vmatprep.subr.mxu0 0.0
      %266 = vmatpush1.msra.mxu0 0.0
      %267 = vmatprep.subr.mxu0 0.0
      %268 = vmatpush1.msra.mxu0 0.0
      %269 = vmatprep.subr.mxu0 0.0
      %270 = vmatpush1.msra.mxu0 0.0
      %271 = vmatprep.subr.mxu0 0.0
      %272 = vmatpush1.msra.mxu0 0.0
      %273 = vmatprep.subr.mxu0 0.0
      %274 = vmatpush1.msra.mxu0 0.0
      %275 = vmatprep.subr.mxu0 0.0
      %276 = vmatpush1.msra.mxu0 0.0
      %277 = vmatprep.subr.mxu0 0.0
      %278 = vmatpush1.msra.mxu0 0.0
      %279 = vmatprep.subr.mxu0 0.0
      %280 = vmatpush1.msra.mxu0 0.0
      %281 = vmatprep.subr.mxu0 0.0
      %282 = vmatpush1.msra.mxu0 0.0
      %283 = vmatprep.subr.mxu0 0.0
      %284 = vmatpush1.msra.mxu0 0.0
      %285 = vmatprep.subr.mxu0 0.0
      %286 = vmatpush1.msra.mxu0 0.0
      %287 = vmatprep.subr.mxu0 0.0
      %288 = vmatpush1.msra.mxu0 0.0
      %289 = vmatprep.subr.mxu0 0.0
      %290 = vmatpush1.msra.mxu0 0.0
      %291 = vmatprep.subr.mxu0 0.0
      %292 = vmatpush1.msra.mxu0 0.0
      %293 = vmatprep.subr.mxu0 0.0
      %294 = vmatpush1.msra.mxu0 0.0
      %295 = vmatprep.subr.mxu0 0.0
      %296 = vmatpush1.msra.mxu0 0.0
      %297 = vmatprep.mubr.f32.mxu0 0.0
      %298 = vmatmul.mubr.f32.gmra.mrb[0].mxu0 %v185
      %v299 = vpop.f32.mrb[0].mxu0
      %v300 = vadd.f32 0.0, %v299
      %v301 = vpop.f32.mrb[0].mxu0
      %302 = vmatprep.mubr.f32.mxu0 0.0
      %303 = vmatmul.mubr.f32.gmra.mrb[0].mxu0 %v186
      %v304 = vpop.f32.mrb[0].mxu0
      %v305 = vadd.f32 0.0, %v304
      %v306 = vpop.f32.mrb[0].mxu0
      %307 = vmatprep.mubr.f32.mxu0 0.0
      %308 = vmatmul.mubr.f32.gmra.mrb[0].mxu0 %v187
      %v309 = vpop.f32.mrb[0].mxu0
      %v310 = vadd.f32 0.0, %v309
      %v311 = vpop.f32.mrb[0].mxu0
      %312 = vmatprep.mubr.f32.mxu0 0.0
      %313 = vmatmul.mubr.f32.gmra.mrb[0].mxu0 %v188
      %v314 = vpop.f32.mrb[0].mxu0
      %v315 = vadd.f32 0.0, %v314
      %v316 = vpop.f32.mrb[0].mxu0
      %317 = vmatprep.mubr.f32.mxu0 0.0
      %318 = vmatmul.mubr.f32.gmra.mrb[0].mxu0 %v189
      %v319 = vpop.f32.mrb[0].mxu0
      %v320 = vadd.f32 0.0, %v319
      %v321 = vpop.f32.mrb[0].mxu0
      %322 = vmatprep.mubr.f32.mxu0 0.0
      %323 = vmatmul.mubr.f32.gmra.mrb[0].mxu0 %v190
      %v324 = vpop.f32.mrb[0].mxu0
      %v325 = vadd.f32 0.0, %v324
      %v326 = vpop.f32.mrb[0].mxu0
      %327 = vmatprep.mubr.f32.mxu0 0.0
      %328 = vmatmul.mubr.f32.gmra.mrb[0].mxu0 %v191
      %v329 = vpop.f32.mrb[0].mxu0
      %v330 = vadd.f32 0.0, %v329
      %v331 = vpop.f32.mrb[0].mxu0
      %332 = vmatprep.mubr.f32.mxu0 0.0
      %333 = vmatmul.mubr.f32.gmra.mrb[0].mxu0 %v192
      %v334 = vpop.f32.mrb[0].mxu0
      %v335 = vadd.f32 0.0, %v334
      %v336 = vpop.f32.mrb[0].mxu0
      %337 = vmatprep.mubr.f32.mxu0 0.0
      %338 = vmatmul.mubr.f32.gmra.mrb[0].mxu0 %v193
      %v339 = vpop.f32.mrb[0].mxu0
      %v340 = vadd.f32 0.0, %v339
      %v341 = vpop.f32.mrb[0].mxu0
      %342 = vmatprep.mubr.f32.mxu0 0.0
      %343 = vmatmul.mubr.f32.gmra.mrb[0].mxu0 %v194
      %v344 = vpop.f32.mrb[0].mxu0
      %v345 = vadd.f32 0.0, %v344
      %v346 = vpop.f32.mrb[0].mxu0
      %347 = vmatprep.mubr.f32.mxu0 0.0
      %348 = vmatmul.mubr.f32.gmra.mrb[0].mxu0 %v195
      %v349 = vpop.f32.mrb[0].mxu0
      %v350 = vadd.f32 0.0, %v349
      %v351 = vpop.f32.mrb[0].mxu0
      %352 = vmatprep.mubr.f32.mxu0 0.0
      %353 = vmatmul.mubr.f32.gmra.mrb[0].mxu0 %v196
      %v354 = vpop.f32.mrb[0].mxu0
      %v355 = vadd.f32 0.0, %v354
      %v356 = vpop.f32.mrb[0].mxu0
      %357 = vmatprep.mubr.f32.mxu0 0.0
      %358 = vmatmul.mubr.f32.gmra.mrb[0].mxu0 %v197
      %v359 = vpop.f32.mrb[0].mxu0
      %v360 = vadd.f32 0.0, %v359
      %v361 = vpop.f32.mrb[0].mxu0
      %362 = vmatprep.mubr.f32.mxu0 0.0
      %363 = vmatmul.mubr.f32.gmra.mrb[0].mxu0 %v198
      %v364 = vpop.f32.mrb[0].mxu0
      %v365 = vadd.f32 0.0, %v364
      %v366 = vpop.f32.mrb[0].mxu0
      %367 = vmatprep.mubr.f32.mxu0 0.0
      %368 = vmatmul.mubr.f32.gmra.mrb[0].mxu0 %v199
      %v369 = vpop.f32.mrb[0].mxu0
      %v370 = vadd.f32 0.0, %v369
      %v371 = vpop.f32.mrb[0].mxu0
      %372 = vmatprep.mubr.f32.mxu0 0.0
      %373 = vmatmul.mubr.f32.gmra.mrb[0].mxu0 %v200
      %v374 = vpop.f32.mrb[0].mxu0
      %v375 = vadd.f32 0.0, %v374
      %v376 = vpop.f32.mrb[0].mxu0
      %377 = vmatprep.mubr.f32.mxu0 0.0
      %378 = vmatmul.mubr.f32.gmra.mrb[0].mxu0 %v201
      %v379 = vpop.f32.mrb[0].mxu0
      %v380 = vadd.f32 0.0, %v379
      %v381 = vpop.f32.mrb[0].mxu0
      %382 = vmatprep.mubr.f32.mxu0 0.0
      %383 = vmatmul.mubr.f32.gmra.mrb[0].mxu0 %v202
      %v384 = vpop.f32.mrb[0].mxu0
      %v385 = vadd.f32 0.0, %v384
      %v386 = vpop.f32.mrb[0].mxu0
      %387 = vmatprep.mubr.f32.mxu0 0.0
      %388 = vmatmul.mubr.f32.gmra.mrb[0].mxu0 %v203
      %v389 = vpop.f32.mrb[0].mxu0
      %v390 = vadd.f32 0.0, %v389
      %v391 = vpop.f32.mrb[0].mxu0
      %392 = vmatprep.mubr.f32.mxu0 0.0
      %393 = vmatmul.mubr.f32.gmra.mrb[0].mxu0 %v204
      %v394 = vpop.f32.mrb[0].mxu0
      %v395 = vadd.f32 0.0, %v394
      %v396 = vpop.f32.mrb[0].mxu0
      %397 = vmatprep.mubr.f32.mxu0 0.0
      %398 = vmatmul.mubr.f32.gmra.mrb[0].mxu0 %v205
      %v399 = vpop.f32.mrb[0].mxu0
      %v400 = vadd.f32 0.0, %v399
      %v401 = vpop.f32.mrb[0].mxu0
      %402 = vmatprep.mubr.f32.mxu0 0.0
      %403 = vmatmul.mubr.f32.gmra.mrb[0].mxu0 %v206
      %v404 = vpop.f32.mrb[0].mxu0
      %v405 = vadd.f32 0.0, %v404
      %v406 = vpop.f32.mrb[0].mxu0
      %407 = vmatprep.mubr.f32.mxu0 0.0
      %408 = vmatmul.mubr.f32.gmra.mrb[0].mxu0 %v207
      %v409 = vpop.f32.mrb[0].mxu0
      %v410 = vadd.f32 0.0, %v409
      %v411 = vpop.f32.mrb[0].mxu0
      %412 = vmatprep.mubr.f32.mxu0 0.0
      %413 = vmatmul.mubr.f32.gmra.mrb[0].mxu0 %v208
      %v414 = vpop.f32.mrb[0].mxu0
      %v415 = vadd.f32 0.0, %v414
      %v416 = vpop.f32.mrb[0].mxu0
      %417 = vmatprep.mubr.f32.mxu0 0.0
      %418 = vmatmul.mubr.f32.gmra.mrb[0].mxu0 %v209
      %v419 = vpop.f32.mrb[0].mxu0
      %v420 = vadd.f32 0.0, %v419
      %v421 = vpop.f32.mrb[0].mxu0
      %422 = vmatprep.mubr.f32.mxu0 0.0
      %423 = vmatmul.mubr.f32.gmra.mrb[0].mxu0 %v210
      %v424 = vpop.f32.mrb[0].mxu0
      %v425 = vadd.f32 0.0, %v424
      %v426 = vpop.f32.mrb[0].mxu0
      %427 = vmatprep.mubr.f32.mxu0 0.0
      %428 = vmatmul.mubr.f32.gmra.mrb[0].mxu0 %v211
      %v429 = vpop.f32.mrb[0].mxu0
      %v430 = vadd.f32 0.0, %v429
      %v431 = vpop.f32.mrb[0].mxu0
      %432 = vmatprep.mubr.f32.mxu0 0.0
      %433 = vmatmul.mubr.f32.gmra.mrb[0].mxu0 %v212
      %v434 = vpop.f32.mrb[0].mxu0
      %v435 = vadd.f32 0.0, %v434
      %v436 = vpop.f32.mrb[0].mxu0
      %437 = vmatprep.mubr.f32.mxu0 0.0
      %438 = vmatmul.mubr.f32.gmra.mrb[0].mxu0 %v213
      %v439 = vpop.f32.mrb[0].mxu0
      %v440 = vadd.f32 0.0, %v439
      %v441 = vpop.f32.mrb[0].mxu0
      %442 = vmatprep.mubr.f32.mxu0 0.0
      %443 = vmatmul.mubr.f32.gmra.mrb[0].mxu0 %v214
      %v444 = vpop.f32.mrb[0].mxu0
      %v445 = vadd.f32 0.0, %v444
      %v446 = vpop.f32.mrb[0].mxu0
      %447 = vmatprep.mubr.f32.mxu0 0.0
      %448 = vmatmul.mubr.f32.gmra.mrb[0].mxu0 %v215
      %v449 = vpop.f32.mrb[0].mxu0
      %v450 = vadd.f32 0.0, %v449
      %v451 = vpop.f32.mrb[0].mxu0
      %452 = vmatprep.mubr.f32.mxu0 0.0
      %453 = vmatmul.mubr.f32.gmra.mrb[0].mxu0 %v216
      %v454 = vpop.f32.mrb[0].mxu0
      %v455 = vadd.f32 0.0, %v454
      %v456 = vpop.f32.mrb[0].mxu0
      %457 = vdwg.mxu0
      %s458 = smul.u32 %s15, 256
      %s459 = scalar_lea.vmem [#allocation2], %s458
      %vm460 = vcmask 130048
      %461 = vst.msk [vmem:[%s459] sm:$0xff] %vm460, %v300
      %462 = vst.msk [vmem:[%s459 + $0x8] sm:$0xff] %vm460, %v305
      %463 = vst.msk [vmem:[%s459 + $0x10] sm:$0xff] %vm460, %v310
      %464 = vst.msk [vmem:[%s459 + $0x18] sm:$0xff] %vm460, %v315
      %465 = vst.msk [vmem:[%s459 + $0x20] sm:$0xff] %vm460, %v320
      %466 = vst.msk [vmem:[%s459 + $0x28] sm:$0xff] %vm460, %v325
      %467 = vst.msk [vmem:[%s459 + $0x30] sm:$0xff] %vm460, %v330
      %468 = vst.msk [vmem:[%s459 + $0x38] sm:$0xff] %vm460, %v335
      %469 = vst.msk [vmem:[%s459 + $0x40] sm:$0xff] %vm460, %v340
      %470 = vst.msk [vmem:[%s459 + $0x48] sm:$0xff] %vm460, %v345
      %471 = vst.msk [vmem:[%s459 + $0x50] sm:$0xff] %vm460, %v350
      %472 = vst.msk [vmem:[%s459 + $0x58] sm:$0xff] %vm460, %v355
      %473 = vst.msk [vmem:[%s459 + $0x60] sm:$0xff] %vm460, %v360
      %474 = vst.msk [vmem:[%s459 + $0x68] sm:$0xff] %vm460, %v365
      %475 = vst.msk [vmem:[%s459 + $0x70] sm:$0xff] %vm460, %v370
      %476 = vst.msk [vmem:[%s459 + $0x78] sm:$0xff] %vm460, %v375
      %477 = vst.msk [vmem:[%s459 + $0x80] sm:$0xff] %vm460, %v380
      %478 = vst.msk [vmem:[%s459 + $0x88] sm:$0xff] %vm460, %v385
      %479 = vst.msk [vmem:[%s459 + $0x90] sm:$0xff] %vm460, %v390
      %480 = vst.msk [vmem:[%s459 + $0x98] sm:$0xff] %vm460, %v395
      %481 = vst.msk [vmem:[%s459 + $0xa0] sm:$0xff] %vm460, %v400
      %482 = vst.msk [vmem:[%s459 + $0xa8] sm:$0xff] %vm460, %v405
      %483 = vst.msk [vmem:[%s459 + $0xb0] sm:$0xff] %vm460, %v410
      %484 = vst.msk [vmem:[%s459 + $0xb8] sm:$0xff] %vm460, %v415
      %485 = vst.msk [vmem:[%s459 + $0xc0] sm:$0xff] %vm460, %v420
      %486 = vst.msk [vmem:[%s459 + $0xc8] sm:$0xff] %vm460, %v425
      %487 = vst.msk [vmem:[%s459 + $0xd0] sm:$0xff] %vm460, %v430
      %488 = vst.msk [vmem:[%s459 + $0xd8] sm:$0xff] %vm460, %v435
      %489 = vst.msk [vmem:[%s459 + $0xe0] sm:$0xff] %vm460, %v440
      %490 = vst.msk [vmem:[%s459 + $0xe8] sm:$0xff] %vm460, %v445
      %491 = vst.msk [vmem:[%s459 + $0xf0] sm:$0xff] %vm460, %v450
      %492 = vst.msk [vmem:[%s459 + $0xf8] sm:$0xff] %vm460, %v455
      %p493 = scmp.eq.s32.totalorder %s15, 1
      // Predicated region
      $region37: #{icml_d_forward.11} parent=35 // pred_check
        %p494 = pneg %p493
      $region38: #{icml_d_forward.11} parent=35 // pred_check_branch
        %496 = sbr.rel (%p494) target = $region40
      $region39: #{icml_d_forward.11} parent=35 // pred_region
        %v497 = vld [vmem:[#allocation2] sm:$0xff]
        %v498 = vld [vmem:[#allocation2 + $0x8] sm:$0xff]
        %v499 = vld [vmem:[#allocation2 + $0x10] sm:$0xff]
        %v500 = vld [vmem:[#allocation2 + $0x18] sm:$0xff]
        %v501 = vld [vmem:[#allocation2 + $0x20] sm:$0xff]
        %v502 = vld [vmem:[#allocation2 + $0x28] sm:$0xff]
        %v503 = vld [vmem:[#allocation2 + $0x30] sm:$0xff]
        %v504 = vld [vmem:[#allocation2 + $0x38] sm:$0xff]
        %v505 = vld [vmem:[#allocation2 + $0x40] sm:$0xff]
        %v506 = vld [vmem:[#allocation2 + $0x48] sm:$0xff]
        %v507 = vld [vmem:[#allocation2 + $0x50] sm:$0xff]
        %v508 = vld [vmem:[#allocation2 + $0x58] sm:$0xff]
        %v509 = vld [vmem:[#allocation2 + $0x60] sm:$0xff]
        %v510 = vld [vmem:[#allocation2 + $0x68] sm:$0xff]
        %v511 = vld [vmem:[#allocation2 + $0x70] sm:$0xff]
        %v512 = vld [vmem:[#allocation2 + $0x78] sm:$0xff]
        %v513 = vld [vmem:[#allocation2 + $0x80] sm:$0xff]
        %v514 = vld [vmem:[#allocation2 + $0x88] sm:$0xff]
        %v515 = vld [vmem:[#allocation2 + $0x90] sm:$0xff]
        %v516 = vld [vmem:[#allocation2 + $0x98] sm:$0xff]
        %v517 = vld [vmem:[#allocation2 + $0xa0] sm:$0xff]
        %v518 = vld [vmem:[#allocation2 + $0xa8] sm:$0xff]
        %v519 = vld [vmem:[#allocation2 + $0xb0] sm:$0xff]
        %v520 = vld [vmem:[#allocation2 + $0xb8] sm:$0xff]
        %v521 = vld [vmem:[#allocation2 + $0xc0] sm:$0xff]
        %v522 = vld [vmem:[#allocation2 + $0xc8] sm:$0xff]
        %v523 = vld [vmem:[#allocation2 + $0xd0] sm:$0xff]
        %v524 = vld [vmem:[#allocation2 + $0xd8] sm:$0xff]
        %v525 = vld [vmem:[#allocation2 + $0xe0] sm:$0xff]
        %v526 = vld [vmem:[#allocation2 + $0xe8] sm:$0xff]
        %v527 = vld [vmem:[#allocation2 + $0xf0] sm:$0xff]
        %v528 = vld [vmem:[#allocation2 + $0xf8] sm:$0xff]
        %v529 = vld [vmem:[#allocation2 + $0x100] sm:$0xff]
        %v530 = vld [vmem:[#allocation2 + $0x108] sm:$0xff]
        %v531 = vld [vmem:[#allocation2 + $0x110] sm:$0xff]
        %v532 = vld [vmem:[#allocation2 + $0x118] sm:$0xff]
        %v533 = vld [vmem:[#allocation2 + $0x120] sm:$0xff]
        %v534 = vld [vmem:[#allocation2 + $0x128] sm:$0xff]
        %v535 = vld [vmem:[#allocation2 + $0x130] sm:$0xff]
        %v536 = vld [vmem:[#allocation2 + $0x138] sm:$0xff]
        %v537 = vld [vmem:[#allocation2 + $0x140] sm:$0xff]
        %v538 = vld [vmem:[#allocation2 + $0x148] sm:$0xff]
        %v539 = vld [vmem:[#allocation2 + $0x150] sm:$0xff]
        %v540 = vld [vmem:[#allocation2 + $0x158] sm:$0xff]
        %v541 = vld [vmem:[#allocation2 + $0x160] sm:$0xff]
        %v542 = vld [vmem:[#allocation2 + $0x168] sm:$0xff]
        %v543 = vld [vmem:[#allocation2 + $0x170] sm:$0xff]
        %v544 = vld [vmem:[#allocation2 + $0x178] sm:$0xff]
        %v545 = vld [vmem:[#allocation2 + $0x180] sm:$0xff]
        %v546 = vld [vmem:[#allocation2 + $0x188] sm:$0xff]
        %v547 = vld [vmem:[#allocation2 + $0x190] sm:$0xff]
        %v548 = vld [vmem:[#allocation2 + $0x198] sm:$0xff]
        %v549 = vld [vmem:[#allocation2 + $0x1a0] sm:$0xff]
        %v550 = vld [vmem:[#allocation2 + $0x1a8] sm:$0xff]
        %v551 = vld [vmem:[#allocation2 + $0x1b0] sm:$0xff]
        %v552 = vld [vmem:[#allocation2 + $0x1b8] sm:$0xff]
        %v553 = vld [vmem:[#allocation2 + $0x1c0] sm:$0xff]
        %v554 = vld [vmem:[#allocation2 + $0x1c8] sm:$0xff]
        %v555 = vld [vmem:[#allocation2 + $0x1d0] sm:$0xff]
        %v556 = vld [vmem:[#allocation2 + $0x1d8] sm:$0xff]
        %v557 = vld [vmem:[#allocation2 + $0x1e0] sm:$0xff]
        %v558 = vld [vmem:[#allocation2 + $0x1e8] sm:$0xff]
        %v559 = vld [vmem:[#allocation2 + $0x1f0] sm:$0xff]
        %v560 = vld [vmem:[#allocation2 + $0x1f8] sm:$0xff]
        %v561 = vsel %vm460, %v497, 0.0
        %v562 = vsel %vm460, %v498, 0.0
        %v563 = vadd.f32 %v561, %v562
        %v564 = vsel %vm460, %v499, 0.0
        %v565 = vadd.f32 %v563, %v564
        %v566 = vsel %vm460, %v500, 0.0
        %v567 = vadd.f32 %v565, %v566
        %v568 = vsel %vm460, %v501, 0.0
        %v569 = vadd.f32 %v567, %v568
        %v570 = vsel %vm460, %v502, 0.0
        %v571 = vadd.f32 %v569, %v570
        %v572 = vsel %vm460, %v503, 0.0
        %v573 = vadd.f32 %v571, %v572
        %v574 = vsel %vm460, %v504, 0.0
        %v575 = vadd.f32 %v573, %v574
        %v576 = vsel %vm460, %v505, 0.0
        %v577 = vadd.f32 %v575, %v576
        %v578 = vsel %vm460, %v506, 0.0
        %v579 = vadd.f32 %v577, %v578
        %v580 = vsel %vm460, %v507, 0.0
        %v581 = vadd.f32 %v579, %v580
        %v582 = vsel %vm460, %v508, 0.0
        %v583 = vadd.f32 %v581, %v582
        %v584 = vsel %vm460, %v509, 0.0
        %v585 = vadd.f32 %v583, %v584
        %v586 = vsel %vm460, %v510, 0.0
        %v587 = vadd.f32 %v585, %v586
        %v588 = vsel %vm460, %v511, 0.0
        %v589 = vadd.f32 %v587, %v588
        %v590 = vsel %vm460, %v512, 0.0
        %v591 = vadd.f32 %v589, %v590
        %v592 = vsel %vm460, %v513, 0.0
        %v593 = vadd.f32 %v591, %v592
        %v594 = vsel %vm460, %v514, 0.0
        %v595 = vadd.f32 %v593, %v594
        %v596 = vsel %vm460, %v515, 0.0
        %v597 = vadd.f32 %v595, %v596
        %v598 = vsel %vm460, %v516, 0.0
        %v599 = vadd.f32 %v597, %v598
        %v600 = vsel %vm460, %v517, 0.0
        %v601 = vadd.f32 %v599, %v600
        %v602 = vsel %vm460, %v518, 0.0
        %v603 = vadd.f32 %v601, %v602
        %v604 = vsel %vm460, %v519, 0.0
        %v605 = vadd.f32 %v603, %v604
        %v606 = vsel %vm460, %v520, 0.0
        %v607 = vadd.f32 %v605, %v606
        %v608 = vsel %vm460, %v521, 0.0
        %v609 = vadd.f32 %v607, %v608
        %v610 = vsel %vm460, %v522, 0.0
        %v611 = vadd.f32 %v609, %v610
        %v612 = vsel %vm460, %v523, 0.0
        %v613 = vadd.f32 %v611, %v612
        %v614 = vsel %vm460, %v524, 0.0
        %v615 = vadd.f32 %v613, %v614
        %v616 = vsel %vm460, %v525, 0.0
        %v617 = vadd.f32 %v615, %v616
        %v618 = vsel %vm460, %v526, 0.0
        %v619 = vadd.f32 %v617, %v618
        %v620 = vsel %vm460, %v527, 0.0
        %v621 = vadd.f32 %v619, %v620
        %v622 = vsel %vm460, %v528, 0.0
        %v623 = vadd.f32 %v621, %v622
        %v624 = vsel %vm460, %v529, 0.0
        %v625 = vadd.f32 %v623, %v624
        %v626 = vsel %vm460, %v530, 0.0
        %v627 = vadd.f32 %v625, %v626
        %v628 = vsel %vm460, %v531, 0.0
        %v629 = vadd.f32 %v627, %v628
        %v630 = vsel %vm460, %v532, 0.0
        %v631 = vadd.f32 %v629, %v630
        %v632 = vsel %vm460, %v533, 0.0
        %v633 = vadd.f32 %v631, %v632
        %v634 = vsel %vm460, %v534, 0.0
        %v635 = vadd.f32 %v633, %v634
        %v636 = vsel %vm460, %v535, 0.0
        %v637 = vadd.f32 %v635, %v636
        %v638 = vsel %vm460, %v536, 0.0
        %v639 = vadd.f32 %v637, %v638
        %v640 = vsel %vm460, %v537, 0.0
        %v641 = vadd.f32 %v639, %v640
        %v642 = vsel %vm460, %v538, 0.0
        %v643 = vadd.f32 %v641, %v642
        %v644 = vsel %vm460, %v539, 0.0
        %v645 = vadd.f32 %v643, %v644
        %v646 = vsel %vm460, %v540, 0.0
        %v647 = vadd.f32 %v645, %v646
        %v648 = vsel %vm460, %v541, 0.0
        %v649 = vadd.f32 %v647, %v648
        %v650 = vsel %vm460, %v542, 0.0
        %v651 = vadd.f32 %v649, %v650
        %v652 = vsel %vm460, %v543, 0.0
        %v653 = vadd.f32 %v651, %v652
        %v654 = vsel %vm460, %v544, 0.0
        %v655 = vadd.f32 %v653, %v654
        %v656 = vsel %vm460, %v545, 0.0
        %v657 = vadd.f32 %v655, %v656
        %v658 = vsel %vm460, %v546, 0.0
        %v659 = vadd.f32 %v657, %v658
        %v660 = vsel %vm460, %v547, 0.0
        %v661 = vadd.f32 %v659, %v660
        %v662 = vsel %vm460, %v548, 0.0
        %v663 = vadd.f32 %v661, %v662
        %v664 = vsel %vm460, %v549, 0.0
        %v665 = vadd.f32 %v663, %v664
        %v666 = vsel %vm460, %v550, 0.0
        %v667 = vadd.f32 %v665, %v666
        %v668 = vsel %vm460, %v551, 0.0
        %v669 = vadd.f32 %v667, %v668
        %v670 = vsel %vm460, %v552, 0.0
        %v671 = vadd.f32 %v669, %v670
        %v672 = vsel %vm460, %v553, 0.0
        %v673 = vadd.f32 %v671, %v672
        %v674 = vsel %vm460, %v554, 0.0
        %v675 = vadd.f32 %v673, %v674
        %v676 = vsel %vm460, %v555, 0.0
        %v677 = vadd.f32 %v675, %v676
        %v678 = vsel %vm460, %v556, 0.0
        %v679 = vadd.f32 %v677, %v678
        %v680 = vsel %vm460, %v557, 0.0
        %v681 = vadd.f32 %v679, %v680
        %v682 = vsel %vm460, %v558, 0.0
        %v683 = vadd.f32 %v681, %v682
        %v684 = vsel %vm460, %v559, 0.0
        %v685 = vadd.f32 %v683, %v684
        %v686 = vsel %vm460, %v560, 0.0
        %v687 = vadd.f32 %v685, %v686
        %v688 = vrot.slane %v687, 4
        %v689 = vadd.f32 %v687, %v688
        %v690 = vrot.slane %v689, 2
        %v691 = vadd.f32 %v689, %v690
        %v692 = vrot.slane %v691, 1
        %v693 = vadd.f32 %v691, %v692
        %v694 = vrcp.pop 512.0
        %v695 = vmul.f32 %v693, %v694
        %v696 = vsub.f32 %v497, %v695
        %v697 = vsub.f32 %v498, %v695
        %v698 = vsub.f32 %v499, %v695
        %v699 = vsub.f32 %v500, %v695
        %v700 = vsub.f32 %v501, %v695
        %v701 = vsub.f32 %v502, %v695
        %v702 = vsub.f32 %v503, %v695
        %v703 = vsub.f32 %v504, %v695
        %v704 = vsub.f32 %v505, %v695
        %v705 = vsub.f32 %v506, %v695
        %v706 = vsub.f32 %v507, %v695
        %v707 = vsub.f32 %v508, %v695
        %v708 = vsub.f32 %v509, %v695
        %v709 = vsub.f32 %v510, %v695
        %v710 = vsub.f32 %v511, %v695
        %v711 = vsub.f32 %v512, %v695
        %v712 = vsub.f32 %v513, %v695
        %v713 = vsub.f32 %v514, %v695
        %v714 = vsub.f32 %v515, %v695
        %v715 = vsub.f32 %v516, %v695
        %v716 = vsub.f32 %v517, %v695
        %v717 = vsub.f32 %v518, %v695
        %v718 = vsub.f32 %v519, %v695
        %v719 = vsub.f32 %v520, %v695
        %v720 = vsub.f32 %v521, %v695
        %v721 = vsub.f32 %v522, %v695
        %v722 = vsub.f32 %v523, %v695
        %v723 = vsub.f32 %v524, %v695
        %v724 = vsub.f32 %v525, %v695
        %v725 = vsub.f32 %v526, %v695
        %v726 = vsub.f32 %v527, %v695
        %v727 = vsub.f32 %v528, %v695
        %v728 = vsub.f32 %v529, %v695
        %v729 = vsub.f32 %v530, %v695
        %v730 = vsub.f32 %v531, %v695
        %v731 = vsub.f32 %v532, %v695
        %v732 = vsub.f32 %v533, %v695
        %v733 = vsub.f32 %v534, %v695
        %v734 = vsub.f32 %v535, %v695
        %v735 = vsub.f32 %v536, %v695
        %v736 = vsub.f32 %v537, %v695
        %v737 = vsub.f32 %v538, %v695
        %v738 = vsub.f32 %v539, %v695
        %v739 = vsub.f32 %v540, %v695
        %v740 = vsub.f32 %v541, %v695
        %v741 = vsub.f32 %v542, %v695
        %v742 = vsub.f32 %v543, %v695
        %v743 = vsub.f32 %v544, %v695
        %v744 = vsub.f32 %v545, %v695
        %v745 = vsub.f32 %v546, %v695
        %v746 = vsub.f32 %v547, %v695
        %v747 = vsub.f32 %v548, %v695
        %v748 = vsub.f32 %v549, %v695
        %v749 = vsub.f32 %v550, %v695
        %v750 = vsub.f32 %v551, %v695
        %v751 = vsub.f32 %v552, %v695
        %v752 = vsub.f32 %v553, %v695
        %v753 = vsub.f32 %v554, %v695
        %v754 = vsub.f32 %v555, %v695
        %v755 = vsub.f32 %v556, %v695
        %v756 = vsub.f32 %v557, %v695
        %v757 = vsub.f32 %v558, %v695
        %v758 = vsub.f32 %v559, %v695
        %v759 = vsub.f32 %v560, %v695
        %v760 = vmul.f32 %v696, %v696
        %v761 = vmul.f32 %v697, %v697
        %v762 = vmul.f32 %v698, %v698
        %v763 = vmul.f32 %v699, %v699
        %v764 = vmul.f32 %v700, %v700
        %v765 = vmul.f32 %v701, %v701
        %v766 = vmul.f32 %v702, %v702
        %v767 = vmul.f32 %v703, %v703
        %v768 = vmul.f32 %v704, %v704
        %v769 = vmul.f32 %v705, %v705
        %v770 = vmul.f32 %v706, %v706
        %v771 = vmul.f32 %v707, %v707
        %v772 = vmul.f32 %v708, %v708
        %v773 = vmul.f32 %v709, %v709
        %v774 = vmul.f32 %v710, %v710
        %v775 = vmul.f32 %v711, %v711
        %v776 = vmul.f32 %v712, %v712
        %v777 = vmul.f32 %v713, %v713
        %v778 = vmul.f32 %v714, %v714
        %v779 = vmul.f32 %v715, %v715
        %v780 = vmul.f32 %v716, %v716
        %v781 = vmul.f32 %v717, %v717
        %v782 = vmul.f32 %v718, %v718
        %v783 = vmul.f32 %v719, %v719
        %v784 = vmul.f32 %v720, %v720
        %v785 = vmul.f32 %v721, %v721
        %v786 = vmul.f32 %v722, %v722
        %v787 = vmul.f32 %v723, %v723
        %v788 = vmul.f32 %v724, %v724
        %v789 = vmul.f32 %v725, %v725
        %v790 = vmul.f32 %v726, %v726
        %v791 = vmul.f32 %v727, %v727
        %v792 = vmul.f32 %v728, %v728
        %v793 = vmul.f32 %v729, %v729
        %v794 = vmul.f32 %v730, %v730
        %v795 = vmul.f32 %v731, %v731
        %v796 = vmul.f32 %v732, %v732
        %v797 = vmul.f32 %v733, %v733
        %v798 = vmul.f32 %v734, %v734
        %v799 = vmul.f32 %v735, %v735
        %v800 = vmul.f32 %v736, %v736
        %v801 = vmul.f32 %v737, %v737
        %v802 = vmul.f32 %v738, %v738
        %v803 = vmul.f32 %v739, %v739
        %v804 = vmul.f32 %v740, %v740
        %v805 = vmul.f32 %v741, %v741
        %v806 = vmul.f32 %v742, %v742
        %v807 = vmul.f32 %v743, %v743
        %v808 = vmul.f32 %v744, %v744
        %v809 = vmul.f32 %v745, %v745
        %v810 = vmul.f32 %v746, %v746
        %v811 = vmul.f32 %v747, %v747
        %v812 = vmul.f32 %v748, %v748
        %v813 = vmul.f32 %v749, %v749
        %v814 = vmul.f32 %v750, %v750
        %v815 = vmul.f32 %v751, %v751
        %v816 = vmul.f32 %v752, %v752
        %v817 = vmul.f32 %v753, %v753
        %v818 = vmul.f32 %v754, %v754
        %v819 = vmul.f32 %v755, %v755
        %v820 = vmul.f32 %v756, %v756
        %v821 = vmul.f32 %v757, %v757
        %v822 = vmul.f32 %v758, %v758
        %v823 = vmul.f32 %v759, %v759
        %v824 = vsel %vm460, %v760, 0.0
        %v825 = vsel %vm460, %v761, 0.0
        %v826 = vadd.f32 %v824, %v825
        %v827 = vsel %vm460, %v762, 0.0
        %v828 = vadd.f32 %v826, %v827
        %v829 = vsel %vm460, %v763, 0.0
        %v830 = vadd.f32 %v828, %v829
        %v831 = vsel %vm460, %v764, 0.0
        %v832 = vadd.f32 %v830, %v831
        %v833 = vsel %vm460, %v765, 0.0
        %v834 = vadd.f32 %v832, %v833
        %v835 = vsel %vm460, %v766, 0.0
        %v836 = vadd.f32 %v834, %v835
        %v837 = vsel %vm460, %v767, 0.0
        %v838 = vadd.f32 %v836, %v837
        %v839 = vsel %vm460, %v768, 0.0
        %v840 = vadd.f32 %v838, %v839
        %v841 = vsel %vm460, %v769, 0.0
        %v842 = vadd.f32 %v840, %v841
        %v843 = vsel %vm460, %v770, 0.0
        %v844 = vadd.f32 %v842, %v843
        %v845 = vsel %vm460, %v771, 0.0
        %v846 = vadd.f32 %v844, %v845
        %v847 = vsel %vm460, %v772, 0.0
        %v848 = vadd.f32 %v846, %v847
        %v849 = vsel %vm460, %v773, 0.0
        %v850 = vadd.f32 %v848, %v849
        %v851 = vsel %vm460, %v774, 0.0
        %v852 = vadd.f32 %v850, %v851
        %v853 = vsel %vm460, %v775, 0.0
        %v854 = vadd.f32 %v852, %v853
        %v855 = vsel %vm460, %v776, 0.0
        %v856 = vadd.f32 %v854, %v855
        %v857 = vsel %vm460, %v777, 0.0
        %v858 = vadd.f32 %v856, %v857
        %v859 = vsel %vm460, %v778, 0.0
        %v860 = vadd.f32 %v858, %v859
        %v861 = vsel %vm460, %v779, 0.0
        %v862 = vadd.f32 %v860, %v861
        %v863 = vsel %vm460, %v780, 0.0
        %v864 = vadd.f32 %v862, %v863
        %v865 = vsel %vm460, %v781, 0.0
        %v866 = vadd.f32 %v864, %v865
        %v867 = vsel %vm460, %v782, 0.0
        %v868 = vadd.f32 %v866, %v867
        %v869 = vsel %vm460, %v783, 0.0
        %v870 = vadd.f32 %v868, %v869
        %v871 = vsel %vm460, %v784, 0.0
        %v872 = vadd.f32 %v870, %v871
        %v873 = vsel %vm460, %v785, 0.0
        %v874 = vadd.f32 %v872, %v873
        %v875 = vsel %vm460, %v786, 0.0
        %v876 = vadd.f32 %v874, %v875
        %v877 = vsel %vm460, %v787, 0.0
        %v878 = vadd.f32 %v876, %v877
        %v879 = vsel %vm460, %v788, 0.0
        %v880 = vadd.f32 %v878, %v879
        %v881 = vsel %vm460, %v789, 0.0
        %v882 = vadd.f32 %v880, %v881
        %v883 = vsel %vm460, %v790, 0.0
        %v884 = vadd.f32 %v882, %v883
        %v885 = vsel %vm460, %v791, 0.0
        %v886 = vadd.f32 %v884, %v885
        %v887 = vsel %vm460, %v792, 0.0
        %v888 = vadd.f32 %v886, %v887
        %v889 = vsel %vm460, %v793, 0.0
        %v890 = vadd.f32 %v888, %v889
        %v891 = vsel %vm460, %v794, 0.0
        %v892 = vadd.f32 %v890, %v891
        %v893 = vsel %vm460, %v795, 0.0
        %v894 = vadd.f32 %v892, %v893
        %v895 = vsel %vm460, %v796, 0.0
        %v896 = vadd.f32 %v894, %v895
        %v897 = vsel %vm460, %v797, 0.0
        %v898 = vadd.f32 %v896, %v897
        %v899 = vsel %vm460, %v798, 0.0
        %v900 = vadd.f32 %v898, %v899
        %v901 = vsel %vm460, %v799, 0.0
        %v902 = vadd.f32 %v900, %v901
        %v903 = vsel %vm460, %v800, 0.0
        %v904 = vadd.f32 %v902, %v903
        %v905 = vsel %vm460, %v801, 0.0
        %v906 = vadd.f32 %v904, %v905
        %v907 = vsel %vm460, %v802, 0.0
        %v908 = vadd.f32 %v906, %v907
        %v909 = vsel %vm460, %v803, 0.0
        %v910 = vadd.f32 %v908, %v909
        %v911 = vsel %vm460, %v804, 0.0
        %v912 = vadd.f32 %v910, %v911
        %v913 = vsel %vm460, %v805, 0.0
        %v914 = vadd.f32 %v912, %v913
        %v915 = vsel %vm460, %v806, 0.0
        %v916 = vadd.f32 %v914, %v915
        %v917 = vsel %vm460, %v807, 0.0
        %v918 = vadd.f32 %v916, %v917
        %v919 = vsel %vm460, %v808, 0.0
        %v920 = vadd.f32 %v918, %v919
        %v921 = vsel %vm460, %v809, 0.0
        %v922 = vadd.f32 %v920, %v921
        %v923 = vsel %vm460, %v810, 0.0
        %v924 = vadd.f32 %v922, %v923
        %v925 = vsel %vm460, %v811, 0.0
        %v926 = vadd.f32 %v924, %v925
        %v927 = vsel %vm460, %v812, 0.0
        %v928 = vadd.f32 %v926, %v927
        %v929 = vsel %vm460, %v813, 0.0
        %v930 = vadd.f32 %v928, %v929
        %v931 = vsel %vm460, %v814, 0.0
        %v932 = vadd.f32 %v930, %v931
        %v933 = vsel %vm460, %v815, 0.0
        %v934 = vadd.f32 %v932, %v933
        %v935 = vsel %vm460, %v816, 0.0
        %v936 = vadd.f32 %v934, %v935
        %v937 = vsel %vm460, %v817, 0.0
        %v938 = vadd.f32 %v936, %v937
        %v939 = vsel %vm460, %v818, 0.0
        %v940 = vadd.f32 %v938, %v939
        %v941 = vsel %vm460, %v819, 0.0
        %v942 = vadd.f32 %v940, %v941
        %v943 = vsel %vm460, %v820, 0.0
        %v944 = vadd.f32 %v942, %v943
        %v945 = vsel %vm460, %v821, 0.0
        %v946 = vadd.f32 %v944, %v945
        %v947 = vsel %vm460, %v822, 0.0
        %v948 = vadd.f32 %v946, %v947
        %v949 = vsel %vm460, %v823, 0.0
        %v950 = vadd.f32 %v948, %v949
        %v951 = vrot.slane %v950, 4
        %v952 = vadd.f32 %v950, %v951
        %v953 = vrot.slane %v952, 2
        %v954 = vadd.f32 %v952, %v953
        %v955 = vrot.slane %v954, 1
        %v956 = vadd.f32 %v954, %v955
        %v957 = vmul.f32 %v956, %v694
        %v958 = vadd.f32 %v957, 1e-05
        %v959 = vrsqrt.pop %v958
        %v960 = vmul.f32 %v696, %v959
        %v961 = vmul.f32 %v697, %v959
        %v962 = vmul.f32 %v698, %v959
        %v963 = vmul.f32 %v699, %v959
        %v964 = vmul.f32 %v700, %v959
        %v965 = vmul.f32 %v701, %v959
        %v966 = vmul.f32 %v702, %v959
        %v967 = vmul.f32 %v703, %v959
        %v968 = vmul.f32 %v704, %v959
        %v969 = vmul.f32 %v705, %v959
        %v970 = vmul.f32 %v706, %v959
        %v971 = vmul.f32 %v707, %v959
        %v972 = vmul.f32 %v708, %v959
        %v973 = vmul.f32 %v709, %v959
        %v974 = vmul.f32 %v710, %v959
        %v975 = vmul.f32 %v711, %v959
        %v976 = vmul.f32 %v712, %v959
        %v977 = vmul.f32 %v713, %v959
        %v978 = vmul.f32 %v714, %v959
        %v979 = vmul.f32 %v715, %v959
        %v980 = vmul.f32 %v716, %v959
        %v981 = vmul.f32 %v717, %v959
        %v982 = vmul.f32 %v718, %v959
        %v983 = vmul.f32 %v719, %v959
        %v984 = vmul.f32 %v720, %v959
        %v985 = vmul.f32 %v721, %v959
        %v986 = vmul.f32 %v722, %v959
        %v987 = vmul.f32 %v723, %v959
        %v988 = vmul.f32 %v724, %v959
        %v989 = vmul.f32 %v725, %v959
        %v990 = vmul.f32 %v726, %v959
        %v991 = vmul.f32 %v727, %v959
        %v992 = vmul.f32 %v728, %v959
        %v993 = vmul.f32 %v729, %v959
        %v994 = vmul.f32 %v730, %v959
        %v995 = vmul.f32 %v731, %v959
        %v996 = vmul.f32 %v732, %v959
        %v997 = vmul.f32 %v733, %v959
        %v998 = vmul.f32 %v734, %v959
        %v999 = vmul.f32 %v735, %v959
        %v1000 = vmul.f32 %v736, %v959
        %v1001 = vmul.f32 %v737, %v959
        %v1002 = vmul.f32 %v738, %v959
        %v1003 = vmul.f32 %v739, %v959
        %v1004 = vmul.f32 %v740, %v959
        %v1005 = vmul.f32 %v741, %v959
        %v1006 = vmul.f32 %v742, %v959
        %v1007 = vmul.f32 %v743, %v959
        %v1008 = vmul.f32 %v744, %v959
        %v1009 = vmul.f32 %v745, %v959
        %v1010 = vmul.f32 %v746, %v959
        %v1011 = vmul.f32 %v747, %v959
        %v1012 = vmul.f32 %v748, %v959
        %v1013 = vmul.f32 %v749, %v959
        %v1014 = vmul.f32 %v750, %v959
        %v1015 = vmul.f32 %v751, %v959
        %v1016 = vmul.f32 %v752, %v959
        %v1017 = vmul.f32 %v753, %v959
        %v1018 = vmul.f32 %v754, %v959
        %v1019 = vmul.f32 %v755, %v959
        %v1020 = vmul.f32 %v756, %v959
        %v1021 = vmul.f32 %v757, %v959
        %v1022 = vmul.f32 %v758, %v959
        %v1023 = vmul.f32 %v759, %v959
        %v1024 = vld [vmem:[%s2] sm:$0x1]
        %v1026 = vlaneseq
        %v1027 = vshrl.u32 %v1026, 7
        %v1028 = vsub.s32 0, %v1027
        %v1029 = vrot.slane %v1024, %v1028
        %v1031 = vmul.f32 %v960, %v1029
        %v1032 = vmul.f32 %v961, %v1029
        %v1033 = vmul.f32 %v962, %v1029
        %v1034 = vmul.f32 %v963, %v1029
        %v1035 = vmul.f32 %v964, %v1029
        %v1036 = vmul.f32 %v965, %v1029
        %v1037 = vmul.f32 %v966, %v1029
        %v1038 = vmul.f32 %v967, %v1029
        %v1039 = vmul.f32 %v968, %v1029
        %v1040 = vmul.f32 %v969, %v1029
        %v1041 = vmul.f32 %v970, %v1029
        %v1042 = vmul.f32 %v971, %v1029
        %v1043 = vmul.f32 %v972, %v1029
        %v1044 = vmul.f32 %v973, %v1029
        %v1045 = vmul.f32 %v974, %v1029
        %v1046 = vmul.f32 %v975, %v1029
        %v1047 = vmul.f32 %v976, %v1029
        %v1048 = vmul.f32 %v977, %v1029
        %v1049 = vmul.f32 %v978, %v1029
        %v1050 = vmul.f32 %v979, %v1029
        %v1051 = vmul.f32 %v980, %v1029
        %v1052 = vmul.f32 %v981, %v1029
        %v1053 = vmul.f32 %v982, %v1029
        %v1054 = vmul.f32 %v983, %v1029
        %v1055 = vmul.f32 %v984, %v1029
        %v1056 = vmul.f32 %v985, %v1029
        %v1057 = vmul.f32 %v986, %v1029
        %v1058 = vmul.f32 %v987, %v1029
        %v1059 = vmul.f32 %v988, %v1029
        %v1060 = vmul.f32 %v989, %v1029
        %v1061 = vmul.f32 %v990, %v1029
        %v1062 = vmul.f32 %v991, %v1029
        %v1063 = vmul.f32 %v992, %v1029
        %v1064 = vmul.f32 %v993, %v1029
        %v1065 = vmul.f32 %v994, %v1029
        %v1066 = vmul.f32 %v995, %v1029
        %v1067 = vmul.f32 %v996, %v1029
        %v1068 = vmul.f32 %v997, %v1029
        %v1069 = vmul.f32 %v998, %v1029
        %v1070 = vmul.f32 %v999, %v1029
        %v1071 = vmul.f32 %v1000, %v1029
        %v1072 = vmul.f32 %v1001, %v1029
        %v1073 = vmul.f32 %v1002, %v1029
        %v1074 = vmul.f32 %v1003, %v1029
        %v1075 = vmul.f32 %v1004, %v1029
        %v1076 = vmul.f32 %v1005, %v1029
        %v1077 = vmul.f32 %v1006, %v1029
        %v1078 = vmul.f32 %v1007, %v1029
        %v1079 = vmul.f32 %v1008, %v1029
        %v1080 = vmul.f32 %v1009, %v1029
        %v1081 = vmul.f32 %v1010, %v1029
        %v1082 = vmul.f32 %v1011, %v1029
        %v1083 = vmul.f32 %v1012, %v1029
        %v1084 = vmul.f32 %v1013, %v1029
        %v1085 = vmul.f32 %v1014, %v1029
        %v1086 = vmul.f32 %v1015, %v1029
        %v1087 = vmul.f32 %v1016, %v1029
        %v1088 = vmul.f32 %v1017, %v1029
        %v1089 = vmul.f32 %v1018, %v1029
        %v1090 = vmul.f32 %v1019, %v1029
        %v1091 = vmul.f32 %v1020, %v1029
        %v1092 = vmul.f32 %v1021, %v1029
        %v1093 = vmul.f32 %v1022, %v1029
        %v1094 = vmul.f32 %v1023, %v1029
        %v1095 = vld [vmem:[%s3] sm:$0x1]
        %v1097 = vlaneseq
        %v1098 = vshrl.u32 %v1097, 7
        %v1099 = vsub.s32 0, %v1098
        %v1100 = vrot.slane %v1095, %v1099
        %v1102 = vadd.f32 %v1031, %v1100
        %v1103 = vadd.f32 %v1032, %v1100
        %v1104 = vadd.f32 %v1033, %v1100
        %v1105 = vadd.f32 %v1034, %v1100
        %v1106 = vadd.f32 %v1035, %v1100
        %v1107 = vadd.f32 %v1036, %v1100
        %v1108 = vadd.f32 %v1037, %v1100
        %v1109 = vadd.f32 %v1038, %v1100
        %v1110 = vadd.f32 %v1039, %v1100
        %v1111 = vadd.f32 %v1040, %v1100
        %v1112 = vadd.f32 %v1041, %v1100
        %v1113 = vadd.f32 %v1042, %v1100
        %v1114 = vadd.f32 %v1043, %v1100
        %v1115 = vadd.f32 %v1044, %v1100
        %v1116 = vadd.f32 %v1045, %v1100
        %v1117 = vadd.f32 %v1046, %v1100
        %v1118 = vadd.f32 %v1047, %v1100
        %v1119 = vadd.f32 %v1048, %v1100
        %v1120 = vadd.f32 %v1049, %v1100
        %v1121 = vadd.f32 %v1050, %v1100
        %v1122 = vadd.f32 %v1051, %v1100
        %v1123 = vadd.f32 %v1052, %v1100
        %v1124 = vadd.f32 %v1053, %v1100
        %v1125 = vadd.f32 %v1054, %v1100
        %v1126 = vadd.f32 %v1055, %v1100
        %v1127 = vadd.f32 %v1056, %v1100
        %v1128 = vadd.f32 %v1057, %v1100
        %v1129 = vadd.f32 %v1058, %v1100
        %v1130 = vadd.f32 %v1059, %v1100
        %v1131 = vadd.f32 %v1060, %v1100
        %v1132 = vadd.f32 %v1061, %v1100
        %v1133 = vadd.f32 %v1062, %v1100
        %v1134 = vadd.f32 %v1063, %v1100
        %v1135 = vadd.f32 %v1064, %v1100
        %v1136 = vadd.f32 %v1065, %v1100
        %v1137 = vadd.f32 %v1066, %v1100
        %v1138 = vadd.f32 %v1067, %v1100
        %v1139 = vadd.f32 %v1068, %v1100
        %v1140 = vadd.f32 %v1069, %v1100
        %v1141 = vadd.f32 %v1070, %v1100
        %v1142 = vadd.f32 %v1071, %v1100
        %v1143 = vadd.f32 %v1072, %v1100
        %v1144 = vadd.f32 %v1073, %v1100
        %v1145 = vadd.f32 %v1074, %v1100
        %v1146 = vadd.f32 %v1075, %v1100
        %v1147 = vadd.f32 %v1076, %v1100
        %v1148 = vadd.f32 %v1077, %v1100
        %v1149 = vadd.f32 %v1078, %v1100
        %v1150 = vadd.f32 %v1079, %v1100
        %v1151 = vadd.f32 %v1080, %v1100
        %v1152 = vadd.f32 %v1081, %v1100
        %v1153 = vadd.f32 %v1082, %v1100
        %v1154 = vadd.f32 %v1083, %v1100
        %v1155 = vadd.f32 %v1084, %v1100
        %v1156 = vadd.f32 %v1085, %v1100
        %v1157 = vadd.f32 %v1086, %v1100
        %v1158 = vadd.f32 %v1087, %v1100
        %v1159 = vadd.f32 %v1088, %v1100
        %v1160 = vadd.f32 %v1089, %v1100
        %v1161 = vadd.f32 %v1090, %v1100
        %v1162 = vadd.f32 %v1091, %v1100
        %v1163 = vadd.f32 %v1092, %v1100
        %v1164 = vadd.f32 %v1093, %v1100
        %v1165 = vadd.f32 %v1094, %v1100
        %vm1166 = vcmp.ge.f32.partialorder %v1102, 0.0
        %vm1167 = vcmp.ge.f32.partialorder %v1103, 0.0
        %vm1168 = vcmp.ge.f32.partialorder %v1104, 0.0
        %vm1169 = vcmp.ge.f32.partialorder %v1105, 0.0
        %vm1170 = vcmp.ge.f32.partialorder %v1106, 0.0
        %vm1171 = vcmp.ge.f32.partialorder %v1107, 0.0
        %vm1172 = vcmp.ge.f32.partialorder %v1108, 0.0
        %vm1173 = vcmp.ge.f32.partialorder %v1109, 0.0
        %vm1174 = vcmp.ge.f32.partialorder %v1110, 0.0
        %vm1175 = vcmp.ge.f32.partialorder %v1111, 0.0
        %vm1176 = vcmp.ge.f32.partialorder %v1112, 0.0
        %vm1177 = vcmp.ge.f32.partialorder %v1113, 0.0
        %vm1178 = vcmp.ge.f32.partialorder %v1114, 0.0
        %vm1179 = vcmp.ge.f32.partialorder %v1115, 0.0
        %vm1180 = vcmp.ge.f32.partialorder %v1116, 0.0
        %vm1181 = vcmp.ge.f32.partialorder %v1117, 0.0
        %vm1182 = vcmp.ge.f32.partialorder %v1118, 0.0
        %vm1183 = vcmp.ge.f32.partialorder %v1119, 0.0
        %vm1184 = vcmp.ge.f32.partialorder %v1120, 0.0
        %vm1185 = vcmp.ge.f32.partialorder %v1121, 0.0
        %vm1186 = vcmp.ge.f32.partialorder %v1122, 0.0
        %vm1187 = vcmp.ge.f32.partialorder %v1123, 0.0
        %vm1188 = vcmp.ge.f32.partialorder %v1124, 0.0
        %vm1189 = vcmp.ge.f32.partialorder %v1125, 0.0
        %vm1190 = vcmp.ge.f32.partialorder %v1126, 0.0
        %vm1191 = vcmp.ge.f32.partialorder %v1127, 0.0
        %vm1192 = vcmp.ge.f32.partialorder %v1128, 0.0
        %vm1193 = vcmp.ge.f32.partialorder %v1129, 0.0
        %vm1194 = vcmp.ge.f32.partialorder %v1130, 0.0
        %vm1195 = vcmp.ge.f32.partialorder %v1131, 0.0
        %vm1196 = vcmp.ge.f32.partialorder %v1132, 0.0
        %vm1197 = vcmp.ge.f32.partialorder %v1133, 0.0
        %vm1198 = vcmp.ge.f32.partialorder %v1134, 0.0
        %vm1199 = vcmp.ge.f32.partialorder %v1135, 0.0
        %vm1200 = vcmp.ge.f32.partialorder %v1136, 0.0
        %vm1201 = vcmp.ge.f32.partialorder %v1137, 0.0
        %vm1202 = vcmp.ge.f32.partialorder %v1138, 0.0
        %vm1203 = vcmp.ge.f32.partialorder %v1139, 0.0
        %vm1204 = vcmp.ge.f32.partialorder %v1140, 0.0
        %vm1205 = vcmp.ge.f32.partialorder %v1141, 0.0
        %vm1206 = vcmp.ge.f32.partialorder %v1142, 0.0
        %vm1207 = vcmp.ge.f32.partialorder %v1143, 0.0
        %vm1208 = vcmp.ge.f32.partialorder %v1144, 0.0
        %vm1209 = vcmp.ge.f32.partialorder %v1145, 0.0
        %vm1210 = vcmp.ge.f32.partialorder %v1146, 0.0
        %vm1211 = vcmp.ge.f32.partialorder %v1147, 0.0
        %vm1212 = vcmp.ge.f32.partialorder %v1148, 0.0
        %vm1213 = vcmp.ge.f32.partialorder %v1149, 0.0
        %vm1214 = vcmp.ge.f32.partialorder %v1150, 0.0
        %vm1215 = vcmp.ge.f32.partialorder %v1151, 0.0
        %vm1216 = vcmp.ge.f32.partialorder %v1152, 0.0
        %vm1217 = vcmp.ge.f32.partialorder %v1153, 0.0
        %vm1218 = vcmp.ge.f32.partialorder %v1154, 0.0
        %vm1219 = vcmp.ge.f32.partialorder %v1155, 0.0
        %vm1220 = vcmp.ge.f32.partialorder %v1156, 0.0
        %vm1221 = vcmp.ge.f32.partialorder %v1157, 0.0
        %vm1222 = vcmp.ge.f32.partialorder %v1158, 0.0
        %vm1223 = vcmp.ge.f32.partialorder %v1159, 0.0
        %vm1224 = vcmp.ge.f32.partialorder %v1160, 0.0
        %vm1225 = vcmp.ge.f32.partialorder %v1161, 0.0
        %vm1226 = vcmp.ge.f32.partialorder %v1162, 0.0
        %vm1227 = vcmp.ge.f32.partialorder %v1163, 0.0
        %vm1228 = vcmp.ge.f32.partialorder %v1164, 0.0
        %vm1229 = vcmp.ge.f32.partialorder %v1165, 0.0
        %v1230 = vmul.f32 %v1102, 0.2
        %v1231 = vmul.f32 %v1103, 0.2
        %v1232 = vmul.f32 %v1104, 0.2
        %v1233 = vmul.f32 %v1105, 0.2
        %v1234 = vmul.f32 %v1106, 0.2
        %v1235 = vmul.f32 %v1107, 0.2
        %v1236 = vmul.f32 %v1108, 0.2
        %v1237 = vmul.f32 %v1109, 0.2
        %v1238 = vmul.f32 %v1110, 0.2
        %v1239 = vmul.f32 %v1111, 0.2
        %v1240 = vmul.f32 %v1112, 0.2
        %v1241 = vmul.f32 %v1113, 0.2
        %v1242 = vmul.f32 %v1114, 0.2
        %v1243 = vmul.f32 %v1115, 0.2
        %v1244 = vmul.f32 %v1116, 0.2
        %v1245 = vmul.f32 %v1117, 0.2
        %v1246 = vmul.f32 %v1118, 0.2
        %v1247 = vmul.f32 %v1119, 0.2
        %v1248 = vmul.f32 %v1120, 0.2
        %v1249 = vmul.f32 %v1121, 0.2
        %v1250 = vmul.f32 %v1122, 0.2
        %v1251 = vmul.f32 %v1123, 0.2
        %v1252 = vmul.f32 %v1124, 0.2
        %v1253 = vmul.f32 %v1125, 0.2
        %v1254 = vmul.f32 %v1126, 0.2
        %v1255 = vmul.f32 %v1127, 0.2
        %v1256 = vmul.f32 %v1128, 0.2
        %v1257 = vmul.f32 %v1129, 0.2
        %v1258 = vmul.f32 %v1130, 0.2
        %v1259 = vmul.f32 %v1131, 0.2
        %v1260 = vmul.f32 %v1132, 0.2
        %v1261 = vmul.f32 %v1133, 0.2
        %v1262 = vmul.f32 %v1134, 0.2
        %v1263 = vmul.f32 %v1135, 0.2
        %v1264 = vmul.f32 %v1136, 0.2
        %v1265 = vmul.f32 %v1137, 0.2
        %v1266 = vmul.f32 %v1138, 0.2
        %v1267 = vmul.f32 %v1139, 0.2
        %v1268 = vmul.f32 %v1140, 0.2
        %v1269 = vmul.f32 %v1141, 0.2
        %v1270 = vmul.f32 %v1142, 0.2
        %v1271 = vmul.f32 %v1143, 0.2
        %v1272 = vmul.f32 %v1144, 0.2
        %v1273 = vmul.f32 %v1145, 0.2
        %v1274 = vmul.f32 %v1146, 0.2
        %v1275 = vmul.f32 %v1147, 0.2
        %v1276 = vmul.f32 %v1148, 0.2
        %v1277 = vmul.f32 %v1149, 0.2
        %v1278 = vmul.f32 %v1150, 0.2
        %v1279 = vmul.f32 %v1151, 0.2
        %v1280 = vmul.f32 %v1152, 0.2
        %v1281 = vmul.f32 %v1153, 0.2
        %v1282 = vmul.f32 %v1154, 0.2
        %v1283 = vmul.f32 %v1155, 0.2
        %v1284 = vmul.f32 %v1156, 0.2
        %v1285 = vmul.f32 %v1157, 0.2
        %v1286 = vmul.f32 %v1158, 0.2
        %v1287 = vmul.f32 %v1159, 0.2
        %v1288 = vmul.f32 %v1160, 0.2
        %v1289 = vmul.f32 %v1161, 0.2
        %v1290 = vmul.f32 %v1162, 0.2
        %v1291 = vmul.f32 %v1163, 0.2
        %v1292 = vmul.f32 %v1164, 0.2
        %v1293 = vmul.f32 %v1165, 0.2
        %v1294 = vsel %vm1166, %v1102, %v1230
        %v1295 = vsel %vm1167, %v1103, %v1231
        %v1296 = vsel %vm1168, %v1104, %v1232
        %v1297 = vsel %vm1169, %v1105, %v1233
        %v1298 = vsel %vm1170, %v1106, %v1234
        %v1299 = vsel %vm1171, %v1107, %v1235
        %v1300 = vsel %vm1172, %v1108, %v1236
        %v1301 = vsel %vm1173, %v1109, %v1237
        %v1302 = vsel %vm1174, %v1110, %v1238
        %v1303 = vsel %vm1175, %v1111, %v1239
        %v1304 = vsel %vm1176, %v1112, %v1240
        %v1305 = vsel %vm1177, %v1113, %v1241
        %v1306 = vsel %vm1178, %v1114, %v1242
        %v1307 = vsel %vm1179, %v1115, %v1243
        %v1308 = vsel %vm1180, %v1116, %v1244
        %v1309 = vsel %vm1181, %v1117, %v1245
        %v1310 = vsel %vm1182, %v1118, %v1246
        %v1311 = vsel %vm1183, %v1119, %v1247
        %v1312 = vsel %vm1184, %v1120, %v1248
        %v1313 = vsel %vm1185, %v1121, %v1249
        %v1314 = vsel %vm1186, %v1122, %v1250
        %v1315 = vsel %vm1187, %v1123, %v1251
        %v1316 = vsel %vm1188, %v1124, %v1252
        %v1317 = vsel %vm1189, %v1125, %v1253
        %v1318 = vsel %vm1190, %v1126, %v1254
        %v1319 = vsel %vm1191, %v1127, %v1255
        %v1320 = vsel %vm1192, %v1128, %v1256
        %v1321 = vsel %vm1193, %v1129, %v1257
        %v1322 = vsel %vm1194, %v1130, %v1258
        %v1323 = vsel %vm1195, %v1131, %v1259
        %v1324 = vsel %vm1196, %v1132, %v1260
        %v1325 = vsel %vm1197, %v1133, %v1261
        %v1326 = vsel %vm1198, %v1134, %v1262
        %v1327 = vsel %vm1199, %v1135, %v1263
        %v1328 = vsel %vm1200, %v1136, %v1264
        %v1329 = vsel %vm1201, %v1137, %v1265
        %v1330 = vsel %vm1202, %v1138, %v1266
        %v1331 = vsel %vm1203, %v1139, %v1267
        %v1332 = vsel %vm1204, %v1140, %v1268
        %v1333 = vsel %vm1205, %v1141, %v1269
        %v1334 = vsel %vm1206, %v1142, %v1270
        %v1335 = vsel %vm1207, %v1143, %v1271
        %v1336 = vsel %vm1208, %v1144, %v1272
        %v1337 = vsel %vm1209, %v1145, %v1273
        %v1338 = vsel %vm1210, %v1146, %v1274
        %v1339 = vsel %vm1211, %v1147, %v1275
        %v1340 = vsel %vm1212, %v1148, %v1276
        %v1341 = vsel %vm1213, %v1149, %v1277
        %v1342 = vsel %vm1214, %v1150, %v1278
        %v1343 = vsel %vm1215, %v1151, %v1279
        %v1344 = vsel %vm1216, %v1152, %v1280
        %v1345 = vsel %vm1217, %v1153, %v1281
        %v1346 = vsel %vm1218, %v1154, %v1282
        %v1347 = vsel %vm1219, %v1155, %v1283
        %v1348 = vsel %vm1220, %v1156, %v1284
        %v1349 = vsel %vm1221, %v1157, %v1285
        %v1350 = vsel %vm1222, %v1158, %v1286
        %v1351 = vsel %vm1223, %v1159, %v1287
        %v1352 = vsel %vm1224, %v1160, %v1288
        %v1353 = vsel %vm1225, %v1161, %v1289
        %v1354 = vsel %vm1226, %v1162, %v1290
        %v1355 = vsel %vm1227, %v1163, %v1291
        %v1356 = vsel %vm1228, %v1164, %v1292
        %v1357 = vsel %vm1229, %v1165, %v1293
        %1358 = vst.msk [vmem:[%s4] sm:$0xff] %vm460, %v1294
        %1359 = vst.msk [vmem:[%s4 + $0x8] sm:$0xff] %vm460, %v1295
        %1360 = vst.msk [vmem:[%s4 + $0x10] sm:$0xff] %vm460, %v1296
        %1361 = vst.msk [vmem:[%s4 + $0x18] sm:$0xff] %vm460, %v1297
        %1362 = vst.msk [vmem:[%s4 + $0x20] sm:$0xff] %vm460, %v1298
        %1363 = vst.msk [vmem:[%s4 + $0x28] sm:$0xff] %vm460, %v1299
        %1364 = vst.msk [vmem:[%s4 + $0x30] sm:$0xff] %vm460, %v1300
        %1365 = vst.msk [vmem:[%s4 + $0x38] sm:$0xff] %vm460, %v1301
        %1366 = vst.msk [vmem:[%s4 + $0x40] sm:$0xff] %vm460, %v1302
        %1367 = vst.msk [vmem:[%s4 + $0x48] sm:$0xff] %vm460, %v1303
        %1368 = vst.msk [vmem:[%s4 + $0x50] sm:$0xff] %vm460, %v1304
        %1369 = vst.msk [vmem:[%s4 + $0x58] sm:$0xff] %vm460, %v1305
        %1370 = vst.msk [vmem:[%s4 + $0x60] sm:$0xff] %vm460, %v1306
        %1371 = vst.msk [vmem:[%s4 + $0x68] sm:$0xff] %vm460, %v1307
        %1372 = vst.msk [vmem:[%s4 + $0x70] sm:$0xff] %vm460, %v1308
        %1373 = vst.msk [vmem:[%s4 + $0x78] sm:$0xff] %vm460, %v1309
        %1374 = vst.msk [vmem:[%s4 + $0x80] sm:$0xff] %vm460, %v1310
        %1375 = vst.msk [vmem:[%s4 + $0x88] sm:$0xff] %vm460, %v1311
        %1376 = vst.msk [vmem:[%s4 + $0x90] sm:$0xff] %vm460, %v1312
        %1377 = vst.msk [vmem:[%s4 + $0x98] sm:$0xff] %vm460, %v1313
        %1378 = vst.msk [vmem:[%s4 + $0xa0] sm:$0xff] %vm460, %v1314
        %1379 = vst.msk [vmem:[%s4 + $0xa8] sm:$0xff] %vm460, %v1315
        %1380 = vst.msk [vmem:[%s4 + $0xb0] sm:$0xff] %vm460, %v1316
        %1381 = vst.msk [vmem:[%s4 + $0xb8] sm:$0xff] %vm460, %v1317
        %1382 = vst.msk [vmem:[%s4 + $0xc0] sm:$0xff] %vm460, %v1318
        %1383 = vst.msk [vmem:[%s4 + $0xc8] sm:$0xff] %vm460, %v1319
        %1384 = vst.msk [vmem:[%s4 + $0xd0] sm:$0xff] %vm460, %v1320
        %1385 = vst.msk [vmem:[%s4 + $0xd8] sm:$0xff] %vm460, %v1321
        %1386 = vst.msk [vmem:[%s4 + $0xe0] sm:$0xff] %vm460, %v1322
        %1387 = vst.msk [vmem:[%s4 + $0xe8] sm:$0xff] %vm460, %v1323
        %1388 = vst.msk [vmem:[%s4 + $0xf0] sm:$0xff] %vm460, %v1324
        %1389 = vst.msk [vmem:[%s4 + $0xf8] sm:$0xff] %vm460, %v1325
        %1390 = vst.msk [vmem:[%s4 + $0x100] sm:$0xff] %vm460, %v1326
        %1391 = vst.msk [vmem:[%s4 + $0x108] sm:$0xff] %vm460, %v1327
        %1392 = vst.msk [vmem:[%s4 + $0x110] sm:$0xff] %vm460, %v1328
        %1393 = vst.msk [vmem:[%s4 + $0x118] sm:$0xff] %vm460, %v1329
        %1394 = vst.msk [vmem:[%s4 + $0x120] sm:$0xff] %vm460, %v1330
        %1395 = vst.msk [vmem:[%s4 + $0x128] sm:$0xff] %vm460, %v1331
        %1396 = vst.msk [vmem:[%s4 + $0x130] sm:$0xff] %vm460, %v1332
        %1397 = vst.msk [vmem:[%s4 + $0x138] sm:$0xff] %vm460, %v1333
        %1398 = vst.msk [vmem:[%s4 + $0x140] sm:$0xff] %vm460, %v1334
        %1399 = vst.msk [vmem:[%s4 + $0x148] sm:$0xff] %vm460, %v1335
        %1400 = vst.msk [vmem:[%s4 + $0x150] sm:$0xff] %vm460, %v1336
        %1401 = vst.msk [vmem:[%s4 + $0x158] sm:$0xff] %vm460, %v1337
        %1402 = vst.msk [vmem:[%s4 + $0x160] sm:$0xff] %vm460, %v1338
        %1403 = vst.msk [vmem:[%s4 + $0x168] sm:$0xff] %vm460, %v1339
        %1404 = vst.msk [vmem:[%s4 + $0x170] sm:$0xff] %vm460, %v1340
        %1405 = vst.msk [vmem:[%s4 + $0x178] sm:$0xff] %vm460, %v1341
        %1406 = vst.msk [vmem:[%s4 + $0x180] sm:$0xff] %vm460, %v1342
        %1407 = vst.msk [vmem:[%s4 + $0x188] sm:$0xff] %vm460, %v1343
        %1408 = vst.msk [vmem:[%s4 + $0x190] sm:$0xff] %vm460, %v1344
        %1409 = vst.msk [vmem:[%s4 + $0x198] sm:$0xff] %vm460, %v1345
        %1410 = vst.msk [vmem:[%s4 + $0x1a0] sm:$0xff] %vm460, %v1346
        %1411 = vst.msk [vmem:[%s4 + $0x1a8] sm:$0xff] %vm460, %v1347
        %1412 = vst.msk [vmem:[%s4 + $0x1b0] sm:$0xff] %vm460, %v1348
        %1413 = vst.msk [vmem:[%s4 + $0x1b8] sm:$0xff] %vm460, %v1349
        %1414 = vst.msk [vmem:[%s4 + $0x1c0] sm:$0xff] %vm460, %v1350
        %1415 = vst.msk [vmem:[%s4 + $0x1c8] sm:$0xff] %vm460, %v1351
        %1416 = vst.msk [vmem:[%s4 + $0x1d0] sm:$0xff] %vm460, %v1352
        %1417 = vst.msk [vmem:[%s4 + $0x1d8] sm:$0xff] %vm460, %v1353
        %1418 = vst.msk [vmem:[%s4 + $0x1e0] sm:$0xff] %vm460, %v1354
        %1419 = vst.msk [vmem:[%s4 + $0x1e8] sm:$0xff] %vm460, %v1355
        %1420 = vst.msk [vmem:[%s4 + $0x1f0] sm:$0xff] %vm460, %v1356
        %1421 = vst.msk [vmem:[%s4 + $0x1f8] sm:$0xff] %vm460, %v1357
      $region40: #{icml_d_forward.11} parent=35 // pred_fallthru
        _
      // Predicated region
      $region41: #{icml_d_forward.11} parent=35 // pred_check
        %p1422 = pneg %p117
      $region42: #{icml_d_forward.11} parent=35 // pred_check_branch
        %1424 = sbr.rel (%p1422) target = $region44
      $region43: #{icml_d_forward.11} parent=35 // pred_region
        _
      $region44: #{icml_d_forward.11} parent=35 // pred_fallthru
        _
      // Predicated region
      $region45: #{icml_d_forward.11} parent=35 // pred_check
        %p1425 = pneg %p117
      $region46: #{icml_d_forward.11} parent=35 // pred_check_branch
        %1427 = sbr.rel (%p1425) target = $region48
      $region47: #{icml_d_forward.11} parent=35 // pred_region
        _
      $region48: #{icml_d_forward.11} parent=35 // pred_fallthru
        _
    $region36: #{icml_d_forward.11} parent=5 // pred_fallthru
      _
    %p1428 = scmp.le.s32.totalorder 2, %s10
    // Predicated region
    $region49: #{icml_d_forward.11} parent=5 // pred_check
      %p1429 = pneg %p1428
    $region50: #{icml_d_forward.11} parent=5 // pred_check_branch
      %1431 = sbr.rel (%p1429) target = $region52
    $region51: #{icml_d_forward.11} parent=5 // pred_region
      %s1432 = ssub.s32 %s10, 2
    $region52: #{icml_d_forward.11} parent=5 // pred_fallthru
      _
  $region6: #{icml_d_forward.11} parent=0 // loop_footer
    %s14 = sadd.s32 1, %s10
  $region7: #{icml_d_forward.11} parent=0 // loop_footer_branch
    %9 = sbr.rel target = $region3
  $region8: #{icml_d_forward.11} parent=0 // loop_exit
    _

// kernel: icml_d_forward.12
$region0: #{icml_d_forward.12}
  #allocation0 [shape = 'u32[]', space=smem, size = 0x4, offset = 0x4, fixed_abs, tag = 'smem constant byte address 0x4 - core index']
  #allocation1 [shape = 'u32[144,128]{1,0:T(1,128)}', space=vmem, size = 0x12000, scoped, tag = 'internal scratch']
  #allocation2 [shape = 'f32[128,32]{1,0:T(8,128)}', space=vmem, size = 0x10000, scoped, tag = 'scratch operand']
  %s0 = inlined_call_operand.vmem [shape: f32[128,256], index: 0, kind: input, shape index: {}]
  %s1 = inlined_call_operand.vmem [shape: f32[256,32], index: 1, kind: input, shape index: {}]
  %s2 = inlined_call_operand.vmem [shape: f32[1,32], index: 2, kind: input, shape index: {}]
  %s3 = inlined_call_operand.vmem [shape: f32[1,32], index: 3, kind: input, shape index: {}]
  %s4 = inlined_call_operand.vmem [shape: f32[128,32], index: 4, kind: output, shape index: {}]
  %s5 = sld [smem:[#allocation0]]
  $region30: #{icml_d_forward.12} parent=0
    _
  %s7 = ssub.s32 1, %s5
  %s8 = scalar_select 0, %s7, %s5
  // Predicated region
  $region2: #{icml_d_forward.12} parent=0 // pred_check
    _
  $region3: #{icml_d_forward.12} parent=0 // pred_check_branch
    %10 = sbr.rel (0) target = $region5
  $region4: #{icml_d_forward.12} parent=0 // pred_region
    _
  $region5: #{icml_d_forward.12} parent=0 // pred_fallthru
    _
  // Predicated region
  $region6: #{icml_d_forward.12} parent=0 // pred_check
    _
  $region7: #{icml_d_forward.12} parent=0 // pred_check_branch
    %12 = sbr.rel (0) target = $region9
  $region8: #{icml_d_forward.12} parent=0 // pred_region
    _
  $region9: #{icml_d_forward.12} parent=0 // pred_fallthru
    _
  // Predicated region
  $region10: #{icml_d_forward.12} parent=0 // pred_check
    _
  $region11: #{icml_d_forward.12} parent=0 // pred_check_branch
    %14 = sbr.rel (0) target = $region13
  $region12: #{icml_d_forward.12} parent=0 // pred_region
    _
  $region13: #{icml_d_forward.12} parent=0 // pred_fallthru
    _
  // Predicated region
  $region14: #{icml_d_forward.12} parent=0 // pred_check
    _
  $region15: #{icml_d_forward.12} parent=0 // pred_check_branch
    %16 = sbr.rel (0) target = $region17
  $region16: #{icml_d_forward.12} parent=0 // pred_region
    _
  $region17: #{icml_d_forward.12} parent=0 // pred_fallthru
    _
  %v17 = vld [vmem:[%s0] sm:$0xff]
  %v18 = vld [vmem:[%s0 + $0x8] sm:$0xff]
  %v19 = vld [vmem:[%s0 + $0x10] sm:$0xff]
  %v20 = vld [vmem:[%s0 + $0x18] sm:$0xff]
  %v21 = vld [vmem:[%s0 + $0x20] sm:$0xff]
  %v22 = vld [vmem:[%s0 + $0x28] sm:$0xff]
  %v23 = vld [vmem:[%s0 + $0x30] sm:$0xff]
  %v24 = vld [vmem:[%s0 + $0x38] sm:$0xff]
  %v25 = vld [vmem:[%s0 + $0x40] sm:$0xff]
  %v26 = vld [vmem:[%s0 + $0x48] sm:$0xff]
  %v27 = vld [vmem:[%s0 + $0x50] sm:$0xff]
  %v28 = vld [vmem:[%s0 + $0x58] sm:$0xff]
  %v29 = vld [vmem:[%s0 + $0x60] sm:$0xff]
  %v30 = vld [vmem:[%s0 + $0x68] sm:$0xff]
  %v31 = vld [vmem:[%s0 + $0x70] sm:$0xff]
  %v32 = vld [vmem:[%s0 + $0x78] sm:$0xff]
  %v33 = vld [vmem:[%s0 + $0x80] sm:$0xff]
  %v34 = vld [vmem:[%s0 + $0x88] sm:$0xff]
  %v35 = vld [vmem:[%s0 + $0x90] sm:$0xff]
  %v36 = vld [vmem:[%s0 + $0x98] sm:$0xff]
  %v37 = vld [vmem:[%s0 + $0xa0] sm:$0xff]
  %v38 = vld [vmem:[%s0 + $0xa8] sm:$0xff]
  %v39 = vld [vmem:[%s0 + $0xb0] sm:$0xff]
  %v40 = vld [vmem:[%s0 + $0xb8] sm:$0xff]
  %v41 = vld [vmem:[%s0 + $0xc0] sm:$0xff]
  %v42 = vld [vmem:[%s0 + $0xc8] sm:$0xff]
  %v43 = vld [vmem:[%s0 + $0xd0] sm:$0xff]
  %v44 = vld [vmem:[%s0 + $0xd8] sm:$0xff]
  %v45 = vld [vmem:[%s0 + $0xe0] sm:$0xff]
  %v46 = vld [vmem:[%s0 + $0xe8] sm:$0xff]
  %v47 = vld [vmem:[%s0 + $0xf0] sm:$0xff]
  %v48 = vld [vmem:[%s0 + $0xf8] sm:$0xff]
  %v49 = vld [vmem:[%s1] sm:$0xff]
  %v50 = vld [vmem:[%s1 + $0x8] sm:$0xff]
  %v51 = vld [vmem:[%s1 + $0x10] sm:$0xff]
  %v52 = vld [vmem:[%s1 + $0x18] sm:$0xff]
  %v53 = vld [vmem:[%s1 + $0x20] sm:$0xff]
  %v54 = vld [vmem:[%s1 + $0x28] sm:$0xff]
  %v55 = vld [vmem:[%s1 + $0x30] sm:$0xff]
  %v56 = vld [vmem:[%s1 + $0x38] sm:$0xff]
  %v57 = vld [vmem:[%s1 + $0x40] sm:$0xff]
  %v58 = vld [vmem:[%s1 + $0x48] sm:$0xff]
  %v59 = vld [vmem:[%s1 + $0x50] sm:$0xff]
  %v60 = vld [vmem:[%s1 + $0x58] sm:$0xff]
  %v61 = vld [vmem:[%s1 + $0x60] sm:$0xff]
  %v62 = vld [vmem:[%s1 + $0x68] sm:$0xff]
  %v63 = vld [vmem:[%s1 + $0x70] sm:$0xff]
  %v64 = vld [vmem:[%s1 + $0x78] sm:$0xff]
  %v65 = vld [vmem:[%s1 + $0x80] sm:$0xff]
  %v66 = vld [vmem:[%s1 + $0x88] sm:$0xff]
  %v67 = vld [vmem:[%s1 + $0x90] sm:$0xff]
  %v68 = vld [vmem:[%s1 + $0x98] sm:$0xff]
  %v69 = vld [vmem:[%s1 + $0xa0] sm:$0xff]
  %v70 = vld [vmem:[%s1 + $0xa8] sm:$0xff]
  %v71 = vld [vmem:[%s1 + $0xb0] sm:$0xff]
  %v72 = vld [vmem:[%s1 + $0xb8] sm:$0xff]
  %v73 = vld [vmem:[%s1 + $0xc0] sm:$0xff]
  %v74 = vld [vmem:[%s1 + $0xc8] sm:$0xff]
  %v75 = vld [vmem:[%s1 + $0xd0] sm:$0xff]
  %v76 = vld [vmem:[%s1 + $0xd8] sm:$0xff]
  %v77 = vld [vmem:[%s1 + $0xe0] sm:$0xff]
  %v78 = vld [vmem:[%s1 + $0xe8] sm:$0xff]
  %v79 = vld [vmem:[%s1 + $0xf0] sm:$0xff]
  %v80 = vld [vmem:[%s1 + $0xf8] sm:$0xff]
  %81 = vmatprep.subr.mxu0 0.0
  %82 = vmatpush1.msra.mxu0 %v49
  %83 = vmatprep.subr.mxu0 0.0
  %84 = vmatpush1.msra.mxu0 %v50
  %85 = vmatprep.subr.mxu0 0.0
  %86 = vmatpush1.msra.mxu0 %v51
  %87 = vmatprep.subr.mxu0 0.0
  %88 = vmatpush1.msra.mxu0 %v52
  %89 = vmatprep.subr.mxu0 0.0
  %90 = vmatpush1.msra.mxu0 %v53
  %91 = vmatprep.subr.mxu0 0.0
  %92 = vmatpush1.msra.mxu0 %v54
  %93 = vmatprep.subr.mxu0 0.0
  %94 = vmatpush1.msra.mxu0 %v55
  %95 = vmatprep.subr.mxu0 0.0
  %96 = vmatpush1.msra.mxu0 %v56
  %97 = vmatprep.subr.mxu0 0.0
  %98 = vmatpush1.msra.mxu0 %v57
  %99 = vmatprep.subr.mxu0 0.0
  %100 = vmatpush1.msra.mxu0 %v58
  %101 = vmatprep.subr.mxu0 0.0
  %102 = vmatpush1.msra.mxu0 %v59
  %103 = vmatprep.subr.mxu0 0.0
  %104 = vmatpush1.msra.mxu0 %v60
  %105 = vmatprep.subr.mxu0 0.0
  %106 = vmatpush1.msra.mxu0 %v61
  %107 = vmatprep.subr.mxu0 0.0
  %108 = vmatpush1.msra.mxu0 %v62
  %109 = vmatprep.subr.mxu0 0.0
  %110 = vmatpush1.msra.mxu0 %v63
  %111 = vmatprep.subr.mxu0 0.0
  %112 = vmatpush1.msra.mxu0 %v64
  %113 = vmatprep.subr.mxu0 0.0
  %114 = vmatpush1.msra.mxu0 %v65
  %115 = vmatprep.subr.mxu0 0.0
  %116 = vmatpush1.msra.mxu0 %v66
  %117 = vmatprep.subr.mxu0 0.0
  %118 = vmatpush1.msra.mxu0 %v67
  %119 = vmatprep.subr.mxu0 0.0
  %120 = vmatpush1.msra.mxu0 %v68
  %121 = vmatprep.subr.mxu0 0.0
  %122 = vmatpush1.msra.mxu0 %v69
  %123 = vmatprep.subr.mxu0 0.0
  %124 = vmatpush1.msra.mxu0 %v70
  %125 = vmatprep.subr.mxu0 0.0
  %126 = vmatpush1.msra.mxu0 %v71
  %127 = vmatprep.subr.mxu0 0.0
  %128 = vmatpush1.msra.mxu0 %v72
  %129 = vmatprep.subr.mxu0 0.0
  %130 = vmatpush1.msra.mxu0 %v73
  %131 = vmatprep.subr.mxu0 0.0
  %132 = vmatpush1.msra.mxu0 %v74
  %133 = vmatprep.subr.mxu0 0.0
  %134 = vmatpush1.msra.mxu0 %v75
  %135 = vmatprep.subr.mxu0 0.0
  %136 = vmatpush1.msra.mxu0 %v76
  %137 = vmatprep.subr.mxu0 0.0
  %138 = vmatpush1.msra.mxu0 %v77
  %139 = vmatprep.subr.mxu0 0.0
  %140 = vmatpush1.msra.mxu0 %v78
  %141 = vmatprep.subr.mxu0 0.0
  %142 = vmatpush1.msra.mxu0 %v79
  %143 = vmatprep.subr.mxu0 0.0
  %144 = vmatpush1.msra.mxu0 %v80
  %145 = vmatprep.mubr.f32.mxu0 %v18
  %146 = vmatmul.mubr.f32.gmra.mrb[0].mxu0 %v17
  %v147 = vpop.f32.mrb[0].mxu0
  %v148 = vadd.f32 0.0, %v147
  %v149 = vpop.f32.mrb[0].mxu0
  %150 = vmatprep.mubr.f32.mxu0 %v20
  %151 = vmatmul.mubr.f32.gmra.mrb[0].mxu0 %v19
  %v152 = vpop.f32.mrb[0].mxu0
  %v153 = vadd.f32 0.0, %v152
  %v154 = vpop.f32.mrb[0].mxu0
  %155 = vmatprep.mubr.f32.mxu0 %v22
  %156 = vmatmul.mubr.f32.gmra.mrb[0].mxu0 %v21
  %v157 = vpop.f32.mrb[0].mxu0
  %v158 = vadd.f32 0.0, %v157
  %v159 = vpop.f32.mrb[0].mxu0
  %160 = vmatprep.mubr.f32.mxu0 %v24
  %161 = vmatmul.mubr.f32.gmra.mrb[0].mxu0 %v23
  %v162 = vpop.f32.mrb[0].mxu0
  %v163 = vadd.f32 0.0, %v162
  %v164 = vpop.f32.mrb[0].mxu0
  %165 = vmatprep.mubr.f32.mxu0 %v26
  %166 = vmatmul.mubr.f32.gmra.mrb[0].mxu0 %v25
  %v167 = vpop.f32.mrb[0].mxu0
  %v168 = vadd.f32 0.0, %v167
  %v169 = vpop.f32.mrb[0].mxu0
  %170 = vmatprep.mubr.f32.mxu0 %v28
  %171 = vmatmul.mubr.f32.gmra.mrb[0].mxu0 %v27
  %v172 = vpop.f32.mrb[0].mxu0
  %v173 = vadd.f32 0.0, %v172
  %v174 = vpop.f32.mrb[0].mxu0
  %175 = vmatprep.mubr.f32.mxu0 %v30
  %176 = vmatmul.mubr.f32.gmra.mrb[0].mxu0 %v29
  %v177 = vpop.f32.mrb[0].mxu0
  %v178 = vadd.f32 0.0, %v177
  %v179 = vpop.f32.mrb[0].mxu0
  %180 = vmatprep.mubr.f32.mxu0 %v32
  %181 = vmatmul.mubr.f32.gmra.mrb[0].mxu0 %v31
  %v182 = vpop.f32.mrb[0].mxu0
  %v183 = vadd.f32 0.0, %v182
  %v184 = vpop.f32.mrb[0].mxu0
  %185 = vmatprep.mubr.f32.mxu0 %v34
  %186 = vmatmul.mubr.f32.gmra.mrb[0].mxu0 %v33
  %v187 = vpop.f32.mrb[0].mxu0
  %v188 = vadd.f32 0.0, %v187
  %v189 = vpop.f32.mrb[0].mxu0
  %190 = vmatprep.mubr.f32.mxu0 %v36
  %191 = vmatmul.mubr.f32.gmra.mrb[0].mxu0 %v35
  %v192 = vpop.f32.mrb[0].mxu0
  %v193 = vadd.f32 0.0, %v192
  %v194 = vpop.f32.mrb[0].mxu0
  %195 = vmatprep.mubr.f32.mxu0 %v38
  %196 = vmatmul.mubr.f32.gmra.mrb[0].mxu0 %v37
  %v197 = vpop.f32.mrb[0].mxu0
  %v198 = vadd.f32 0.0, %v197
  %v199 = vpop.f32.mrb[0].mxu0
  %200 = vmatprep.mubr.f32.mxu0 %v40
  %201 = vmatmul.mubr.f32.gmra.mrb[0].mxu0 %v39
  %v202 = vpop.f32.mrb[0].mxu0
  %v203 = vadd.f32 0.0, %v202
  %v204 = vpop.f32.mrb[0].mxu0
  %205 = vmatprep.mubr.f32.mxu0 %v42
  %206 = vmatmul.mubr.f32.gmra.mrb[0].mxu0 %v41
  %v207 = vpop.f32.mrb[0].mxu0
  %v208 = vadd.f32 0.0, %v207
  %v209 = vpop.f32.mrb[0].mxu0
  %210 = vmatprep.mubr.f32.mxu0 %v44
  %211 = vmatmul.mubr.f32.gmra.mrb[0].mxu0 %v43
  %v212 = vpop.f32.mrb[0].mxu0
  %v213 = vadd.f32 0.0, %v212
  %v214 = vpop.f32.mrb[0].mxu0
  %215 = vmatprep.mubr.f32.mxu0 %v46
  %216 = vmatmul.mubr.f32.gmra.mrb[0].mxu0 %v45
  %v217 = vpop.f32.mrb[0].mxu0
  %v218 = vadd.f32 0.0, %v217
  %v219 = vpop.f32.mrb[0].mxu0
  %220 = vmatprep.mubr.f32.mxu0 %v48
  %221 = vmatmul.mubr.f32.gmra.mrb[0].mxu0 %v47
  %v222 = vpop.f32.mrb[0].mxu0
  %v223 = vadd.f32 0.0, %v222
  %v224 = vpop.f32.mrb[0].mxu0
  %225 = vdwg.mxu0
  %s226 = smul.u32 0, 128
  %s227 = scalar_lea.vmem [#allocation2], %s226
  %vm228 = vcmask 261120
  %229 = vst.msk [vmem:[%s227] sm:$0xff] %vm228, %v148
  %230 = vst.msk [vmem:[%s227 + $0x8] sm:$0xff] %vm228, %v153
  %231 = vst.msk [vmem:[%s227 + $0x10] sm:$0xff] %vm228, %v158
  %232 = vst.msk [vmem:[%s227 + $0x18] sm:$0xff] %vm228, %v163
  %233 = vst.msk [vmem:[%s227 + $0x20] sm:$0xff] %vm228, %v168
  %234 = vst.msk [vmem:[%s227 + $0x28] sm:$0xff] %vm228, %v173
  %235 = vst.msk [vmem:[%s227 + $0x30] sm:$0xff] %vm228, %v178
  %236 = vst.msk [vmem:[%s227 + $0x38] sm:$0xff] %vm228, %v183
  %237 = vst.msk [vmem:[%s227 + $0x40] sm:$0xff] %vm228, %v188
  %238 = vst.msk [vmem:[%s227 + $0x48] sm:$0xff] %vm228, %v193
  %239 = vst.msk [vmem:[%s227 + $0x50] sm:$0xff] %vm228, %v198
  %240 = vst.msk [vmem:[%s227 + $0x58] sm:$0xff] %vm228, %v203
  %241 = vst.msk [vmem:[%s227 + $0x60] sm:$0xff] %vm228, %v208
  %242 = vst.msk [vmem:[%s227 + $0x68] sm:$0xff] %vm228, %v213
  %243 = vst.msk [vmem:[%s227 + $0x70] sm:$0xff] %vm228, %v218
  %244 = vst.msk [vmem:[%s227 + $0x78] sm:$0xff] %vm228, %v223
  %p245 = scmp.eq.s32.totalorder 0, 0
  // Predicated region
  $region18: #{icml_d_forward.12} parent=0 // pred_check
    %p246 = pneg %p245
  $region19: #{icml_d_forward.12} parent=0 // pred_check_branch
    %248 = sbr.rel (%p246) target = $region21
  $region20: #{icml_d_forward.12} parent=0 // pred_region
    %v249 = vld [vmem:[#allocation2] sm:$0xff]
    %v250 = vld [vmem:[#allocation2 + $0x8] sm:$0xff]
    %v251 = vld [vmem:[#allocation2 + $0x10] sm:$0xff]
    %v252 = vld [vmem:[#allocation2 + $0x18] sm:$0xff]
    %v253 = vld [vmem:[#allocation2 + $0x20] sm:$0xff]
    %v254 = vld [vmem:[#allocation2 + $0x28] sm:$0xff]
    %v255 = vld [vmem:[#allocation2 + $0x30] sm:$0xff]
    %v256 = vld [vmem:[#allocation2 + $0x38] sm:$0xff]
    %v257 = vld [vmem:[#allocation2 + $0x40] sm:$0xff]
    %v258 = vld [vmem:[#allocation2 + $0x48] sm:$0xff]
    %v259 = vld [vmem:[#allocation2 + $0x50] sm:$0xff]
    %v260 = vld [vmem:[#allocation2 + $0x58] sm:$0xff]
    %v261 = vld [vmem:[#allocation2 + $0x60] sm:$0xff]
    %v262 = vld [vmem:[#allocation2 + $0x68] sm:$0xff]
    %v263 = vld [vmem:[#allocation2 + $0x70] sm:$0xff]
    %v264 = vld [vmem:[#allocation2 + $0x78] sm:$0xff]
    %v265 = vsel %vm228, %v249, 0.0
    %v266 = vsel %vm228, %v250, 0.0
    %v267 = vadd.f32 %v265, %v266
    %v268 = vsel %vm228, %v251, 0.0
    %v269 = vadd.f32 %v267, %v268
    %v270 = vsel %vm228, %v252, 0.0
    %v271 = vadd.f32 %v269, %v270
    %v272 = vsel %vm228, %v253, 0.0
    %v273 = vadd.f32 %v271, %v272
    %v274 = vsel %vm228, %v254, 0.0
    %v275 = vadd.f32 %v273, %v274
    %v276 = vsel %vm228, %v255, 0.0
    %v277 = vadd.f32 %v275, %v276
    %v278 = vsel %vm228, %v256, 0.0
    %v279 = vadd.f32 %v277, %v278
    %v280 = vsel %vm228, %v257, 0.0
    %v281 = vadd.f32 %v279, %v280
    %v282 = vsel %vm228, %v258, 0.0
    %v283 = vadd.f32 %v281, %v282
    %v284 = vsel %vm228, %v259, 0.0
    %v285 = vadd.f32 %v283, %v284
    %v286 = vsel %vm228, %v260, 0.0
    %v287 = vadd.f32 %v285, %v286
    %v288 = vsel %vm228, %v261, 0.0
    %v289 = vadd.f32 %v287, %v288
    %v290 = vsel %vm228, %v262, 0.0
    %v291 = vadd.f32 %v289, %v290
    %v292 = vsel %vm228, %v263, 0.0
    %v293 = vadd.f32 %v291, %v292
    %v294 = vsel %vm228, %v264, 0.0
    %v295 = vadd.f32 %v293, %v294
    %v296 = vrot.slane %v295, 4
    %v297 = vadd.f32 %v295, %v296
    %v298 = vrot.slane %v297, 2
    %v299 = vadd.f32 %v297, %v298
    %v300 = vrot.slane %v299, 1
    %v301 = vadd.f32 %v299, %v300
    %v302 = vrcp.pop 128.0
    %v303 = vmul.f32 %v301, %v302
    %v304 = vsub.f32 %v249, %v303
    %v305 = vsub.f32 %v250, %v303
    %v306 = vsub.f32 %v251, %v303
    %v307 = vsub.f32 %v252, %v303
    %v308 = vsub.f32 %v253, %v303
    %v309 = vsub.f32 %v254, %v303
    %v310 = vsub.f32 %v255, %v303
    %v311 = vsub.f32 %v256, %v303
    %v312 = vsub.f32 %v257, %v303
    %v313 = vsub.f32 %v258, %v303
    %v314 = vsub.f32 %v259, %v303
    %v315 = vsub.f32 %v260, %v303
    %v316 = vsub.f32 %v261, %v303
    %v317 = vsub.f32 %v262, %v303
    %v318 = vsub.f32 %v263, %v303
    %v319 = vsub.f32 %v264, %v303
    %v320 = vmul.f32 %v304, %v304
    %v321 = vmul.f32 %v305, %v305
    %v322 = vmul.f32 %v306, %v306
    %v323 = vmul.f32 %v307, %v307
    %v324 = vmul.f32 %v308, %v308
    %v325 = vmul.f32 %v309, %v309
    %v326 = vmul.f32 %v310, %v310
    %v327 = vmul.f32 %v311, %v311
    %v328 = vmul.f32 %v312, %v312
    %v329 = vmul.f32 %v313, %v313
    %v330 = vmul.f32 %v314, %v314
    %v331 = vmul.f32 %v315, %v315
    %v332 = vmul.f32 %v316, %v316
    %v333 = vmul.f32 %v317, %v317
    %v334 = vmul.f32 %v318, %v318
    %v335 = vmul.f32 %v319, %v319
    %v336 = vsel %vm228, %v320, 0.0
    %v337 = vsel %vm228, %v321, 0.0
    %v338 = vadd.f32 %v336, %v337
    %v339 = vsel %vm228, %v322, 0.0
    %v340 = vadd.f32 %v338, %v339
    %v341 = vsel %vm228, %v323, 0.0
    %v342 = vadd.f32 %v340, %v341
    %v343 = vsel %vm228, %v324, 0.0
    %v344 = vadd.f32 %v342, %v343
    %v345 = vsel %vm228, %v325, 0.0
    %v346 = vadd.f32 %v344, %v345
    %v347 = vsel %vm228, %v326, 0.0
    %v348 = vadd.f32 %v346, %v347
    %v349 = vsel %vm228, %v327, 0.0
    %v350 = vadd.f32 %v348, %v349
    %v351 = vsel %vm228, %v328, 0.0
    %v352 = vadd.f32 %v350, %v351
    %v353 = vsel %vm228, %v329, 0.0
    %v354 = vadd.f32 %v352, %v353
    %v355 = vsel %vm228, %v330, 0.0
    %v356 = vadd.f32 %v354, %v355
    %v357 = vsel %vm228, %v331, 0.0
    %v358 = vadd.f32 %v356, %v357
    %v359 = vsel %vm228, %v332, 0.0
    %v360 = vadd.f32 %v358, %v359
    %v361 = vsel %vm228, %v333, 0.0
    %v362 = vadd.f32 %v360, %v361
    %v363 = vsel %vm228, %v334, 0.0
    %v364 = vadd.f32 %v362, %v363
    %v365 = vsel %vm228, %v335, 0.0
    %v366 = vadd.f32 %v364, %v365
    %v367 = vrot.slane %v366, 4
    %v368 = vadd.f32 %v366, %v367
    %v369 = vrot.slane %v368, 2
    %v370 = vadd.f32 %v368, %v369
    %v371 = vrot.slane %v370, 1
    %v372 = vadd.f32 %v370, %v371
    %v373 = vmul.f32 %v372, %v302
    %v374 = vadd.f32 %v373, 1e-05
    %v375 = vrsqrt.pop %v374
    %v376 = vmul.f32 %v304, %v375
    %v377 = vmul.f32 %v305, %v375
    %v378 = vmul.f32 %v306, %v375
    %v379 = vmul.f32 %v307, %v375
    %v380 = vmul.f32 %v308, %v375
    %v381 = vmul.f32 %v309, %v375
    %v382 = vmul.f32 %v310, %v375
    %v383 = vmul.f32 %v311, %v375
    %v384 = vmul.f32 %v312, %v375
    %v385 = vmul.f32 %v313, %v375
    %v386 = vmul.f32 %v314, %v375
    %v387 = vmul.f32 %v315, %v375
    %v388 = vmul.f32 %v316, %v375
    %v389 = vmul.f32 %v317, %v375
    %v390 = vmul.f32 %v318, %v375
    %v391 = vmul.f32 %v319, %v375
    %v392 = vld [vmem:[%s2] sm:$0x1]
    %v394 = vlaneseq
    %v395 = vshrl.u32 %v394, 7
    %v396 = vsub.s32 0, %v395
    %v397 = vrot.slane %v392, %v396
    %v399 = vmul.f32 %v376, %v397
    %v400 = vmul.f32 %v377, %v397
    %v401 = vmul.f32 %v378, %v397
    %v402 = vmul.f32 %v379, %v397
    %v403 = vmul.f32 %v380, %v397
    %v404 = vmul.f32 %v381, %v397
    %v405 = vmul.f32 %v382, %v397
    %v406 = vmul.f32 %v383, %v397
    %v407 = vmul.f32 %v384, %v397
    %v408 = vmul.f32 %v385, %v397
    %v409 = vmul.f32 %v386, %v397
    %v410 = vmul.f32 %v387, %v397
    %v411 = vmul.f32 %v388, %v397
    %v412 = vmul.f32 %v389, %v397
    %v413 = vmul.f32 %v390, %v397
    %v414 = vmul.f32 %v391, %v397
    %v415 = vld [vmem:[%s3] sm:$0x1]
    %v417 = vlaneseq
    %v418 = vshrl.u32 %v417, 7
    %v419 = vsub.s32 0, %v418
    %v420 = vrot.slane %v415, %v419
    %v422 = vadd.f32 %v399, %v420
    %v423 = vadd.f32 %v400, %v420
    %v424 = vadd.f32 %v401, %v420
    %v425 = vadd.f32 %v402, %v420
    %v426 = vadd.f32 %v403, %v420
    %v427 = vadd.f32 %v404, %v420
    %v428 = vadd.f32 %v405, %v420
    %v429 = vadd.f32 %v406, %v420
    %v430 = vadd.f32 %v407, %v420
    %v431 = vadd.f32 %v408, %v420
    %v432 = vadd.f32 %v409, %v420
    %v433 = vadd.f32 %v410, %v420
    %v434 = vadd.f32 %v411, %v420
    %v435 = vadd.f32 %v412, %v420
    %v436 = vadd.f32 %v413, %v420
    %v437 = vadd.f32 %v414, %v420
    %vm438 = vcmp.ge.f32.partialorder %v422, 0.0
    %vm439 = vcmp.ge.f32.partialorder %v423, 0.0
    %vm440 = vcmp.ge.f32.partialorder %v424, 0.0
    %vm441 = vcmp.ge.f32.partialorder %v425, 0.0
    %vm442 = vcmp.ge.f32.partialorder %v426, 0.0
    %vm443 = vcmp.ge.f32.partialorder %v427, 0.0
    %vm444 = vcmp.ge.f32.partialorder %v428, 0.0
    %vm445 = vcmp.ge.f32.partialorder %v429, 0.0
    %vm446 = vcmp.ge.f32.partialorder %v430, 0.0
    %vm447 = vcmp.ge.f32.partialorder %v431, 0.0
    %vm448 = vcmp.ge.f32.partialorder %v432, 0.0
    %vm449 = vcmp.ge.f32.partialorder %v433, 0.0
    %vm450 = vcmp.ge.f32.partialorder %v434, 0.0
    %vm451 = vcmp.ge.f32.partialorder %v435, 0.0
    %vm452 = vcmp.ge.f32.partialorder %v436, 0.0
    %vm453 = vcmp.ge.f32.partialorder %v437, 0.0
    %v454 = vmul.f32 %v422, 0.2
    %v455 = vmul.f32 %v423, 0.2
    %v456 = vmul.f32 %v424, 0.2
    %v457 = vmul.f32 %v425, 0.2
    %v458 = vmul.f32 %v426, 0.2
    %v459 = vmul.f32 %v427, 0.2
    %v460 = vmul.f32 %v428, 0.2
    %v461 = vmul.f32 %v429, 0.2
    %v462 = vmul.f32 %v430, 0.2
    %v463 = vmul.f32 %v431, 0.2
    %v464 = vmul.f32 %v432, 0.2
    %v465 = vmul.f32 %v433, 0.2
    %v466 = vmul.f32 %v434, 0.2
    %v467 = vmul.f32 %v435, 0.2
    %v468 = vmul.f32 %v436, 0.2
    %v469 = vmul.f32 %v437, 0.2
    %v470 = vsel %vm438, %v422, %v454
    %v471 = vsel %vm439, %v423, %v455
    %v472 = vsel %vm440, %v424, %v456
    %v473 = vsel %vm441, %v425, %v457
    %v474 = vsel %vm442, %v426, %v458
    %v475 = vsel %vm443, %v427, %v459
    %v476 = vsel %vm444, %v428, %v460
    %v477 = vsel %vm445, %v429, %v461
    %v478 = vsel %vm446, %v430, %v462
    %v479 = vsel %vm447, %v431, %v463
    %v480 = vsel %vm448, %v432, %v464
    %v481 = vsel %vm449, %v433, %v465
    %v482 = vsel %vm450, %v434, %v466
    %v483 = vsel %vm451, %v435, %v467
    %v484 = vsel %vm452, %v436, %v468
    %v485 = vsel %vm453, %v437, %v469
    %486 = vst.msk [vmem:[%s4] sm:$0xff] %vm228, %v470
    %487 = vst.msk [vmem:[%s4 + $0x8] sm:$0xff] %vm228, %v471
    %488 = vst.msk [vmem:[%s4 + $0x10] sm:$0xff] %vm228, %v472
    %489 = vst.msk [vmem:[%s4 + $0x18] sm:$0xff] %vm228, %v473
    %490 = vst.msk [vmem:[%s4 + $0x20] sm:$0xff] %vm228, %v474
    %491 = vst.msk [vmem:[%s4 + $0x28] sm:$0xff] %vm228, %v475
    %492 = vst.msk [vmem:[%s4 + $0x30] sm:$0xff] %vm228, %v476
    %493 = vst.msk [vmem:[%s4 + $0x38] sm:$0xff] %vm228, %v477
    %494 = vst.msk [vmem:[%s4 + $0x40] sm:$0xff] %vm228, %v478
    %495 = vst.msk [vmem:[%s4 + $0x48] sm:$0xff] %vm228, %v479
    %496 = vst.msk [vmem:[%s4 + $0x50] sm:$0xff] %vm228, %v480
    %497 = vst.msk [vmem:[%s4 + $0x58] sm:$0xff] %vm228, %v481
    %498 = vst.msk [vmem:[%s4 + $0x60] sm:$0xff] %vm228, %v482
    %499 = vst.msk [vmem:[%s4 + $0x68] sm:$0xff] %vm228, %v483
    %500 = vst.msk [vmem:[%s4 + $0x70] sm:$0xff] %vm228, %v484
    %501 = vst.msk [vmem:[%s4 + $0x78] sm:$0xff] %vm228, %v485
  $region21: #{icml_d_forward.12} parent=0 // pred_fallthru
    _
  // Predicated region
  $region22: #{icml_d_forward.12} parent=0 // pred_check
    _
  $region23: #{icml_d_forward.12} parent=0 // pred_check_branch
    %503 = sbr.rel (0) target = $region25
  $region24: #{icml_d_forward.12} parent=0 // pred_region
    _
  $region25: #{icml_d_forward.12} parent=0 // pred_fallthru
    _
  // Predicated region
  $region26: #{icml_d_forward.12} parent=0 // pred_check
    _
  $region27: #{icml_d_forward.12} parent=0 // pred_check_branch
    %505 = sbr.rel (0) target = $region29
  $region28: #{icml_d_forward.12} parent=0 // pred_region
    _
  $region29: #{icml_d_forward.12} parent=0 // pred_fallthru
    _

// kernel: icml_d_forward.13
$region0: #{icml_d_forward.13}
  #allocation0 [shape = 'u32[]', space=smem, size = 0x4, offset = 0x4, fixed_abs, tag = 'smem constant byte address 0x4 - core index']
  #allocation1 [shape = 'u32[144,128]{1,0:T(1,128)}', space=vmem, size = 0x12000, scoped, tag = 'internal scratch']
  #allocation2 [shape = 'f32[32,64]{1,0:T(8,128)}', space=vmem, size = 0x4000, scoped, tag = 'scratch operand']
  %s0 = inlined_call_operand.vmem [shape: f32[32,512], index: 0, kind: input, shape index: {}]
  %s1 = inlined_call_operand.vmem [shape: f32[512,64], index: 1, kind: input, shape index: {}]
  %s2 = inlined_call_operand.vmem [shape: f32[1,64], index: 2, kind: input, shape index: {}]
  %s3 = inlined_call_operand.vmem [shape: f32[1,64], index: 3, kind: input, shape index: {}]
  %s4 = inlined_call_operand.vmem [shape: f32[32,64], index: 4, kind: output, shape index: {}]
  %s5 = sld [smem:[#allocation0]]
  $region30: #{icml_d_forward.13} parent=0
    _
  %s7 = ssub.s32 1, %s5
  %s8 = scalar_select 0, %s7, %s5
  // Predicated region
  $region2: #{icml_d_forward.13} parent=0 // pred_check
    _
  $region3: #{icml_d_forward.13} parent=0 // pred_check_branch
    %10 = sbr.rel (0) target = $region5
  $region4: #{icml_d_forward.13} parent=0 // pred_region
    _
  $region5: #{icml_d_forward.13} parent=0 // pred_fallthru
    _
  // Predicated region
  $region6: #{icml_d_forward.13} parent=0 // pred_check
    _
  $region7: #{icml_d_forward.13} parent=0 // pred_check_branch
    %12 = sbr.rel (0) target = $region9
  $region8: #{icml_d_forward.13} parent=0 // pred_region
    _
  $region9: #{icml_d_forward.13} parent=0 // pred_fallthru
    _
  // Predicated region
  $region10: #{icml_d_forward.13} parent=0 // pred_check
    _
  $region11: #{icml_d_forward.13} parent=0 // pred_check_branch
    %14 = sbr.rel (0) target = $region13
  $region12: #{icml_d_forward.13} parent=0 // pred_region
    _
  $region13: #{icml_d_forward.13} parent=0 // pred_fallthru
    _
  // Predicated region
  $region14: #{icml_d_forward.13} parent=0 // pred_check
    _
  $region15: #{icml_d_forward.13} parent=0 // pred_check_branch
    %16 = sbr.rel (0) target = $region17
  $region16: #{icml_d_forward.13} parent=0 // pred_region
    _
  $region17: #{icml_d_forward.13} parent=0 // pred_fallthru
    _
  %v17 = vld [vmem:[%s0] sm:$0xff]
  %v18 = vld [vmem:[%s0 + $0x8] sm:$0xff]
  %v19 = vld [vmem:[%s0 + $0x10] sm:$0xff]
  %v20 = vld [vmem:[%s0 + $0x18] sm:$0xff]
  %v21 = vld [vmem:[%s0 + $0x20] sm:$0xff]
  %v22 = vld [vmem:[%s0 + $0x28] sm:$0xff]
  %v23 = vld [vmem:[%s0 + $0x30] sm:$0xff]
  %v24 = vld [vmem:[%s0 + $0x38] sm:$0xff]
  %v25 = vld [vmem:[%s0 + $0x40] sm:$0xff]
  %v26 = vld [vmem:[%s0 + $0x48] sm:$0xff]
  %v27 = vld [vmem:[%s0 + $0x50] sm:$0xff]
  %v28 = vld [vmem:[%s0 + $0x58] sm:$0xff]
  %v29 = vld [vmem:[%s0 + $0x60] sm:$0xff]
  %v30 = vld [vmem:[%s0 + $0x68] sm:$0xff]
  %v31 = vld [vmem:[%s0 + $0x70] sm:$0xff]
  %v32 = vld [vmem:[%s0 + $0x78] sm:$0xff]
  %v33 = vld [vmem:[%s1] sm:$0xff]
  %v34 = vld [vmem:[%s1 + $0x8] sm:$0xff]
  %v35 = vld [vmem:[%s1 + $0x10] sm:$0xff]
  %v36 = vld [vmem:[%s1 + $0x18] sm:$0xff]
  %v37 = vld [vmem:[%s1 + $0x20] sm:$0xff]
  %v38 = vld [vmem:[%s1 + $0x28] sm:$0xff]
  %v39 = vld [vmem:[%s1 + $0x30] sm:$0xff]
  %v40 = vld [vmem:[%s1 + $0x38] sm:$0xff]
  %v41 = vld [vmem:[%s1 + $0x40] sm:$0xff]
  %v42 = vld [vmem:[%s1 + $0x48] sm:$0xff]
  %v43 = vld [vmem:[%s1 + $0x50] sm:$0xff]
  %v44 = vld [vmem:[%s1 + $0x58] sm:$0xff]
  %v45 = vld [vmem:[%s1 + $0x60] sm:$0xff]
  %v46 = vld [vmem:[%s1 + $0x68] sm:$0xff]
  %v47 = vld [vmem:[%s1 + $0x70] sm:$0xff]
  %v48 = vld [vmem:[%s1 + $0x78] sm:$0xff]
  %v49 = vld [vmem:[%s1 + $0x80] sm:$0xff]
  %v50 = vld [vmem:[%s1 + $0x88] sm:$0xff]
  %v51 = vld [vmem:[%s1 + $0x90] sm:$0xff]
  %v52 = vld [vmem:[%s1 + $0x98] sm:$0xff]
  %v53 = vld [vmem:[%s1 + $0xa0] sm:$0xff]
  %v54 = vld [vmem:[%s1 + $0xa8] sm:$0xff]
  %v55 = vld [vmem:[%s1 + $0xb0] sm:$0xff]
  %v56 = vld [vmem:[%s1 + $0xb8] sm:$0xff]
  %v57 = vld [vmem:[%s1 + $0xc0] sm:$0xff]
  %v58 = vld [vmem:[%s1 + $0xc8] sm:$0xff]
  %v59 = vld [vmem:[%s1 + $0xd0] sm:$0xff]
  %v60 = vld [vmem:[%s1 + $0xd8] sm:$0xff]
  %v61 = vld [vmem:[%s1 + $0xe0] sm:$0xff]
  %v62 = vld [vmem:[%s1 + $0xe8] sm:$0xff]
  %v63 = vld [vmem:[%s1 + $0xf0] sm:$0xff]
  %v64 = vld [vmem:[%s1 + $0xf8] sm:$0xff]
  %v65 = vld [vmem:[%s1 + $0x100] sm:$0xff]
  %v66 = vld [vmem:[%s1 + $0x108] sm:$0xff]
  %v67 = vld [vmem:[%s1 + $0x110] sm:$0xff]
  %v68 = vld [vmem:[%s1 + $0x118] sm:$0xff]
  %v69 = vld [vmem:[%s1 + $0x120] sm:$0xff]
  %v70 = vld [vmem:[%s1 + $0x128] sm:$0xff]
  %v71 = vld [vmem:[%s1 + $0x130] sm:$0xff]
  %v72 = vld [vmem:[%s1 + $0x138] sm:$0xff]
  %v73 = vld [vmem:[%s1 + $0x140] sm:$0xff]
  %v74 = vld [vmem:[%s1 + $0x148] sm:$0xff]
  %v75 = vld [vmem:[%s1 + $0x150] sm:$0xff]
  %v76 = vld [vmem:[%s1 + $0x158] sm:$0xff]
  %v77 = vld [vmem:[%s1 + $0x160] sm:$0xff]
  %v78 = vld [vmem:[%s1 + $0x168] sm:$0xff]
  %v79 = vld [vmem:[%s1 + $0x170] sm:$0xff]
  %v80 = vld [vmem:[%s1 + $0x178] sm:$0xff]
  %v81 = vld [vmem:[%s1 + $0x180] sm:$0xff]
  %v82 = vld [vmem:[%s1 + $0x188] sm:$0xff]
  %v83 = vld [vmem:[%s1 + $0x190] sm:$0xff]
  %v84 = vld [vmem:[%s1 + $0x198] sm:$0xff]
  %v85 = vld [vmem:[%s1 + $0x1a0] sm:$0xff]
  %v86 = vld [vmem:[%s1 + $0x1a8] sm:$0xff]
  %v87 = vld [vmem:[%s1 + $0x1b0] sm:$0xff]
  %v88 = vld [vmem:[%s1 + $0x1b8] sm:$0xff]
  %v89 = vld [vmem:[%s1 + $0x1c0] sm:$0xff]
  %v90 = vld [vmem:[%s1 + $0x1c8] sm:$0xff]
  %v91 = vld [vmem:[%s1 + $0x1d0] sm:$0xff]
  %v92 = vld [vmem:[%s1 + $0x1d8] sm:$0xff]
  %v93 = vld [vmem:[%s1 + $0x1e0] sm:$0xff]
  %v94 = vld [vmem:[%s1 + $0x1e8] sm:$0xff]
  %v95 = vld [vmem:[%s1 + $0x1f0] sm:$0xff]
  %v96 = vld [vmem:[%s1 + $0x1f8] sm:$0xff]
  %97 = vmatprep.subr.mxu0 0.0
  %98 = vmatpush1.msra.mxu0 %v33
  %99 = vmatprep.subr.mxu0 0.0
  %100 = vmatpush1.msra.mxu0 %v34
  %101 = vmatprep.subr.mxu0 0.0
  %102 = vmatpush1.msra.mxu0 %v35
  %103 = vmatprep.subr.mxu0 0.0
  %104 = vmatpush1.msra.mxu0 %v36
  %105 = vmatprep.subr.mxu0 0.0
  %106 = vmatpush1.msra.mxu0 %v37
  %107 = vmatprep.subr.mxu0 0.0
  %108 = vmatpush1.msra.mxu0 %v38
  %109 = vmatprep.subr.mxu0 0.0
  %110 = vmatpush1.msra.mxu0 %v39
  %111 = vmatprep.subr.mxu0 0.0
  %112 = vmatpush1.msra.mxu0 %v40
  %113 = vmatprep.subr.mxu0 0.0
  %114 = vmatpush1.msra.mxu0 %v41
  %115 = vmatprep.subr.mxu0 0.0
  %116 = vmatpush1.msra.mxu0 %v42
  %117 = vmatprep.subr.mxu0 0.0
  %118 = vmatpush1.msra.mxu0 %v43
  %119 = vmatprep.subr.mxu0 0.0
  %120 = vmatpush1.msra.mxu0 %v44
  %121 = vmatprep.subr.mxu0 0.0
  %122 = vmatpush1.msra.mxu0 %v45
  %123 = vmatprep.subr.mxu0 0.0
  %124 = vmatpush1.msra.mxu0 %v46
  %125 = vmatprep.subr.mxu0 0.0
  %126 = vmatpush1.msra.mxu0 %v47
  %127 = vmatprep.subr.mxu0 0.0
  %128 = vmatpush1.msra.mxu0 %v48
  %129 = vmatprep.subr.mxu0 0.0
  %130 = vmatpush1.msra.mxu0 %v49
  %131 = vmatprep.subr.mxu0 0.0
  %132 = vmatpush1.msra.mxu0 %v50
  %133 = vmatprep.subr.mxu0 0.0
  %134 = vmatpush1.msra.mxu0 %v51
  %135 = vmatprep.subr.mxu0 0.0
  %136 = vmatpush1.msra.mxu0 %v52
  %137 = vmatprep.subr.mxu0 0.0
  %138 = vmatpush1.msra.mxu0 %v53
  %139 = vmatprep.subr.mxu0 0.0
  %140 = vmatpush1.msra.mxu0 %v54
  %141 = vmatprep.subr.mxu0 0.0
  %142 = vmatpush1.msra.mxu0 %v55
  %143 = vmatprep.subr.mxu0 0.0
  %144 = vmatpush1.msra.mxu0 %v56
  %145 = vmatprep.subr.mxu0 0.0
  %146 = vmatpush1.msra.mxu0 %v57
  %147 = vmatprep.subr.mxu0 0.0
  %148 = vmatpush1.msra.mxu0 %v58
  %149 = vmatprep.subr.mxu0 0.0
  %150 = vmatpush1.msra.mxu0 %v59
  %151 = vmatprep.subr.mxu0 0.0
  %152 = vmatpush1.msra.mxu0 %v60
  %153 = vmatprep.subr.mxu0 0.0
  %154 = vmatpush1.msra.mxu0 %v61
  %155 = vmatprep.subr.mxu0 0.0
  %156 = vmatpush1.msra.mxu0 %v62
  %157 = vmatprep.subr.mxu0 0.0
  %158 = vmatpush1.msra.mxu0 %v63
  %159 = vmatprep.subr.mxu0 0.0
  %160 = vmatpush1.msra.mxu0 %v64
  %161 = vmatprep.mubr.f32.mxu0 %v18
  %162 = vmatmul.mubr.f32.gmra.mrb[0].mxu0 %v17
  %v163 = vpop.f32.mrb[0].mxu0
  %v164 = vadd.f32 0.0, %v163
  %v165 = vpop.f32.mrb[0].mxu0
  %166 = vmatprep.mubr.f32.mxu0 %v22
  %167 = vmatmul.mubr.f32.gmra.mrb[0].mxu0 %v21
  %v168 = vpop.f32.mrb[0].mxu0
  %v169 = vadd.f32 0.0, %v168
  %v170 = vpop.f32.mrb[0].mxu0
  %171 = vmatprep.mubr.f32.mxu0 %v26
  %172 = vmatmul.mubr.f32.gmra.mrb[0].mxu0 %v25
  %v173 = vpop.f32.mrb[0].mxu0
  %v174 = vadd.f32 0.0, %v173
  %v175 = vpop.f32.mrb[0].mxu0
  %176 = vmatprep.mubr.f32.mxu0 %v30
  %177 = vmatmul.mubr.f32.gmra.mrb[0].mxu0 %v29
  %v178 = vpop.f32.mrb[0].mxu0
  %v179 = vadd.f32 0.0, %v178
  %v180 = vpop.f32.mrb[0].mxu0
  %181 = vdwg.mxu0
  %182 = vmatprep.subr.mxu0 0.0
  %183 = vmatpush1.msra.mxu0 %v65
  %184 = vmatprep.subr.mxu0 0.0
  %185 = vmatpush1.msra.mxu0 %v66
  %186 = vmatprep.subr.mxu0 0.0
  %187 = vmatpush1.msra.mxu0 %v67
  %188 = vmatprep.subr.mxu0 0.0
  %189 = vmatpush1.msra.mxu0 %v68
  %190 = vmatprep.subr.mxu0 0.0
  %191 = vmatpush1.msra.mxu0 %v69
  %192 = vmatprep.subr.mxu0 0.0
  %193 = vmatpush1.msra.mxu0 %v70
  %194 = vmatprep.subr.mxu0 0.0
  %195 = vmatpush1.msra.mxu0 %v71
  %196 = vmatprep.subr.mxu0 0.0
  %197 = vmatpush1.msra.mxu0 %v72
  %198 = vmatprep.subr.mxu0 0.0
  %199 = vmatpush1.msra.mxu0 %v73
  %200 = vmatprep.subr.mxu0 0.0
  %201 = vmatpush1.msra.mxu0 %v74
  %202 = vmatprep.subr.mxu0 0.0
  %203 = vmatpush1.msra.mxu0 %v75
  %204 = vmatprep.subr.mxu0 0.0
  %205 = vmatpush1.msra.mxu0 %v76
  %206 = vmatprep.subr.mxu0 0.0
  %207 = vmatpush1.msra.mxu0 %v77
  %208 = vmatprep.subr.mxu0 0.0
  %209 = vmatpush1.msra.mxu0 %v78
  %210 = vmatprep.subr.mxu0 0.0
  %211 = vmatpush1.msra.mxu0 %v79
  %212 = vmatprep.subr.mxu0 0.0
  %213 = vmatpush1.msra.mxu0 %v80
  %214 = vmatprep.subr.mxu0 0.0
  %215 = vmatpush1.msra.mxu0 %v81
  %216 = vmatprep.subr.mxu0 0.0
  %217 = vmatpush1.msra.mxu0 %v82
  %218 = vmatprep.subr.mxu0 0.0
  %219 = vmatpush1.msra.mxu0 %v83
  %220 = vmatprep.subr.mxu0 0.0
  %221 = vmatpush1.msra.mxu0 %v84
  %222 = vmatprep.subr.mxu0 0.0
  %223 = vmatpush1.msra.mxu0 %v85
  %224 = vmatprep.subr.mxu0 0.0
  %225 = vmatpush1.msra.mxu0 %v86
  %226 = vmatprep.subr.mxu0 0.0
  %227 = vmatpush1.msra.mxu0 %v87
  %228 = vmatprep.subr.mxu0 0.0
  %229 = vmatpush1.msra.mxu0 %v88
  %230 = vmatprep.subr.mxu0 0.0
  %231 = vmatpush1.msra.mxu0 %v89
  %232 = vmatprep.subr.mxu0 0.0
  %233 = vmatpush1.msra.mxu0 %v90
  %234 = vmatprep.subr.mxu0 0.0
  %235 = vmatpush1.msra.mxu0 %v91
  %236 = vmatprep.subr.mxu0 0.0
  %237 = vmatpush1.msra.mxu0 %v92
  %238 = vmatprep.subr.mxu0 0.0
  %239 = vmatpush1.msra.mxu0 %v93
  %240 = vmatprep.subr.mxu0 0.0
  %241 = vmatpush1.msra.mxu0 %v94
  %242 = vmatprep.subr.mxu0 0.0
  %243 = vmatpush1.msra.mxu0 %v95
  %244 = vmatprep.subr.mxu0 0.0
  %245 = vmatpush1.msra.mxu0 %v96
  %246 = vmatprep.mubr.f32.mxu0 %v20
  %247 = vmatmul.mubr.f32.gmra.mrb[0].mxu0 %v19
  %v248 = vpop.f32.mrb[0].mxu0
  %v249 = vadd.f32 %v164, %v248
  %v250 = vpop.f32.mrb[0].mxu0
  %251 = vmatprep.mubr.f32.mxu0 %v24
  %252 = vmatmul.mubr.f32.gmra.mrb[0].mxu0 %v23
  %v253 = vpop.f32.mrb[0].mxu0
  %v254 = vadd.f32 %v169, %v253
  %v255 = vpop.f32.mrb[0].mxu0
  %256 = vmatprep.mubr.f32.mxu0 %v28
  %257 = vmatmul.mubr.f32.gmra.mrb[0].mxu0 %v27
  %v258 = vpop.f32.mrb[0].mxu0
  %v259 = vadd.f32 %v174, %v258
  %v260 = vpop.f32.mrb[0].mxu0
  %261 = vmatprep.mubr.f32.mxu0 %v32
  %262 = vmatmul.mubr.f32.gmra.mrb[0].mxu0 %v31
  %v263 = vpop.f32.mrb[0].mxu0
  %v264 = vadd.f32 %v179, %v263
  %v265 = vpop.f32.mrb[0].mxu0
  %266 = vdwg.mxu0
  %s267 = smul.u32 0, 32
  %s268 = scalar_lea.vmem [#allocation2], %s267
  %vm269 = vcmask 523264
  %270 = vst.msk [vmem:[%s268] sm:$0xff] %vm269, %v249
  %271 = vst.msk [vmem:[%s268 + $0x8] sm:$0xff] %vm269, %v254
  %272 = vst.msk [vmem:[%s268 + $0x10] sm:$0xff] %vm269, %v259
  %273 = vst.msk [vmem:[%s268 + $0x18] sm:$0xff] %vm269, %v264
  %p274 = scmp.eq.s32.totalorder 0, 0
  // Predicated region
  $region18: #{icml_d_forward.13} parent=0 // pred_check
    %p275 = pneg %p274
  $region19: #{icml_d_forward.13} parent=0 // pred_check_branch
    %277 = sbr.rel (%p275) target = $region21
  $region20: #{icml_d_forward.13} parent=0 // pred_region
    %v278 = vld [vmem:[#allocation2] sm:$0xff]
    %v279 = vld [vmem:[#allocation2 + $0x8] sm:$0xff]
    %v280 = vld [vmem:[#allocation2 + $0x10] sm:$0xff]
    %v281 = vld [vmem:[#allocation2 + $0x18] sm:$0xff]
    %v282 = vsel %vm269, %v278, 0.0
    %v283 = vsel %vm269, %v279, 0.0
    %v284 = vadd.f32 %v282, %v283
    %v285 = vsel %vm269, %v280, 0.0
    %v286 = vadd.f32 %v284, %v285
    %v287 = vsel %vm269, %v281, 0.0
    %v288 = vadd.f32 %v286, %v287
    %v289 = vrot.slane %v288, 4
    %v290 = vadd.f32 %v288, %v289
    %v291 = vrot.slane %v290, 2
    %v292 = vadd.f32 %v290, %v291
    %v293 = vrot.slane %v292, 1
    %v294 = vadd.f32 %v292, %v293
    %v295 = vrcp.pop 32.0
    %v296 = vmul.f32 %v294, %v295
    %v297 = vsub.f32 %v278, %v296
    %v298 = vsub.f32 %v279, %v296
    %v299 = vsub.f32 %v280, %v296
    %v300 = vsub.f32 %v281, %v296
    %v301 = vmul.f32 %v297, %v297
    %v302 = vmul.f32 %v298, %v298
    %v303 = vmul.f32 %v299, %v299
    %v304 = vmul.f32 %v300, %v300
    %v305 = vsel %vm269, %v301, 0.0
    %v306 = vsel %vm269, %v302, 0.0
    %v307 = vadd.f32 %v305, %v306
    %v308 = vsel %vm269, %v303, 0.0
    %v309 = vadd.f32 %v307, %v308
    %v310 = vsel %vm269, %v304, 0.0
    %v311 = vadd.f32 %v309, %v310
    %v312 = vrot.slane %v311, 4
    %v313 = vadd.f32 %v311, %v312
    %v314 = vrot.slane %v313, 2
    %v315 = vadd.f32 %v313, %v314
    %v316 = vrot.slane %v315, 1
    %v317 = vadd.f32 %v315, %v316
    %v318 = vmul.f32 %v317, %v295
    %v319 = vadd.f32 %v318, 1e-05
    %v320 = vrsqrt.pop %v319
    %v321 = vmul.f32 %v297, %v320
    %v322 = vmul.f32 %v298, %v320
    %v323 = vmul.f32 %v299, %v320
    %v324 = vmul.f32 %v300, %v320
    %v325 = vld [vmem:[%s2] sm:$0x1]
    %v327 = vlaneseq
    %v328 = vshrl.u32 %v327, 7
    %v329 = vsub.s32 0, %v328
    %v330 = vrot.slane %v325, %v329
    %v332 = vmul.f32 %v321, %v330
    %v333 = vmul.f32 %v322, %v330
    %v334 = vmul.f32 %v323, %v330
    %v335 = vmul.f32 %v324, %v330
    %v336 = vld [vmem:[%s3] sm:$0x1]
    %v338 = vlaneseq
    %v339 = vshrl.u32 %v338, 7
    %v340 = vsub.s32 0, %v339
    %v341 = vrot.slane %v336, %v340
    %v343 = vadd.f32 %v332, %v341
    %v344 = vadd.f32 %v333, %v341
    %v345 = vadd.f32 %v334, %v341
    %v346 = vadd.f32 %v335, %v341
    %347 = vst.msk [vmem:[%s4] sm:$0xff] %vm269, %v343
    %348 = vst.msk [vmem:[%s4 + $0x8] sm:$0xff] %vm269, %v344
    %349 = vst.msk [vmem:[%s4 + $0x10] sm:$0xff] %vm269, %v345
    %350 = vst.msk [vmem:[%s4 + $0x18] sm:$0xff] %vm269, %v346
  $region21: #{icml_d_forward.13} parent=0 // pred_fallthru
    _
  // Predicated region
  $region22: #{icml_d_forward.13} parent=0 // pred_check
    _
  $region23: #{icml_d_forward.13} parent=0 // pred_check_branch
    %352 = sbr.rel (0) target = $region25
  $region24: #{icml_d_forward.13} parent=0 // pred_region
    _
  $region25: #{icml_d_forward.13} parent=0 // pred_fallthru
    _
  // Predicated region
  $region26: #{icml_d_forward.13} parent=0 // pred_check
    _
  $region27: #{icml_d_forward.13} parent=0 // pred_check_branch
    %354 = sbr.rel (0) target = $region29
  $region28: #{icml_d_forward.13} parent=0 // pred_region
    _
  $region29: #{icml_d_forward.13} parent=0 // pred_fallthru
    _

// kernel: icml_d_forward.14
$region0: #{icml_d_forward.14}
  #allocation0 [shape = 'u32[]', space=smem, size = 0x4, offset = 0x4, fixed_abs, tag = 'smem constant byte address 0x4 - core index']
  #allocation1 [shape = 'u32[144,128]{1,0:T(1,128)}', space=vmem, size = 0x12000, scoped, tag = 'internal scratch']
  #allocation2 [shape = 'f32[32,16]{1,0:T(8,128)}', space=vmem, size = 0x4000, scoped, tag = 'scratch operand']
  %s0 = inlined_call_operand.vmem [shape: f32[32,64], index: 0, kind: input, shape index: {}]
  %s1 = inlined_call_operand.vmem [shape: f32[64,16], index: 1, kind: input, shape index: {}]
  %s2 = inlined_call_operand.vmem [shape: f32[1,16], index: 2, kind: input, shape index: {}]
  %s3 = inlined_call_operand.vmem [shape: f32[1,16], index: 3, kind: input, shape index: {}]
  %s4 = inlined_call_operand.vmem [shape: f32[32,16], index: 4, kind: output, shape index: {}]
  %s5 = sld [smem:[#allocation0]]
  $region30: #{icml_d_forward.14} parent=0
    _
  %s7 = ssub.s32 1, %s5
  %s8 = scalar_select 0, %s7, %s5
  // Predicated region
  $region2: #{icml_d_forward.14} parent=0 // pred_check
    _
  $region3: #{icml_d_forward.14} parent=0 // pred_check_branch
    %10 = sbr.rel (0) target = $region5
  $region4: #{icml_d_forward.14} parent=0 // pred_region
    _
  $region5: #{icml_d_forward.14} parent=0 // pred_fallthru
    _
  // Predicated region
  $region6: #{icml_d_forward.14} parent=0 // pred_check
    _
  $region7: #{icml_d_forward.14} parent=0 // pred_check_branch
    %12 = sbr.rel (0) target = $region9
  $region8: #{icml_d_forward.14} parent=0 // pred_region
    _
  $region9: #{icml_d_forward.14} parent=0 // pred_fallthru
    _
  // Predicated region
  $region10: #{icml_d_forward.14} parent=0 // pred_check
    _
  $region11: #{icml_d_forward.14} parent=0 // pred_check_branch
    %14 = sbr.rel (0) target = $region13
  $region12: #{icml_d_forward.14} parent=0 // pred_region
    _
  $region13: #{icml_d_forward.14} parent=0 // pred_fallthru
    _
  // Predicated region
  $region14: #{icml_d_forward.14} parent=0 // pred_check
    _
  $region15: #{icml_d_forward.14} parent=0 // pred_check_branch
    %16 = sbr.rel (0) target = $region17
  $region16: #{icml_d_forward.14} parent=0 // pred_region
    _
  $region17: #{icml_d_forward.14} parent=0 // pred_fallthru
    _
  %v17 = vld [vmem:[%s0] sm:$0xff]
  %v18 = vld [vmem:[%s0 + $0x8] sm:$0xff]
  %v19 = vld [vmem:[%s0 + $0x10] sm:$0xff]
  %v20 = vld [vmem:[%s0 + $0x18] sm:$0xff]
  %v21 = vld [vmem:[%s1] sm:$0xff]
  %v22 = vld [vmem:[%s1 + $0x8] sm:$0xff]
  %v23 = vld [vmem:[%s1 + $0x10] sm:$0xff]
  %v24 = vld [vmem:[%s1 + $0x18] sm:$0xff]
  %v25 = vld [vmem:[%s1 + $0x20] sm:$0xff]
  %v26 = vld [vmem:[%s1 + $0x28] sm:$0xff]
  %v27 = vld [vmem:[%s1 + $0x30] sm:$0xff]
  %v28 = vld [vmem:[%s1 + $0x38] sm:$0xff]
  %vm29 = vcmask 523264
  %v31 = vsel %vm29, %v17, 0
  %v34 = vsel %vm29, %v18, 0
  %v37 = vsel %vm29, %v19, 0
  %v40 = vsel %vm29, %v20, 0
  %42 = vmatprep.subr.mxu0 0.0
  %43 = vmatpush1.msra.mxu0 %v21
  %44 = vmatprep.subr.mxu0 0.0
  %45 = vmatpush1.msra.mxu0 %v22
  %46 = vmatprep.subr.mxu0 0.0
  %47 = vmatpush1.msra.mxu0 %v23
  %48 = vmatprep.subr.mxu0 0.0
  %49 = vmatpush1.msra.mxu0 %v24
  %50 = vmatprep.subr.mxu0 0.0
  %51 = vmatpush1.msra.mxu0 %v25
  %52 = vmatprep.subr.mxu0 0.0
  %53 = vmatpush1.msra.mxu0 %v26
  %54 = vmatprep.subr.mxu0 0.0
  %55 = vmatpush1.msra.mxu0 %v27
  %56 = vmatprep.subr.mxu0 0.0
  %57 = vmatpush1.msra.mxu0 %v28
  %58 = vmatprep.subr.mxu0 0.0
  %59 = vmatpush1.msra.mxu0 0.0
  %60 = vmatprep.subr.mxu0 0.0
  %61 = vmatpush1.msra.mxu0 0.0
  %62 = vmatprep.subr.mxu0 0.0
  %63 = vmatpush1.msra.mxu0 0.0
  %64 = vmatprep.subr.mxu0 0.0
  %65 = vmatpush1.msra.mxu0 0.0
  %66 = vmatprep.subr.mxu0 0.0
  %67 = vmatpush1.msra.mxu0 0.0
  %68 = vmatprep.subr.mxu0 0.0
  %69 = vmatpush1.msra.mxu0 0.0
  %70 = vmatprep.subr.mxu0 0.0
  %71 = vmatpush1.msra.mxu0 0.0
  %72 = vmatprep.subr.mxu0 0.0
  %73 = vmatpush1.msra.mxu0 0.0
  %74 = vmatprep.subr.mxu0 0.0
  %75 = vmatpush1.msra.mxu0 0.0
  %76 = vmatprep.subr.mxu0 0.0
  %77 = vmatpush1.msra.mxu0 0.0
  %78 = vmatprep.subr.mxu0 0.0
  %79 = vmatpush1.msra.mxu0 0.0
  %80 = vmatprep.subr.mxu0 0.0
  %81 = vmatpush1.msra.mxu0 0.0
  %82 = vmatprep.subr.mxu0 0.0
  %83 = vmatpush1.msra.mxu0 0.0
  %84 = vmatprep.subr.mxu0 0.0
  %85 = vmatpush1.msra.mxu0 0.0
  %86 = vmatprep.subr.mxu0 0.0
  %87 = vmatpush1.msra.mxu0 0.0
  %88 = vmatprep.subr.mxu0 0.0
  %89 = vmatpush1.msra.mxu0 0.0
  %90 = vmatprep.subr.mxu0 0.0
  %91 = vmatpush1.msra.mxu0 0.0
  %92 = vmatprep.subr.mxu0 0.0
  %93 = vmatpush1.msra.mxu0 0.0
  %94 = vmatprep.subr.mxu0 0.0
  %95 = vmatpush1.msra.mxu0 0.0
  %96 = vmatprep.subr.mxu0 0.0
  %97 = vmatpush1.msra.mxu0 0.0
  %98 = vmatprep.subr.mxu0 0.0
  %99 = vmatpush1.msra.mxu0 0.0
  %100 = vmatprep.subr.mxu0 0.0
  %101 = vmatpush1.msra.mxu0 0.0
  %102 = vmatprep.subr.mxu0 0.0
  %103 = vmatpush1.msra.mxu0 0.0
  %104 = vmatprep.subr.mxu0 0.0
  %105 = vmatpush1.msra.mxu0 0.0
  %106 = vmatprep.mubr.f32.mxu0 0.0
  %107 = vmatmul.mubr.f32.gmra.mrb[0].mxu0 %v31
  %v108 = vpop.f32.mrb[0].mxu0
  %v109 = vadd.f32 0.0, %v108
  %v110 = vpop.f32.mrb[0].mxu0
  %111 = vmatprep.mubr.f32.mxu0 0.0
  %112 = vmatmul.mubr.f32.gmra.mrb[0].mxu0 %v34
  %v113 = vpop.f32.mrb[0].mxu0
  %v114 = vadd.f32 0.0, %v113
  %v115 = vpop.f32.mrb[0].mxu0
  %116 = vmatprep.mubr.f32.mxu0 0.0
  %117 = vmatmul.mubr.f32.gmra.mrb[0].mxu0 %v37
  %v118 = vpop.f32.mrb[0].mxu0
  %v119 = vadd.f32 0.0, %v118
  %v120 = vpop.f32.mrb[0].mxu0
  %121 = vmatprep.mubr.f32.mxu0 0.0
  %122 = vmatmul.mubr.f32.gmra.mrb[0].mxu0 %v40
  %v123 = vpop.f32.mrb[0].mxu0
  %v124 = vadd.f32 0.0, %v123
  %v125 = vpop.f32.mrb[0].mxu0
  %126 = vdwg.mxu0
  %s127 = smul.u32 0, 32
  %s128 = scalar_lea.vmem [#allocation2], %s127
  %vm129 = vcmask 130048
  %130 = vst.msk [vmem:[%s128] sm:$0xff] %vm129, %v109
  %131 = vst.msk [vmem:[%s128 + $0x8] sm:$0xff] %vm129, %v114
  %132 = vst.msk [vmem:[%s128 + $0x10] sm:$0xff] %vm129, %v119
  %133 = vst.msk [vmem:[%s128 + $0x18] sm:$0xff] %vm129, %v124
  %p134 = scmp.eq.s32.totalorder 0, 0
  // Predicated region
  $region18: #{icml_d_forward.14} parent=0 // pred_check
    %p135 = pneg %p134
  $region19: #{icml_d_forward.14} parent=0 // pred_check_branch
    %137 = sbr.rel (%p135) target = $region21
  $region20: #{icml_d_forward.14} parent=0 // pred_region
    %v138 = vld [vmem:[#allocation2] sm:$0xff]
    %v139 = vld [vmem:[#allocation2 + $0x8] sm:$0xff]
    %v140 = vld [vmem:[#allocation2 + $0x10] sm:$0xff]
    %v141 = vld [vmem:[#allocation2 + $0x18] sm:$0xff]
    %v142 = vsel %vm129, %v138, 0.0
    %v143 = vsel %vm129, %v139, 0.0
    %v144 = vadd.f32 %v142, %v143
    %v145 = vsel %vm129, %v140, 0.0
    %v146 = vadd.f32 %v144, %v145
    %v147 = vsel %vm129, %v141, 0.0
    %v148 = vadd.f32 %v146, %v147
    %v149 = vrot.slane %v148, 4
    %v150 = vadd.f32 %v148, %v149
    %v151 = vrot.slane %v150, 2
    %v152 = vadd.f32 %v150, %v151
    %v153 = vrot.slane %v152, 1
    %v154 = vadd.f32 %v152, %v153
    %v155 = vrcp.pop 32.0
    %v156 = vmul.f32 %v154, %v155
    %v157 = vsub.f32 %v138, %v156
    %v158 = vsub.f32 %v139, %v156
    %v159 = vsub.f32 %v140, %v156
    %v160 = vsub.f32 %v141, %v156
    %v161 = vmul.f32 %v157, %v157
    %v162 = vmul.f32 %v158, %v158
    %v163 = vmul.f32 %v159, %v159
    %v164 = vmul.f32 %v160, %v160
    %v165 = vsel %vm129, %v161, 0.0
    %v166 = vsel %vm129, %v162, 0.0
    %v167 = vadd.f32 %v165, %v166
    %v168 = vsel %vm129, %v163, 0.0
    %v169 = vadd.f32 %v167, %v168
    %v170 = vsel %vm129, %v164, 0.0
    %v171 = vadd.f32 %v169, %v170
    %v172 = vrot.slane %v171, 4
    %v173 = vadd.f32 %v171, %v172
    %v174 = vrot.slane %v173, 2
    %v175 = vadd.f32 %v173, %v174
    %v176 = vrot.slane %v175, 1
    %v177 = vadd.f32 %v175, %v176
    %v178 = vmul.f32 %v177, %v155
    %v179 = vadd.f32 %v178, 1e-05
    %v180 = vrsqrt.pop %v179
    %v181 = vmul.f32 %v157, %v180
    %v182 = vmul.f32 %v158, %v180
    %v183 = vmul.f32 %v159, %v180
    %v184 = vmul.f32 %v160, %v180
    %v185 = vld [vmem:[%s2] sm:$0x1]
    %v187 = vlaneseq
    %v188 = vshrl.u32 %v187, 7
    %v189 = vsub.s32 0, %v188
    %v190 = vrot.slane %v185, %v189
    %v192 = vmul.f32 %v181, %v190
    %v193 = vmul.f32 %v182, %v190
    %v194 = vmul.f32 %v183, %v190
    %v195 = vmul.f32 %v184, %v190
    %v196 = vld [vmem:[%s3] sm:$0x1]
    %v198 = vlaneseq
    %v199 = vshrl.u32 %v198, 7
    %v200 = vsub.s32 0, %v199
    %v201 = vrot.slane %v196, %v200
    %v203 = vadd.f32 %v192, %v201
    %v204 = vadd.f32 %v193, %v201
    %v205 = vadd.f32 %v194, %v201
    %v206 = vadd.f32 %v195, %v201
    %vm207 = vcmp.ge.f32.partialorder %v203, 0.0
    %vm208 = vcmp.ge.f32.partialorder %v204, 0.0
    %vm209 = vcmp.ge.f32.partialorder %v205, 0.0
    %vm210 = vcmp.ge.f32.partialorder %v206, 0.0
    %v211 = vmul.f32 %v203, 0.2
    %v212 = vmul.f32 %v204, 0.2
    %v213 = vmul.f32 %v205, 0.2
    %v214 = vmul.f32 %v206, 0.2
    %v215 = vsel %vm207, %v203, %v211
    %v216 = vsel %vm208, %v204, %v212
    %v217 = vsel %vm209, %v205, %v213
    %v218 = vsel %vm210, %v206, %v214
    %219 = vst.msk [vmem:[%s4] sm:$0xff] %vm129, %v215
    %220 = vst.msk [vmem:[%s4 + $0x8] sm:$0xff] %vm129, %v216
    %221 = vst.msk [vmem:[%s4 + $0x10] sm:$0xff] %vm129, %v217
    %222 = vst.msk [vmem:[%s4 + $0x18] sm:$0xff] %vm129, %v218
  $region21: #{icml_d_forward.14} parent=0 // pred_fallthru
    _
  // Predicated region
  $region22: #{icml_d_forward.14} parent=0 // pred_check
    _
  $region23: #{icml_d_forward.14} parent=0 // pred_check_branch
    %224 = sbr.rel (0) target = $region25
  $region24: #{icml_d_forward.14} parent=0 // pred_region
    _
  $region25: #{icml_d_forward.14} parent=0 // pred_fallthru
    _
  // Predicated region
  $region26: #{icml_d_forward.14} parent=0 // pred_check
    _
  $region27: #{icml_d_forward.14} parent=0 // pred_check_branch
    %226 = sbr.rel (0) target = $region29
  $region28: #{icml_d_forward.14} parent=0 // pred_region
    _
  $region29: #{icml_d_forward.14} parent=0 // pred_fallthru
    _

// kernel: icml_d_forward.15
$region0: #{icml_d_forward.15}
  #allocation0 [shape = 'u32[]', space=smem, size = 0x4, offset = 0x4, fixed_abs, tag = 'smem constant byte address 0x4 - core index']
  #allocation1 [shape = 'u32[144,128]{1,0:T(1,128)}', space=vmem, size = 0x12000, scoped, tag = 'internal scratch']
  #allocation2 [shape = 'f32[32,16]{1,0:T(8,128)}', space=vmem, size = 0x4000, scoped, tag = 'scratch operand']
  %s0 = inlined_call_operand.vmem [shape: f32[32,144], index: 0, kind: input, shape index: {}]
  %s1 = inlined_call_operand.vmem [shape: f32[144,16], index: 1, kind: input, shape index: {}]
  %s2 = inlined_call_operand.vmem [shape: f32[1,16], index: 2, kind: input, shape index: {}]
  %s3 = inlined_call_operand.vmem [shape: f32[1,16], index: 3, kind: input, shape index: {}]
  %s4 = inlined_call_operand.vmem [shape: f32[32,16], index: 4, kind: output, shape index: {}]
  %s5 = sld [smem:[#allocation0]]
  $region30: #{icml_d_forward.15} parent=0
    _
  %s7 = ssub.s32 1, %s5
  %s8 = scalar_select 0, %s7, %s5
  // Predicated region
  $region2: #{icml_d_forward.15} parent=0 // pred_check
    _
  $region3: #{icml_d_forward.15} parent=0 // pred_check_branch
    %10 = sbr.rel (0) target = $region5
  $region4: #{icml_d_forward.15} parent=0 // pred_region
    _
  $region5: #{icml_d_forward.15} parent=0 // pred_fallthru
    _
  // Predicated region
  $region6: #{icml_d_forward.15} parent=0 // pred_check
    _
  $region7: #{icml_d_forward.15} parent=0 // pred_check_branch
    %12 = sbr.rel (0) target = $region9
  $region8: #{icml_d_forward.15} parent=0 // pred_region
    _
  $region9: #{icml_d_forward.15} parent=0 // pred_fallthru
    _
  // Predicated region
  $region10: #{icml_d_forward.15} parent=0 // pred_check
    _
  $region11: #{icml_d_forward.15} parent=0 // pred_check_branch
    %14 = sbr.rel (0) target = $region13
  $region12: #{icml_d_forward.15} parent=0 // pred_region
    _
  $region13: #{icml_d_forward.15} parent=0 // pred_fallthru
    _
  // Predicated region
  $region14: #{icml_d_forward.15} parent=0 // pred_check
    _
  $region15: #{icml_d_forward.15} parent=0 // pred_check_branch
    %16 = sbr.rel (0) target = $region17
  $region16: #{icml_d_forward.15} parent=0 // pred_region
    _
  $region17: #{icml_d_forward.15} parent=0 // pred_fallthru
    _
  %v17 = vld [vmem:[%s0] sm:$0xff]
  %v18 = vld [vmem:[%s0 + $0x8] sm:$0xff]
  %v19 = vld [vmem:[%s0 + $0x10] sm:$0xff]
  %v20 = vld [vmem:[%s0 + $0x18] sm:$0xff]
  %v21 = vld [vmem:[%s0 + $0x20] sm:$0xff]
  %v22 = vld [vmem:[%s0 + $0x28] sm:$0xff]
  %v23 = vld [vmem:[%s0 + $0x30] sm:$0xff]
  %v24 = vld [vmem:[%s0 + $0x38] sm:$0xff]
  %v25 = vld [vmem:[%s1] sm:$0xff]
  %v26 = vld [vmem:[%s1 + $0x8] sm:$0xff]
  %v27 = vld [vmem:[%s1 + $0x10] sm:$0xff]
  %v28 = vld [vmem:[%s1 + $0x18] sm:$0xff]
  %v29 = vld [vmem:[%s1 + $0x20] sm:$0xff]
  %v30 = vld [vmem:[%s1 + $0x28] sm:$0xff]
  %v31 = vld [vmem:[%s1 + $0x30] sm:$0xff]
  %v32 = vld [vmem:[%s1 + $0x38] sm:$0xff]
  %v33 = vld [vmem:[%s1 + $0x40] sm:$0xff]
  %v34 = vld [vmem:[%s1 + $0x48] sm:$0xff]
  %v35 = vld [vmem:[%s1 + $0x50] sm:$0xff]
  %v36 = vld [vmem:[%s1 + $0x58] sm:$0xff]
  %v37 = vld [vmem:[%s1 + $0x60] sm:$0xff]
  %v38 = vld [vmem:[%s1 + $0x68] sm:$0xff]
  %v39 = vld [vmem:[%s1 + $0x70] sm:$0xff]
  %v40 = vld [vmem:[%s1 + $0x78] sm:$0xff]
  %v41 = vld [vmem:[%s1 + $0x80] sm:$0xff]
  %v42 = vld [vmem:[%s1 + $0x88] sm:$0xff]
  %vm43 = vcmask 130048
  %v45 = vsel %vm43, %v18, 0
  %v48 = vsel %vm43, %v20, 0
  %v51 = vsel %vm43, %v22, 0
  %v54 = vsel %vm43, %v24, 0
  %56 = vmatprep.subr.mxu0 0.0
  %57 = vmatpush1.msra.mxu0 %v25
  %58 = vmatprep.subr.mxu0 0.0
  %59 = vmatpush1.msra.mxu0 %v26
  %60 = vmatprep.subr.mxu0 0.0
  %61 = vmatpush1.msra.mxu0 %v27
  %62 = vmatprep.subr.mxu0 0.0
  %63 = vmatpush1.msra.mxu0 %v28
  %64 = vmatprep.subr.mxu0 0.0
  %65 = vmatpush1.msra.mxu0 %v29
  %66 = vmatprep.subr.mxu0 0.0
  %67 = vmatpush1.msra.mxu0 %v30
  %68 = vmatprep.subr.mxu0 0.0
  %69 = vmatpush1.msra.mxu0 %v31
  %70 = vmatprep.subr.mxu0 0.0
  %71 = vmatpush1.msra.mxu0 %v32
  %72 = vmatprep.subr.mxu0 0.0
  %73 = vmatpush1.msra.mxu0 %v33
  %74 = vmatprep.subr.mxu0 0.0
  %75 = vmatpush1.msra.mxu0 %v34
  %76 = vmatprep.subr.mxu0 0.0
  %77 = vmatpush1.msra.mxu0 %v35
  %78 = vmatprep.subr.mxu0 0.0
  %79 = vmatpush1.msra.mxu0 %v36
  %80 = vmatprep.subr.mxu0 0.0
  %81 = vmatpush1.msra.mxu0 %v37
  %82 = vmatprep.subr.mxu0 0.0
  %83 = vmatpush1.msra.mxu0 %v38
  %84 = vmatprep.subr.mxu0 0.0
  %85 = vmatpush1.msra.mxu0 %v39
  %86 = vmatprep.subr.mxu0 0.0
  %87 = vmatpush1.msra.mxu0 %v40
  %88 = vmatprep.subr.mxu0 0.0
  %89 = vmatpush1.msra.mxu0 %v41
  %90 = vmatprep.subr.mxu0 0.0
  %91 = vmatpush1.msra.mxu0 %v42
  %92 = vmatprep.subr.mxu0 0.0
  %93 = vmatpush1.msra.mxu0 0.0
  %94 = vmatprep.subr.mxu0 0.0
  %95 = vmatpush1.msra.mxu0 0.0
  %96 = vmatprep.subr.mxu0 0.0
  %97 = vmatpush1.msra.mxu0 0.0
  %98 = vmatprep.subr.mxu0 0.0
  %99 = vmatpush1.msra.mxu0 0.0
  %100 = vmatprep.subr.mxu0 0.0
  %101 = vmatpush1.msra.mxu0 0.0
  %102 = vmatprep.subr.mxu0 0.0
  %103 = vmatpush1.msra.mxu0 0.0
  %104 = vmatprep.subr.mxu0 0.0
  %105 = vmatpush1.msra.mxu0 0.0
  %106 = vmatprep.subr.mxu0 0.0
  %107 = vmatpush1.msra.mxu0 0.0
  %108 = vmatprep.subr.mxu0 0.0
  %109 = vmatpush1.msra.mxu0 0.0
  %110 = vmatprep.subr.mxu0 0.0
  %111 = vmatpush1.msra.mxu0 0.0
  %112 = vmatprep.subr.mxu0 0.0
  %113 = vmatpush1.msra.mxu0 0.0
  %114 = vmatprep.subr.mxu0 0.0
  %115 = vmatpush1.msra.mxu0 0.0
  %116 = vmatprep.subr.mxu0 0.0
  %117 = vmatpush1.msra.mxu0 0.0
  %118 = vmatprep.subr.mxu0 0.0
  %119 = vmatpush1.msra.mxu0 0.0
  %120 = vmatprep.mubr.f32.mxu0 %v45
  %121 = vmatmul.mubr.f32.gmra.mrb[0].mxu0 %v17
  %v122 = vpop.f32.mrb[0].mxu0
  %v123 = vadd.f32 0.0, %v122
  %v124 = vpop.f32.mrb[0].mxu0
  %125 = vmatprep.mubr.f32.mxu0 %v48
  %126 = vmatmul.mubr.f32.gmra.mrb[0].mxu0 %v19
  %v127 = vpop.f32.mrb[0].mxu0
  %v128 = vadd.f32 0.0, %v127
  %v129 = vpop.f32.mrb[0].mxu0
  %130 = vmatprep.mubr.f32.mxu0 %v51
  %131 = vmatmul.mubr.f32.gmra.mrb[0].mxu0 %v21
  %v132 = vpop.f32.mrb[0].mxu0
  %v133 = vadd.f32 0.0, %v132
  %v134 = vpop.f32.mrb[0].mxu0
  %135 = vmatprep.mubr.f32.mxu0 %v54
  %136 = vmatmul.mubr.f32.gmra.mrb[0].mxu0 %v23
  %v137 = vpop.f32.mrb[0].mxu0
  %v138 = vadd.f32 0.0, %v137
  %v139 = vpop.f32.mrb[0].mxu0
  %140 = vdwg.mxu0
  %s141 = smul.u32 0, 32
  %s142 = scalar_lea.vmem [#allocation2], %s141
  %143 = vst.msk [vmem:[%s142] sm:$0xff] %vm43, %v123
  %144 = vst.msk [vmem:[%s142 + $0x8] sm:$0xff] %vm43, %v128
  %145 = vst.msk [vmem:[%s142 + $0x10] sm:$0xff] %vm43, %v133
  %146 = vst.msk [vmem:[%s142 + $0x18] sm:$0xff] %vm43, %v138
  %p147 = scmp.eq.s32.totalorder 0, 0
  // Predicated region
  $region18: #{icml_d_forward.15} parent=0 // pred_check
    %p148 = pneg %p147
  $region19: #{icml_d_forward.15} parent=0 // pred_check_branch
    %150 = sbr.rel (%p148) target = $region21
  $region20: #{icml_d_forward.15} parent=0 // pred_region
    %v151 = vld [vmem:[#allocation2] sm:$0xff]
    %v152 = vld [vmem:[#allocation2 + $0x8] sm:$0xff]
    %v153 = vld [vmem:[#allocation2 + $0x10] sm:$0xff]
    %v154 = vld [vmem:[#allocation2 + $0x18] sm:$0xff]
    %v155 = vsel %vm43, %v151, 0.0
    %v156 = vsel %vm43, %v152, 0.0
    %v157 = vadd.f32 %v155, %v156
    %v158 = vsel %vm43, %v153, 0.0
    %v159 = vadd.f32 %v157, %v158
    %v160 = vsel %vm43, %v154, 0.0
    %v161 = vadd.f32 %v159, %v160
    %v162 = vrot.slane %v161, 4
    %v163 = vadd.f32 %v161, %v162
    %v164 = vrot.slane %v163, 2
    %v165 = vadd.f32 %v163, %v164
    %v166 = vrot.slane %v165, 1
    %v167 = vadd.f32 %v165, %v166
    %v168 = vrcp.pop 32.0
    %v169 = vmul.f32 %v167, %v168
    %v170 = vsub.f32 %v151, %v169
    %v171 = vsub.f32 %v152, %v169
    %v172 = vsub.f32 %v153, %v169
    %v173 = vsub.f32 %v154, %v169
    %v174 = vmul.f32 %v170, %v170
    %v175 = vmul.f32 %v171, %v171
    %v176 = vmul.f32 %v172, %v172
    %v177 = vmul.f32 %v173, %v173
    %v178 = vsel %vm43, %v174, 0.0
    %v179 = vsel %vm43, %v175, 0.0
    %v180 = vadd.f32 %v178, %v179
    %v181 = vsel %vm43, %v176, 0.0
    %v182 = vadd.f32 %v180, %v181
    %v183 = vsel %vm43, %v177, 0.0
    %v184 = vadd.f32 %v182, %v183
    %v185 = vrot.slane %v184, 4
    %v186 = vadd.f32 %v184, %v185
    %v187 = vrot.slane %v186, 2
    %v188 = vadd.f32 %v186, %v187
    %v189 = vrot.slane %v188, 1
    %v190 = vadd.f32 %v188, %v189
    %v191 = vmul.f32 %v190, %v168
    %v192 = vadd.f32 %v191, 1e-05
    %v193 = vrsqrt.pop %v192
    %v194 = vmul.f32 %v170, %v193
    %v195 = vmul.f32 %v171, %v193
    %v196 = vmul.f32 %v172, %v193
    %v197 = vmul.f32 %v173, %v193
    %v198 = vld [vmem:[%s2] sm:$0x1]
    %v200 = vlaneseq
    %v201 = vshrl.u32 %v200, 7
    %v202 = vsub.s32 0, %v201
    %v203 = vrot.slane %v198, %v202
    %v205 = vmul.f32 %v194, %v203
    %v206 = vmul.f32 %v195, %v203
    %v207 = vmul.f32 %v196, %v203
    %v208 = vmul.f32 %v197, %v203
    %v209 = vld [vmem:[%s3] sm:$0x1]
    %v211 = vlaneseq
    %v212 = vshrl.u32 %v211, 7
    %v213 = vsub.s32 0, %v212
    %v214 = vrot.slane %v209, %v213
    %v216 = vadd.f32 %v205, %v214
    %v217 = vadd.f32 %v206, %v214
    %v218 = vadd.f32 %v207, %v214
    %v219 = vadd.f32 %v208, %v214
    %vm220 = vcmp.ge.f32.partialorder %v216, 0.0
    %vm221 = vcmp.ge.f32.partialorder %v217, 0.0
    %vm222 = vcmp.ge.f32.partialorder %v218, 0.0
    %vm223 = vcmp.ge.f32.partialorder %v219, 0.0
    %v224 = vmul.f32 %v216, 0.2
    %v225 = vmul.f32 %v217, 0.2
    %v226 = vmul.f32 %v218, 0.2
    %v227 = vmul.f32 %v219, 0.2
    %v228 = vsel %vm220, %v216, %v224
    %v229 = vsel %vm221, %v217, %v225
    %v230 = vsel %vm222, %v218, %v226
    %v231 = vsel %vm223, %v219, %v227
    %232 = vst.msk [vmem:[%s4] sm:$0xff] %vm43, %v228
    %233 = vst.msk [vmem:[%s4 + $0x8] sm:$0xff] %vm43, %v229
    %234 = vst.msk [vmem:[%s4 + $0x10] sm:$0xff] %vm43, %v230
    %235 = vst.msk [vmem:[%s4 + $0x18] sm:$0xff] %vm43, %v231
  $region21: #{icml_d_forward.15} parent=0 // pred_fallthru
    _
  // Predicated region
  $region22: #{icml_d_forward.15} parent=0 // pred_check
    _
  $region23: #{icml_d_forward.15} parent=0 // pred_check_branch
    %237 = sbr.rel (0) target = $region25
  $region24: #{icml_d_forward.15} parent=0 // pred_region
    _
  $region25: #{icml_d_forward.15} parent=0 // pred_fallthru
    _
  // Predicated region
  $region26: #{icml_d_forward.15} parent=0 // pred_check
    _
  $region27: #{icml_d_forward.15} parent=0 // pred_check_branch
    %239 = sbr.rel (0) target = $region29
  $region28: #{icml_d_forward.15} parent=0 // pred_region
    _
  $region29: #{icml_d_forward.15} parent=0 // pred_fallthru
    _

// kernel: icml_d_forward.16
$region0: #{icml_d_forward.16}
  #allocation0 [shape = 'u32[]', space=smem, size = 0x4, offset = 0x4, fixed_abs, tag = 'smem constant byte address 0x4 - core index']
  #allocation1 [shape = 'u32[144,128]{1,0:T(1,128)}', space=vmem, size = 0x12000, scoped, tag = 'internal scratch']
  #allocation2 [shape = 'f32[32,64]{1,0:T(8,128)}', space=vmem, size = 0x4000, scoped, tag = 'scratch operand']
  %s0 = inlined_call_operand.vmem [shape: f32[32,144], index: 0, kind: input, shape index: {}]
  %s1 = inlined_call_operand.vmem [shape: f32[144,64], index: 1, kind: input, shape index: {}]
  %s2 = inlined_call_operand.vmem [shape: f32[1,64], index: 2, kind: input, shape index: {}]
  %s3 = inlined_call_operand.vmem [shape: f32[1,64], index: 3, kind: input, shape index: {}]
  %s4 = inlined_call_operand.vmem [shape: f32[32,64], index: 4, kind: input, shape index: {}]
  %s5 = inlined_call_operand.vmem [shape: f32[32,64], index: 5, kind: output, shape index: {}]
  %s6 = sld [smem:[#allocation0]]
  $region34: #{icml_d_forward.16} parent=0
    _
  %s8 = ssub.s32 1, %s6
  %s9 = scalar_select 0, %s8, %s6
  // Predicated region
  $region2: #{icml_d_forward.16} parent=0 // pred_check
    _
  $region3: #{icml_d_forward.16} parent=0 // pred_check_branch
    %11 = sbr.rel (0) target = $region5
  $region4: #{icml_d_forward.16} parent=0 // pred_region
    _
  $region5: #{icml_d_forward.16} parent=0 // pred_fallthru
    _
  // Predicated region
  $region6: #{icml_d_forward.16} parent=0 // pred_check
    _
  $region7: #{icml_d_forward.16} parent=0 // pred_check_branch
    %13 = sbr.rel (0) target = $region9
  $region8: #{icml_d_forward.16} parent=0 // pred_region
    _
  $region9: #{icml_d_forward.16} parent=0 // pred_fallthru
    _
  // Predicated region
  $region10: #{icml_d_forward.16} parent=0 // pred_check
    _
  $region11: #{icml_d_forward.16} parent=0 // pred_check_branch
    %15 = sbr.rel (0) target = $region13
  $region12: #{icml_d_forward.16} parent=0 // pred_region
    _
  $region13: #{icml_d_forward.16} parent=0 // pred_fallthru
    _
  // Predicated region
  $region14: #{icml_d_forward.16} parent=0 // pred_check
    _
  $region15: #{icml_d_forward.16} parent=0 // pred_check_branch
    %17 = sbr.rel (0) target = $region17
  $region16: #{icml_d_forward.16} parent=0 // pred_region
    _
  $region17: #{icml_d_forward.16} parent=0 // pred_fallthru
    _
  // Predicated region
  $region18: #{icml_d_forward.16} parent=0 // pred_check
    _
  $region19: #{icml_d_forward.16} parent=0 // pred_check_branch
    %19 = sbr.rel (0) target = $region21
  $region20: #{icml_d_forward.16} parent=0 // pred_region
    _
  $region21: #{icml_d_forward.16} parent=0 // pred_fallthru
    _
  %v20 = vld [vmem:[%s0] sm:$0xff]
  %v21 = vld [vmem:[%s0 + $0x8] sm:$0xff]
  %v22 = vld [vmem:[%s0 + $0x10] sm:$0xff]
  %v23 = vld [vmem:[%s0 + $0x18] sm:$0xff]
  %v24 = vld [vmem:[%s0 + $0x20] sm:$0xff]
  %v25 = vld [vmem:[%s0 + $0x28] sm:$0xff]
  %v26 = vld [vmem:[%s0 + $0x30] sm:$0xff]
  %v27 = vld [vmem:[%s0 + $0x38] sm:$0xff]
  %v28 = vld [vmem:[%s1] sm:$0xff]
  %v29 = vld [vmem:[%s1 + $0x8] sm:$0xff]
  %v30 = vld [vmem:[%s1 + $0x10] sm:$0xff]
  %v31 = vld [vmem:[%s1 + $0x18] sm:$0xff]
  %v32 = vld [vmem:[%s1 + $0x20] sm:$0xff]
  %v33 = vld [vmem:[%s1 + $0x28] sm:$0xff]
  %v34 = vld [vmem:[%s1 + $0x30] sm:$0xff]
  %v35 = vld [vmem:[%s1 + $0x38] sm:$0xff]
  %v36 = vld [vmem:[%s1 + $0x40] sm:$0xff]
  %v37 = vld [vmem:[%s1 + $0x48] sm:$0xff]
  %v38 = vld [vmem:[%s1 + $0x50] sm:$0xff]
  %v39 = vld [vmem:[%s1 + $0x58] sm:$0xff]
  %v40 = vld [vmem:[%s1 + $0x60] sm:$0xff]
  %v41 = vld [vmem:[%s1 + $0x68] sm:$0xff]
  %v42 = vld [vmem:[%s1 + $0x70] sm:$0xff]
  %v43 = vld [vmem:[%s1 + $0x78] sm:$0xff]
  %v44 = vld [vmem:[%s1 + $0x80] sm:$0xff]
  %v45 = vld [vmem:[%s1 + $0x88] sm:$0xff]
  %vm46 = vcmask 130048
  %v48 = vsel %vm46, %v21, 0
  %v51 = vsel %vm46, %v23, 0
  %v54 = vsel %vm46, %v25, 0
  %v57 = vsel %vm46, %v27, 0
  %59 = vmatprep.subr.mxu0 0.0
  %60 = vmatpush1.msra.mxu0 %v28
  %61 = vmatprep.subr.mxu0 0.0
  %62 = vmatpush1.msra.mxu0 %v29
  %63 = vmatprep.subr.mxu0 0.0
  %64 = vmatpush1.msra.mxu0 %v30
  %65 = vmatprep.subr.mxu0 0.0
  %66 = vmatpush1.msra.mxu0 %v31
  %67 = vmatprep.subr.mxu0 0.0
  %68 = vmatpush1.msra.mxu0 %v32
  %69 = vmatprep.subr.mxu0 0.0
  %70 = vmatpush1.msra.mxu0 %v33
  %71 = vmatprep.subr.mxu0 0.0
  %72 = vmatpush1.msra.mxu0 %v34
  %73 = vmatprep.subr.mxu0 0.0
  %74 = vmatpush1.msra.mxu0 %v35
  %75 = vmatprep.subr.mxu0 0.0
  %76 = vmatpush1.msra.mxu0 %v36
  %77 = vmatprep.subr.mxu0 0.0
  %78 = vmatpush1.msra.mxu0 %v37
  %79 = vmatprep.subr.mxu0 0.0
  %80 = vmatpush1.msra.mxu0 %v38
  %81 = vmatprep.subr.mxu0 0.0
  %82 = vmatpush1.msra.mxu0 %v39
  %83 = vmatprep.subr.mxu0 0.0
  %84 = vmatpush1.msra.mxu0 %v40
  %85 = vmatprep.subr.mxu0 0.0
  %86 = vmatpush1.msra.mxu0 %v41
  %87 = vmatprep.subr.mxu0 0.0
  %88 = vmatpush1.msra.mxu0 %v42
  %89 = vmatprep.subr.mxu0 0.0
  %90 = vmatpush1.msra.mxu0 %v43
  %91 = vmatprep.subr.mxu0 0.0
  %92 = vmatpush1.msra.mxu0 %v44
  %93 = vmatprep.subr.mxu0 0.0
  %94 = vmatpush1.msra.mxu0 %v45
  %95 = vmatprep.subr.mxu0 0.0
  %96 = vmatpush1.msra.mxu0 0.0
  %97 = vmatprep.subr.mxu0 0.0
  %98 = vmatpush1.msra.mxu0 0.0
  %99 = vmatprep.subr.mxu0 0.0
  %100 = vmatpush1.msra.mxu0 0.0
  %101 = vmatprep.subr.mxu0 0.0
  %102 = vmatpush1.msra.mxu0 0.0
  %103 = vmatprep.subr.mxu0 0.0
  %104 = vmatpush1.msra.mxu0 0.0
  %105 = vmatprep.subr.mxu0 0.0
  %106 = vmatpush1.msra.mxu0 0.0
  %107 = vmatprep.subr.mxu0 0.0
  %108 = vmatpush1.msra.mxu0 0.0
  %109 = vmatprep.subr.mxu0 0.0
  %110 = vmatpush1.msra.mxu0 0.0
  %111 = vmatprep.subr.mxu0 0.0
  %112 = vmatpush1.msra.mxu0 0.0
  %113 = vmatprep.subr.mxu0 0.0
  %114 = vmatpush1.msra.mxu0 0.0
  %115 = vmatprep.subr.mxu0 0.0
  %116 = vmatpush1.msra.mxu0 0.0
  %117 = vmatprep.subr.mxu0 0.0
  %118 = vmatpush1.msra.mxu0 0.0
  %119 = vmatprep.subr.mxu0 0.0
  %120 = vmatpush1.msra.mxu0 0.0
  %121 = vmatprep.subr.mxu0 0.0
  %122 = vmatpush1.msra.mxu0 0.0
  %123 = vmatprep.mubr.f32.mxu0 %v48
  %124 = vmatmul.mubr.f32.gmra.mrb[0].mxu0 %v20
  %v125 = vpop.f32.mrb[0].mxu0
  %v126 = vadd.f32 0.0, %v125
  %v127 = vpop.f32.mrb[0].mxu0
  %128 = vmatprep.mubr.f32.mxu0 %v51
  %129 = vmatmul.mubr.f32.gmra.mrb[0].mxu0 %v22
  %v130 = vpop.f32.mrb[0].mxu0
  %v131 = vadd.f32 0.0, %v130
  %v132 = vpop.f32.mrb[0].mxu0
  %133 = vmatprep.mubr.f32.mxu0 %v54
  %134 = vmatmul.mubr.f32.gmra.mrb[0].mxu0 %v24
  %v135 = vpop.f32.mrb[0].mxu0
  %v136 = vadd.f32 0.0, %v135
  %v137 = vpop.f32.mrb[0].mxu0
  %138 = vmatprep.mubr.f32.mxu0 %v57
  %139 = vmatmul.mubr.f32.gmra.mrb[0].mxu0 %v26
  %v140 = vpop.f32.mrb[0].mxu0
  %v141 = vadd.f32 0.0, %v140
  %v142 = vpop.f32.mrb[0].mxu0
  %143 = vdwg.mxu0
  %s144 = smul.u32 0, 32
  %s145 = scalar_lea.vmem [#allocation2], %s144
  %vm146 = vcmask 523264
  %147 = vst.msk [vmem:[%s145] sm:$0xff] %vm146, %v126
  %148 = vst.msk [vmem:[%s145 + $0x8] sm:$0xff] %vm146, %v131
  %149 = vst.msk [vmem:[%s145 + $0x10] sm:$0xff] %vm146, %v136
  %150 = vst.msk [vmem:[%s145 + $0x18] sm:$0xff] %vm146, %v141
  %p151 = scmp.eq.s32.totalorder 0, 0
  // Predicated region
  $region22: #{icml_d_forward.16} parent=0 // pred_check
    %p152 = pneg %p151
  $region23: #{icml_d_forward.16} parent=0 // pred_check_branch
    %154 = sbr.rel (%p152) target = $region25
  $region24: #{icml_d_forward.16} parent=0 // pred_region
    %v155 = vld [vmem:[#allocation2] sm:$0xff]
    %v156 = vld [vmem:[#allocation2 + $0x8] sm:$0xff]
    %v157 = vld [vmem:[#allocation2 + $0x10] sm:$0xff]
    %v158 = vld [vmem:[#allocation2 + $0x18] sm:$0xff]
    %v159 = vsel %vm146, %v155, 0.0
    %v160 = vsel %vm146, %v156, 0.0
    %v161 = vadd.f32 %v159, %v160
    %v162 = vsel %vm146, %v157, 0.0
    %v163 = vadd.f32 %v161, %v162
    %v164 = vsel %vm146, %v158, 0.0
    %v165 = vadd.f32 %v163, %v164
    %v166 = vrot.slane %v165, 4
    %v167 = vadd.f32 %v165, %v166
    %v168 = vrot.slane %v167, 2
    %v169 = vadd.f32 %v167, %v168
    %v170 = vrot.slane %v169, 1
    %v171 = vadd.f32 %v169, %v170
    %v172 = vrcp.pop 32.0
    %v173 = vmul.f32 %v171, %v172
    %v174 = vsub.f32 %v155, %v173
    %v175 = vsub.f32 %v156, %v173
    %v176 = vsub.f32 %v157, %v173
    %v177 = vsub.f32 %v158, %v173
    %v178 = vmul.f32 %v174, %v174
    %v179 = vmul.f32 %v175, %v175
    %v180 = vmul.f32 %v176, %v176
    %v181 = vmul.f32 %v177, %v177
    %v182 = vsel %vm146, %v178, 0.0
    %v183 = vsel %vm146, %v179, 0.0
    %v184 = vadd.f32 %v182, %v183
    %v185 = vsel %vm146, %v180, 0.0
    %v186 = vadd.f32 %v184, %v185
    %v187 = vsel %vm146, %v181, 0.0
    %v188 = vadd.f32 %v186, %v187
    %v189 = vrot.slane %v188, 4
    %v190 = vadd.f32 %v188, %v189
    %v191 = vrot.slane %v190, 2
    %v192 = vadd.f32 %v190, %v191
    %v193 = vrot.slane %v192, 1
    %v194 = vadd.f32 %v192, %v193
    %v195 = vmul.f32 %v194, %v172
    %v196 = vadd.f32 %v195, 1e-05
    %v197 = vrsqrt.pop %v196
    %v198 = vmul.f32 %v174, %v197
    %v199 = vmul.f32 %v175, %v197
    %v200 = vmul.f32 %v176, %v197
    %v201 = vmul.f32 %v177, %v197
    %v202 = vld [vmem:[%s2] sm:$0x1]
    %v204 = vlaneseq
    %v205 = vshrl.u32 %v204, 7
    %v206 = vsub.s32 0, %v205
    %v207 = vrot.slane %v202, %v206
    %v209 = vmul.f32 %v198, %v207
    %v210 = vmul.f32 %v199, %v207
    %v211 = vmul.f32 %v200, %v207
    %v212 = vmul.f32 %v201, %v207
    %v213 = vld [vmem:[%s3] sm:$0x1]
    %v215 = vlaneseq
    %v216 = vshrl.u32 %v215, 7
    %v217 = vsub.s32 0, %v216
    %v218 = vrot.slane %v213, %v217
    %v220 = vadd.f32 %v209, %v218
    %v221 = vadd.f32 %v210, %v218
    %v222 = vadd.f32 %v211, %v218
    %v223 = vadd.f32 %v212, %v218
    %v224 = vld [vmem:[%s4] sm:$0xff]
    %v225 = vld [vmem:[%s4 + $0x8] sm:$0xff]
    %v226 = vld [vmem:[%s4 + $0x10] sm:$0xff]
    %v227 = vld [vmem:[%s4 + $0x18] sm:$0xff]
    %v228 = vadd.f32 %v220, %v224
    %v229 = vadd.f32 %v221, %v225
    %v230 = vadd.f32 %v222, %v226
    %v231 = vadd.f32 %v223, %v227
    %vm232 = vcmp.ge.f32.partialorder %v228, 0.0
    %vm233 = vcmp.ge.f32.partialorder %v229, 0.0
    %vm234 = vcmp.ge.f32.partialorder %v230, 0.0
    %vm235 = vcmp.ge.f32.partialorder %v231, 0.0
    %v236 = vmul.f32 %v228, 0.2
    %v237 = vmul.f32 %v229, 0.2
    %v238 = vmul.f32 %v230, 0.2
    %v239 = vmul.f32 %v231, 0.2
    %v240 = vsel %vm232, %v228, %v236
    %v241 = vsel %vm233, %v229, %v237
    %v242 = vsel %vm234, %v230, %v238
    %v243 = vsel %vm235, %v231, %v239
    %244 = vst.msk [vmem:[%s5] sm:$0xff] %vm146, %v240
    %245 = vst.msk [vmem:[%s5 + $0x8] sm:$0xff] %vm146, %v241
    %246 = vst.msk [vmem:[%s5 + $0x10] sm:$0xff] %vm146, %v242
    %247 = vst.msk [vmem:[%s5 + $0x18] sm:$0xff] %vm146, %v243
  $region25: #{icml_d_forward.16} parent=0 // pred_fallthru
    _
  // Predicated region
  $region26: #{icml_d_forward.16} parent=0 // pred_check
    _
  $region27: #{icml_d_forward.16} parent=0 // pred_check_branch
    %249 = sbr.rel (0) target = $region29
  $region28: #{icml_d_forward.16} parent=0 // pred_region
    _
  $region29: #{icml_d_forward.16} parent=0 // pred_fallthru
    _
  // Predicated region
  $region30: #{icml_d_forward.16} parent=0 // pred_check
    _
  $region31: #{icml_d_forward.16} parent=0 // pred_check_branch
    %251 = sbr.rel (0) target = $region33
  $region32: #{icml_d_forward.16} parent=0 // pred_region
    _
  $region33: #{icml_d_forward.16} parent=0 // pred_fallthru
    _

// kernel: icml_d_forward.17
$region0: #{icml_d_forward.17}
  #allocation0 [shape = 'u32[]', space=smem, size = 0x4, offset = 0x4, fixed_abs, tag = 'smem constant byte address 0x4 - core index']
  #allocation1 [shape = 'u32[144,128]{1,0:T(1,128)}', space=vmem, size = 0x12000, scoped, tag = 'internal scratch']
  %s0 = inlined_call_operand.vmem [shape: f32[2,1024], index: 0, kind: input, shape index: {}]
  %s1 = inlined_call_operand.vmem [shape: f32[1024,128], index: 1, kind: input, shape index: {}]
  %s2 = inlined_call_operand.vmem [shape: f32[1,128], index: 2, kind: input, shape index: {}]
  %s3 = inlined_call_operand.vmem [shape: f32[2,128], index: 3, kind: output, shape index: {}]
  %s4 = sld [smem:[#allocation0]]
  $region22: #{icml_d_forward.17} parent=0
    _
  %s6 = ssub.s32 1, %s4
  %s7 = scalar_select 0, %s6, %s4
  // Predicated region
  $region2: #{icml_d_forward.17} parent=0 // pred_check
    _
  $region3: #{icml_d_forward.17} parent=0 // pred_check_branch
    %9 = sbr.rel (0) target = $region5
  $region4: #{icml_d_forward.17} parent=0 // pred_region
    _
  $region5: #{icml_d_forward.17} parent=0 // pred_fallthru
    _
  // Predicated region
  $region6: #{icml_d_forward.17} parent=0 // pred_check
    _
  $region7: #{icml_d_forward.17} parent=0 // pred_check_branch
    %11 = sbr.rel (0) target = $region9
  $region8: #{icml_d_forward.17} parent=0 // pred_region
    _
  $region9: #{icml_d_forward.17} parent=0 // pred_fallthru
    _
  // Predicated region
  $region10: #{icml_d_forward.17} parent=0 // pred_check
    _
  $region11: #{icml_d_forward.17} parent=0 // pred_check_branch
    %13 = sbr.rel (0) target = $region13
  $region12: #{icml_d_forward.17} parent=0 // pred_region
    _
  $region13: #{icml_d_forward.17} parent=0 // pred_fallthru
    _
  %v14 = vld [vmem:[%s0] sm:$0xff]
  %v15 = vld [vmem:[%s0 + $0x8] sm:$0xff]
  %v16 = vld [vmem:[%s1] sm:$0xff]
  %v17 = vld [vmem:[%s1 + $0x8] sm:$0xff]
  %v18 = vld [vmem:[%s1 + $0x10] sm:$0xff]
  %v19 = vld [vmem:[%s1 + $0x18] sm:$0xff]
  %v20 = vld [vmem:[%s1 + $0x20] sm:$0xff]
  %v21 = vld [vmem:[%s1 + $0x28] sm:$0xff]
  %v22 = vld [vmem:[%s1 + $0x30] sm:$0xff]
  %v23 = vld [vmem:[%s1 + $0x38] sm:$0xff]
  %v24 = vld [vmem:[%s1 + $0x40] sm:$0xff]
  %v25 = vld [vmem:[%s1 + $0x48] sm:$0xff]
  %v26 = vld [vmem:[%s1 + $0x50] sm:$0xff]
  %v27 = vld [vmem:[%s1 + $0x58] sm:$0xff]
  %v28 = vld [vmem:[%s1 + $0x60] sm:$0xff]
  %v29 = vld [vmem:[%s1 + $0x68] sm:$0xff]
  %v30 = vld [vmem:[%s1 + $0x70] sm:$0xff]
  %v31 = vld [vmem:[%s1 + $0x78] sm:$0xff]
  %v32 = vld [vmem:[%s1 + $0x80] sm:$0xff]
  %v33 = vld [vmem:[%s1 + $0x88] sm:$0xff]
  %v34 = vld [vmem:[%s1 + $0x90] sm:$0xff]
  %v35 = vld [vmem:[%s1 + $0x98] sm:$0xff]
  %v36 = vld [vmem:[%s1 + $0xa0] sm:$0xff]
  %v37 = vld [vmem:[%s1 + $0xa8] sm:$0xff]
  %v38 = vld [vmem:[%s1 + $0xb0] sm:$0xff]
  %v39 = vld [vmem:[%s1 + $0xb8] sm:$0xff]
  %v40 = vld [vmem:[%s1 + $0xc0] sm:$0xff]
  %v41 = vld [vmem:[%s1 + $0xc8] sm:$0xff]
  %v42 = vld [vmem:[%s1 + $0xd0] sm:$0xff]
  %v43 = vld [vmem:[%s1 + $0xd8] sm:$0xff]
  %v44 = vld [vmem:[%s1 + $0xe0] sm:$0xff]
  %v45 = vld [vmem:[%s1 + $0xe8] sm:$0xff]
  %v46 = vld [vmem:[%s1 + $0xf0] sm:$0xff]
  %v47 = vld [vmem:[%s1 + $0xf8] sm:$0xff]
  %v48 = vld [vmem:[%s1 + $0x100] sm:$0xff]
  %v49 = vld [vmem:[%s1 + $0x108] sm:$0xff]
  %v50 = vld [vmem:[%s1 + $0x110] sm:$0xff]
  %v51 = vld [vmem:[%s1 + $0x118] sm:$0xff]
  %v52 = vld [vmem:[%s1 + $0x120] sm:$0xff]
  %v53 = vld [vmem:[%s1 + $0x128] sm:$0xff]
  %v54 = vld [vmem:[%s1 + $0x130] sm:$0xff]
  %v55 = vld [vmem:[%s1 + $0x138] sm:$0xff]
  %v56 = vld [vmem:[%s1 + $0x140] sm:$0xff]
  %v57 = vld [vmem:[%s1 + $0x148] sm:$0xff]
  %v58 = vld [vmem:[%s1 + $0x150] sm:$0xff]
  %v59 = vld [vmem:[%s1 + $0x158] sm:$0xff]
  %v60 = vld [vmem:[%s1 + $0x160] sm:$0xff]
  %v61 = vld [vmem:[%s1 + $0x168] sm:$0xff]
  %v62 = vld [vmem:[%s1 + $0x170] sm:$0xff]
  %v63 = vld [vmem:[%s1 + $0x178] sm:$0xff]
  %v64 = vld [vmem:[%s1 + $0x180] sm:$0xff]
  %v65 = vld [vmem:[%s1 + $0x188] sm:$0xff]
  %v66 = vld [vmem:[%s1 + $0x190] sm:$0xff]
  %v67 = vld [vmem:[%s1 + $0x198] sm:$0xff]
  %v68 = vld [vmem:[%s1 + $0x1a0] sm:$0xff]
  %v69 = vld [vmem:[%s1 + $0x1a8] sm:$0xff]
  %v70 = vld [vmem:[%s1 + $0x1b0] sm:$0xff]
  %v71 = vld [vmem:[%s1 + $0x1b8] sm:$0xff]
  %v72 = vld [vmem:[%s1 + $0x1c0] sm:$0xff]
  %v73 = vld [vmem:[%s1 + $0x1c8] sm:$0xff]
  %v74 = vld [vmem:[%s1 + $0x1d0] sm:$0xff]
  %v75 = vld [vmem:[%s1 + $0x1d8] sm:$0xff]
  %v76 = vld [vmem:[%s1 + $0x1e0] sm:$0xff]
  %v77 = vld [vmem:[%s1 + $0x1e8] sm:$0xff]
  %v78 = vld [vmem:[%s1 + $0x1f0] sm:$0xff]
  %v79 = vld [vmem:[%s1 + $0x1f8] sm:$0xff]
  %v80 = vld [vmem:[%s1 + $0x200] sm:$0xff]
  %v81 = vld [vmem:[%s1 + $0x208] sm:$0xff]
  %v82 = vld [vmem:[%s1 + $0x210] sm:$0xff]
  %v83 = vld [vmem:[%s1 + $0x218] sm:$0xff]
  %v84 = vld [vmem:[%s1 + $0x220] sm:$0xff]
  %v85 = vld [vmem:[%s1 + $0x228] sm:$0xff]
  %v86 = vld [vmem:[%s1 + $0x230] sm:$0xff]
  %v87 = vld [vmem:[%s1 + $0x238] sm:$0xff]
  %v88 = vld [vmem:[%s1 + $0x240] sm:$0xff]
  %v89 = vld [vmem:[%s1 + $0x248] sm:$0xff]
  %v90 = vld [vmem:[%s1 + $0x250] sm:$0xff]
  %v91 = vld [vmem:[%s1 + $0x258] sm:$0xff]
  %v92 = vld [vmem:[%s1 + $0x260] sm:$0xff]
  %v93 = vld [vmem:[%s1 + $0x268] sm:$0xff]
  %v94 = vld [vmem:[%s1 + $0x270] sm:$0xff]
  %v95 = vld [vmem:[%s1 + $0x278] sm:$0xff]
  %v96 = vld [vmem:[%s1 + $0x280] sm:$0xff]
  %v97 = vld [vmem:[%s1 + $0x288] sm:$0xff]
  %v98 = vld [vmem:[%s1 + $0x290] sm:$0xff]
  %v99 = vld [vmem:[%s1 + $0x298] sm:$0xff]
  %v100 = vld [vmem:[%s1 + $0x2a0] sm:$0xff]
  %v101 = vld [vmem:[%s1 + $0x2a8] sm:$0xff]
  %v102 = vld [vmem:[%s1 + $0x2b0] sm:$0xff]
  %v103 = vld [vmem:[%s1 + $0x2b8] sm:$0xff]
  %v104 = vld [vmem:[%s1 + $0x2c0] sm:$0xff]
  %v105 = vld [vmem:[%s1 + $0x2c8] sm:$0xff]
  %v106 = vld [vmem:[%s1 + $0x2d0] sm:$0xff]
  %v107 = vld [vmem:[%s1 + $0x2d8] sm:$0xff]
  %v108 = vld [vmem:[%s1 + $0x2e0] sm:$0xff]
  %v109 = vld [vmem:[%s1 + $0x2e8] sm:$0xff]
  %v110 = vld [vmem:[%s1 + $0x2f0] sm:$0xff]
  %v111 = vld [vmem:[%s1 + $0x2f8] sm:$0xff]
  %v112 = vld [vmem:[%s1 + $0x300] sm:$0xff]
  %v113 = vld [vmem:[%s1 + $0x308] sm:$0xff]
  %v114 = vld [vmem:[%s1 + $0x310] sm:$0xff]
  %v115 = vld [vmem:[%s1 + $0x318] sm:$0xff]
  %v116 = vld [vmem:[%s1 + $0x320] sm:$0xff]
  %v117 = vld [vmem:[%s1 + $0x328] sm:$0xff]
  %v118 = vld [vmem:[%s1 + $0x330] sm:$0xff]
  %v119 = vld [vmem:[%s1 + $0x338] sm:$0xff]
  %v120 = vld [vmem:[%s1 + $0x340] sm:$0xff]
  %v121 = vld [vmem:[%s1 + $0x348] sm:$0xff]
  %v122 = vld [vmem:[%s1 + $0x350] sm:$0xff]
  %v123 = vld [vmem:[%s1 + $0x358] sm:$0xff]
  %v124 = vld [vmem:[%s1 + $0x360] sm:$0xff]
  %v125 = vld [vmem:[%s1 + $0x368] sm:$0xff]
  %v126 = vld [vmem:[%s1 + $0x370] sm:$0xff]
  %v127 = vld [vmem:[%s1 + $0x378] sm:$0xff]
  %v128 = vld [vmem:[%s1 + $0x380] sm:$0xff]
  %v129 = vld [vmem:[%s1 + $0x388] sm:$0xff]
  %v130 = vld [vmem:[%s1 + $0x390] sm:$0xff]
  %v131 = vld [vmem:[%s1 + $0x398] sm:$0xff]
  %v132 = vld [vmem:[%s1 + $0x3a0] sm:$0xff]
  %v133 = vld [vmem:[%s1 + $0x3a8] sm:$0xff]
  %v134 = vld [vmem:[%s1 + $0x3b0] sm:$0xff]
  %v135 = vld [vmem:[%s1 + $0x3b8] sm:$0xff]
  %v136 = vld [vmem:[%s1 + $0x3c0] sm:$0xff]
  %v137 = vld [vmem:[%s1 + $0x3c8] sm:$0xff]
  %v138 = vld [vmem:[%s1 + $0x3d0] sm:$0xff]
  %v139 = vld [vmem:[%s1 + $0x3d8] sm:$0xff]
  %v140 = vld [vmem:[%s1 + $0x3e0] sm:$0xff]
  %v141 = vld [vmem:[%s1 + $0x3e8] sm:$0xff]
  %v142 = vld [vmem:[%s1 + $0x3f0] sm:$0xff]
  %v143 = vld [vmem:[%s1 + $0x3f8] sm:$0xff]
  %v144 = vld [vmem:[%s2] sm:$0x1]
  %v146 = vlaneseq
  %v147 = vshrl.u32 %v146, 7
  %v148 = vsub.s32 0, %v147
  %v149 = vrot.slane %v144, %v148
  %v153 = vcombine.high %v14, %v14
  %v155 = vunpack.c.l.s4 1983009808
  %v156 = vunpack.c.0.s8 %v155
  %v157 = vlaneseq
  %v158 = vshrl.u32 %v157, 7
  %v159 = vsub.s32 %v156, %v158
  %v160 = vrot.slane %v14, %v159
  %v162 = vunpack.c.l.s4 1983009808
  %v163 = vunpack.c.0.s8 %v162
  %v164 = vlaneseq
  %v165 = vshrl.u32 %v164, 7
  %v166 = vsub.s32 %v163, %v165
  %v167 = vrot.slane %v153, %v166
  %v168 = vcombine.high %v160, %v160
  %v169 = vcombine.high %v167, %v167
  %v170 = vcombine.high %v15, %v15
  %v172 = vunpack.c.l.s4 1983009808
  %v173 = vunpack.c.0.s8 %v172
  %v174 = vlaneseq
  %v175 = vshrl.u32 %v174, 7
  %v176 = vsub.s32 %v173, %v175
  %v177 = vrot.slane %v15, %v176
  %v179 = vunpack.c.l.s4 1983009808
  %v180 = vunpack.c.0.s8 %v179
  %v181 = vlaneseq
  %v182 = vshrl.u32 %v181, 7
  %v183 = vsub.s32 %v180, %v182
  %v184 = vrot.slane %v170, %v183
  %v185 = vcombine.high %v177, %v177
  %v186 = vcombine.high %v184, %v184
  %195 = vmatprep.subr.mxu0 0.0
  %196 = vmatpush1.msra.mxu0 %v16
  %197 = vmatprep.subr.mxu0 0.0
  %198 = vmatpush1.msra.mxu0 %v17
  %199 = vmatprep.subr.mxu0 0.0
  %200 = vmatpush1.msra.mxu0 %v18
  %201 = vmatprep.subr.mxu0 0.0
  %202 = vmatpush1.msra.mxu0 %v19
  %203 = vmatprep.subr.mxu0 0.0
  %204 = vmatpush1.msra.mxu0 %v20
  %205 = vmatprep.subr.mxu0 0.0
  %206 = vmatpush1.msra.mxu0 %v21
  %207 = vmatprep.subr.mxu0 0.0
  %208 = vmatpush1.msra.mxu0 %v22
  %209 = vmatprep.subr.mxu0 0.0
  %210 = vmatpush1.msra.mxu0 %v23
  %211 = vmatprep.subr.mxu0 0.0
  %212 = vmatpush1.msra.mxu0 %v24
  %213 = vmatprep.subr.mxu0 0.0
  %214 = vmatpush1.msra.mxu0 %v25
  %215 = vmatprep.subr.mxu0 0.0
  %216 = vmatpush1.msra.mxu0 %v26
  %217 = vmatprep.subr.mxu0 0.0
  %218 = vmatpush1.msra.mxu0 %v27
  %219 = vmatprep.subr.mxu0 0.0
  %220 = vmatpush1.msra.mxu0 %v28
  %221 = vmatprep.subr.mxu0 0.0
  %222 = vmatpush1.msra.mxu0 %v29
  %223 = vmatprep.subr.mxu0 0.0
  %224 = vmatpush1.msra.mxu0 %v30
  %225 = vmatprep.subr.mxu0 0.0
  %226 = vmatpush1.msra.mxu0 %v31
  %227 = vmatprep.subr.mxu0 0.0
  %228 = vmatpush1.msra.mxu0 %v32
  %229 = vmatprep.subr.mxu0 0.0
  %230 = vmatpush1.msra.mxu0 %v33
  %231 = vmatprep.subr.mxu0 0.0
  %232 = vmatpush1.msra.mxu0 %v34
  %233 = vmatprep.subr.mxu0 0.0
  %234 = vmatpush1.msra.mxu0 %v35
  %235 = vmatprep.subr.mxu0 0.0
  %236 = vmatpush1.msra.mxu0 %v36
  %237 = vmatprep.subr.mxu0 0.0
  %238 = vmatpush1.msra.mxu0 %v37
  %239 = vmatprep.subr.mxu0 0.0
  %240 = vmatpush1.msra.mxu0 %v38
  %241 = vmatprep.subr.mxu0 0.0
  %242 = vmatpush1.msra.mxu0 %v39
  %243 = vmatprep.subr.mxu0 0.0
  %244 = vmatpush1.msra.mxu0 %v40
  %245 = vmatprep.subr.mxu0 0.0
  %246 = vmatpush1.msra.mxu0 %v41
  %247 = vmatprep.subr.mxu0 0.0
  %248 = vmatpush1.msra.mxu0 %v42
  %249 = vmatprep.subr.mxu0 0.0
  %250 = vmatpush1.msra.mxu0 %v43
  %251 = vmatprep.subr.mxu0 0.0
  %252 = vmatpush1.msra.mxu0 %v44
  %253 = vmatprep.subr.mxu0 0.0
  %254 = vmatpush1.msra.mxu0 %v45
  %255 = vmatprep.subr.mxu0 0.0
  %256 = vmatpush1.msra.mxu0 %v46
  %257 = vmatprep.subr.mxu0 0.0
  %258 = vmatpush1.msra.mxu0 %v47
  %259 = vmatprep.mubr.f32.mxu0 %v168
  %260 = vmatmul.mubr.f32.gmra.mrb[0].mxu0 %v160
  %v261 = vpop.f32.mrb[0].mxu0
  %v262 = vadd.f32 %v149, %v261
  %v263 = vpop.f32.mrb[0].mxu0
  %264 = vdwg.mxu0
  %265 = vmatprep.subr.mxu0 0.0
  %266 = vmatpush1.msra.mxu0 %v48
  %267 = vmatprep.subr.mxu0 0.0
  %268 = vmatpush1.msra.mxu0 %v49
  %269 = vmatprep.subr.mxu0 0.0
  %270 = vmatpush1.msra.mxu0 %v50
  %271 = vmatprep.subr.mxu0 0.0
  %272 = vmatpush1.msra.mxu0 %v51
  %273 = vmatprep.subr.mxu0 0.0
  %274 = vmatpush1.msra.mxu0 %v52
  %275 = vmatprep.subr.mxu0 0.0
  %276 = vmatpush1.msra.mxu0 %v53
  %277 = vmatprep.subr.mxu0 0.0
  %278 = vmatpush1.msra.mxu0 %v54
  %279 = vmatprep.subr.mxu0 0.0
  %280 = vmatpush1.msra.mxu0 %v55
  %281 = vmatprep.subr.mxu0 0.0
  %282 = vmatpush1.msra.mxu0 %v56
  %283 = vmatprep.subr.mxu0 0.0
  %284 = vmatpush1.msra.mxu0 %v57
  %285 = vmatprep.subr.mxu0 0.0
  %286 = vmatpush1.msra.mxu0 %v58
  %287 = vmatprep.subr.mxu0 0.0
  %288 = vmatpush1.msra.mxu0 %v59
  %289 = vmatprep.subr.mxu0 0.0
  %290 = vmatpush1.msra.mxu0 %v60
  %291 = vmatprep.subr.mxu0 0.0
  %292 = vmatpush1.msra.mxu0 %v61
  %293 = vmatprep.subr.mxu0 0.0
  %294 = vmatpush1.msra.mxu0 %v62
  %295 = vmatprep.subr.mxu0 0.0
  %296 = vmatpush1.msra.mxu0 %v63
  %297 = vmatprep.subr.mxu0 0.0
  %298 = vmatpush1.msra.mxu0 %v64
  %299 = vmatprep.subr.mxu0 0.0
  %300 = vmatpush1.msra.mxu0 %v65
  %301 = vmatprep.subr.mxu0 0.0
  %302 = vmatpush1.msra.mxu0 %v66
  %303 = vmatprep.subr.mxu0 0.0
  %304 = vmatpush1.msra.mxu0 %v67
  %305 = vmatprep.subr.mxu0 0.0
  %306 = vmatpush1.msra.mxu0 %v68
  %307 = vmatprep.subr.mxu0 0.0
  %308 = vmatpush1.msra.mxu0 %v69
  %309 = vmatprep.subr.mxu0 0.0
  %310 = vmatpush1.msra.mxu0 %v70
  %311 = vmatprep.subr.mxu0 0.0
  %312 = vmatpush1.msra.mxu0 %v71
  %313 = vmatprep.subr.mxu0 0.0
  %314 = vmatpush1.msra.mxu0 %v72
  %315 = vmatprep.subr.mxu0 0.0
  %316 = vmatpush1.msra.mxu0 %v73
  %317 = vmatprep.subr.mxu0 0.0
  %318 = vmatpush1.msra.mxu0 %v74
  %319 = vmatprep.subr.mxu0 0.0
  %320 = vmatpush1.msra.mxu0 %v75
  %321 = vmatprep.subr.mxu0 0.0
  %322 = vmatpush1.msra.mxu0 %v76
  %323 = vmatprep.subr.mxu0 0.0
  %324 = vmatpush1.msra.mxu0 %v77
  %325 = vmatprep.subr.mxu0 0.0
  %326 = vmatpush1.msra.mxu0 %v78
  %327 = vmatprep.subr.mxu0 0.0
  %328 = vmatpush1.msra.mxu0 %v79
  %329 = vmatprep.mubr.f32.mxu0 %v169
  %330 = vmatmul.mubr.f32.gmra.mrb[0].mxu0 %v167
  %v331 = vpop.f32.mrb[0].mxu0
  %v332 = vadd.f32 %v262, %v331
  %v333 = vpop.f32.mrb[0].mxu0
  %334 = vdwg.mxu0
  %335 = vmatprep.subr.mxu0 0.0
  %336 = vmatpush1.msra.mxu0 %v80
  %337 = vmatprep.subr.mxu0 0.0
  %338 = vmatpush1.msra.mxu0 %v81
  %339 = vmatprep.subr.mxu0 0.0
  %340 = vmatpush1.msra.mxu0 %v82
  %341 = vmatprep.subr.mxu0 0.0
  %342 = vmatpush1.msra.mxu0 %v83
  %343 = vmatprep.subr.mxu0 0.0
  %344 = vmatpush1.msra.mxu0 %v84
  %345 = vmatprep.subr.mxu0 0.0
  %346 = vmatpush1.msra.mxu0 %v85
  %347 = vmatprep.subr.mxu0 0.0
  %348 = vmatpush1.msra.mxu0 %v86
  %349 = vmatprep.subr.mxu0 0.0
  %350 = vmatpush1.msra.mxu0 %v87
  %351 = vmatprep.subr.mxu0 0.0
  %352 = vmatpush1.msra.mxu0 %v88
  %353 = vmatprep.subr.mxu0 0.0
  %354 = vmatpush1.msra.mxu0 %v89
  %355 = vmatprep.subr.mxu0 0.0
  %356 = vmatpush1.msra.mxu0 %v90
  %357 = vmatprep.subr.mxu0 0.0
  %358 = vmatpush1.msra.mxu0 %v91
  %359 = vmatprep.subr.mxu0 0.0
  %360 = vmatpush1.msra.mxu0 %v92
  %361 = vmatprep.subr.mxu0 0.0
  %362 = vmatpush1.msra.mxu0 %v93
  %363 = vmatprep.subr.mxu0 0.0
  %364 = vmatpush1.msra.mxu0 %v94
  %365 = vmatprep.subr.mxu0 0.0
  %366 = vmatpush1.msra.mxu0 %v95
  %367 = vmatprep.subr.mxu0 0.0
  %368 = vmatpush1.msra.mxu0 %v96
  %369 = vmatprep.subr.mxu0 0.0
  %370 = vmatpush1.msra.mxu0 %v97
  %371 = vmatprep.subr.mxu0 0.0
  %372 = vmatpush1.msra.mxu0 %v98
  %373 = vmatprep.subr.mxu0 0.0
  %374 = vmatpush1.msra.mxu0 %v99
  %375 = vmatprep.subr.mxu0 0.0
  %376 = vmatpush1.msra.mxu0 %v100
  %377 = vmatprep.subr.mxu0 0.0
  %378 = vmatpush1.msra.mxu0 %v101
  %379 = vmatprep.subr.mxu0 0.0
  %380 = vmatpush1.msra.mxu0 %v102
  %381 = vmatprep.subr.mxu0 0.0
  %382 = vmatpush1.msra.mxu0 %v103
  %383 = vmatprep.subr.mxu0 0.0
  %384 = vmatpush1.msra.mxu0 %v104
  %385 = vmatprep.subr.mxu0 0.0
  %386 = vmatpush1.msra.mxu0 %v105
  %387 = vmatprep.subr.mxu0 0.0
  %388 = vmatpush1.msra.mxu0 %v106
  %389 = vmatprep.subr.mxu0 0.0
  %390 = vmatpush1.msra.mxu0 %v107
  %391 = vmatprep.subr.mxu0 0.0
  %392 = vmatpush1.msra.mxu0 %v108
  %393 = vmatprep.subr.mxu0 0.0
  %394 = vmatpush1.msra.mxu0 %v109
  %395 = vmatprep.subr.mxu0 0.0
  %396 = vmatpush1.msra.mxu0 %v110
  %397 = vmatprep.subr.mxu0 0.0
  %398 = vmatpush1.msra.mxu0 %v111
  %399 = vmatprep.mubr.f32.mxu0 %v185
  %400 = vmatmul.mubr.f32.gmra.mrb[0].mxu0 %v177
  %v401 = vpop.f32.mrb[0].mxu0
  %v402 = vadd.f32 %v332, %v401
  %v403 = vpop.f32.mrb[0].mxu0
  %404 = vdwg.mxu0
  %405 = vmatprep.subr.mxu0 0.0
  %406 = vmatpush1.msra.mxu0 %v112
  %407 = vmatprep.subr.mxu0 0.0
  %408 = vmatpush1.msra.mxu0 %v113
  %409 = vmatprep.subr.mxu0 0.0
  %410 = vmatpush1.msra.mxu0 %v114
  %411 = vmatprep.subr.mxu0 0.0
  %412 = vmatpush1.msra.mxu0 %v115
  %413 = vmatprep.subr.mxu0 0.0
  %414 = vmatpush1.msra.mxu0 %v116
  %415 = vmatprep.subr.mxu0 0.0
  %416 = vmatpush1.msra.mxu0 %v117
  %417 = vmatprep.subr.mxu0 0.0
  %418 = vmatpush1.msra.mxu0 %v118
  %419 = vmatprep.subr.mxu0 0.0
  %420 = vmatpush1.msra.mxu0 %v119
  %421 = vmatprep.subr.mxu0 0.0
  %422 = vmatpush1.msra.mxu0 %v120
  %423 = vmatprep.subr.mxu0 0.0
  %424 = vmatpush1.msra.mxu0 %v121
  %425 = vmatprep.subr.mxu0 0.0
  %426 = vmatpush1.msra.mxu0 %v122
  %427 = vmatprep.subr.mxu0 0.0
  %428 = vmatpush1.msra.mxu0 %v123
  %429 = vmatprep.subr.mxu0 0.0
  %430 = vmatpush1.msra.mxu0 %v124
  %431 = vmatprep.subr.mxu0 0.0
  %432 = vmatpush1.msra.mxu0 %v125
  %433 = vmatprep.subr.mxu0 0.0
  %434 = vmatpush1.msra.mxu0 %v126
  %435 = vmatprep.subr.mxu0 0.0
  %436 = vmatpush1.msra.mxu0 %v127
  %437 = vmatprep.subr.mxu0 0.0
  %438 = vmatpush1.msra.mxu0 %v128
  %439 = vmatprep.subr.mxu0 0.0
  %440 = vmatpush1.msra.mxu0 %v129
  %441 = vmatprep.subr.mxu0 0.0
  %442 = vmatpush1.msra.mxu0 %v130
  %443 = vmatprep.subr.mxu0 0.0
  %444 = vmatpush1.msra.mxu0 %v131
  %445 = vmatprep.subr.mxu0 0.0
  %446 = vmatpush1.msra.mxu0 %v132
  %447 = vmatprep.subr.mxu0 0.0
  %448 = vmatpush1.msra.mxu0 %v133
  %449 = vmatprep.subr.mxu0 0.0
  %450 = vmatpush1.msra.mxu0 %v134
  %451 = vmatprep.subr.mxu0 0.0
  %452 = vmatpush1.msra.mxu0 %v135
  %453 = vmatprep.subr.mxu0 0.0
  %454 = vmatpush1.msra.mxu0 %v136
  %455 = vmatprep.subr.mxu0 0.0
  %456 = vmatpush1.msra.mxu0 %v137
  %457 = vmatprep.subr.mxu0 0.0
  %458 = vmatpush1.msra.mxu0 %v138
  %459 = vmatprep.subr.mxu0 0.0
  %460 = vmatpush1.msra.mxu0 %v139
  %461 = vmatprep.subr.mxu0 0.0
  %462 = vmatpush1.msra.mxu0 %v140
  %463 = vmatprep.subr.mxu0 0.0
  %464 = vmatpush1.msra.mxu0 %v141
  %465 = vmatprep.subr.mxu0 0.0
  %466 = vmatpush1.msra.mxu0 %v142
  %467 = vmatprep.subr.mxu0 0.0
  %468 = vmatpush1.msra.mxu0 %v143
  %469 = vmatprep.mubr.f32.mxu0 %v186
  %470 = vmatmul.mubr.f32.gmra.mrb[0].mxu0 %v184
  %v471 = vpop.f32.mrb[0].mxu0
  %v472 = vadd.f32 %v402, %v471
  %v473 = vpop.f32.mrb[0].mxu0
  %474 = vdwg.mxu0
  %vm475 = vcmp.ge.f32.partialorder %v472, 0.0
  %v476 = vmul.f32 %v472, 0.2
  %v477 = vsel %vm475, %v472, %v476
  %478 = vst [vmem:[%s3] sm:$0x3] %v477
  // Predicated region
  $region14: #{icml_d_forward.17} parent=0 // pred_check
    _
  $region15: #{icml_d_forward.17} parent=0 // pred_check_branch
    %480 = sbr.rel (0) target = $region17
  $region16: #{icml_d_forward.17} parent=0 // pred_region
    _
  $region17: #{icml_d_forward.17} parent=0 // pred_fallthru
    _
  // Predicated region
  $region18: #{icml_d_forward.17} parent=0 // pred_check
    _
  $region19: #{icml_d_forward.17} parent=0 // pred_check_branch
    %482 = sbr.rel (0) target = $region21
  $region20: #{icml_d_forward.17} parent=0 // pred_region
    _
  $region21: #{icml_d_forward.17} parent=0 // pred_fallthru
    _

// kernel: icml_d_forward.18
$region0: #{icml_d_forward.18}
  #allocation0 [shape = 'u32[]', space=smem, size = 0x4, offset = 0x4, fixed_abs, tag = 'smem constant byte address 0x4 - core index']
  #allocation1 [shape = 'u32[144,128]{1,0:T(1,128)}', space=vmem, size = 0x12000, scoped, tag = 'internal scratch']
  #allocation2 [shape = 'f32[32,64]{1,0:T(8,128)}', space=vmem, size = 0x4000, scoped, tag = 'scratch operand']
  %s0 = inlined_call_operand.vmem [shape: f32[32,192], index: 0, kind: input, shape index: {}]
  %s1 = inlined_call_operand.vmem [shape: f32[192,64], index: 1, kind: input, shape index: {}]
  %s2 = inlined_call_operand.vmem [shape: f32[1,64], index: 2, kind: input, shape index: {}]
  %s3 = inlined_call_operand.vmem [shape: f32[1,64], index: 3, kind: input, shape index: {}]
  %s4 = inlined_call_operand.vmem [shape: f32[32,64], index: 4, kind: output, shape index: {}]
  %s5 = sld [smem:[#allocation0]]
  $region30: #{icml_d_forward.18} parent=0
    _
  %s7 = ssub.s32 1, %s5
  %s8 = scalar_select 0, %s7, %s5
  // Predicated region
  $region2: #{icml_d_forward.18} parent=0 // pred_check
    _
  $region3: #{icml_d_forward.18} parent=0 // pred_check_branch
    %10 = sbr.rel (0) target = $region5
  $region4: #{icml_d_forward.18} parent=0 // pred_region
    _
  $region5: #{icml_d_forward.18} parent=0 // pred_fallthru
    _
  // Predicated region
  $region6: #{icml_d_forward.18} parent=0 // pred_check
    _
  $region7: #{icml_d_forward.18} parent=0 // pred_check_branch
    %12 = sbr.rel (0) target = $region9
  $region8: #{icml_d_forward.18} parent=0 // pred_region
    _
  $region9: #{icml_d_forward.18} parent=0 // pred_fallthru
    _
  // Predicated region
  $region10: #{icml_d_forward.18} parent=0 // pred_check
    _
  $region11: #{icml_d_forward.18} parent=0 // pred_check_branch
    %14 = sbr.rel (0) target = $region13
  $region12: #{icml_d_forward.18} parent=0 // pred_region
    _
  $region13: #{icml_d_forward.18} parent=0 // pred_fallthru
    _
  // Predicated region
  $region14: #{icml_d_forward.18} parent=0 // pred_check
    _
  $region15: #{icml_d_forward.18} parent=0 // pred_check_branch
    %16 = sbr.rel (0) target = $region17
  $region16: #{icml_d_forward.18} parent=0 // pred_region
    _
  $region17: #{icml_d_forward.18} parent=0 // pred_fallthru
    _
  %v17 = vld [vmem:[%s0] sm:$0xff]
  %v18 = vld [vmem:[%s0 + $0x8] sm:$0xff]
  %v19 = vld [vmem:[%s0 + $0x10] sm:$0xff]
  %v20 = vld [vmem:[%s0 + $0x18] sm:$0xff]
  %v21 = vld [vmem:[%s0 + $0x20] sm:$0xff]
  %v22 = vld [vmem:[%s0 + $0x28] sm:$0xff]
  %v23 = vld [vmem:[%s0 + $0x30] sm:$0xff]
  %v24 = vld [vmem:[%s0 + $0x38] sm:$0xff]
  %v25 = vld [vmem:[%s1] sm:$0xff]
  %v26 = vld [vmem:[%s1 + $0x8] sm:$0xff]
  %v27 = vld [vmem:[%s1 + $0x10] sm:$0xff]
  %v28 = vld [vmem:[%s1 + $0x18] sm:$0xff]
  %v29 = vld [vmem:[%s1 + $0x20] sm:$0xff]
  %v30 = vld [vmem:[%s1 + $0x28] sm:$0xff]
  %v31 = vld [vmem:[%s1 + $0x30] sm:$0xff]
  %v32 = vld [vmem:[%s1 + $0x38] sm:$0xff]
  %v33 = vld [vmem:[%s1 + $0x40] sm:$0xff]
  %v34 = vld [vmem:[%s1 + $0x48] sm:$0xff]
  %v35 = vld [vmem:[%s1 + $0x50] sm:$0xff]
  %v36 = vld [vmem:[%s1 + $0x58] sm:$0xff]
  %v37 = vld [vmem:[%s1 + $0x60] sm:$0xff]
  %v38 = vld [vmem:[%s1 + $0x68] sm:$0xff]
  %v39 = vld [vmem:[%s1 + $0x70] sm:$0xff]
  %v40 = vld [vmem:[%s1 + $0x78] sm:$0xff]
  %v41 = vld [vmem:[%s1 + $0x80] sm:$0xff]
  %v42 = vld [vmem:[%s1 + $0x88] sm:$0xff]
  %v43 = vld [vmem:[%s1 + $0x90] sm:$0xff]
  %v44 = vld [vmem:[%s1 + $0x98] sm:$0xff]
  %v45 = vld [vmem:[%s1 + $0xa0] sm:$0xff]
  %v46 = vld [vmem:[%s1 + $0xa8] sm:$0xff]
  %v47 = vld [vmem:[%s1 + $0xb0] sm:$0xff]
  %v48 = vld [vmem:[%s1 + $0xb8] sm:$0xff]
  %vm49 = vcmask 523264
  %v51 = vsel %vm49, %v18, 0
  %v54 = vsel %vm49, %v20, 0
  %v57 = vsel %vm49, %v22, 0
  %v60 = vsel %vm49, %v24, 0
  %62 = vmatprep.subr.mxu0 0.0
  %63 = vmatpush1.msra.mxu0 %v25
  %64 = vmatprep.subr.mxu0 0.0
  %65 = vmatpush1.msra.mxu0 %v26
  %66 = vmatprep.subr.mxu0 0.0
  %67 = vmatpush1.msra.mxu0 %v27
  %68 = vmatprep.subr.mxu0 0.0
  %69 = vmatpush1.msra.mxu0 %v28
  %70 = vmatprep.subr.mxu0 0.0
  %71 = vmatpush1.msra.mxu0 %v29
  %72 = vmatprep.subr.mxu0 0.0
  %73 = vmatpush1.msra.mxu0 %v30
  %74 = vmatprep.subr.mxu0 0.0
  %75 = vmatpush1.msra.mxu0 %v31
  %76 = vmatprep.subr.mxu0 0.0
  %77 = vmatpush1.msra.mxu0 %v32
  %78 = vmatprep.subr.mxu0 0.0
  %79 = vmatpush1.msra.mxu0 %v33
  %80 = vmatprep.subr.mxu0 0.0
  %81 = vmatpush1.msra.mxu0 %v34
  %82 = vmatprep.subr.mxu0 0.0
  %83 = vmatpush1.msra.mxu0 %v35
  %84 = vmatprep.subr.mxu0 0.0
  %85 = vmatpush1.msra.mxu0 %v36
  %86 = vmatprep.subr.mxu0 0.0
  %87 = vmatpush1.msra.mxu0 %v37
  %88 = vmatprep.subr.mxu0 0.0
  %89 = vmatpush1.msra.mxu0 %v38
  %90 = vmatprep.subr.mxu0 0.0
  %91 = vmatpush1.msra.mxu0 %v39
  %92 = vmatprep.subr.mxu0 0.0
  %93 = vmatpush1.msra.mxu0 %v40
  %94 = vmatprep.subr.mxu0 0.0
  %95 = vmatpush1.msra.mxu0 %v41
  %96 = vmatprep.subr.mxu0 0.0
  %97 = vmatpush1.msra.mxu0 %v42
  %98 = vmatprep.subr.mxu0 0.0
  %99 = vmatpush1.msra.mxu0 %v43
  %100 = vmatprep.subr.mxu0 0.0
  %101 = vmatpush1.msra.mxu0 %v44
  %102 = vmatprep.subr.mxu0 0.0
  %103 = vmatpush1.msra.mxu0 %v45
  %104 = vmatprep.subr.mxu0 0.0
  %105 = vmatpush1.msra.mxu0 %v46
  %106 = vmatprep.subr.mxu0 0.0
  %107 = vmatpush1.msra.mxu0 %v47
  %108 = vmatprep.subr.mxu0 0.0
  %109 = vmatpush1.msra.mxu0 %v48
  %110 = vmatprep.subr.mxu0 0.0
  %111 = vmatpush1.msra.mxu0 0.0
  %112 = vmatprep.subr.mxu0 0.0
  %113 = vmatpush1.msra.mxu0 0.0
  %114 = vmatprep.subr.mxu0 0.0
  %115 = vmatpush1.msra.mxu0 0.0
  %116 = vmatprep.subr.mxu0 0.0
  %117 = vmatpush1.msra.mxu0 0.0
  %118 = vmatprep.subr.mxu0 0.0
  %119 = vmatpush1.msra.mxu0 0.0
  %120 = vmatprep.subr.mxu0 0.0
  %121 = vmatpush1.msra.mxu0 0.0
  %122 = vmatprep.subr.mxu0 0.0
  %123 = vmatpush1.msra.mxu0 0.0
  %124 = vmatprep.subr.mxu0 0.0
  %125 = vmatpush1.msra.mxu0 0.0
  %126 = vmatprep.mubr.f32.mxu0 %v51
  %127 = vmatmul.mubr.f32.gmra.mrb[0].mxu0 %v17
  %v128 = vpop.f32.mrb[0].mxu0
  %v129 = vadd.f32 0.0, %v128
  %v130 = vpop.f32.mrb[0].mxu0
  %131 = vmatprep.mubr.f32.mxu0 %v54
  %132 = vmatmul.mubr.f32.gmra.mrb[0].mxu0 %v19
  %v133 = vpop.f32.mrb[0].mxu0
  %v134 = vadd.f32 0.0, %v133
  %v135 = vpop.f32.mrb[0].mxu0
  %136 = vmatprep.mubr.f32.mxu0 %v57
  %137 = vmatmul.mubr.f32.gmra.mrb[0].mxu0 %v21
  %v138 = vpop.f32.mrb[0].mxu0
  %v139 = vadd.f32 0.0, %v138
  %v140 = vpop.f32.mrb[0].mxu0
  %141 = vmatprep.mubr.f32.mxu0 %v60
  %142 = vmatmul.mubr.f32.gmra.mrb[0].mxu0 %v23
  %v143 = vpop.f32.mrb[0].mxu0
  %v144 = vadd.f32 0.0, %v143
  %v145 = vpop.f32.mrb[0].mxu0
  %146 = vdwg.mxu0
  %s147 = smul.u32 0, 32
  %s148 = scalar_lea.vmem [#allocation2], %s147
  %149 = vst.msk [vmem:[%s148] sm:$0xff] %vm49, %v129
  %150 = vst.msk [vmem:[%s148 + $0x8] sm:$0xff] %vm49, %v134
  %151 = vst.msk [vmem:[%s148 + $0x10] sm:$0xff] %vm49, %v139
  %152 = vst.msk [vmem:[%s148 + $0x18] sm:$0xff] %vm49, %v144
  %p153 = scmp.eq.s32.totalorder 0, 0
  // Predicated region
  $region18: #{icml_d_forward.18} parent=0 // pred_check
    %p154 = pneg %p153
  $region19: #{icml_d_forward.18} parent=0 // pred_check_branch
    %156 = sbr.rel (%p154) target = $region21
  $region20: #{icml_d_forward.18} parent=0 // pred_region
    %v157 = vld [vmem:[#allocation2] sm:$0xff]
    %v158 = vld [vmem:[#allocation2 + $0x8] sm:$0xff]
    %v159 = vld [vmem:[#allocation2 + $0x10] sm:$0xff]
    %v160 = vld [vmem:[#allocation2 + $0x18] sm:$0xff]
    %v161 = vsel %vm49, %v157, 0.0
    %v162 = vsel %vm49, %v158, 0.0
    %v163 = vadd.f32 %v161, %v162
    %v164 = vsel %vm49, %v159, 0.0
    %v165 = vadd.f32 %v163, %v164
    %v166 = vsel %vm49, %v160, 0.0
    %v167 = vadd.f32 %v165, %v166
    %v168 = vrot.slane %v167, 4
    %v169 = vadd.f32 %v167, %v168
    %v170 = vrot.slane %v169, 2
    %v171 = vadd.f32 %v169, %v170
    %v172 = vrot.slane %v171, 1
    %v173 = vadd.f32 %v171, %v172
    %v174 = vrcp.pop 32.0
    %v175 = vmul.f32 %v173, %v174
    %v176 = vsub.f32 %v157, %v175
    %v177 = vsub.f32 %v158, %v175
    %v178 = vsub.f32 %v159, %v175
    %v179 = vsub.f32 %v160, %v175
    %v180 = vmul.f32 %v176, %v176
    %v181 = vmul.f32 %v177, %v177
    %v182 = vmul.f32 %v178, %v178
    %v183 = vmul.f32 %v179, %v179
    %v184 = vsel %vm49, %v180, 0.0
    %v185 = vsel %vm49, %v181, 0.0
    %v186 = vadd.f32 %v184, %v185
    %v187 = vsel %vm49, %v182, 0.0
    %v188 = vadd.f32 %v186, %v187
    %v189 = vsel %vm49, %v183, 0.0
    %v190 = vadd.f32 %v188, %v189
    %v191 = vrot.slane %v190, 4
    %v192 = vadd.f32 %v190, %v191
    %v193 = vrot.slane %v192, 2
    %v194 = vadd.f32 %v192, %v193
    %v195 = vrot.slane %v194, 1
    %v196 = vadd.f32 %v194, %v195
    %v197 = vmul.f32 %v196, %v174
    %v198 = vadd.f32 %v197, 1e-05
    %v199 = vrsqrt.pop %v198
    %v200 = vmul.f32 %v176, %v199
    %v201 = vmul.f32 %v177, %v199
    %v202 = vmul.f32 %v178, %v199
    %v203 = vmul.f32 %v179, %v199
    %v204 = vld [vmem:[%s2] sm:$0x1]
    %v206 = vlaneseq
    %v207 = vshrl.u32 %v206, 7
    %v208 = vsub.s32 0, %v207
    %v209 = vrot.slane %v204, %v208
    %v211 = vmul.f32 %v200, %v209
    %v212 = vmul.f32 %v201, %v209
    %v213 = vmul.f32 %v202, %v209
    %v214 = vmul.f32 %v203, %v209
    %v215 = vld [vmem:[%s3] sm:$0x1]
    %v217 = vlaneseq
    %v218 = vshrl.u32 %v217, 7
    %v219 = vsub.s32 0, %v218
    %v220 = vrot.slane %v215, %v219
    %v222 = vadd.f32 %v211, %v220
    %v223 = vadd.f32 %v212, %v220
    %v224 = vadd.f32 %v213, %v220
    %v225 = vadd.f32 %v214, %v220
    %vm226 = vcmp.ge.f32.partialorder %v222, 0.0
    %vm227 = vcmp.ge.f32.partialorder %v223, 0.0
    %vm228 = vcmp.ge.f32.partialorder %v224, 0.0
    %vm229 = vcmp.ge.f32.partialorder %v225, 0.0
    %v230 = vmul.f32 %v222, 0.2
    %v231 = vmul.f32 %v223, 0.2
    %v232 = vmul.f32 %v224, 0.2
    %v233 = vmul.f32 %v225, 0.2
    %v234 = vsel %vm226, %v222, %v230
    %v235 = vsel %vm227, %v223, %v231
    %v236 = vsel %vm228, %v224, %v232
    %v237 = vsel %vm229, %v225, %v233
    %238 = vst.msk [vmem:[%s4] sm:$0xff] %vm49, %v234
    %239 = vst.msk [vmem:[%s4 + $0x8] sm:$0xff] %vm49, %v235
    %240 = vst.msk [vmem:[%s4 + $0x10] sm:$0xff] %vm49, %v236
    %241 = vst.msk [vmem:[%s4 + $0x18] sm:$0xff] %vm49, %v237
  $region21: #{icml_d_forward.18} parent=0 // pred_fallthru
    _
  // Predicated region
  $region22: #{icml_d_forward.18} parent=0 // pred_check
    _
  $region23: #{icml_d_forward.18} parent=0 // pred_check_branch
    %243 = sbr.rel (0) target = $region25
  $region24: #{icml_d_forward.18} parent=0 // pred_region
    _
  $region25: #{icml_d_forward.18} parent=0 // pred_fallthru
    _
  // Predicated region
  $region26: #{icml_d_forward.18} parent=0 // pred_check
    _
  $region27: #{icml_d_forward.18} parent=0 // pred_check_branch
    %245 = sbr.rel (0) target = $region29
  $region28: #{icml_d_forward.18} parent=0 // pred_region
    _
  $region29: #{icml_d_forward.18} parent=0 // pred_fallthru
    _

// kernel: icml_d_forward.19
$region0: #{icml_d_forward.19}
  #allocation0 [shape = 'u32[]', space=smem, size = 0x4, offset = 0x4, fixed_abs, tag = 'smem constant byte address 0x4 - core index']
  #allocation1 [shape = 'u32[144,128]{1,0:T(1,128)}', space=vmem, size = 0x12000, scoped, tag = 'internal scratch']
  %s0 = inlined_call_operand.vmem [shape: f32[2,1024], index: 0, kind: input, shape index: {}]
  %s1 = inlined_call_operand.vmem [shape: f32[1,1024], index: 1, kind: input, shape index: {}]
  %s2 = inlined_call_operand.vmem [shape: f32[2,1], index: 2, kind: output, shape index: {}]
  %s3 = sld [smem:[#allocation0]]
  $region18: #{icml_d_forward.19} parent=0
    _
  %s5 = ssub.s32 1, %s3
  %s6 = scalar_select 0, %s5, %s3
  // Predicated region
  $region2: #{icml_d_forward.19} parent=0 // pred_check
    _
  $region3: #{icml_d_forward.19} parent=0 // pred_check_branch
    %8 = sbr.rel (0) target = $region5
  $region4: #{icml_d_forward.19} parent=0 // pred_region
    _
  $region5: #{icml_d_forward.19} parent=0 // pred_fallthru
    _
  // Predicated region
  $region6: #{icml_d_forward.19} parent=0 // pred_check
    _
  $region7: #{icml_d_forward.19} parent=0 // pred_check_branch
    %10 = sbr.rel (0) target = $region9
  $region8: #{icml_d_forward.19} parent=0 // pred_region
    _
  $region9: #{icml_d_forward.19} parent=0 // pred_fallthru
    _
  %v11 = vld [vmem:[%s0] sm:$0xff]
  %v12 = vld [vmem:[%s0 + $0x8] sm:$0xff]
  %v13 = vld [vmem:[%s1] sm:$0xff]
  %v15 = vlaneseq
  %v16 = vshrl.u32 %v15, 7
  %v17 = vsub.s32 0, %v16
  %v18 = vrot.slane %v13, %v17
  %v19 = vlaneseq
  %v20 = vshrl.u32 %v19, 7
  %v21 = vsub.s32 1, %v20
  %v22 = vrot.slane %v13, %v21
  %v23 = vlaneseq
  %v24 = vshrl.u32 %v23, 7
  %v25 = vsub.s32 2, %v24
  %v26 = vrot.slane %v13, %v25
  %v27 = vlaneseq
  %v28 = vshrl.u32 %v27, 7
  %v29 = vsub.s32 3, %v28
  %v30 = vrot.slane %v13, %v29
  %v31 = vlaneseq
  %v32 = vshrl.u32 %v31, 7
  %v33 = vsub.s32 4, %v32
  %v34 = vrot.slane %v13, %v33
  %v35 = vlaneseq
  %v36 = vshrl.u32 %v35, 7
  %v37 = vsub.s32 5, %v36
  %v38 = vrot.slane %v13, %v37
  %v39 = vlaneseq
  %v40 = vshrl.u32 %v39, 7
  %v41 = vsub.s32 6, %v40
  %v42 = vrot.slane %v13, %v41
  %v43 = vlaneseq
  %v44 = vshrl.u32 %v43, 7
  %v45 = vsub.s32 7, %v44
  %v46 = vrot.slane %v13, %v45
  %v47 = vcombine.low %v18, %v22
  %v48 = vcombine.low %v26, %v30
  %v50 = vunpack.c.l.s4 1983009808
  %v51 = vunpack.c.0.s8 %v50
  %v52 = vlaneseq
  %v53 = vshrl.u32 %v52, 7
  %v54 = vsub.s32 %v51, %v53
  %v55 = vrot.slane %v47, %v54
  %v57 = vunpack.c.l.s4 1983009808
  %v58 = vunpack.c.0.s8 %v57
  %v59 = vlaneseq
  %v60 = vshrl.u32 %v59, 7
  %v61 = vsub.s32 %v58, %v60
  %v62 = vrot.slane %v48, %v61
  %v63 = vcombine.low %v55, %v62
  %v64 = vcombine.low %v34, %v38
  %v65 = vcombine.low %v42, %v46
  %v67 = vunpack.c.l.s4 1983009808
  %v68 = vunpack.c.0.s8 %v67
  %v69 = vlaneseq
  %v70 = vshrl.u32 %v69, 7
  %v71 = vsub.s32 %v68, %v70
  %v72 = vrot.slane %v64, %v71
  %v74 = vunpack.c.l.s4 1983009808
  %v75 = vunpack.c.0.s8 %v74
  %v76 = vlaneseq
  %v77 = vshrl.u32 %v76, 7
  %v78 = vsub.s32 %v75, %v77
  %v79 = vrot.slane %v65, %v78
  %v80 = vcombine.low %v72, %v79
  %v83 = vmul.f32 %v11, %v63
  %v84 = vmul.f32 %v12, %v80
  %v87 = vcombine.high %v83, %v83
  %v89 = vunpack.c.l.s4 1983009808
  %v90 = vunpack.c.0.s8 %v89
  %v91 = vlaneseq
  %v92 = vshrl.u32 %v91, 7
  %v93 = vsub.s32 %v90, %v92
  %v94 = vrot.slane %v83, %v93
  %v96 = vunpack.c.l.s4 1983009808
  %v97 = vunpack.c.0.s8 %v96
  %v98 = vlaneseq
  %v99 = vshrl.u32 %v98, 7
  %v100 = vsub.s32 %v97, %v99
  %v101 = vrot.slane %v87, %v100
  %v102 = vcombine.high %v94, %v94
  %v103 = vcombine.high %v101, %v101
  %v104 = vcombine.high %v84, %v84
  %v106 = vunpack.c.l.s4 1983009808
  %v107 = vunpack.c.0.s8 %v106
  %v108 = vlaneseq
  %v109 = vshrl.u32 %v108, 7
  %v110 = vsub.s32 %v107, %v109
  %v111 = vrot.slane %v84, %v110
  %v113 = vunpack.c.l.s4 1983009808
  %v114 = vunpack.c.0.s8 %v113
  %v115 = vlaneseq
  %v116 = vshrl.u32 %v115, 7
  %v117 = vsub.s32 %v114, %v116
  %v118 = vrot.slane %v104, %v117
  %v119 = vcombine.high %v111, %v111
  %v120 = vcombine.high %v118, %v118
  %vm129 = vcmask 1041408
  %v130 = vsel %vm129, %v94, 0.0
  %v131 = vsel %vm129, %v102, 0.0
  %v132 = vadd.f32 %v130, %v131
  %v133 = vsel %vm129, %v101, 0.0
  %v134 = vadd.f32 %v132, %v133
  %v135 = vsel %vm129, %v103, 0.0
  %v136 = vadd.f32 %v134, %v135
  %v137 = vsel %vm129, %v111, 0.0
  %v138 = vadd.f32 %v136, %v137
  %v139 = vsel %vm129, %v119, 0.0
  %v140 = vadd.f32 %v138, %v139
  %v141 = vsel %vm129, %v118, 0.0
  %v142 = vadd.f32 %v140, %v141
  %v143 = vsel %vm129, %v120, 0.0
  %v144 = vadd.f32 %v142, %v143
  %145 = vadd.xlane.f32.xlu0 %v144
  %v146 = vpop.xlane.xlu0 %145
  %v147 = vxor.u32 %v146, 2147483648
  %v148 = vmul.f32 %v147, 1.442695
  %v149 = vpow.pop %v148
  %v150 = vadd.f32 %v149, 1.0
  %v151 = vrcp.pop %v150
  %v152 = vmul.f32 1.0, %v151
  %vm153 = vcmask 1024
  %154 = vst.msk [vmem:[%s2] sm:$0x3] %vm153, %v152
  // Predicated region
  $region10: #{icml_d_forward.19} parent=0 // pred_check
    _
  $region11: #{icml_d_forward.19} parent=0 // pred_check_branch
    %156 = sbr.rel (0) target = $region13
  $region12: #{icml_d_forward.19} parent=0 // pred_region
    _
  $region13: #{icml_d_forward.19} parent=0 // pred_fallthru
    _
  // Predicated region
  $region14: #{icml_d_forward.19} parent=0 // pred_check
    _
  $region15: #{icml_d_forward.19} parent=0 // pred_check_branch
    %158 = sbr.rel (0) target = $region17
  $region16: #{icml_d_forward.19} parent=0 // pred_region
    _
  $region17: #{icml_d_forward.19} parent=0 // pred_fallthru
    _

</llo_original>
